<compile_context>
chip_gen: v7x
topology: tpu7x:2x2x1
jax: 0.10.0
libtpu: 0.0.40
codegen_flags: <defaults>
</compile_context>

<pallas_src>
import numpy as np
import jax
import jax.numpy as jnp
from jax.experimental import pallas as pl
from jax.experimental.pallas import tpu as pltpu


# ----------------------------------------------------------------------------
# Fused per-hook kernel: conv3x3 -> conv3x3 -> separable bilinear upsample
# ----------------------------------------------------------------------------
def _hcol_hook_kernel(x_ref, w1_ref, b1_ref, w2_ref, b2_ref, wht_ref, wwt_ref,
                      canvas_ref, o_ref, pad1_ref, pad2_ref, col1_ref, col2_ref):
    """Refs (grid step = one block of B images):
      x_ref   : (B, Hi, Wi, Cin)   f32   hook activations (NHWC)
      w1_ref  : (9*Cin, Cmid)      bf16  conv1 weight, im2col layout (tap-major)
      w2_ref  : (9*Cmid, Cmid)     bf16  conv2 weight, im2col layout
      b*_ref  : (1, Cmid)          f32
      wht_ref : (Hi, Ho)           bf16  bilinear row weights, transposed
      wwt_ref : (Wi, Wo)           bf16  bilinear col weights, transposed
      canvas_ref : full hypercolumn tensor in HBM (aliased to the output; unused here)
      o_ref   : (B, Cmid, Ho, Wo)  f32   this hook's channel slice of the canvas (NCHW)
    Scratch (VMEM, bf16): pad1 (B,Hi+2,Wi+2,Cin), pad2 (B,Hi+2,Wi+2,Cmid),
                          col1 (B*Hi*Wi, 9*Cin), col2 (B*Hi*Wi, 9*Cmid).
    """
    del canvas_ref  # written only through o_ref (aliased output canvas)
    B, Hi, Wi, _ = x_ref.shape
    Cmid, Ho, Wo = o_ref.shape[1], o_ref.shape[2], o_ref.shape[3]
    M = B * Hi * Wi

    def conv3x3(pad_ref, col_ref, interior_bf16, w_ref, b_ref):
        cin = pad_ref.shape[-1]
        # zero only the 1-pixel halo; the interior is fully overwritten every step
        zlr = jnp.zeros((B, Hi + 2, 1, cin), jnp.bfloat16)
        ztb = jnp.zeros((B, 1, Wi + 2, cin), jnp.bfloat16)
        pad_ref[:, :, 0:1, :] = zlr
        pad_ref[:, :, Wi + 1:Wi + 2, :] = zlr
        pad_ref[:, 0:1, :, :] = ztb
        pad_ref[:, Hi + 1:Hi + 2, :, :] = ztb
        pad_ref[:, 1:Hi + 1, 1:Wi + 1, :] = interior_bf16
        # im2col operand (M, 9*cin), contracted in ONE MXU matmul (f32 accumulation)
        for dy in range(3):
            for dx in range(3):
                tap = dy * 3 + dx
                patch = pad_ref[:, dy:dy + Hi, dx:dx + Wi, :].reshape(M, cin)
                col_ref[:, tap * cin:(tap + 1) * cin] = patch
        return jnp.dot(col_ref[...], w_ref[...],
                       preferred_element_type=jnp.float32) + b_ref[...]

    y1 = conv3x3(pad1_ref, col1_ref, x_ref[...].astype(jnp.bfloat16),
                 w1_ref, b1_ref)                               # (M, Cmid) f32
    y2 = conv3x3(pad2_ref, col2_ref,
                 y1.reshape(B, Hi, Wi, Cmid).astype(jnp.bfloat16),
                 w2_ref, b2_ref)                               # (M, Cmid) f32

    # ---- separable bilinear upsample: 2 single matmuls per image, NCHW output ----
    wht = wht_ref[...]                                          # (Hi, Ho) bf16
    wwt = wwt_ref[...]                                          # (Wi, Wo) bf16
    for b in range(B):
        yb = y2[b * Hi * Wi:(b + 1) * Hi * Wi, :]               # (Hi*Wi, Cmid)
        # one small relayout (pre-upsample data): rows become (c, w), lanes Hi
        op1 = jnp.transpose(yb.T.reshape(Cmid, Hi, Wi), (0, 2, 1))
        op1 = op1.reshape(Cmid * Wi, Hi).astype(jnp.bfloat16)
        t = jnp.dot(op1, wht, preferred_element_type=jnp.float32)   # (Cmid*Wi, Ho)
        # rows become (c, ho), lanes Wi  (row-split + batched minor transpose)
        op2 = jnp.transpose(t.reshape(Cmid, Wi, Ho), (0, 2, 1))
        op2 = op2.reshape(Cmid * Ho, Wi).astype(jnp.bfloat16)
        ob = jnp.dot(op2, wwt, preferred_element_type=jnp.float32)  # (Cmid*Ho, Wo)
        o_ref[b] = ob.reshape(Cmid, Ho, Wo).astype(o_ref.dtype)     # dense NCHW slab


def hcol_hook_into_canvas(hook_idx, x_nhwc, w1, b1, w2, b2, wht, wwt, canvas,
                          batch_block):
    """Runs one hook's fused head and writes its channel slice into `canvas`
    (aliased in place); returns the updated canvas."""
    N, Hi, Wi, Cin = x_nhwc.shape
    Cmid = w1.shape[-1]
    Ho, Wo = wht.shape[1], wwt.shape[1]
    B = batch_block
    assert N % B == 0
    return pl.pallas_call(
        _hcol_hook_kernel,
        grid=(N // B,),
        in_specs=[
            pl.BlockSpec((B, Hi, Wi, Cin), lambda nb: (nb, 0, 0, 0)),
            pl.BlockSpec((9 * Cin, Cmid), lambda nb: (0, 0)),
            pl.BlockSpec((1, Cmid), lambda nb: (0, 0)),
            pl.BlockSpec((9 * Cmid, Cmid), lambda nb: (0, 0)),
            pl.BlockSpec((1, Cmid), lambda nb: (0, 0)),
            pl.BlockSpec((Hi, Ho), lambda nb: (0, 0)),
            pl.BlockSpec((Wi, Wo), lambda nb: (0, 0)),
            pl.BlockSpec(memory_space=pl.ANY),            # aliased canvas (HBM)
        ],
        out_specs=pl.BlockSpec((B, Cmid, Ho, Wo),
                               lambda nb: (nb, hook_idx, 0, 0)),
        out_shape=jax.ShapeDtypeStruct(canvas.shape, canvas.dtype),
        scratch_shapes=[
            pltpu.VMEM((B, Hi + 2, Wi + 2, Cin), jnp.bfloat16),
            pltpu.VMEM((B, Hi + 2, Wi + 2, Cmid), jnp.bfloat16),
            pltpu.VMEM((B * Hi * Wi, 9 * Cin), jnp.bfloat16),
            pltpu.VMEM((B * Hi * Wi, 9 * Cmid), jnp.bfloat16),
        ],
        input_output_aliases={7: 0},
        compiler_params=pltpu.CompilerParams(
            dimension_semantics=("parallel",),
            vmem_limit_bytes=48 * 1024 * 1024,
        ),
    )(x_nhwc, w1, b1, w2, b2, wht, wwt, canvas)


# ----------------------------------------------------------------------------
# Bilinear (align_corners=False) interpolation matrices
# ----------------------------------------------------------------------------
def bilinear_matrix(in_size, out_size):
    """PyTorch F.interpolate(mode='bilinear', align_corners=False) row weights."""
    scale = in_size / out_size
    dst = np.arange(out_size, dtype=np.float64)
    src = np.maximum((dst + 0.5) * scale - 0.5, 0.0)
    i0 = np.minimum(np.floor(src).astype(np.int64), in_size - 1)
    i1 = np.minimum(i0 + 1, in_size - 1)
    lam1 = src - i0
    lam0 = 1.0 - lam1
    m = np.zeros((out_size, in_size), dtype=np.float64)
    m[np.arange(out_size), i0] += lam0
    m[np.arange(out_size), i1] += lam1
    return m.astype(np.float32)


# ----------------------------------------------------------------------------
# Hcolumns module (Pallas version)
# ----------------------------------------------------------------------------
class HcolumnsPallas:
    def __init__(self, nc, key, is_se_resnext=False):
        self.n = len(nc) - 1
        self.nc = list(nc)
        self.is_se_resnext = is_se_resnext
        self.params = []    # original layout (3,3,Cin,Cout) f32, for the reference
        self.kparams = []   # kernel layout: (9*Cin,Cout) bf16 weights, (1,Cout) f32 bias
        cmid = nc[-1]
        for i in range(self.n):
            key, k1, k2, k3, k4 = jax.random.split(key, 5)
            w1 = 0.1 * jax.random.normal(k1, (3, 3, nc[i], cmid), jnp.float32)
            b1 = 0.1 * jax.random.normal(k2, (cmid,), jnp.float32)
            w2 = 0.1 * jax.random.normal(k3, (3, 3, cmid, cmid), jnp.float32)
            b2 = 0.1 * jax.random.normal(k4, (cmid,), jnp.float32)
            self.params.append((w1, b1, w2, b2))
            self.kparams.append((
                w1.reshape(9 * nc[i], cmid).astype(jnp.bfloat16),
                b1.reshape(1, cmid),
                w2.reshape(9 * cmid, cmid).astype(jnp.bfloat16),
                b2.reshape(1, cmid),
            ))
        self._interp_cache = {}

    def _interp_t(self, size_in, size_out):
        key = (size_in, size_out)
        if key not in self._interp_cache:
            m = bilinear_matrix(size_in, size_out)            # (out, in) f32
            self._interp_cache[key] = jnp.asarray(m.T, dtype=jnp.bfloat16)
        return self._interp_cache[key]

    @staticmethod
    def _batch_block(n, max_b=8):
        b = 1
        for cand in range(2, min(n, max_b) + 1):
            if n % cand == 0:
                b = cand
        return b

    def __call__(self, hooks_stored_nchw, x_nchw):
        n = self.n
        N, _, H, W = x_nchw.shape
        cmid = self.nc[-1]
        # x occupies the trailing channels of the hypercolumn tensor; every hook's
        # pallas_call fills its own channel slice in place (concat folded away).
        canvas = jnp.pad(x_nchw, ((0, 0), (n * cmid, 0), (0, 0), (0, 0)))
        bb = self._batch_block(N)
        for i in range(n):
            w1, b1, w2, b2 = self.kparams[i]
            h = hooks_stored_nchw[i]
            _, _, hi, wi = h.shape
            scale = 2 ** (n - i) * (2 if self.is_se_resnext else 1)
            ho, wo = hi * scale, wi * scale
            assert (ho, wo) == (H, W), "upsampled hook must match x's spatial size"
            wht = self._interp_t(hi, ho)                     # (Hi, Ho) bf16
            wwt = self._interp_t(wi, wo)                     # (Wi, Wo) bf16
            h_nhwc = jnp.transpose(h, (0, 2, 3, 1))          # small, pre-upsample
            canvas = hcol_hook_into_canvas(i, h_nhwc, w1, b1, w2, b2, wht, wwt,
                                           canvas, bb)
        return canvas                                        # (N, n*Cmid + Cx, H, W)


# ----------------------------------------------------------------------------
# Pure-numpy reference (float64) for a sanity check
# ----------------------------------------------------------------------------
def ref_conv3x3(x_nhwc, w, b):
    N, H, W, Cin = x_nhwc.shape
    Cout = w.shape[-1]
    xp = np.pad(x_nhwc, ((0, 0), (1, 1), (1, 1), (0, 0)))
    out = np.zeros((N, H, W, Cout), dtype=np.float64)
    for dy in range(3):
        for dx in range(3):
            out += xp[:, dy:dy + H, dx:dx + W, :] @ np.asarray(w[dy, dx], np.float64)
    return out + np.asarray(b, np.float64)


def ref_forward(module, hooks_stored_nchw, x_nchw):
    n = module.n
    outs = []
    for i in range(n):
        w1, b1, w2, b2 = (np.asarray(p, np.float64) for p in module.params[i])
        h = np.transpose(np.asarray(hooks_stored_nchw[i], np.float64), (0, 2, 3, 1))
        h = ref_conv3x3(h, w1, b1)
        h = ref_conv3x3(h, w2, b2)
        scale = 2 ** (n - i) * (2 if module.is_se_resnext else 1)
        wh = bilinear_matrix(h.shape[1], h.shape[1] * scale).astype(np.float64)
        ww = bilinear_matrix(h.shape[2], h.shape[2] * scale).astype(np.float64)
        h = np.einsum('oh,pw,nhwc->nopc', wh, ww, h)
        outs.append(np.transpose(h, (0, 3, 1, 2)))
    outs.append(np.asarray(x_nchw, np.float64))
    return np.concatenate(outs, axis=1)


# ----------------------------------------------------------------------------
if __name__ == "__main__":
    key = jax.random.PRNGKey(0)
    key, kh0, kh1, kx, kp = jax.random.split(key, 5)

    # n = 2 hooks; nc = [channels(hook0), channels(hook1), channels(x)]
    nc = [8, 6, 4]
    # x: (N=2, C=4, H=16, W=16); hook i spatial size = 16 / 2**(n-i)
    x = jax.random.normal(kx, (2, 4, 16, 16), jnp.float32)
    hook0 = jax.random.normal(kh0, (2, 8, 4, 4), jnp.float32)    # upsampled x4
    hook1 = jax.random.normal(kh1, (2, 6, 8, 8), jnp.float32)    # upsampled x2

    module = HcolumnsPallas(nc, kp, is_se_resnext=False)

    fwd = jax.jit(module.__call__)
    out = jax.block_until_ready(fwd([hook0, hook1], x))

    assert out.shape == (2, 4 + 4 + 4, 16, 16), out.shape

    ref = ref_forward(module, [hook0, hook1], x)
    np.testing.assert_allclose(np.asarray(out, np.float64), ref, atol=5e-2, rtol=5e-2)

    print("KERNEL_OK")
</pallas_src>

<mosaic_0001>
module attributes {stable_mosaic.version = 11 : i64} {
  func.func @_hcol_hook_kernel(%arg0: i32, %arg1: memref<2x4x4x8xf32, #tpu.memory_space<vmem>>, %arg2: memref<72x4xbf16, #tpu.memory_space<vmem>>, %arg3: memref<1x4xf32, #tpu.memory_space<vmem>>, %arg4: memref<36x4xbf16, #tpu.memory_space<vmem>>, %arg5: memref<1x4xf32, #tpu.memory_space<vmem>>, %arg6: memref<4x16xbf16, #tpu.memory_space<vmem>>, %arg7: memref<4x16xbf16, #tpu.memory_space<vmem>>, %arg8: memref<2x12x16x16xf32, #tpu.memory_space<any>>, %arg9: memref<2x4x16x16xf32, #tpu.memory_space<vmem>>, %arg10: memref<2x6x6x8xbf16, #tpu.memory_space<vmem>>, %arg11: memref<2x6x6x4xbf16, #tpu.memory_space<vmem>>, %arg12: memref<32x72xbf16, #tpu.memory_space<vmem>>, %arg13: memref<32x36xbf16, #tpu.memory_space<vmem>>) attributes {dimension_semantics = [#tpu.dimension_semantics<parallel>], iteration_bounds = array<i64: 1>, scalar_prefetch = 0 : i64, scratch_operands = 4 : i64, tpu.core_type = #tpu.core_type<tc>, window_params = [{transform_indices = @transform_0, window_bounds = array<i64: 2, 4, 4, 8>}, {pipeline_mode = #tpu.pipeline_mode<synchronous>, transform_indices = @transform_1, window_bounds = array<i64: 72, 4>}, {pipeline_mode = #tpu.pipeline_mode<synchronous>, transform_indices = @transform_2, window_bounds = array<i64: 1, 4>}, {pipeline_mode = #tpu.pipeline_mode<synchronous>, transform_indices = @transform_3, window_bounds = array<i64: 36, 4>}, {pipeline_mode = #tpu.pipeline_mode<synchronous>, transform_indices = @transform_4, window_bounds = array<i64: 1, 4>}, {pipeline_mode = #tpu.pipeline_mode<synchronous>, transform_indices = @transform_5, window_bounds = array<i64: 4, 16>}, {pipeline_mode = #tpu.pipeline_mode<synchronous>, transform_indices = @transform_6, window_bounds = array<i64: 4, 16>}, {}, {transform_indices = @transform_8, window_bounds = array<i64: 2, 4, 16, 16>}]} {
    %c0 = arith.constant 0 : index
    %c0_0 = arith.constant 0 : index
    %c0_1 = arith.constant 0 : index
    %c0_2 = arith.constant 0 : index
    %0 = vector.load %arg1[%c0, %c0_0, %c0_1, %c0_2] : memref<2x4x4x8xf32, #tpu.memory_space<vmem>>, vector<2x4x4x8xf32>
    %1 = arith.truncf %0 : vector<2x4x4x8xf32> to vector<2x4x4x8xbf16>
    %cst = arith.constant 0.000000e+00 : bf16
    %2 = vector.broadcast %cst : bf16 to vector<2x6x1x8xbf16>
    %cst_3 = arith.constant 0.000000e+00 : bf16
    %3 = vector.broadcast %cst_3 : bf16 to vector<2x1x6x8xbf16>
    %c0_4 = arith.constant 0 : index
    %c0_5 = arith.constant 0 : index
    %c0_6 = arith.constant 0 : index
    %c0_7 = arith.constant 0 : index
    %4 = vector.load %arg10[%c0_4, %c0_5, %c0_6, %c0_7] : memref<2x6x6x8xbf16, #tpu.memory_space<vmem>>, vector<2x6x1x8xbf16>
    tpu.vector_store %arg10[%c0_4, %c0_5, %c0_6, %c0_7], %2 {strides = array<i32>} : memref<2x6x6x8xbf16, #tpu.memory_space<vmem>>, vector<2x6x1x8xbf16>,
    %c0_8 = arith.constant 0 : index
    %c0_9 = arith.constant 0 : index
    %c5 = arith.constant 5 : index
    %c0_10 = arith.constant 0 : index
    %5 = vector.load %arg10[%c0_8, %c0_9, %c5, %c0_10] : memref<2x6x6x8xbf16, #tpu.memory_space<vmem>>, vector<2x6x1x8xbf16>
    tpu.vector_store %arg10[%c0_8, %c0_9, %c5, %c0_10], %2 {strides = array<i32>} : memref<2x6x6x8xbf16, #tpu.memory_space<vmem>>, vector<2x6x1x8xbf16>,
    %c0_11 = arith.constant 0 : index
    %c0_12 = arith.constant 0 : index
    %c0_13 = arith.constant 0 : index
    %c0_14 = arith.constant 0 : index
    %6 = vector.load %arg10[%c0_11, %c0_12, %c0_13, %c0_14] : memref<2x6x6x8xbf16, #tpu.memory_space<vmem>>, vector<2x1x6x8xbf16>
    tpu.vector_store %arg10[%c0_11, %c0_12, %c0_13, %c0_14], %3 {strides = array<i32>} : memref<2x6x6x8xbf16, #tpu.memory_space<vmem>>, vector<2x1x6x8xbf16>,
    %c0_15 = arith.constant 0 : index
    %c5_16 = arith.constant 5 : index
    %c0_17 = arith.constant 0 : index
    %c0_18 = arith.constant 0 : index
    %7 = vector.load %arg10[%c0_15, %c5_16, %c0_17, %c0_18] : memref<2x6x6x8xbf16, #tpu.memory_space<vmem>>, vector<2x1x6x8xbf16>
    tpu.vector_store %arg10[%c0_15, %c5_16, %c0_17, %c0_18], %3 {strides = array<i32>} : memref<2x6x6x8xbf16, #tpu.memory_space<vmem>>, vector<2x1x6x8xbf16>,
    %c0_19 = arith.constant 0 : index
    %c1 = arith.constant 1 : index
    %c1_20 = arith.constant 1 : index
    %c0_21 = arith.constant 0 : index
    %8 = vector.load %arg10[%c0_19, %c1, %c1_20, %c0_21] : memref<2x6x6x8xbf16, #tpu.memory_space<vmem>>, vector<2x4x4x8xbf16>
    tpu.vector_store %arg10[%c0_19, %c1, %c1_20, %c0_21], %1 {strides = array<i32>} : memref<2x6x6x8xbf16, #tpu.memory_space<vmem>>, vector<2x4x4x8xbf16>,
    %c0_22 = arith.constant 0 : index
    %c0_23 = arith.constant 0 : index
    %c0_24 = arith.constant 0 : index
    %c0_25 = arith.constant 0 : index
    %9 = vector.load %arg10[%c0_22, %c0_23, %c0_24, %c0_25] : memref<2x6x6x8xbf16, #tpu.memory_space<vmem>>, vector<2x4x4x8xbf16>
    %10 = vector.shape_cast %9 : vector<2x4x4x8xbf16> to vector<32x8xbf16>
    %c0_26 = arith.constant 0 : index
    %c0_27 = arith.constant 0 : index
    %11 = vector.load %arg12[%c0_26, %c0_27] : memref<32x72xbf16, #tpu.memory_space<vmem>>, vector<32x8xbf16>
    tpu.vector_store %arg12[%c0_26, %c0_27], %10 {strides = array<i32>} : memref<32x72xbf16, #tpu.memory_space<vmem>>, vector<32x8xbf16>,
    %c0_28 = arith.constant 0 : index
    %c0_29 = arith.constant 0 : index
    %c1_30 = arith.constant 1 : index
    %c0_31 = arith.constant 0 : index
    %12 = vector.load %arg10[%c0_28, %c0_29, %c1_30, %c0_31] : memref<2x6x6x8xbf16, #tpu.memory_space<vmem>>, vector<2x4x4x8xbf16>
    %13 = vector.shape_cast %12 : vector<2x4x4x8xbf16> to vector<32x8xbf16>
    %c0_32 = arith.constant 0 : index
    %c8 = arith.constant 8 : index
    %14 = vector.load %arg12[%c0_32, %c8] : memref<32x72xbf16, #tpu.memory_space<vmem>>, vector<32x8xbf16>
    tpu.vector_store %arg12[%c0_32, %c8], %13 {strides = array<i32>} : memref<32x72xbf16, #tpu.memory_space<vmem>>, vector<32x8xbf16>,
    %c0_33 = arith.constant 0 : index
    %c0_34 = arith.constant 0 : index
    %c2 = arith.constant 2 : index
    %c0_35 = arith.constant 0 : index
    %15 = vector.load %arg10[%c0_33, %c0_34, %c2, %c0_35] : memref<2x6x6x8xbf16, #tpu.memory_space<vmem>>, vector<2x4x4x8xbf16>
    %16 = vector.shape_cast %15 : vector<2x4x4x8xbf16> to vector<32x8xbf16>
    %c0_36 = arith.constant 0 : index
    %c16 = arith.constant 16 : index
    %17 = vector.load %arg12[%c0_36, %c16] : memref<32x72xbf16, #tpu.memory_space<vmem>>, vector<32x8xbf16>
    tpu.vector_store %arg12[%c0_36, %c16], %16 {strides = array<i32>} : memref<32x72xbf16, #tpu.memory_space<vmem>>, vector<32x8xbf16>,
    %c0_37 = arith.constant 0 : index
    %c1_38 = arith.constant 1 : index
    %c0_39 = arith.constant 0 : index
    %c0_40 = arith.constant 0 : index
    %18 = vector.load %arg10[%c0_37, %c1_38, %c0_39, %c0_40] : memref<2x6x6x8xbf16, #tpu.memory_space<vmem>>, vector<2x4x4x8xbf16>
    %19 = vector.shape_cast %18 : vector<2x4x4x8xbf16> to vector<32x8xbf16>
    %c0_41 = arith.constant 0 : index
    %c24 = arith.constant 24 : index
    %20 = vector.load %arg12[%c0_41, %c24] : memref<32x72xbf16, #tpu.memory_space<vmem>>, vector<32x8xbf16>
    tpu.vector_store %arg12[%c0_41, %c24], %19 {strides = array<i32>} : memref<32x72xbf16, #tpu.memory_space<vmem>>, vector<32x8xbf16>,
    %c0_42 = arith.constant 0 : index
    %c1_43 = arith.constant 1 : index
    %c1_44 = arith.constant 1 : index
    %c0_45 = arith.constant 0 : index
    %21 = vector.load %arg10[%c0_42, %c1_43, %c1_44, %c0_45] : memref<2x6x6x8xbf16, #tpu.memory_space<vmem>>, vector<2x4x4x8xbf16>
    %22 = vector.shape_cast %21 : vector<2x4x4x8xbf16> to vector<32x8xbf16>
    %c0_46 = arith.constant 0 : index
    %c32 = arith.constant 32 : index
    %23 = vector.load %arg12[%c0_46, %c32] : memref<32x72xbf16, #tpu.memory_space<vmem>>, vector<32x8xbf16>
    tpu.vector_store %arg12[%c0_46, %c32], %22 {strides = array<i32>} : memref<32x72xbf16, #tpu.memory_space<vmem>>, vector<32x8xbf16>,
    %c0_47 = arith.constant 0 : index
    %c1_48 = arith.constant 1 : index
    %c2_49 = arith.constant 2 : index
    %c0_50 = arith.constant 0 : index
    %24 = vector.load %arg10[%c0_47, %c1_48, %c2_49, %c0_50] : memref<2x6x6x8xbf16, #tpu.memory_space<vmem>>, vector<2x4x4x8xbf16>
    %25 = vector.shape_cast %24 : vector<2x4x4x8xbf16> to vector<32x8xbf16>
    %c0_51 = arith.constant 0 : index
    %c40 = arith.constant 40 : index
    %26 = vector.load %arg12[%c0_51, %c40] : memref<32x72xbf16, #tpu.memory_space<vmem>>, vector<32x8xbf16>
    tpu.vector_store %arg12[%c0_51, %c40], %25 {strides = array<i32>} : memref<32x72xbf16, #tpu.memory_space<vmem>>, vector<32x8xbf16>,
    %c0_52 = arith.constant 0 : index
    %c2_53 = arith.constant 2 : index
    %c0_54 = arith.constant 0 : index
    %c0_55 = arith.constant 0 : index
    %27 = vector.load %arg10[%c0_52, %c2_53, %c0_54, %c0_55] : memref<2x6x6x8xbf16, #tpu.memory_space<vmem>>, vector<2x4x4x8xbf16>
    %28 = vector.shape_cast %27 : vector<2x4x4x8xbf16> to vector<32x8xbf16>
    %c0_56 = arith.constant 0 : index
    %c48 = arith.constant 48 : index
    %29 = vector.load %arg12[%c0_56, %c48] : memref<32x72xbf16, #tpu.memory_space<vmem>>, vector<32x8xbf16>
    tpu.vector_store %arg12[%c0_56, %c48], %28 {strides = array<i32>} : memref<32x72xbf16, #tpu.memory_space<vmem>>, vector<32x8xbf16>,
    %c0_57 = arith.constant 0 : index
    %c2_58 = arith.constant 2 : index
    %c1_59 = arith.constant 1 : index
    %c0_60 = arith.constant 0 : index
    %30 = vector.load %arg10[%c0_57, %c2_58, %c1_59, %c0_60] : memref<2x6x6x8xbf16, #tpu.memory_space<vmem>>, vector<2x4x4x8xbf16>
    %31 = vector.shape_cast %30 : vector<2x4x4x8xbf16> to vector<32x8xbf16>
    %c0_61 = arith.constant 0 : index
    %c56 = arith.constant 56 : index
    %32 = vector.load %arg12[%c0_61, %c56] : memref<32x72xbf16, #tpu.memory_space<vmem>>, vector<32x8xbf16>
    tpu.vector_store %arg12[%c0_61, %c56], %31 {strides = array<i32>} : memref<32x72xbf16, #tpu.memory_space<vmem>>, vector<32x8xbf16>,
    %c0_62 = arith.constant 0 : index
    %c2_63 = arith.constant 2 : index
    %c2_64 = arith.constant 2 : index
    %c0_65 = arith.constant 0 : index
    %33 = vector.load %arg10[%c0_62, %c2_63, %c2_64, %c0_65] : memref<2x6x6x8xbf16, #tpu.memory_space<vmem>>, vector<2x4x4x8xbf16>
    %34 = vector.shape_cast %33 : vector<2x4x4x8xbf16> to vector<32x8xbf16>
    %c0_66 = arith.constant 0 : index
    %c64 = arith.constant 64 : index
    %35 = vector.load %arg12[%c0_66, %c64] : memref<32x72xbf16, #tpu.memory_space<vmem>>, vector<32x8xbf16>
    tpu.vector_store %arg12[%c0_66, %c64], %34 {strides = array<i32>} : memref<32x72xbf16, #tpu.memory_space<vmem>>, vector<32x8xbf16>,
    %c0_67 = arith.constant 0 : index
    %c0_68 = arith.constant 0 : index
    %36 = vector.load %arg12[%c0_67, %c0_68] : memref<32x72xbf16, #tpu.memory_space<vmem>>, vector<32x72xbf16>
    %c0_69 = arith.constant 0 : index
    %c0_70 = arith.constant 0 : index
    %37 = vector.load %arg2[%c0_69, %c0_70] : memref<72x4xbf16, #tpu.memory_space<vmem>>, vector<72x4xbf16>
    %cst_71 = arith.constant dense<0.000000e+00> : vector<32x4xf32>
    %38 = tpu.matmul %36, %37, %cst_71 {dimension_numbers = #tpu.dot_dimension_numbers<[1], [0], [0], [1], [0, 0, 1, 1], [], []>} : vector<32x72xbf16>, vector<72x4xbf16>, vector<32x4xf32> -> vector<32x4xf32>
    %c0_72 = arith.constant 0 : index
    %c0_73 = arith.constant 0 : index
    %39 = vector.load %arg3[%c0_72, %c0_73] : memref<1x4xf32, #tpu.memory_space<vmem>>, vector<1x4xf32>
    %40 = vector.broadcast %39 : vector<1x4xf32> to vector<32x4xf32>
    %41 = arith.addf %38, %40 : vector<32x4xf32>
    %42 = vector.shape_cast %41 : vector<32x4xf32> to vector<2x4x4x4xf32>
    %43 = arith.truncf %42 : vector<2x4x4x4xf32> to vector<2x4x4x4xbf16>
    %cst_74 = arith.constant 0.000000e+00 : bf16
    %44 = vector.broadcast %cst_74 : bf16 to vector<2x6x1x4xbf16>
    %cst_75 = arith.constant 0.000000e+00 : bf16
    %45 = vector.broadcast %cst_75 : bf16 to vector<2x1x6x4xbf16>
    %c0_76 = arith.constant 0 : index
    %c0_77 = arith.constant 0 : index
    %c0_78 = arith.constant 0 : index
    %c0_79 = arith.constant 0 : index
    %46 = vector.load %arg11[%c0_76, %c0_77, %c0_78, %c0_79] : memref<2x6x6x4xbf16, #tpu.memory_space<vmem>>, vector<2x6x1x4xbf16>
    tpu.vector_store %arg11[%c0_76, %c0_77, %c0_78, %c0_79], %44 {strides = array<i32>} : memref<2x6x6x4xbf16, #tpu.memory_space<vmem>>, vector<2x6x1x4xbf16>,
    %c0_80 = arith.constant 0 : index
    %c0_81 = arith.constant 0 : index
    %c5_82 = arith.constant 5 : index
    %c0_83 = arith.constant 0 : index
    %47 = vector.load %arg11[%c0_80, %c0_81, %c5_82, %c0_83] : memref<2x6x6x4xbf16, #tpu.memory_space<vmem>>, vector<2x6x1x4xbf16>
    tpu.vector_store %arg11[%c0_80, %c0_81, %c5_82, %c0_83], %44 {strides = array<i32>} : memref<2x6x6x4xbf16, #tpu.memory_space<vmem>>, vector<2x6x1x4xbf16>,
    %c0_84 = arith.constant 0 : index
    %c0_85 = arith.constant 0 : index
    %c0_86 = arith.constant 0 : index
    %c0_87 = arith.constant 0 : index
    %48 = vector.load %arg11[%c0_84, %c0_85, %c0_86, %c0_87] : memref<2x6x6x4xbf16, #tpu.memory_space<vmem>>, vector<2x1x6x4xbf16>
    tpu.vector_store %arg11[%c0_84, %c0_85, %c0_86, %c0_87], %45 {strides = array<i32>} : memref<2x6x6x4xbf16, #tpu.memory_space<vmem>>, vector<2x1x6x4xbf16>,
    %c0_88 = arith.constant 0 : index
    %c5_89 = arith.constant 5 : index
    %c0_90 = arith.constant 0 : index
    %c0_91 = arith.constant 0 : index
    %49 = vector.load %arg11[%c0_88, %c5_89, %c0_90, %c0_91] : memref<2x6x6x4xbf16, #tpu.memory_space<vmem>>, vector<2x1x6x4xbf16>
    tpu.vector_store %arg11[%c0_88, %c5_89, %c0_90, %c0_91], %45 {strides = array<i32>} : memref<2x6x6x4xbf16, #tpu.memory_space<vmem>>, vector<2x1x6x4xbf16>,
    %c0_92 = arith.constant 0 : index
    %c1_93 = arith.constant 1 : index
    %c1_94 = arith.constant 1 : index
    %c0_95 = arith.constant 0 : index
    %50 = vector.load %arg11[%c0_92, %c1_93, %c1_94, %c0_95] : memref<2x6x6x4xbf16, #tpu.memory_space<vmem>>, vector<2x4x4x4xbf16>
    tpu.vector_store %arg11[%c0_92, %c1_93, %c1_94, %c0_95], %43 {strides = array<i32>} : memref<2x6x6x4xbf16, #tpu.memory_space<vmem>>, vector<2x4x4x4xbf16>,
    %c0_96 = arith.constant 0 : index
    %c0_97 = arith.constant 0 : index
    %c0_98 = arith.constant 0 : index
    %c0_99 = arith.constant 0 : index
    %51 = vector.load %arg11[%c0_96, %c0_97, %c0_98, %c0_99] : memref<2x6x6x4xbf16, #tpu.memory_space<vmem>>, vector<2x4x4x4xbf16>
    %52 = vector.shape_cast %51 : vector<2x4x4x4xbf16> to vector<32x4xbf16>
    %c0_100 = arith.constant 0 : index
    %c0_101 = arith.constant 0 : index
    %53 = vector.load %arg13[%c0_100, %c0_101] : memref<32x36xbf16, #tpu.memory_space<vmem>>, vector<32x4xbf16>
    tpu.vector_store %arg13[%c0_100, %c0_101], %52 {strides = array<i32>} : memref<32x36xbf16, #tpu.memory_space<vmem>>, vector<32x4xbf16>,
    %c0_102 = arith.constant 0 : index
    %c0_103 = arith.constant 0 : index
    %c1_104 = arith.constant 1 : index
    %c0_105 = arith.constant 0 : index
    %54 = vector.load %arg11[%c0_102, %c0_103, %c1_104, %c0_105] : memref<2x6x6x4xbf16, #tpu.memory_space<vmem>>, vector<2x4x4x4xbf16>
    %55 = vector.shape_cast %54 : vector<2x4x4x4xbf16> to vector<32x4xbf16>
    %c0_106 = arith.constant 0 : index
    %c4 = arith.constant 4 : index
    %56 = vector.load %arg13[%c0_106, %c4] : memref<32x36xbf16, #tpu.memory_space<vmem>>, vector<32x4xbf16>
    tpu.vector_store %arg13[%c0_106, %c4], %55 {strides = array<i32>} : memref<32x36xbf16, #tpu.memory_space<vmem>>, vector<32x4xbf16>,
    %c0_107 = arith.constant 0 : index
    %c0_108 = arith.constant 0 : index
    %c2_109 = arith.constant 2 : index
    %c0_110 = arith.constant 0 : index
    %57 = vector.load %arg11[%c0_107, %c0_108, %c2_109, %c0_110] : memref<2x6x6x4xbf16, #tpu.memory_space<vmem>>, vector<2x4x4x4xbf16>
    %58 = vector.shape_cast %57 : vector<2x4x4x4xbf16> to vector<32x4xbf16>
    %c0_111 = arith.constant 0 : index
    %c8_112 = arith.constant 8 : index
    %59 = vector.load %arg13[%c0_111, %c8_112] : memref<32x36xbf16, #tpu.memory_space<vmem>>, vector<32x4xbf16>
    tpu.vector_store %arg13[%c0_111, %c8_112], %58 {strides = array<i32>} : memref<32x36xbf16, #tpu.memory_space<vmem>>, vector<32x4xbf16>,
    %c0_113 = arith.constant 0 : index
    %c1_114 = arith.constant 1 : index
    %c0_115 = arith.constant 0 : index
    %c0_116 = arith.constant 0 : index
    %60 = vector.load %arg11[%c0_113, %c1_114, %c0_115, %c0_116] : memref<2x6x6x4xbf16, #tpu.memory_space<vmem>>, vector<2x4x4x4xbf16>
    %61 = vector.shape_cast %60 : vector<2x4x4x4xbf16> to vector<32x4xbf16>
    %c0_117 = arith.constant 0 : index
    %c12 = arith.constant 12 : index
    %62 = vector.load %arg13[%c0_117, %c12] : memref<32x36xbf16, #tpu.memory_space<vmem>>, vector<32x4xbf16>
    tpu.vector_store %arg13[%c0_117, %c12], %61 {strides = array<i32>} : memref<32x36xbf16, #tpu.memory_space<vmem>>, vector<32x4xbf16>,
    %c0_118 = arith.constant 0 : index
    %c1_119 = arith.constant 1 : index
    %c1_120 = arith.constant 1 : index
    %c0_121 = arith.constant 0 : index
    %63 = vector.load %arg11[%c0_118, %c1_119, %c1_120, %c0_121] : memref<2x6x6x4xbf16, #tpu.memory_space<vmem>>, vector<2x4x4x4xbf16>
    %64 = vector.shape_cast %63 : vector<2x4x4x4xbf16> to vector<32x4xbf16>
    %c0_122 = arith.constant 0 : index
    %c16_123 = arith.constant 16 : index
    %65 = vector.load %arg13[%c0_122, %c16_123] : memref<32x36xbf16, #tpu.memory_space<vmem>>, vector<32x4xbf16>
    tpu.vector_store %arg13[%c0_122, %c16_123], %64 {strides = array<i32>} : memref<32x36xbf16, #tpu.memory_space<vmem>>, vector<32x4xbf16>,
    %c0_124 = arith.constant 0 : index
    %c1_125 = arith.constant 1 : index
    %c2_126 = arith.constant 2 : index
    %c0_127 = arith.constant 0 : index
    %66 = vector.load %arg11[%c0_124, %c1_125, %c2_126, %c0_127] : memref<2x6x6x4xbf16, #tpu.memory_space<vmem>>, vector<2x4x4x4xbf16>
    %67 = vector.shape_cast %66 : vector<2x4x4x4xbf16> to vector<32x4xbf16>
    %c0_128 = arith.constant 0 : index
    %c20 = arith.constant 20 : index
    %68 = vector.load %arg13[%c0_128, %c20] : memref<32x36xbf16, #tpu.memory_space<vmem>>, vector<32x4xbf16>
    tpu.vector_store %arg13[%c0_128, %c20], %67 {strides = array<i32>} : memref<32x36xbf16, #tpu.memory_space<vmem>>, vector<32x4xbf16>,
    %c0_129 = arith.constant 0 : index
    %c2_130 = arith.constant 2 : index
    %c0_131 = arith.constant 0 : index
    %c0_132 = arith.constant 0 : index
    %69 = vector.load %arg11[%c0_129, %c2_130, %c0_131, %c0_132] : memref<2x6x6x4xbf16, #tpu.memory_space<vmem>>, vector<2x4x4x4xbf16>
    %70 = vector.shape_cast %69 : vector<2x4x4x4xbf16> to vector<32x4xbf16>
    %c0_133 = arith.constant 0 : index
    %c24_134 = arith.constant 24 : index
    %71 = vector.load %arg13[%c0_133, %c24_134] : memref<32x36xbf16, #tpu.memory_space<vmem>>, vector<32x4xbf16>
    tpu.vector_store %arg13[%c0_133, %c24_134], %70 {strides = array<i32>} : memref<32x36xbf16, #tpu.memory_space<vmem>>, vector<32x4xbf16>,
    %c0_135 = arith.constant 0 : index
    %c2_136 = arith.constant 2 : index
    %c1_137 = arith.constant 1 : index
    %c0_138 = arith.constant 0 : index
    %72 = vector.load %arg11[%c0_135, %c2_136, %c1_137, %c0_138] : memref<2x6x6x4xbf16, #tpu.memory_space<vmem>>, vector<2x4x4x4xbf16>
    %73 = vector.shape_cast %72 : vector<2x4x4x4xbf16> to vector<32x4xbf16>
    %c0_139 = arith.constant 0 : index
    %c28 = arith.constant 28 : index
    %74 = vector.load %arg13[%c0_139, %c28] : memref<32x36xbf16, #tpu.memory_space<vmem>>, vector<32x4xbf16>
    tpu.vector_store %arg13[%c0_139, %c28], %73 {strides = array<i32>} : memref<32x36xbf16, #tpu.memory_space<vmem>>, vector<32x4xbf16>,
    %c0_140 = arith.constant 0 : index
    %c2_141 = arith.constant 2 : index
    %c2_142 = arith.constant 2 : index
    %c0_143 = arith.constant 0 : index
    %75 = vector.load %arg11[%c0_140, %c2_141, %c2_142, %c0_143] : memref<2x6x6x4xbf16, #tpu.memory_space<vmem>>, vector<2x4x4x4xbf16>
    %76 = vector.shape_cast %75 : vector<2x4x4x4xbf16> to vector<32x4xbf16>
    %c0_144 = arith.constant 0 : index
    %c32_145 = arith.constant 32 : index
    %77 = vector.load %arg13[%c0_144, %c32_145] : memref<32x36xbf16, #tpu.memory_space<vmem>>, vector<32x4xbf16>
    tpu.vector_store %arg13[%c0_144, %c32_145], %76 {strides = array<i32>} : memref<32x36xbf16, #tpu.memory_space<vmem>>, vector<32x4xbf16>,
    %c0_146 = arith.constant 0 : index
    %c0_147 = arith.constant 0 : index
    %78 = vector.load %arg13[%c0_146, %c0_147] : memref<32x36xbf16, #tpu.memory_space<vmem>>, vector<32x36xbf16>
    %c0_148 = arith.constant 0 : index
    %c0_149 = arith.constant 0 : index
    %79 = vector.load %arg4[%c0_148, %c0_149] : memref<36x4xbf16, #tpu.memory_space<vmem>>, vector<36x4xbf16>
    %cst_150 = arith.constant dense<0.000000e+00> : vector<32x4xf32>
    %80 = tpu.matmul %78, %79, %cst_150 {dimension_numbers = #tpu.dot_dimension_numbers<[1], [0], [0], [1], [0, 0, 1, 1], [], []>} : vector<32x36xbf16>, vector<36x4xbf16>, vector<32x4xf32> -> vector<32x4xf32>
    %c0_151 = arith.constant 0 : index
    %c0_152 = arith.constant 0 : index
    %81 = vector.load %arg5[%c0_151, %c0_152] : memref<1x4xf32, #tpu.memory_space<vmem>>, vector<1x4xf32>
    %82 = vector.broadcast %81 : vector<1x4xf32> to vector<32x4xf32>
    %83 = arith.addf %80, %82 : vector<32x4xf32>
    %c0_153 = arith.constant 0 : index
    %c0_154 = arith.constant 0 : index
    %84 = vector.load %arg6[%c0_153, %c0_154] : memref<4x16xbf16, #tpu.memory_space<vmem>>, vector<4x16xbf16>
    %c0_155 = arith.constant 0 : index
    %c0_156 = arith.constant 0 : index
    %85 = vector.load %arg7[%c0_155, %c0_156] : memref<4x16xbf16, #tpu.memory_space<vmem>>, vector<4x16xbf16>
    %86 = vector.extract_strided_slice %83 {offsets = [0, 0], sizes = [16, 4], strides = [1, 1]} : vector<32x4xf32> to vector<16x4xf32>
    %87 = tpu.transpose %86, [1, 0] : vector<16x4xf32> -> vector<4x16xf32>
    %88 = vector.shape_cast %87 : vector<4x16xf32> to vector<4x4x4xf32>
    %89 = tpu.transpose %88, [0, 2, 1] : vector<4x4x4xf32> -> vector<4x4x4xf32>
    %90 = vector.shape_cast %89 : vector<4x4x4xf32> to vector<16x4xf32>
    %91 = arith.truncf %90 : vector<16x4xf32> to vector<16x4xbf16>
    %cst_157 = arith.constant dense<0.000000e+00> : vector<16x16xf32>
    %92 = tpu.matmul %91, %84, %cst_157 {dimension_numbers = #tpu.dot_dimension_numbers<[1], [0], [0], [1], [0, 0, 1, 1], [], []>} : vector<16x4xbf16>, vector<4x16xbf16>, vector<16x16xf32> -> vector<16x16xf32>
    %93 = vector.shape_cast %92 : vector<16x16xf32> to vector<4x4x16xf32>
    %94 = tpu.transpose %93, [0, 2, 1] : vector<4x4x16xf32> -> vector<4x16x4xf32>
    %95 = vector.shape_cast %94 : vector<4x16x4xf32> to vector<64x4xf32>
    %96 = arith.truncf %95 : vector<64x4xf32> to vector<64x4xbf16>
    %cst_158 = arith.constant dense<0.000000e+00> : vector<64x16xf32>
    %97 = tpu.matmul %96, %85, %cst_158 {dimension_numbers = #tpu.dot_dimension_numbers<[1], [0], [0], [1], [0, 0, 1, 1], [], []>} : vector<64x4xbf16>, vector<4x16xbf16>, vector<64x16xf32> -> vector<64x16xf32>
    %98 = vector.shape_cast %97 : vector<64x16xf32> to vector<4x16x16xf32>
    %c0_159 = arith.constant 0 : index
    %c0_160 = arith.constant 0 : index
    %c0_161 = arith.constant 0 : index
    %c0_162 = arith.constant 0 : index
    %99 = vector.load %arg9[%c0_159, %c0_160, %c0_161, %c0_162] : memref<2x4x16x16xf32, #tpu.memory_space<vmem>>, vector<1x4x16x16xf32>
    %100 = vector.shape_cast %99 : vector<1x4x16x16xf32> to vector<4x16x16xf32>
    %101 = vector.shape_cast %98 : vector<4x16x16xf32> to vector<1x4x16x16xf32>
    tpu.vector_store %arg9[%c0_159, %c0_160, %c0_161, %c0_162], %101 {strides = array<i32>} : memref<2x4x16x16xf32, #tpu.memory_space<vmem>>, vector<1x4x16x16xf32>,
    %102 = vector.extract_strided_slice %83 {offsets = [16, 0], sizes = [16, 4], strides = [1, 1]} : vector<32x4xf32> to vector<16x4xf32>
    %103 = tpu.transpose %102, [1, 0] : vector<16x4xf32> -> vector<4x16xf32>
    %104 = vector.shape_cast %103 : vector<4x16xf32> to vector<4x4x4xf32>
    %105 = tpu.transpose %104, [0, 2, 1] : vector<4x4x4xf32> -> vector<4x4x4xf32>
    %106 = vector.shape_cast %105 : vector<4x4x4xf32> to vector<16x4xf32>
    %107 = arith.truncf %106 : vector<16x4xf32> to vector<16x4xbf16>
    %cst_163 = arith.constant dense<0.000000e+00> : vector<16x16xf32>
    %108 = tpu.matmul %107, %84, %cst_163 {dimension_numbers = #tpu.dot_dimension_numbers<[1], [0], [0], [1], [0, 0, 1, 1], [], []>} : vector<16x4xbf16>, vector<4x16xbf16>, vector<16x16xf32> -> vector<16x16xf32>
    %109 = vector.shape_cast %108 : vector<16x16xf32> to vector<4x4x16xf32>
    %110 = tpu.transpose %109, [0, 2, 1] : vector<4x4x16xf32> -> vector<4x16x4xf32>
    %111 = vector.shape_cast %110 : vector<4x16x4xf32> to vector<64x4xf32>
    %112 = arith.truncf %111 : vector<64x4xf32> to vector<64x4xbf16>
    %cst_164 = arith.constant dense<0.000000e+00> : vector<64x16xf32>
    %113 = tpu.matmul %112, %85, %cst_164 {dimension_numbers = #tpu.dot_dimension_numbers<[1], [0], [0], [1], [0, 0, 1, 1], [], []>} : vector<64x4xbf16>, vector<4x16xbf16>, vector<64x16xf32> -> vector<64x16xf32>
    %114 = vector.shape_cast %113 : vector<64x16xf32> to vector<4x16x16xf32>
    %c1_165 = arith.constant 1 : index
    %c0_166 = arith.constant 0 : index
    %c0_167 = arith.constant 0 : index
    %c0_168 = arith.constant 0 : index
    %115 = vector.load %arg9[%c1_165, %c0_166, %c0_167, %c0_168] : memref<2x4x16x16xf32, #tpu.memory_space<vmem>>, vector<1x4x16x16xf32>
    %116 = vector.shape_cast %115 : vector<1x4x16x16xf32> to vector<4x16x16xf32>
    %117 = vector.shape_cast %114 : vector<4x16x16xf32> to vector<1x4x16x16xf32>
    tpu.vector_store %arg9[%c1_165, %c0_166, %c0_167, %c0_168], %117 {strides = array<i32>} : memref<2x4x16x16xf32, #tpu.memory_space<vmem>>, vector<1x4x16x16xf32>,
    return
  }
  func.func @transform_0(%arg0: i32) -> (i32, i32, i32, i32) {
    %c0_i32 = arith.constant 0 : i32
    %c0_i32_0 = arith.constant 0 : i32
    %c0_i32_1 = arith.constant 0 : i32
    %c0_i32_2 = arith.constant 0 : i32
    return %arg0, %c0_i32, %c0_i32_0, %c0_i32_1 : i32, i32, i32, i32
  }
  func.func @transform_1(%arg0: i32) -> (i32, i32) {
    %c0_i32 = arith.constant 0 : i32
    %c0_i32_0 = arith.constant 0 : i32
    %c0_i32_1 = arith.constant 0 : i32
    return %c0_i32, %c0_i32_0 : i32, i32
  }
  func.func @transform_2(%arg0: i32) -> (i32, i32) {
    %c0_i32 = arith.constant 0 : i32
    %c0_i32_0 = arith.constant 0 : i32
    %c0_i32_1 = arith.constant 0 : i32
    return %c0_i32, %c0_i32_0 : i32, i32
  }
  func.func @transform_3(%arg0: i32) -> (i32, i32) {
    %c0_i32 = arith.constant 0 : i32
    %c0_i32_0 = arith.constant 0 : i32
    %c0_i32_1 = arith.constant 0 : i32
    return %c0_i32, %c0_i32_0 : i32, i32
  }
  func.func @transform_4(%arg0: i32) -> (i32, i32) {
    %c0_i32 = arith.constant 0 : i32
    %c0_i32_0 = arith.constant 0 : i32
    %c0_i32_1 = arith.constant 0 : i32
    return %c0_i32, %c0_i32_0 : i32, i32
  }
  func.func @transform_5(%arg0: i32) -> (i32, i32) {
    %c0_i32 = arith.constant 0 : i32
    %c0_i32_0 = arith.constant 0 : i32
    %c0_i32_1 = arith.constant 0 : i32
    return %c0_i32, %c0_i32_0 : i32, i32
  }
  func.func @transform_6(%arg0: i32) -> (i32, i32) {
    %c0_i32 = arith.constant 0 : i32
    %c0_i32_0 = arith.constant 0 : i32
    %c0_i32_1 = arith.constant 0 : i32
    return %c0_i32, %c0_i32_0 : i32, i32
  }
  func.func @transform_8(%arg0: i32) -> (i32, i32, i32, i32) {
    %c0_i32 = arith.constant 0 : i32
    %c0_i32_0 = arith.constant 0 : i32
    %c0_i32_1 = arith.constant 0 : i32
    %c0_i32_2 = arith.constant 0 : i32
    return %arg0, %c0_i32, %c0_i32_0, %c0_i32_1 : i32, i32, i32, i32
  }
}

module attributes {stable_mosaic.version = 11 : i64} {
  func.func @_hcol_hook_kernel(%arg0: i32, %arg1: memref<2x8x8x6xf32, #tpu.memory_space<vmem>>, %arg2: memref<54x4xbf16, #tpu.memory_space<vmem>>, %arg3: memref<1x4xf32, #tpu.memory_space<vmem>>, %arg4: memref<36x4xbf16, #tpu.memory_space<vmem>>, %arg5: memref<1x4xf32, #tpu.memory_space<vmem>>, %arg6: memref<8x16xbf16, #tpu.memory_space<vmem>>, %arg7: memref<8x16xbf16, #tpu.memory_space<vmem>>, %arg8: memref<2x12x16x16xf32, #tpu.memory_space<any>>, %arg9: memref<2x4x16x16xf32, #tpu.memory_space<vmem>>, %arg10: memref<2x10x10x6xbf16, #tpu.memory_space<vmem>>, %arg11: memref<2x10x10x4xbf16, #tpu.memory_space<vmem>>, %arg12: memref<128x54xbf16, #tpu.memory_space<vmem>>, %arg13: memref<128x36xbf16, #tpu.memory_space<vmem>>) attributes {dimension_semantics = [#tpu.dimension_semantics<parallel>], iteration_bounds = array<i64: 1>, scalar_prefetch = 0 : i64, scratch_operands = 4 : i64, tpu.core_type = #tpu.core_type<tc>, window_params = [{transform_indices = @transform_0, window_bounds = array<i64: 2, 8, 8, 6>}, {pipeline_mode = #tpu.pipeline_mode<synchronous>, transform_indices = @transform_1, window_bounds = array<i64: 54, 4>}, {pipeline_mode = #tpu.pipeline_mode<synchronous>, transform_indices = @transform_2, window_bounds = array<i64: 1, 4>}, {pipeline_mode = #tpu.pipeline_mode<synchronous>, transform_indices = @transform_3, window_bounds = array<i64: 36, 4>}, {pipeline_mode = #tpu.pipeline_mode<synchronous>, transform_indices = @transform_4, window_bounds = array<i64: 1, 4>}, {pipeline_mode = #tpu.pipeline_mode<synchronous>, transform_indices = @transform_5, window_bounds = array<i64: 8, 16>}, {pipeline_mode = #tpu.pipeline_mode<synchronous>, transform_indices = @transform_6, window_bounds = array<i64: 8, 16>}, {}, {transform_indices = @transform_8, window_bounds = array<i64: 2, 4, 16, 16>}]} {
    %c0 = arith.constant 0 : index
    %c0_0 = arith.constant 0 : index
    %c0_1 = arith.constant 0 : index
    %c0_2 = arith.constant 0 : index
    %0 = vector.load %arg1[%c0, %c0_0, %c0_1, %c0_2] : memref<2x8x8x6xf32, #tpu.memory_space<vmem>>, vector<2x8x8x6xf32>
    %1 = arith.truncf %0 : vector<2x8x8x6xf32> to vector<2x8x8x6xbf16>
    %cst = arith.constant 0.000000e+00 : bf16
    %2 = vector.broadcast %cst : bf16 to vector<2x10x1x6xbf16>
    %cst_3 = arith.constant 0.000000e+00 : bf16
    %3 = vector.broadcast %cst_3 : bf16 to vector<2x1x10x6xbf16>
    %c0_4 = arith.constant 0 : index
    %c0_5 = arith.constant 0 : index
    %c0_6 = arith.constant 0 : index
    %c0_7 = arith.constant 0 : index
    %4 = vector.load %arg10[%c0_4, %c0_5, %c0_6, %c0_7] : memref<2x10x10x6xbf16, #tpu.memory_space<vmem>>, vector<2x10x1x6xbf16>
    tpu.vector_store %arg10[%c0_4, %c0_5, %c0_6, %c0_7], %2 {strides = array<i32>} : memref<2x10x10x6xbf16, #tpu.memory_space<vmem>>, vector<2x10x1x6xbf16>,
    %c0_8 = arith.constant 0 : index
    %c0_9 = arith.constant 0 : index
    %c9 = arith.constant 9 : index
    %c0_10 = arith.constant 0 : index
    %5 = vector.load %arg10[%c0_8, %c0_9, %c9, %c0_10] : memref<2x10x10x6xbf16, #tpu.memory_space<vmem>>, vector<2x10x1x6xbf16>
    tpu.vector_store %arg10[%c0_8, %c0_9, %c9, %c0_10], %2 {strides = array<i32>} : memref<2x10x10x6xbf16, #tpu.memory_space<vmem>>, vector<2x10x1x6xbf16>,
    %c0_11 = arith.constant 0 : index
    %c0_12 = arith.constant 0 : index
    %c0_13 = arith.constant 0 : index
    %c0_14 = arith.constant 0 : index
    %6 = vector.load %arg10[%c0_11, %c0_12, %c0_13, %c0_14] : memref<2x10x10x6xbf16, #tpu.memory_space<vmem>>, vector<2x1x10x6xbf16>
    tpu.vector_store %arg10[%c0_11, %c0_12, %c0_13, %c0_14], %3 {strides = array<i32>} : memref<2x10x10x6xbf16, #tpu.memory_space<vmem>>, vector<2x1x10x6xbf16>,
    %c0_15 = arith.constant 0 : index
    %c9_16 = arith.constant 9 : index
    %c0_17 = arith.constant 0 : index
    %c0_18 = arith.constant 0 : index
    %7 = vector.load %arg10[%c0_15, %c9_16, %c0_17, %c0_18] : memref<2x10x10x6xbf16, #tpu.memory_space<vmem>>, vector<2x1x10x6xbf16>
    tpu.vector_store %arg10[%c0_15, %c9_16, %c0_17, %c0_18], %3 {strides = array<i32>} : memref<2x10x10x6xbf16, #tpu.memory_space<vmem>>, vector<2x1x10x6xbf16>,
    %c0_19 = arith.constant 0 : index
    %c1 = arith.constant 1 : index
    %c1_20 = arith.constant 1 : index
    %c0_21 = arith.constant 0 : index
    %8 = vector.load %arg10[%c0_19, %c1, %c1_20, %c0_21] : memref<2x10x10x6xbf16, #tpu.memory_space<vmem>>, vector<2x8x8x6xbf16>
    tpu.vector_store %arg10[%c0_19, %c1, %c1_20, %c0_21], %1 {strides = array<i32>} : memref<2x10x10x6xbf16, #tpu.memory_space<vmem>>, vector<2x8x8x6xbf16>,
    %c0_22 = arith.constant 0 : index
    %c0_23 = arith.constant 0 : index
    %c0_24 = arith.constant 0 : index
    %c0_25 = arith.constant 0 : index
    %9 = vector.load %arg10[%c0_22, %c0_23, %c0_24, %c0_25] : memref<2x10x10x6xbf16, #tpu.memory_space<vmem>>, vector<2x8x8x6xbf16>
    %10 = vector.shape_cast %9 : vector<2x8x8x6xbf16> to vector<128x6xbf16>
    %c0_26 = arith.constant 0 : index
    %c0_27 = arith.constant 0 : index
    %11 = vector.load %arg12[%c0_26, %c0_27] : memref<128x54xbf16, #tpu.memory_space<vmem>>, vector<128x6xbf16>
    tpu.vector_store %arg12[%c0_26, %c0_27], %10 {strides = array<i32>} : memref<128x54xbf16, #tpu.memory_space<vmem>>, vector<128x6xbf16>,
    %c0_28 = arith.constant 0 : index
    %c0_29 = arith.constant 0 : index
    %c1_30 = arith.constant 1 : index
    %c0_31 = arith.constant 0 : index
    %12 = vector.load %arg10[%c0_28, %c0_29, %c1_30, %c0_31] : memref<2x10x10x6xbf16, #tpu.memory_space<vmem>>, vector<2x8x8x6xbf16>
    %13 = vector.shape_cast %12 : vector<2x8x8x6xbf16> to vector<128x6xbf16>
    %c0_32 = arith.constant 0 : index
    %c6 = arith.constant 6 : index
    %14 = vector.load %arg12[%c0_32, %c6] : memref<128x54xbf16, #tpu.memory_space<vmem>>, vector<128x6xbf16>
    tpu.vector_store %arg12[%c0_32, %c6], %13 {strides = array<i32>} : memref<128x54xbf16, #tpu.memory_space<vmem>>, vector<128x6xbf16>,
    %c0_33 = arith.constant 0 : index
    %c0_34 = arith.constant 0 : index
    %c2 = arith.constant 2 : index
    %c0_35 = arith.constant 0 : index
    %15 = vector.load %arg10[%c0_33, %c0_34, %c2, %c0_35] : memref<2x10x10x6xbf16, #tpu.memory_space<vmem>>, vector<2x8x8x6xbf16>
    %16 = vector.shape_cast %15 : vector<2x8x8x6xbf16> to vector<128x6xbf16>
    %c0_36 = arith.constant 0 : index
    %c12 = arith.constant 12 : index
    %17 = vector.load %arg12[%c0_36, %c12] : memref<128x54xbf16, #tpu.memory_space<vmem>>, vector<128x6xbf16>
    tpu.vector_store %arg12[%c0_36, %c12], %16 {strides = array<i32>} : memref<128x54xbf16, #tpu.memory_space<vmem>>, vector<128x6xbf16>,
    %c0_37 = arith.constant 0 : index
    %c1_38 = arith.constant 1 : index
    %c0_39 = arith.constant 0 : index
    %c0_40 = arith.constant 0 : index
    %18 = vector.load %arg10[%c0_37, %c1_38, %c0_39, %c0_40] : memref<2x10x10x6xbf16, #tpu.memory_space<vmem>>, vector<2x8x8x6xbf16>
    %19 = vector.shape_cast %18 : vector<2x8x8x6xbf16> to vector<128x6xbf16>
    %c0_41 = arith.constant 0 : index
    %c18 = arith.constant 18 : index
    %20 = vector.load %arg12[%c0_41, %c18] : memref<128x54xbf16, #tpu.memory_space<vmem>>, vector<128x6xbf16>
    tpu.vector_store %arg12[%c0_41, %c18], %19 {strides = array<i32>} : memref<128x54xbf16, #tpu.memory_space<vmem>>, vector<128x6xbf16>,
    %c0_42 = arith.constant 0 : index
    %c1_43 = arith.constant 1 : index
    %c1_44 = arith.constant 1 : index
    %c0_45 = arith.constant 0 : index
    %21 = vector.load %arg10[%c0_42, %c1_43, %c1_44, %c0_45] : memref<2x10x10x6xbf16, #tpu.memory_space<vmem>>, vector<2x8x8x6xbf16>
    %22 = vector.shape_cast %21 : vector<2x8x8x6xbf16> to vector<128x6xbf16>
    %c0_46 = arith.constant 0 : index
    %c24 = arith.constant 24 : index
    %23 = vector.load %arg12[%c0_46, %c24] : memref<128x54xbf16, #tpu.memory_space<vmem>>, vector<128x6xbf16>
    tpu.vector_store %arg12[%c0_46, %c24], %22 {strides = array<i32>} : memref<128x54xbf16, #tpu.memory_space<vmem>>, vector<128x6xbf16>,
    %c0_47 = arith.constant 0 : index
    %c1_48 = arith.constant 1 : index
    %c2_49 = arith.constant 2 : index
    %c0_50 = arith.constant 0 : index
    %24 = vector.load %arg10[%c0_47, %c1_48, %c2_49, %c0_50] : memref<2x10x10x6xbf16, #tpu.memory_space<vmem>>, vector<2x8x8x6xbf16>
    %25 = vector.shape_cast %24 : vector<2x8x8x6xbf16> to vector<128x6xbf16>
    %c0_51 = arith.constant 0 : index
    %c30 = arith.constant 30 : index
    %26 = vector.load %arg12[%c0_51, %c30] : memref<128x54xbf16, #tpu.memory_space<vmem>>, vector<128x6xbf16>
    tpu.vector_store %arg12[%c0_51, %c30], %25 {strides = array<i32>} : memref<128x54xbf16, #tpu.memory_space<vmem>>, vector<128x6xbf16>,
    %c0_52 = arith.constant 0 : index
    %c2_53 = arith.constant 2 : index
    %c0_54 = arith.constant 0 : index
    %c0_55 = arith.constant 0 : index
    %27 = vector.load %arg10[%c0_52, %c2_53, %c0_54, %c0_55] : memref<2x10x10x6xbf16, #tpu.memory_space<vmem>>, vector<2x8x8x6xbf16>
    %28 = vector.shape_cast %27 : vector<2x8x8x6xbf16> to vector<128x6xbf16>
    %c0_56 = arith.constant 0 : index
    %c36 = arith.constant 36 : index
    %29 = vector.load %arg12[%c0_56, %c36] : memref<128x54xbf16, #tpu.memory_space<vmem>>, vector<128x6xbf16>
    tpu.vector_store %arg12[%c0_56, %c36], %28 {strides = array<i32>} : memref<128x54xbf16, #tpu.memory_space<vmem>>, vector<128x6xbf16>,
    %c0_57 = arith.constant 0 : index
    %c2_58 = arith.constant 2 : index
    %c1_59 = arith.constant 1 : index
    %c0_60 = arith.constant 0 : index
    %30 = vector.load %arg10[%c0_57, %c2_58, %c1_59, %c0_60] : memref<2x10x10x6xbf16, #tpu.memory_space<vmem>>, vector<2x8x8x6xbf16>
    %31 = vector.shape_cast %30 : vector<2x8x8x6xbf16> to vector<128x6xbf16>
    %c0_61 = arith.constant 0 : index
    %c42 = arith.constant 42 : index
    %32 = vector.load %arg12[%c0_61, %c42] : memref<128x54xbf16, #tpu.memory_space<vmem>>, vector<128x6xbf16>
    tpu.vector_store %arg12[%c0_61, %c42], %31 {strides = array<i32>} : memref<128x54xbf16, #tpu.memory_space<vmem>>, vector<128x6xbf16>,
    %c0_62 = arith.constant 0 : index
    %c2_63 = arith.constant 2 : index
    %c2_64 = arith.constant 2 : index
    %c0_65 = arith.constant 0 : index
    %33 = vector.load %arg10[%c0_62, %c2_63, %c2_64, %c0_65] : memref<2x10x10x6xbf16, #tpu.memory_space<vmem>>, vector<2x8x8x6xbf16>
    %34 = vector.shape_cast %33 : vector<2x8x8x6xbf16> to vector<128x6xbf16>
    %c0_66 = arith.constant 0 : index
    %c48 = arith.constant 48 : index
    %35 = vector.load %arg12[%c0_66, %c48] : memref<128x54xbf16, #tpu.memory_space<vmem>>, vector<128x6xbf16>
    tpu.vector_store %arg12[%c0_66, %c48], %34 {strides = array<i32>} : memref<128x54xbf16, #tpu.memory_space<vmem>>, vector<128x6xbf16>,
    %c0_67 = arith.constant 0 : index
    %c0_68 = arith.constant 0 : index
    %36 = vector.load %arg12[%c0_67, %c0_68] : memref<128x54xbf16, #tpu.memory_space<vmem>>, vector<128x54xbf16>
    %c0_69 = arith.constant 0 : index
    %c0_70 = arith.constant 0 : index
    %37 = vector.load %arg2[%c0_69, %c0_70] : memref<54x4xbf16, #tpu.memory_space<vmem>>, vector<54x4xbf16>
    %cst_71 = arith.constant dense<0.000000e+00> : vector<128x4xf32>
    %38 = tpu.matmul %36, %37, %cst_71 {dimension_numbers = #tpu.dot_dimension_numbers<[1], [0], [0], [1], [0, 0, 1, 1], [], []>} : vector<128x54xbf16>, vector<54x4xbf16>, vector<128x4xf32> -> vector<128x4xf32>
    %c0_72 = arith.constant 0 : index
    %c0_73 = arith.constant 0 : index
    %39 = vector.load %arg3[%c0_72, %c0_73] : memref<1x4xf32, #tpu.memory_space<vmem>>, vector<1x4xf32>
    %40 = vector.broadcast %39 : vector<1x4xf32> to vector<128x4xf32>
    %41 = arith.addf %38, %40 : vector<128x4xf32>
    %42 = vector.shape_cast %41 : vector<128x4xf32> to vector<2x8x8x4xf32>
    %43 = arith.truncf %42 : vector<2x8x8x4xf32> to vector<2x8x8x4xbf16>
    %cst_74 = arith.constant 0.000000e+00 : bf16
    %44 = vector.broadcast %cst_74 : bf16 to vector<2x10x1x4xbf16>
    %cst_75 = arith.constant 0.000000e+00 : bf16
    %45 = vector.broadcast %cst_75 : bf16 to vector<2x1x10x4xbf16>
    %c0_76 = arith.constant 0 : index
    %c0_77 = arith.constant 0 : index
    %c0_78 = arith.constant 0 : index
    %c0_79 = arith.constant 0 : index
    %46 = vector.load %arg11[%c0_76, %c0_77, %c0_78, %c0_79] : memref<2x10x10x4xbf16, #tpu.memory_space<vmem>>, vector<2x10x1x4xbf16>
    tpu.vector_store %arg11[%c0_76, %c0_77, %c0_78, %c0_79], %44 {strides = array<i32>} : memref<2x10x10x4xbf16, #tpu.memory_space<vmem>>, vector<2x10x1x4xbf16>,
    %c0_80 = arith.constant 0 : index
    %c0_81 = arith.constant 0 : index
    %c9_82 = arith.constant 9 : index
    %c0_83 = arith.constant 0 : index
    %47 = vector.load %arg11[%c0_80, %c0_81, %c9_82, %c0_83] : memref<2x10x10x4xbf16, #tpu.memory_space<vmem>>, vector<2x10x1x4xbf16>
    tpu.vector_store %arg11[%c0_80, %c0_81, %c9_82, %c0_83], %44 {strides = array<i32>} : memref<2x10x10x4xbf16, #tpu.memory_space<vmem>>, vector<2x10x1x4xbf16>,
    %c0_84 = arith.constant 0 : index
    %c0_85 = arith.constant 0 : index
    %c0_86 = arith.constant 0 : index
    %c0_87 = arith.constant 0 : index
    %48 = vector.load %arg11[%c0_84, %c0_85, %c0_86, %c0_87] : memref<2x10x10x4xbf16, #tpu.memory_space<vmem>>, vector<2x1x10x4xbf16>
    tpu.vector_store %arg11[%c0_84, %c0_85, %c0_86, %c0_87], %45 {strides = array<i32>} : memref<2x10x10x4xbf16, #tpu.memory_space<vmem>>, vector<2x1x10x4xbf16>,
    %c0_88 = arith.constant 0 : index
    %c9_89 = arith.constant 9 : index
    %c0_90 = arith.constant 0 : index
    %c0_91 = arith.constant 0 : index
    %49 = vector.load %arg11[%c0_88, %c9_89, %c0_90, %c0_91] : memref<2x10x10x4xbf16, #tpu.memory_space<vmem>>, vector<2x1x10x4xbf16>
    tpu.vector_store %arg11[%c0_88, %c9_89, %c0_90, %c0_91], %45 {strides = array<i32>} : memref<2x10x10x4xbf16, #tpu.memory_space<vmem>>, vector<2x1x10x4xbf16>,
    %c0_92 = arith.constant 0 : index
    %c1_93 = arith.constant 1 : index
    %c1_94 = arith.constant 1 : index
    %c0_95 = arith.constant 0 : index
    %50 = vector.load %arg11[%c0_92, %c1_93, %c1_94, %c0_95] : memref<2x10x10x4xbf16, #tpu.memory_space<vmem>>, vector<2x8x8x4xbf16>
    tpu.vector_store %arg11[%c0_92, %c1_93, %c1_94, %c0_95], %43 {strides = array<i32>} : memref<2x10x10x4xbf16, #tpu.memory_space<vmem>>, vector<2x8x8x4xbf16>,
    %c0_96 = arith.constant 0 : index
    %c0_97 = arith.constant 0 : index
    %c0_98 = arith.constant 0 : index
    %c0_99 = arith.constant 0 : index
    %51 = vector.load %arg11[%c0_96, %c0_97, %c0_98, %c0_99] : memref<2x10x10x4xbf16, #tpu.memory_space<vmem>>, vector<2x8x8x4xbf16>
    %52 = vector.shape_cast %51 : vector<2x8x8x4xbf16> to vector<128x4xbf16>
    %c0_100 = arith.constant 0 : index
    %c0_101 = arith.constant 0 : index
    %53 = vector.load %arg13[%c0_100, %c0_101] : memref<128x36xbf16, #tpu.memory_space<vmem>>, vector<128x4xbf16>
    tpu.vector_store %arg13[%c0_100, %c0_101], %52 {strides = array<i32>} : memref<128x36xbf16, #tpu.memory_space<vmem>>, vector<128x4xbf16>,
    %c0_102 = arith.constant 0 : index
    %c0_103 = arith.constant 0 : index
    %c1_104 = arith.constant 1 : index
    %c0_105 = arith.constant 0 : index
    %54 = vector.load %arg11[%c0_102, %c0_103, %c1_104, %c0_105] : memref<2x10x10x4xbf16, #tpu.memory_space<vmem>>, vector<2x8x8x4xbf16>
    %55 = vector.shape_cast %54 : vector<2x8x8x4xbf16> to vector<128x4xbf16>
    %c0_106 = arith.constant 0 : index
    %c4 = arith.constant 4 : index
    %56 = vector.load %arg13[%c0_106, %c4] : memref<128x36xbf16, #tpu.memory_space<vmem>>, vector<128x4xbf16>
    tpu.vector_store %arg13[%c0_106, %c4], %55 {strides = array<i32>} : memref<128x36xbf16, #tpu.memory_space<vmem>>, vector<128x4xbf16>,
    %c0_107 = arith.constant 0 : index
    %c0_108 = arith.constant 0 : index
    %c2_109 = arith.constant 2 : index
    %c0_110 = arith.constant 0 : index
    %57 = vector.load %arg11[%c0_107, %c0_108, %c2_109, %c0_110] : memref<2x10x10x4xbf16, #tpu.memory_space<vmem>>, vector<2x8x8x4xbf16>
    %58 = vector.shape_cast %57 : vector<2x8x8x4xbf16> to vector<128x4xbf16>
    %c0_111 = arith.constant 0 : index
    %c8 = arith.constant 8 : index
    %59 = vector.load %arg13[%c0_111, %c8] : memref<128x36xbf16, #tpu.memory_space<vmem>>, vector<128x4xbf16>
    tpu.vector_store %arg13[%c0_111, %c8], %58 {strides = array<i32>} : memref<128x36xbf16, #tpu.memory_space<vmem>>, vector<128x4xbf16>,
    %c0_112 = arith.constant 0 : index
    %c1_113 = arith.constant 1 : index
    %c0_114 = arith.constant 0 : index
    %c0_115 = arith.constant 0 : index
    %60 = vector.load %arg11[%c0_112, %c1_113, %c0_114, %c0_115] : memref<2x10x10x4xbf16, #tpu.memory_space<vmem>>, vector<2x8x8x4xbf16>
    %61 = vector.shape_cast %60 : vector<2x8x8x4xbf16> to vector<128x4xbf16>
    %c0_116 = arith.constant 0 : index
    %c12_117 = arith.constant 12 : index
    %62 = vector.load %arg13[%c0_116, %c12_117] : memref<128x36xbf16, #tpu.memory_space<vmem>>, vector<128x4xbf16>
    tpu.vector_store %arg13[%c0_116, %c12_117], %61 {strides = array<i32>} : memref<128x36xbf16, #tpu.memory_space<vmem>>, vector<128x4xbf16>,
    %c0_118 = arith.constant 0 : index
    %c1_119 = arith.constant 1 : index
    %c1_120 = arith.constant 1 : index
    %c0_121 = arith.constant 0 : index
    %63 = vector.load %arg11[%c0_118, %c1_119, %c1_120, %c0_121] : memref<2x10x10x4xbf16, #tpu.memory_space<vmem>>, vector<2x8x8x4xbf16>
    %64 = vector.shape_cast %63 : vector<2x8x8x4xbf16> to vector<128x4xbf16>
    %c0_122 = arith.constant 0 : index
    %c16 = arith.constant 16 : index
    %65 = vector.load %arg13[%c0_122, %c16] : memref<128x36xbf16, #tpu.memory_space<vmem>>, vector<128x4xbf16>
    tpu.vector_store %arg13[%c0_122, %c16], %64 {strides = array<i32>} : memref<128x36xbf16, #tpu.memory_space<vmem>>, vector<128x4xbf16>,
    %c0_123 = arith.constant 0 : index
    %c1_124 = arith.constant 1 : index
    %c2_125 = arith.constant 2 : index
    %c0_126 = arith.constant 0 : index
    %66 = vector.load %arg11[%c0_123, %c1_124, %c2_125, %c0_126] : memref<2x10x10x4xbf16, #tpu.memory_space<vmem>>, vector<2x8x8x4xbf16>
    %67 = vector.shape_cast %66 : vector<2x8x8x4xbf16> to vector<128x4xbf16>
    %c0_127 = arith.constant 0 : index
    %c20 = arith.constant 20 : index
    %68 = vector.load %arg13[%c0_127, %c20] : memref<128x36xbf16, #tpu.memory_space<vmem>>, vector<128x4xbf16>
    tpu.vector_store %arg13[%c0_127, %c20], %67 {strides = array<i32>} : memref<128x36xbf16, #tpu.memory_space<vmem>>, vector<128x4xbf16>,
    %c0_128 = arith.constant 0 : index
    %c2_129 = arith.constant 2 : index
    %c0_130 = arith.constant 0 : index
    %c0_131 = arith.constant 0 : index
    %69 = vector.load %arg11[%c0_128, %c2_129, %c0_130, %c0_131] : memref<2x10x10x4xbf16, #tpu.memory_space<vmem>>, vector<2x8x8x4xbf16>
    %70 = vector.shape_cast %69 : vector<2x8x8x4xbf16> to vector<128x4xbf16>
    %c0_132 = arith.constant 0 : index
    %c24_133 = arith.constant 24 : index
    %71 = vector.load %arg13[%c0_132, %c24_133] : memref<128x36xbf16, #tpu.memory_space<vmem>>, vector<128x4xbf16>
    tpu.vector_store %arg13[%c0_132, %c24_133], %70 {strides = array<i32>} : memref<128x36xbf16, #tpu.memory_space<vmem>>, vector<128x4xbf16>,
    %c0_134 = arith.constant 0 : index
    %c2_135 = arith.constant 2 : index
    %c1_136 = arith.constant 1 : index
    %c0_137 = arith.constant 0 : index
    %72 = vector.load %arg11[%c0_134, %c2_135, %c1_136, %c0_137] : memref<2x10x10x4xbf16, #tpu.memory_space<vmem>>, vector<2x8x8x4xbf16>
    %73 = vector.shape_cast %72 : vector<2x8x8x4xbf16> to vector<128x4xbf16>
    %c0_138 = arith.constant 0 : index
    %c28 = arith.constant 28 : index
    %74 = vector.load %arg13[%c0_138, %c28] : memref<128x36xbf16, #tpu.memory_space<vmem>>, vector<128x4xbf16>
    tpu.vector_store %arg13[%c0_138, %c28], %73 {strides = array<i32>} : memref<128x36xbf16, #tpu.memory_space<vmem>>, vector<128x4xbf16>,
    %c0_139 = arith.constant 0 : index
    %c2_140 = arith.constant 2 : index
    %c2_141 = arith.constant 2 : index
    %c0_142 = arith.constant 0 : index
    %75 = vector.load %arg11[%c0_139, %c2_140, %c2_141, %c0_142] : memref<2x10x10x4xbf16, #tpu.memory_space<vmem>>, vector<2x8x8x4xbf16>
    %76 = vector.shape_cast %75 : vector<2x8x8x4xbf16> to vector<128x4xbf16>
    %c0_143 = arith.constant 0 : index
    %c32 = arith.constant 32 : index
    %77 = vector.load %arg13[%c0_143, %c32] : memref<128x36xbf16, #tpu.memory_space<vmem>>, vector<128x4xbf16>
    tpu.vector_store %arg13[%c0_143, %c32], %76 {strides = array<i32>} : memref<128x36xbf16, #tpu.memory_space<vmem>>, vector<128x4xbf16>,
    %c0_144 = arith.constant 0 : index
    %c0_145 = arith.constant 0 : index
    %78 = vector.load %arg13[%c0_144, %c0_145] : memref<128x36xbf16, #tpu.memory_space<vmem>>, vector<128x36xbf16>
    %c0_146 = arith.constant 0 : index
    %c0_147 = arith.constant 0 : index
    %79 = vector.load %arg4[%c0_146, %c0_147] : memref<36x4xbf16, #tpu.memory_space<vmem>>, vector<36x4xbf16>
    %cst_148 = arith.constant dense<0.000000e+00> : vector<128x4xf32>
    %80 = tpu.matmul %78, %79, %cst_148 {dimension_numbers = #tpu.dot_dimension_numbers<[1], [0], [0], [1], [0, 0, 1, 1], [], []>} : vector<128x36xbf16>, vector<36x4xbf16>, vector<128x4xf32> -> vector<128x4xf32>
    %c0_149 = arith.constant 0 : index
    %c0_150 = arith.constant 0 : index
    %81 = vector.load %arg5[%c0_149, %c0_150] : memref<1x4xf32, #tpu.memory_space<vmem>>, vector<1x4xf32>
    %82 = vector.broadcast %81 : vector<1x4xf32> to vector<128x4xf32>
    %83 = arith.addf %80, %82 : vector<128x4xf32>
    %c0_151 = arith.constant 0 : index
    %c0_152 = arith.constant 0 : index
    %84 = vector.load %arg6[%c0_151, %c0_152] : memref<8x16xbf16, #tpu.memory_space<vmem>>, vector<8x16xbf16>
    %c0_153 = arith.constant 0 : index
    %c0_154 = arith.constant 0 : index
    %85 = vector.load %arg7[%c0_153, %c0_154] : memref<8x16xbf16, #tpu.memory_space<vmem>>, vector<8x16xbf16>
    %86 = vector.extract_strided_slice %83 {offsets = [0, 0], sizes = [64, 4], strides = [1, 1]} : vector<128x4xf32> to vector<64x4xf32>
    %87 = tpu.transpose %86, [1, 0] : vector<64x4xf32> -> vector<4x64xf32>
    %88 = vector.shape_cast %87 : vector<4x64xf32> to vector<4x8x8xf32>
    %89 = tpu.transpose %88, [0, 2, 1] : vector<4x8x8xf32> -> vector<4x8x8xf32>
    %90 = vector.shape_cast %89 : vector<4x8x8xf32> to vector<32x8xf32>
    %91 = arith.truncf %90 : vector<32x8xf32> to vector<32x8xbf16>
    %cst_155 = arith.constant dense<0.000000e+00> : vector<32x16xf32>
    %92 = tpu.matmul %91, %84, %cst_155 {dimension_numbers = #tpu.dot_dimension_numbers<[1], [0], [0], [1], [0, 0, 1, 1], [], []>} : vector<32x8xbf16>, vector<8x16xbf16>, vector<32x16xf32> -> vector<32x16xf32>
    %93 = vector.shape_cast %92 : vector<32x16xf32> to vector<4x8x16xf32>
    %94 = tpu.transpose %93, [0, 2, 1] : vector<4x8x16xf32> -> vector<4x16x8xf32>
    %95 = vector.shape_cast %94 : vector<4x16x8xf32> to vector<64x8xf32>
    %96 = arith.truncf %95 : vector<64x8xf32> to vector<64x8xbf16>
    %cst_156 = arith.constant dense<0.000000e+00> : vector<64x16xf32>
    %97 = tpu.matmul %96, %85, %cst_156 {dimension_numbers = #tpu.dot_dimension_numbers<[1], [0], [0], [1], [0, 0, 1, 1], [], []>} : vector<64x8xbf16>, vector<8x16xbf16>, vector<64x16xf32> -> vector<64x16xf32>
    %98 = vector.shape_cast %97 : vector<64x16xf32> to vector<4x16x16xf32>
    %c0_157 = arith.constant 0 : index
    %c0_158 = arith.constant 0 : index
    %c0_159 = arith.constant 0 : index
    %c0_160 = arith.constant 0 : index
    %99 = vector.load %arg9[%c0_157, %c0_158, %c0_159, %c0_160] : memref<2x4x16x16xf32, #tpu.memory_space<vmem>>, vector<1x4x16x16xf32>
    %100 = vector.shape_cast %99 : vector<1x4x16x16xf32> to vector<4x16x16xf32>
    %101 = vector.shape_cast %98 : vector<4x16x16xf32> to vector<1x4x16x16xf32>
    tpu.vector_store %arg9[%c0_157, %c0_158, %c0_159, %c0_160], %101 {strides = array<i32>} : memref<2x4x16x16xf32, #tpu.memory_space<vmem>>, vector<1x4x16x16xf32>,
    %102 = vector.extract_strided_slice %83 {offsets = [64, 0], sizes = [64, 4], strides = [1, 1]} : vector<128x4xf32> to vector<64x4xf32>
    %103 = tpu.transpose %102, [1, 0] : vector<64x4xf32> -> vector<4x64xf32>
    %104 = vector.shape_cast %103 : vector<4x64xf32> to vector<4x8x8xf32>
    %105 = tpu.transpose %104, [0, 2, 1] : vector<4x8x8xf32> -> vector<4x8x8xf32>
    %106 = vector.shape_cast %105 : vector<4x8x8xf32> to vector<32x8xf32>
    %107 = arith.truncf %106 : vector<32x8xf32> to vector<32x8xbf16>
    %cst_161 = arith.constant dense<0.000000e+00> : vector<32x16xf32>
    %108 = tpu.matmul %107, %84, %cst_161 {dimension_numbers = #tpu.dot_dimension_numbers<[1], [0], [0], [1], [0, 0, 1, 1], [], []>} : vector<32x8xbf16>, vector<8x16xbf16>, vector<32x16xf32> -> vector<32x16xf32>
    %109 = vector.shape_cast %108 : vector<32x16xf32> to vector<4x8x16xf32>
    %110 = tpu.transpose %109, [0, 2, 1] : vector<4x8x16xf32> -> vector<4x16x8xf32>
    %111 = vector.shape_cast %110 : vector<4x16x8xf32> to vector<64x8xf32>
    %112 = arith.truncf %111 : vector<64x8xf32> to vector<64x8xbf16>
    %cst_162 = arith.constant dense<0.000000e+00> : vector<64x16xf32>
    %113 = tpu.matmul %112, %85, %cst_162 {dimension_numbers = #tpu.dot_dimension_numbers<[1], [0], [0], [1], [0, 0, 1, 1], [], []>} : vector<64x8xbf16>, vector<8x16xbf16>, vector<64x16xf32> -> vector<64x16xf32>
    %114 = vector.shape_cast %113 : vector<64x16xf32> to vector<4x16x16xf32>
    %c1_163 = arith.constant 1 : index
    %c0_164 = arith.constant 0 : index
    %c0_165 = arith.constant 0 : index
    %c0_166 = arith.constant 0 : index
    %115 = vector.load %arg9[%c1_163, %c0_164, %c0_165, %c0_166] : memref<2x4x16x16xf32, #tpu.memory_space<vmem>>, vector<1x4x16x16xf32>
    %116 = vector.shape_cast %115 : vector<1x4x16x16xf32> to vector<4x16x16xf32>
    %117 = vector.shape_cast %114 : vector<4x16x16xf32> to vector<1x4x16x16xf32>
    tpu.vector_store %arg9[%c1_163, %c0_164, %c0_165, %c0_166], %117 {strides = array<i32>} : memref<2x4x16x16xf32, #tpu.memory_space<vmem>>, vector<1x4x16x16xf32>,
    return
  }
  func.func @transform_0(%arg0: i32) -> (i32, i32, i32, i32) {
    %c0_i32 = arith.constant 0 : i32
    %c0_i32_0 = arith.constant 0 : i32
    %c0_i32_1 = arith.constant 0 : i32
    %c0_i32_2 = arith.constant 0 : i32
    return %arg0, %c0_i32, %c0_i32_0, %c0_i32_1 : i32, i32, i32, i32
  }
  func.func @transform_1(%arg0: i32) -> (i32, i32) {
    %c0_i32 = arith.constant 0 : i32
    %c0_i32_0 = arith.constant 0 : i32
    %c0_i32_1 = arith.constant 0 : i32
    return %c0_i32, %c0_i32_0 : i32, i32
  }
  func.func @transform_2(%arg0: i32) -> (i32, i32) {
    %c0_i32 = arith.constant 0 : i32
    %c0_i32_0 = arith.constant 0 : i32
    %c0_i32_1 = arith.constant 0 : i32
    return %c0_i32, %c0_i32_0 : i32, i32
  }
  func.func @transform_3(%arg0: i32) -> (i32, i32) {
    %c0_i32 = arith.constant 0 : i32
    %c0_i32_0 = arith.constant 0 : i32
    %c0_i32_1 = arith.constant 0 : i32
    return %c0_i32, %c0_i32_0 : i32, i32
  }
  func.func @transform_4(%arg0: i32) -> (i32, i32) {
    %c0_i32 = arith.constant 0 : i32
    %c0_i32_0 = arith.constant 0 : i32
    %c0_i32_1 = arith.constant 0 : i32
    return %c0_i32, %c0_i32_0 : i32, i32
  }
  func.func @transform_5(%arg0: i32) -> (i32, i32) {
    %c0_i32 = arith.constant 0 : i32
    %c0_i32_0 = arith.constant 0 : i32
    %c0_i32_1 = arith.constant 0 : i32
    return %c0_i32, %c0_i32_0 : i32, i32
  }
  func.func @transform_6(%arg0: i32) -> (i32, i32) {
    %c0_i32 = arith.constant 0 : i32
    %c0_i32_0 = arith.constant 0 : i32
    %c0_i32_1 = arith.constant 0 : i32
    return %c0_i32, %c0_i32_0 : i32, i32
  }
  func.func @transform_8(%arg0: i32) -> (i32, i32, i32, i32) {
    %c1_i32 = arith.constant 1 : i32
    %c0_i32 = arith.constant 0 : i32
    %c0_i32_0 = arith.constant 0 : i32
    %c0_i32_1 = arith.constant 0 : i32
    return %arg0, %c1_i32, %c0_i32, %c0_i32_0 : i32, i32, i32, i32
  }
}

</mosaic_0001>

<llo_original>
// kernel: a_call__.2
$region0: #{a_call__.2}
  #allocation0 [shape = 'u32[]', space=smem, size = 0x4, offset = 0x4, fixed_abs, tag = 'smem constant byte address 0x4 - core index']
  #allocation1 [shape = 'u32[144,128]{1,0:T(1,128)}', space=vmem, size = 0x12000, scoped, tag = 'internal scratch']
  #allocation2 [shape = 'bf16[2,6,6,8]{3,2,1,0:T(8,128)(2,1)}', space=vmem, size = 0x6000, scoped, tag = 'scratch operand']
  #allocation3 [shape = 'bf16[2,6,6,4]{3,2,1,0:T(8,128)(2,1)}', space=vmem, size = 0x6000, scoped, tag = 'scratch operand']
  #allocation4 [shape = 'bf16[32,72]{1,0:T(16,128)(2,1)}', space=vmem, size = 0x2000, scoped, tag = 'scratch operand']
  #allocation5 [shape = 'bf16[32,36]{1,0:T(16,128)(2,1)}', space=vmem, size = 0x2000, scoped, tag = 'scratch operand']
  %s0 = inlined_call_operand.vmem [shape: f32[2,4,4,8], index: 0, kind: input, shape index: {}]
  %s1 = inlined_call_operand.vmem [shape: bf16[72,4], index: 1, kind: input, shape index: {}]
  %s2 = inlined_call_operand.vmem [shape: f32[1,4], index: 2, kind: input, shape index: {}]
  %s3 = inlined_call_operand.vmem [shape: bf16[36,4], index: 3, kind: input, shape index: {}]
  %s4 = inlined_call_operand.vmem [shape: f32[1,4], index: 4, kind: input, shape index: {}]
  %s5 = inlined_call_operand.vmem [shape: bf16[4,16], index: 5, kind: input, shape index: {}, may-alias: {5,6}]
  %s6 = inlined_call_operand.vmem [shape: bf16[4,16], index: 6, kind: input, shape index: {}, may-alias: {5,6}]
  %s7 = inlined_call_operand.vmem [shape: f32[2,12,16,16], index: 7, kind: input, shape index: {}, may-alias: {7,8}]
  %s8 = inlined_call_operand.vmem [shape: f32[2,12,16,16], index: 8, kind: output, shape index: {}, may-alias: {7,8}]
  %s9 = sld [smem:[#allocation0]]
  $region72: #{a_call__.2} parent=0
    _
  %s11 = ssub.s32 1, %s9
  %s12 = scalar_select 0, %s11, %s9
  $region1: #{a_call__.2} parent=0
    #allocation6 [shape = 'u8[65536]{0}', space=vmem, size = 0x10000, scoped, tag = 'output window, operand 0, single buffered']
    // Predicated region
    $region2: #{a_call__.2} parent=1 // pred_check
      _
    $region3: #{a_call__.2} parent=1 // pred_check_branch
      %14 = sbr.rel (0) target = $region5
    $region4: #{a_call__.2} parent=1 // pred_region
      _
    $region5: #{a_call__.2} parent=1 // pred_fallthru
      _
    // Predicated region
    $region6: #{a_call__.2} parent=1 // pred_check
      _
    $region7: #{a_call__.2} parent=1 // pred_check_branch
      %16 = sbr.rel (0) target = $region9
    $region8: #{a_call__.2} parent=1 // pred_region
      _
    $region9: #{a_call__.2} parent=1 // pred_fallthru
      _
    // Predicated region
    $region10: #{a_call__.2} parent=1 // pred_check
      _
    $region11: #{a_call__.2} parent=1 // pred_check_branch
      %18 = sbr.rel (0) target = $region13
    $region12: #{a_call__.2} parent=1 // pred_region
      _
    $region13: #{a_call__.2} parent=1 // pred_fallthru
      _
    // Predicated region
    $region14: #{a_call__.2} parent=1 // pred_check
      _
    $region15: #{a_call__.2} parent=1 // pred_check_branch
      %20 = sbr.rel (0) target = $region17
    $region16: #{a_call__.2} parent=1 // pred_region
      _
    $region17: #{a_call__.2} parent=1 // pred_fallthru
      _
    // Predicated region
    $region18: #{a_call__.2} parent=1 // pred_check
      _
    $region19: #{a_call__.2} parent=1 // pred_check_branch
      %22 = sbr.rel (0) target = $region21
    $region20: #{a_call__.2} parent=1 // pred_region
      _
    $region21: #{a_call__.2} parent=1 // pred_fallthru
      _
    // Predicated region
    $region22: #{a_call__.2} parent=1 // pred_check
      _
    $region23: #{a_call__.2} parent=1 // pred_check_branch
      %24 = sbr.rel (0) target = $region25
    $region24: #{a_call__.2} parent=1 // pred_region
      _
    $region25: #{a_call__.2} parent=1 // pred_fallthru
      _
    // Predicated region
    $region26: #{a_call__.2} parent=1 // pred_check
      _
    $region27: #{a_call__.2} parent=1 // pred_check_branch
      %26 = sbr.rel (0) target = $region29
    $region28: #{a_call__.2} parent=1 // pred_region
      _
    $region29: #{a_call__.2} parent=1 // pred_fallthru
      _
    %v28 = vld [vmem:[%s0] sm:$0xf]
    %v29 = vld [vmem:[%s0 + $0x4] sm:$0xf]
    %v30 = vld [vmem:[%s0 + $0x8] sm:$0xf]
    %v31 = vld [vmem:[%s0 + $0xc] sm:$0xf]
    %v32 = vld [vmem:[%s0 + $0x10] sm:$0xf]
    %v33 = vld [vmem:[%s0 + $0x14] sm:$0xf]
    %v34 = vld [vmem:[%s0 + $0x18] sm:$0xf]
    %v35 = vld [vmem:[%s0 + $0x1c] sm:$0xf]
    %v36 = vpack.c.bf16 %v28, %v28
    %v37 = vpack.c.bf16 %v29, %v29
    %v38 = vpack.c.bf16 %v30, %v30
    %v39 = vpack.c.bf16 %v31, %v31
    %v40 = vpack.c.bf16 %v32, %v32
    %v41 = vpack.c.bf16 %v33, %v33
    %v42 = vpack.c.bf16 %v34, %v34
    %v43 = vpack.c.bf16 %v35, %v35
    %vm44 = vcmask 57344
    %vm45 = vsmask.f32 256
    %vm46 = vmand %vm44, %vm45
    %v47 = vld [vmem:[#allocation2] sm:$0x1]
    %v48 = vsel %vm46, 0, %v47
    %49 = vst [vmem:[#allocation2] sm:$0x1] %v48
    %v50 = vld [vmem:[#allocation2 + $0x4] sm:$0x1]
    %v51 = vsel %vm46, 0, %v50
    %52 = vst [vmem:[#allocation2 + $0x4] sm:$0x1] %v51
    %v53 = vld [vmem:[#allocation2 + $0x8] sm:$0x1]
    %v54 = vsel %vm46, 0, %v53
    %55 = vst [vmem:[#allocation2 + $0x8] sm:$0x1] %v54
    %v56 = vld [vmem:[#allocation2 + $0xc] sm:$0x1]
    %v57 = vsel %vm46, 0, %v56
    %58 = vst [vmem:[#allocation2 + $0xc] sm:$0x1] %v57
    %v59 = vld [vmem:[#allocation2 + $0x10] sm:$0x1]
    %v60 = vsel %vm46, 0, %v59
    %61 = vst [vmem:[#allocation2 + $0x10] sm:$0x1] %v60
    %v62 = vld [vmem:[#allocation2 + $0x14] sm:$0x1]
    %v63 = vsel %vm46, 0, %v62
    %64 = vst [vmem:[#allocation2 + $0x14] sm:$0x1] %v63
    %v65 = vld [vmem:[#allocation2 + $0x18] sm:$0x1]
    %v66 = vsel %vm46, 0, %v65
    %67 = vst [vmem:[#allocation2 + $0x18] sm:$0x1] %v66
    %v68 = vld [vmem:[#allocation2 + $0x1c] sm:$0x1]
    %v69 = vsel %vm46, 0, %v68
    %70 = vst [vmem:[#allocation2 + $0x1c] sm:$0x1] %v69
    %v71 = vld [vmem:[#allocation2 + $0x20] sm:$0x1]
    %v72 = vsel %vm46, 0, %v71
    %73 = vst [vmem:[#allocation2 + $0x20] sm:$0x1] %v72
    %v74 = vld [vmem:[#allocation2 + $0x24] sm:$0x1]
    %v75 = vsel %vm46, 0, %v74
    %76 = vst [vmem:[#allocation2 + $0x24] sm:$0x1] %v75
    %v77 = vld [vmem:[#allocation2 + $0x28] sm:$0x1]
    %v78 = vsel %vm46, 0, %v77
    %79 = vst [vmem:[#allocation2 + $0x28] sm:$0x1] %v78
    %v80 = vld [vmem:[#allocation2 + $0x2c] sm:$0x1]
    %v81 = vsel %vm46, 0, %v80
    %82 = vst [vmem:[#allocation2 + $0x2c] sm:$0x1] %v81
    %vm83 = vcmask 59394
    %vm84 = vsmask.f32 7946
    %vm85 = vmand %vm83, %vm84
    %v86 = vld [vmem:[#allocation2] sm:$0x4]
    %v87 = vsel %vm85, 0, %v86
    %88 = vst [vmem:[#allocation2] sm:$0x4] %v87
    %v89 = vld [vmem:[#allocation2 + $0x4] sm:$0x4]
    %v90 = vsel %vm85, 0, %v89
    %91 = vst [vmem:[#allocation2 + $0x4] sm:$0x4] %v90
    %v92 = vld [vmem:[#allocation2 + $0x8] sm:$0x4]
    %v93 = vsel %vm85, 0, %v92
    %94 = vst [vmem:[#allocation2 + $0x8] sm:$0x4] %v93
    %v95 = vld [vmem:[#allocation2 + $0xc] sm:$0x4]
    %v96 = vsel %vm85, 0, %v95
    %97 = vst [vmem:[#allocation2 + $0xc] sm:$0x4] %v96
    %v98 = vld [vmem:[#allocation2 + $0x10] sm:$0x4]
    %v99 = vsel %vm85, 0, %v98
    %100 = vst [vmem:[#allocation2 + $0x10] sm:$0x4] %v99
    %v101 = vld [vmem:[#allocation2 + $0x14] sm:$0x4]
    %v102 = vsel %vm85, 0, %v101
    %103 = vst [vmem:[#allocation2 + $0x14] sm:$0x4] %v102
    %v104 = vld [vmem:[#allocation2 + $0x18] sm:$0x4]
    %v105 = vsel %vm85, 0, %v104
    %106 = vst [vmem:[#allocation2 + $0x18] sm:$0x4] %v105
    %v107 = vld [vmem:[#allocation2 + $0x1c] sm:$0x4]
    %v108 = vsel %vm85, 0, %v107
    %109 = vst [vmem:[#allocation2 + $0x1c] sm:$0x4] %v108
    %v110 = vld [vmem:[#allocation2 + $0x20] sm:$0x4]
    %v111 = vsel %vm85, 0, %v110
    %112 = vst [vmem:[#allocation2 + $0x20] sm:$0x4] %v111
    %v113 = vld [vmem:[#allocation2 + $0x24] sm:$0x4]
    %v114 = vsel %vm85, 0, %v113
    %115 = vst [vmem:[#allocation2 + $0x24] sm:$0x4] %v114
    %v116 = vld [vmem:[#allocation2 + $0x28] sm:$0x4]
    %v117 = vsel %vm85, 0, %v116
    %118 = vst [vmem:[#allocation2 + $0x28] sm:$0x4] %v117
    %v119 = vld [vmem:[#allocation2 + $0x2c] sm:$0x4]
    %v120 = vsel %vm85, 0, %v119
    %121 = vst [vmem:[#allocation2 + $0x2c] sm:$0x4] %v120
    %vm122 = vcmask 59392
    %123 = vst.msk [vmem:[#allocation2] sm:$0x7] %vm122, 0
    %124 = vst.msk [vmem:[#allocation2 + $0x18] sm:$0x7] %vm122, 0
    %s125 = scalar_lea.vmem [#allocation2], 20
    %126 = vst.msk [vmem:[%s125] sm:$0x7] %vm122, 0
    %127 = vst.msk [vmem:[%s125 + $0x18] sm:$0x7] %vm122, 0
    %v136 = vunpack.c.l.b16 %v36
    %v137 = vunpack.c.l.b16 %v37
    %v138 = vunpack.c.l.b16 %v38
    %v139 = vunpack.c.l.b16 %v39
    %v140 = vunpack.c.l.b16 %v40
    %v141 = vunpack.c.l.b16 %v41
    %v142 = vunpack.c.l.b16 %v42
    %v143 = vunpack.c.l.b16 %v43
    %v144 = vpack.c.b16 %v136, %v136
    %v145 = vpack.c.b16 %v137, %v137
    %v146 = vpack.c.b16 %v138, %v138
    %v147 = vpack.c.b16 %v139, %v139
    %v148 = vpack.c.b16 %v140, %v140
    %v149 = vpack.c.b16 %v141, %v141
    %v150 = vpack.c.b16 %v142, %v142
    %v151 = vpack.c.b16 %v143, %v143
    %v153 = vshrl.u32 %v144, 16
    %v155 = vrot.slane %v153, 7
    %v156 = vshll.u32 %v144, 16
    %v158 = vor.u32 %v155, %v156
    %v160 = vshrl.u32 %v145, 16
    %v162 = vrot.slane %v160, 7
    %v163 = vshll.u32 %v145, 16
    %v165 = vor.u32 %v162, %v163
    %v167 = vshrl.u32 %v146, 16
    %v169 = vrot.slane %v167, 7
    %v170 = vshll.u32 %v146, 16
    %v172 = vor.u32 %v169, %v170
    %v174 = vshrl.u32 %v147, 16
    %v176 = vrot.slane %v174, 7
    %v177 = vshll.u32 %v147, 16
    %v179 = vor.u32 %v176, %v177
    %v181 = vshrl.u32 %v148, 16
    %v183 = vrot.slane %v181, 7
    %v184 = vshll.u32 %v148, 16
    %v186 = vor.u32 %v183, %v184
    %v188 = vshrl.u32 %v149, 16
    %v190 = vrot.slane %v188, 7
    %v191 = vshll.u32 %v149, 16
    %v193 = vor.u32 %v190, %v191
    %v195 = vshrl.u32 %v150, 16
    %v197 = vrot.slane %v195, 7
    %v198 = vshll.u32 %v150, 16
    %v200 = vor.u32 %v197, %v198
    %v202 = vshrl.u32 %v151, 16
    %v204 = vrot.slane %v202, 7
    %v205 = vshll.u32 %v151, 16
    %v207 = vor.u32 %v204, %v205
    %s216 = scalar_lea.vmem [#allocation2], 4
    %vm217 = vcmask 59392
    %vm218 = vsmask.f32 2306
    %vm219 = vmand %vm217, %vm218
    %v220 = vld [vmem:[%s216] sm:$0x7]
    %v221 = vsel %vm219, %v158, %v220
    %222 = vst [vmem:[%s216] sm:$0x7] %v221
    %v223 = vld [vmem:[%s216 + $0x4] sm:$0x7]
    %v224 = vsel %vm219, %v165, %v223
    %225 = vst [vmem:[%s216 + $0x4] sm:$0x7] %v224
    %v226 = vld [vmem:[%s216 + $0x8] sm:$0x7]
    %v227 = vsel %vm219, %v172, %v226
    %228 = vst [vmem:[%s216 + $0x8] sm:$0x7] %v227
    %v229 = vld [vmem:[%s216 + $0xc] sm:$0x7]
    %v230 = vsel %vm219, %v179, %v229
    %231 = vst [vmem:[%s216 + $0xc] sm:$0x7] %v230
    %v232 = vld [vmem:[%s216 + $0x18] sm:$0x7]
    %v233 = vsel %vm219, %v186, %v232
    %234 = vst [vmem:[%s216 + $0x18] sm:$0x7] %v233
    %v235 = vld [vmem:[%s216 + $0x1c] sm:$0x7]
    %v236 = vsel %vm219, %v193, %v235
    %237 = vst [vmem:[%s216 + $0x1c] sm:$0x7] %v236
    %v238 = vld [vmem:[%s216 + $0x20] sm:$0x7]
    %v239 = vsel %vm219, %v200, %v238
    %240 = vst [vmem:[%s216 + $0x20] sm:$0x7] %v239
    %v241 = vld [vmem:[%s216 + $0x24] sm:$0x7]
    %v242 = vsel %vm219, %v207, %v241
    %243 = vst [vmem:[%s216 + $0x24] sm:$0x7] %v242
    %v244 = vld [vmem:[#allocation2] sm:$0x3]
    %v245 = vld [vmem:[#allocation2 + $0x4] sm:$0x3]
    %v246 = vld [vmem:[#allocation2 + $0x8] sm:$0x3]
    %v247 = vld [vmem:[#allocation2 + $0xc] sm:$0x3]
    %v248 = vld [vmem:[#allocation2 + $0x18] sm:$0x3]
    %v249 = vld [vmem:[#allocation2 + $0x1c] sm:$0x3]
    %v250 = vld [vmem:[#allocation2 + $0x20] sm:$0x3]
    %v251 = vld [vmem:[#allocation2 + $0x24] sm:$0x3]
    %v260 = vcombine.low %v244, %v245
    %v261 = vcombine.low %v246, %v247
    %v263 = vunpack.c.l.s4 1983009808
    %v264 = vunpack.c.0.s8 %v263
    %v265 = vlaneseq
    %v266 = vshrl.u32 %v265, 7
    %v267 = vsub.s32 %v264, %v266
    %v268 = vrot.slane %v260, %v267
    %v270 = vunpack.c.l.s4 1983009808
    %v271 = vunpack.c.0.s8 %v270
    %v272 = vlaneseq
    %v273 = vshrl.u32 %v272, 7
    %v274 = vsub.s32 %v271, %v273
    %v275 = vrot.slane %v261, %v274
    %v276 = vcombine.low %v268, %v275
    %v277 = vcombine.low %v248, %v249
    %v278 = vcombine.low %v250, %v251
    %v280 = vunpack.c.l.s4 1983009808
    %v281 = vunpack.c.0.s8 %v280
    %v282 = vlaneseq
    %v283 = vshrl.u32 %v282, 7
    %v284 = vsub.s32 %v281, %v283
    %v285 = vrot.slane %v277, %v284
    %v287 = vunpack.c.l.s4 1983009808
    %v288 = vunpack.c.0.s8 %v287
    %v289 = vlaneseq
    %v290 = vshrl.u32 %v289, 7
    %v291 = vsub.s32 %v288, %v290
    %v292 = vrot.slane %v278, %v291
    %v293 = vcombine.low %v285, %v292
    %vm296 = vcmask 64512
    %297 = vst.msk [vmem:[#allocation4] sm:$0xff] %vm296, %v276
    %298 = vst.msk [vmem:[#allocation4 + $0x8] sm:$0xff] %vm296, %v293
    %v299 = vld [vmem:[#allocation2] sm:$0x7]
    %v300 = vld [vmem:[#allocation2 + $0x4] sm:$0x7]
    %v301 = vld [vmem:[#allocation2 + $0x8] sm:$0x7]
    %v302 = vld [vmem:[#allocation2 + $0xc] sm:$0x7]
    %v303 = vld [vmem:[#allocation2 + $0x18] sm:$0x7]
    %v304 = vld [vmem:[#allocation2 + $0x1c] sm:$0x7]
    %v305 = vld [vmem:[#allocation2 + $0x20] sm:$0x7]
    %v306 = vld [vmem:[#allocation2 + $0x24] sm:$0x7]
    %v316 = vunpack.c.l.s4 1983009808
    %v317 = vunpack.c.0.s8 %v316
    %v318 = vlaneseq
    %v319 = vshrl.u32 %v318, 7
    %v320 = vsub.s32 %v317, %v319
    %v321 = vrot.slane %v299, %v320
    %v322 = vcombine.high %v321, %v321
    %v324 = vunpack.c.l.s4 1983009808
    %v325 = vunpack.c.0.s8 %v324
    %v326 = vlaneseq
    %v327 = vshrl.u32 %v326, 7
    %v328 = vsub.s32 %v325, %v327
    %v329 = vrot.slane %v300, %v328
    %v330 = vcombine.high %v329, %v329
    %v332 = vunpack.c.l.s4 1983009808
    %v333 = vunpack.c.0.s8 %v332
    %v334 = vlaneseq
    %v335 = vshrl.u32 %v334, 7
    %v336 = vsub.s32 %v333, %v335
    %v337 = vrot.slane %v301, %v336
    %v338 = vcombine.high %v337, %v337
    %v340 = vunpack.c.l.s4 1983009808
    %v341 = vunpack.c.0.s8 %v340
    %v342 = vlaneseq
    %v343 = vshrl.u32 %v342, 7
    %v344 = vsub.s32 %v341, %v343
    %v345 = vrot.slane %v302, %v344
    %v346 = vcombine.high %v345, %v345
    %v348 = vunpack.c.l.s4 1983009808
    %v349 = vunpack.c.0.s8 %v348
    %v350 = vlaneseq
    %v351 = vshrl.u32 %v350, 7
    %v352 = vsub.s32 %v349, %v351
    %v353 = vrot.slane %v303, %v352
    %v354 = vcombine.high %v353, %v353
    %v356 = vunpack.c.l.s4 1983009808
    %v357 = vunpack.c.0.s8 %v356
    %v358 = vlaneseq
    %v359 = vshrl.u32 %v358, 7
    %v360 = vsub.s32 %v357, %v359
    %v361 = vrot.slane %v304, %v360
    %v362 = vcombine.high %v361, %v361
    %v364 = vunpack.c.l.s4 1983009808
    %v365 = vunpack.c.0.s8 %v364
    %v366 = vlaneseq
    %v367 = vshrl.u32 %v366, 7
    %v368 = vsub.s32 %v365, %v367
    %v369 = vrot.slane %v305, %v368
    %v370 = vcombine.high %v369, %v369
    %v372 = vunpack.c.l.s4 1983009808
    %v373 = vunpack.c.0.s8 %v372
    %v374 = vlaneseq
    %v375 = vshrl.u32 %v374, 7
    %v376 = vsub.s32 %v373, %v375
    %v377 = vrot.slane %v306, %v376
    %v378 = vcombine.high %v377, %v377
    %vm379 = vsmask.f32 1280
    %vm380 = vsmask.f32 3336
    %vm381 = vmor %vm379, %vm380
    %vm382 = vsmask.f32 5392
    %vm383 = vmor %vm381, %vm382
    %vm384 = vsmask.f32 7448
    %vm385 = vmor %vm383, %vm384
    %v387 = vshrl.u32 %v321, 16
    %v389 = vrot.slane %v387, 6
    %v390 = vshll.u32 %v321, 16
    %v392 = vrot.slane %v390, 7
    %v393 = vor.u32 %v389, %v392
    %v394 = vrot.slane %v393, 2
    %v396 = vshll.u32 %v322, 16
    %v398 = vrot.slane %v396, 7
    %v399 = vsel %vm385, %v394, %v398
    %v401 = vshrl.u32 %v329, 16
    %v403 = vrot.slane %v401, 6
    %v404 = vshll.u32 %v329, 16
    %v406 = vrot.slane %v404, 7
    %v407 = vor.u32 %v403, %v406
    %v408 = vrot.slane %v407, 2
    %v410 = vshll.u32 %v330, 16
    %v412 = vrot.slane %v410, 7
    %v413 = vsel %vm385, %v408, %v412
    %v415 = vshrl.u32 %v337, 16
    %v417 = vrot.slane %v415, 6
    %v418 = vshll.u32 %v337, 16
    %v420 = vrot.slane %v418, 7
    %v421 = vor.u32 %v417, %v420
    %v422 = vrot.slane %v421, 2
    %v424 = vshll.u32 %v338, 16
    %v426 = vrot.slane %v424, 7
    %v427 = vsel %vm385, %v422, %v426
    %v429 = vshrl.u32 %v345, 16
    %v431 = vrot.slane %v429, 6
    %v432 = vshll.u32 %v345, 16
    %v434 = vrot.slane %v432, 7
    %v435 = vor.u32 %v431, %v434
    %v436 = vrot.slane %v435, 2
    %v438 = vshll.u32 %v346, 16
    %v440 = vrot.slane %v438, 7
    %v441 = vsel %vm385, %v436, %v440
    %v443 = vshrl.u32 %v353, 16
    %v445 = vrot.slane %v443, 6
    %v446 = vshll.u32 %v353, 16
    %v448 = vrot.slane %v446, 7
    %v449 = vor.u32 %v445, %v448
    %v450 = vrot.slane %v449, 2
    %v452 = vshll.u32 %v354, 16
    %v454 = vrot.slane %v452, 7
    %v455 = vsel %vm385, %v450, %v454
    %v457 = vshrl.u32 %v361, 16
    %v459 = vrot.slane %v457, 6
    %v460 = vshll.u32 %v361, 16
    %v462 = vrot.slane %v460, 7
    %v463 = vor.u32 %v459, %v462
    %v464 = vrot.slane %v463, 2
    %v466 = vshll.u32 %v362, 16
    %v468 = vrot.slane %v466, 7
    %v469 = vsel %vm385, %v464, %v468
    %v471 = vshrl.u32 %v369, 16
    %v473 = vrot.slane %v471, 6
    %v474 = vshll.u32 %v369, 16
    %v476 = vrot.slane %v474, 7
    %v477 = vor.u32 %v473, %v476
    %v478 = vrot.slane %v477, 2
    %v480 = vshll.u32 %v370, 16
    %v482 = vrot.slane %v480, 7
    %v483 = vsel %vm385, %v478, %v482
    %v485 = vshrl.u32 %v377, 16
    %v487 = vrot.slane %v485, 6
    %v488 = vshll.u32 %v377, 16
    %v490 = vrot.slane %v488, 7
    %v491 = vor.u32 %v487, %v490
    %v492 = vrot.slane %v491, 2
    %v494 = vshll.u32 %v378, 16
    %v496 = vrot.slane %v494, 7
    %v497 = vsel %vm385, %v492, %v496
    %v498 = vcombine.low %v399, %v413
    %v499 = vcombine.low %v427, %v441
    %v501 = vunpack.c.l.s4 1983009808
    %v502 = vunpack.c.0.s8 %v501
    %v503 = vlaneseq
    %v504 = vshrl.u32 %v503, 7
    %v505 = vsub.s32 %v502, %v504
    %v506 = vrot.slane %v498, %v505
    %v508 = vunpack.c.l.s4 1983009808
    %v509 = vunpack.c.0.s8 %v508
    %v510 = vlaneseq
    %v511 = vshrl.u32 %v510, 7
    %v512 = vsub.s32 %v509, %v511
    %v513 = vrot.slane %v499, %v512
    %v514 = vcombine.low %v506, %v513
    %v515 = vcombine.low %v455, %v469
    %v516 = vcombine.low %v483, %v497
    %v518 = vunpack.c.l.s4 1983009808
    %v519 = vunpack.c.0.s8 %v518
    %v520 = vlaneseq
    %v521 = vshrl.u32 %v520, 7
    %v522 = vsub.s32 %v519, %v521
    %v523 = vrot.slane %v515, %v522
    %v525 = vunpack.c.l.s4 1983009808
    %v526 = vunpack.c.0.s8 %v525
    %v527 = vlaneseq
    %v528 = vshrl.u32 %v527, 7
    %v529 = vsub.s32 %v526, %v528
    %v530 = vrot.slane %v516, %v529
    %v531 = vcombine.low %v523, %v530
    %532 = vrot.lane.b32.xlu0 %v514, 8
    %v533 = vpop.permute.xlu0 %532
    %534 = vrot.lane.b32.xlu0 %v531, 8
    %v535 = vpop.permute.xlu0 %534
    %vm538 = vcmask 130112
    %539 = vst.msk [vmem:[#allocation4] sm:$0xff] %vm538, %v533
    %540 = vst.msk [vmem:[#allocation4 + $0x8] sm:$0xff] %vm538, %v535
    %v541 = vld [vmem:[#allocation2] sm:$0x6]
    %v542 = vld [vmem:[#allocation2 + $0x4] sm:$0x6]
    %v543 = vld [vmem:[#allocation2 + $0x8] sm:$0x6]
    %v544 = vld [vmem:[#allocation2 + $0xc] sm:$0x6]
    %v545 = vld [vmem:[#allocation2 + $0x18] sm:$0x6]
    %v546 = vld [vmem:[#allocation2 + $0x1c] sm:$0x6]
    %v547 = vld [vmem:[#allocation2 + $0x20] sm:$0x6]
    %v548 = vld [vmem:[#allocation2 + $0x24] sm:$0x6]
    %v558 = vunpack.c.l.s4 1983009808
    %v559 = vunpack.c.0.s8 %v558
    %v560 = vlaneseq
    %v561 = vshrl.u32 %v560, 7
    %v562 = vsub.s32 %v559, %v561
    %v563 = vrot.slane %v541, %v562
    %v564 = vcombine.high %v563, %v563
    %v566 = vunpack.c.l.s4 1983009808
    %v567 = vunpack.c.0.s8 %v566
    %v568 = vlaneseq
    %v569 = vshrl.u32 %v568, 7
    %v570 = vsub.s32 %v567, %v569
    %v571 = vrot.slane %v542, %v570
    %v572 = vcombine.high %v571, %v571
    %v574 = vunpack.c.l.s4 1983009808
    %v575 = vunpack.c.0.s8 %v574
    %v576 = vlaneseq
    %v577 = vshrl.u32 %v576, 7
    %v578 = vsub.s32 %v575, %v577
    %v579 = vrot.slane %v543, %v578
    %v580 = vcombine.high %v579, %v579
    %v582 = vunpack.c.l.s4 1983009808
    %v583 = vunpack.c.0.s8 %v582
    %v584 = vlaneseq
    %v585 = vshrl.u32 %v584, 7
    %v586 = vsub.s32 %v583, %v585
    %v587 = vrot.slane %v544, %v586
    %v588 = vcombine.high %v587, %v587
    %v590 = vunpack.c.l.s4 1983009808
    %v591 = vunpack.c.0.s8 %v590
    %v592 = vlaneseq
    %v593 = vshrl.u32 %v592, 7
    %v594 = vsub.s32 %v591, %v593
    %v595 = vrot.slane %v545, %v594
    %v596 = vcombine.high %v595, %v595
    %v598 = vunpack.c.l.s4 1983009808
    %v599 = vunpack.c.0.s8 %v598
    %v600 = vlaneseq
    %v601 = vshrl.u32 %v600, 7
    %v602 = vsub.s32 %v599, %v601
    %v603 = vrot.slane %v546, %v602
    %v604 = vcombine.high %v603, %v603
    %v606 = vunpack.c.l.s4 1983009808
    %v607 = vunpack.c.0.s8 %v606
    %v608 = vlaneseq
    %v609 = vshrl.u32 %v608, 7
    %v610 = vsub.s32 %v607, %v609
    %v611 = vrot.slane %v547, %v610
    %v612 = vcombine.high %v611, %v611
    %v614 = vunpack.c.l.s4 1983009808
    %v615 = vunpack.c.0.s8 %v614
    %v616 = vlaneseq
    %v617 = vshrl.u32 %v616, 7
    %v618 = vsub.s32 %v615, %v617
    %v619 = vrot.slane %v548, %v618
    %v620 = vcombine.high %v619, %v619
    %vm621 = vcmask 1040384
    %vm622 = vcmask 1042434
    %vm623 = vmor %vm621, %vm622
    %vm624 = vcmask 1044484
    %vm625 = vmor %vm623, %vm624
    %vm626 = vcmask 1046534
    %vm627 = vmor %vm625, %vm626
    %v628 = vrot.slane %v563, 7
    %v629 = vrot.slane %v628, 2
    %v630 = vrot.slane %v564, 7
    %v631 = vsel %vm627, %v629, %v630
    %v632 = vrot.slane %v571, 7
    %v633 = vrot.slane %v632, 2
    %v634 = vrot.slane %v572, 7
    %v635 = vsel %vm627, %v633, %v634
    %v636 = vrot.slane %v579, 7
    %v637 = vrot.slane %v636, 2
    %v638 = vrot.slane %v580, 7
    %v639 = vsel %vm627, %v637, %v638
    %v640 = vrot.slane %v587, 7
    %v641 = vrot.slane %v640, 2
    %v642 = vrot.slane %v588, 7
    %v643 = vsel %vm627, %v641, %v642
    %v644 = vrot.slane %v595, 7
    %v645 = vrot.slane %v644, 2
    %v646 = vrot.slane %v596, 7
    %v647 = vsel %vm627, %v645, %v646
    %v648 = vrot.slane %v603, 7
    %v649 = vrot.slane %v648, 2
    %v650 = vrot.slane %v604, 7
    %v651 = vsel %vm627, %v649, %v650
    %v652 = vrot.slane %v611, 7
    %v653 = vrot.slane %v652, 2
    %v654 = vrot.slane %v612, 7
    %v655 = vsel %vm627, %v653, %v654
    %v656 = vrot.slane %v619, 7
    %v657 = vrot.slane %v656, 2
    %v658 = vrot.slane %v620, 7
    %v659 = vsel %vm627, %v657, %v658
    %v660 = vcombine.low %v631, %v635
    %v661 = vcombine.low %v639, %v643
    %v663 = vunpack.c.l.s4 1983009808
    %v664 = vunpack.c.0.s8 %v663
    %v665 = vlaneseq
    %v666 = vshrl.u32 %v665, 7
    %v667 = vsub.s32 %v664, %v666
    %v668 = vrot.slane %v660, %v667
    %v670 = vunpack.c.l.s4 1983009808
    %v671 = vunpack.c.0.s8 %v670
    %v672 = vlaneseq
    %v673 = vshrl.u32 %v672, 7
    %v674 = vsub.s32 %v671, %v673
    %v675 = vrot.slane %v661, %v674
    %v676 = vcombine.low %v668, %v675
    %v677 = vcombine.low %v647, %v651
    %v678 = vcombine.low %v655, %v659
    %v680 = vunpack.c.l.s4 1983009808
    %v681 = vunpack.c.0.s8 %v680
    %v682 = vlaneseq
    %v683 = vshrl.u32 %v682, 7
    %v684 = vsub.s32 %v681, %v683
    %v685 = vrot.slane %v677, %v684
    %v687 = vunpack.c.l.s4 1983009808
    %v688 = vunpack.c.0.s8 %v687
    %v689 = vlaneseq
    %v690 = vshrl.u32 %v689, 7
    %v691 = vsub.s32 %v688, %v690
    %v692 = vrot.slane %v678, %v691
    %v693 = vcombine.low %v685, %v692
    %694 = vrot.lane.b32.xlu0 %v676, 16
    %v695 = vpop.permute.xlu0 %694
    %696 = vrot.lane.b32.xlu0 %v693, 16
    %v697 = vpop.permute.xlu0 %696
    %vm700 = vcmask 195712
    %701 = vst.msk [vmem:[#allocation4] sm:$0xff] %vm700, %v695
    %702 = vst.msk [vmem:[#allocation4 + $0x8] sm:$0xff] %vm700, %v697
    %v703 = vld [vmem:[%s216] sm:$0x3]
    %v704 = vld [vmem:[%s216 + $0x4] sm:$0x3]
    %v705 = vld [vmem:[%s216 + $0x8] sm:$0x3]
    %v706 = vld [vmem:[%s216 + $0xc] sm:$0x3]
    %v707 = vld [vmem:[%s216 + $0x18] sm:$0x3]
    %v708 = vld [vmem:[%s216 + $0x1c] sm:$0x3]
    %v709 = vld [vmem:[%s216 + $0x20] sm:$0x3]
    %v710 = vld [vmem:[%s216 + $0x24] sm:$0x3]
    %v719 = vcombine.low %v703, %v704
    %v720 = vcombine.low %v705, %v706
    %v722 = vunpack.c.l.s4 1983009808
    %v723 = vunpack.c.0.s8 %v722
    %v724 = vlaneseq
    %v725 = vshrl.u32 %v724, 7
    %v726 = vsub.s32 %v723, %v725
    %v727 = vrot.slane %v719, %v726
    %v729 = vunpack.c.l.s4 1983009808
    %v730 = vunpack.c.0.s8 %v729
    %v731 = vlaneseq
    %v732 = vshrl.u32 %v731, 7
    %v733 = vsub.s32 %v730, %v732
    %v734 = vrot.slane %v720, %v733
    %v735 = vcombine.low %v727, %v734
    %v736 = vcombine.low %v707, %v708
    %v737 = vcombine.low %v709, %v710
    %v739 = vunpack.c.l.s4 1983009808
    %v740 = vunpack.c.0.s8 %v739
    %v741 = vlaneseq
    %v742 = vshrl.u32 %v741, 7
    %v743 = vsub.s32 %v740, %v742
    %v744 = vrot.slane %v736, %v743
    %v746 = vunpack.c.l.s4 1983009808
    %v747 = vunpack.c.0.s8 %v746
    %v748 = vlaneseq
    %v749 = vshrl.u32 %v748, 7
    %v750 = vsub.s32 %v747, %v749
    %v751 = vrot.slane %v737, %v750
    %v752 = vcombine.low %v744, %v751
    %753 = vrot.lane.b32.xlu0 %v735, 24
    %v754 = vpop.permute.xlu0 %753
    %755 = vrot.lane.b32.xlu0 %v752, 24
    %v756 = vpop.permute.xlu0 %755
    %vm759 = vcmask 261312
    %760 = vst.msk [vmem:[#allocation4] sm:$0xff] %vm759, %v754
    %761 = vst.msk [vmem:[#allocation4 + $0x8] sm:$0xff] %vm759, %v756
    %v762 = vld [vmem:[%s216] sm:$0x7]
    %v763 = vld [vmem:[%s216 + $0x4] sm:$0x7]
    %v764 = vld [vmem:[%s216 + $0x8] sm:$0x7]
    %v765 = vld [vmem:[%s216 + $0xc] sm:$0x7]
    %v766 = vld [vmem:[%s216 + $0x18] sm:$0x7]
    %v767 = vld [vmem:[%s216 + $0x1c] sm:$0x7]
    %v768 = vld [vmem:[%s216 + $0x20] sm:$0x7]
    %v769 = vld [vmem:[%s216 + $0x24] sm:$0x7]
    %v779 = vunpack.c.l.s4 1983009808
    %v780 = vunpack.c.0.s8 %v779
    %v781 = vlaneseq
    %v782 = vshrl.u32 %v781, 7
    %v783 = vsub.s32 %v780, %v782
    %v784 = vrot.slane %v762, %v783
    %v785 = vcombine.high %v784, %v784
    %v787 = vunpack.c.l.s4 1983009808
    %v788 = vunpack.c.0.s8 %v787
    %v789 = vlaneseq
    %v790 = vshrl.u32 %v789, 7
    %v791 = vsub.s32 %v788, %v790
    %v792 = vrot.slane %v763, %v791
    %v793 = vcombine.high %v792, %v792
    %v795 = vunpack.c.l.s4 1983009808
    %v796 = vunpack.c.0.s8 %v795
    %v797 = vlaneseq
    %v798 = vshrl.u32 %v797, 7
    %v799 = vsub.s32 %v796, %v798
    %v800 = vrot.slane %v764, %v799
    %v801 = vcombine.high %v800, %v800
    %v803 = vunpack.c.l.s4 1983009808
    %v804 = vunpack.c.0.s8 %v803
    %v805 = vlaneseq
    %v806 = vshrl.u32 %v805, 7
    %v807 = vsub.s32 %v804, %v806
    %v808 = vrot.slane %v765, %v807
    %v809 = vcombine.high %v808, %v808
    %v811 = vunpack.c.l.s4 1983009808
    %v812 = vunpack.c.0.s8 %v811
    %v813 = vlaneseq
    %v814 = vshrl.u32 %v813, 7
    %v815 = vsub.s32 %v812, %v814
    %v816 = vrot.slane %v766, %v815
    %v817 = vcombine.high %v816, %v816
    %v819 = vunpack.c.l.s4 1983009808
    %v820 = vunpack.c.0.s8 %v819
    %v821 = vlaneseq
    %v822 = vshrl.u32 %v821, 7
    %v823 = vsub.s32 %v820, %v822
    %v824 = vrot.slane %v767, %v823
    %v825 = vcombine.high %v824, %v824
    %v827 = vunpack.c.l.s4 1983009808
    %v828 = vunpack.c.0.s8 %v827
    %v829 = vlaneseq
    %v830 = vshrl.u32 %v829, 7
    %v831 = vsub.s32 %v828, %v830
    %v832 = vrot.slane %v768, %v831
    %v833 = vcombine.high %v832, %v832
    %v835 = vunpack.c.l.s4 1983009808
    %v836 = vunpack.c.0.s8 %v835
    %v837 = vlaneseq
    %v838 = vshrl.u32 %v837, 7
    %v839 = vsub.s32 %v836, %v838
    %v840 = vrot.slane %v769, %v839
    %v841 = vcombine.high %v840, %v840
    %v843 = vshrl.u32 %v784, 16
    %v845 = vrot.slane %v843, 6
    %v846 = vshll.u32 %v784, 16
    %v848 = vrot.slane %v846, 7
    %v849 = vor.u32 %v845, %v848
    %v850 = vrot.slane %v849, 2
    %v852 = vshll.u32 %v785, 16
    %v854 = vrot.slane %v852, 7
    %v855 = vsel %vm385, %v850, %v854
    %v857 = vshrl.u32 %v792, 16
    %v859 = vrot.slane %v857, 6
    %v860 = vshll.u32 %v792, 16
    %v862 = vrot.slane %v860, 7
    %v863 = vor.u32 %v859, %v862
    %v864 = vrot.slane %v863, 2
    %v866 = vshll.u32 %v793, 16
    %v868 = vrot.slane %v866, 7
    %v869 = vsel %vm385, %v864, %v868
    %v871 = vshrl.u32 %v800, 16
    %v873 = vrot.slane %v871, 6
    %v874 = vshll.u32 %v800, 16
    %v876 = vrot.slane %v874, 7
    %v877 = vor.u32 %v873, %v876
    %v878 = vrot.slane %v877, 2
    %v880 = vshll.u32 %v801, 16
    %v882 = vrot.slane %v880, 7
    %v883 = vsel %vm385, %v878, %v882
    %v885 = vshrl.u32 %v808, 16
    %v887 = vrot.slane %v885, 6
    %v888 = vshll.u32 %v808, 16
    %v890 = vrot.slane %v888, 7
    %v891 = vor.u32 %v887, %v890
    %v892 = vrot.slane %v891, 2
    %v894 = vshll.u32 %v809, 16
    %v896 = vrot.slane %v894, 7
    %v897 = vsel %vm385, %v892, %v896
    %v899 = vshrl.u32 %v816, 16
    %v901 = vrot.slane %v899, 6
    %v902 = vshll.u32 %v816, 16
    %v904 = vrot.slane %v902, 7
    %v905 = vor.u32 %v901, %v904
    %v906 = vrot.slane %v905, 2
    %v908 = vshll.u32 %v817, 16
    %v910 = vrot.slane %v908, 7
    %v911 = vsel %vm385, %v906, %v910
    %v913 = vshrl.u32 %v824, 16
    %v915 = vrot.slane %v913, 6
    %v916 = vshll.u32 %v824, 16
    %v918 = vrot.slane %v916, 7
    %v919 = vor.u32 %v915, %v918
    %v920 = vrot.slane %v919, 2
    %v922 = vshll.u32 %v825, 16
    %v924 = vrot.slane %v922, 7
    %v925 = vsel %vm385, %v920, %v924
    %v927 = vshrl.u32 %v832, 16
    %v929 = vrot.slane %v927, 6
    %v930 = vshll.u32 %v832, 16
    %v932 = vrot.slane %v930, 7
    %v933 = vor.u32 %v929, %v932
    %v934 = vrot.slane %v933, 2
    %v936 = vshll.u32 %v833, 16
    %v938 = vrot.slane %v936, 7
    %v939 = vsel %vm385, %v934, %v938
    %v941 = vshrl.u32 %v840, 16
    %v943 = vrot.slane %v941, 6
    %v944 = vshll.u32 %v840, 16
    %v946 = vrot.slane %v944, 7
    %v947 = vor.u32 %v943, %v946
    %v948 = vrot.slane %v947, 2
    %v950 = vshll.u32 %v841, 16
    %v952 = vrot.slane %v950, 7
    %v953 = vsel %vm385, %v948, %v952
    %v954 = vcombine.low %v855, %v869
    %v955 = vcombine.low %v883, %v897
    %v957 = vunpack.c.l.s4 1983009808
    %v958 = vunpack.c.0.s8 %v957
    %v959 = vlaneseq
    %v960 = vshrl.u32 %v959, 7
    %v961 = vsub.s32 %v958, %v960
    %v962 = vrot.slane %v954, %v961
    %v964 = vunpack.c.l.s4 1983009808
    %v965 = vunpack.c.0.s8 %v964
    %v966 = vlaneseq
    %v967 = vshrl.u32 %v966, 7
    %v968 = vsub.s32 %v965, %v967
    %v969 = vrot.slane %v955, %v968
    %v970 = vcombine.low %v962, %v969
    %v971 = vcombine.low %v911, %v925
    %v972 = vcombine.low %v939, %v953
    %v974 = vunpack.c.l.s4 1983009808
    %v975 = vunpack.c.0.s8 %v974
    %v976 = vlaneseq
    %v977 = vshrl.u32 %v976, 7
    %v978 = vsub.s32 %v975, %v977
    %v979 = vrot.slane %v971, %v978
    %v981 = vunpack.c.l.s4 1983009808
    %v982 = vunpack.c.0.s8 %v981
    %v983 = vlaneseq
    %v984 = vshrl.u32 %v983, 7
    %v985 = vsub.s32 %v982, %v984
    %v986 = vrot.slane %v972, %v985
    %v987 = vcombine.low %v979, %v986
    %988 = vrot.lane.b32.xlu0 %v970, 32
    %v989 = vpop.permute.xlu0 %988
    %990 = vrot.lane.b32.xlu0 %v987, 32
    %v991 = vpop.permute.xlu0 %990
    %vm994 = vcmask 326912
    %995 = vst.msk [vmem:[#allocation4] sm:$0xff] %vm994, %v989
    %996 = vst.msk [vmem:[#allocation4 + $0x8] sm:$0xff] %vm994, %v991
    %v997 = vld [vmem:[%s216] sm:$0x6]
    %v998 = vld [vmem:[%s216 + $0x4] sm:$0x6]
    %v999 = vld [vmem:[%s216 + $0x8] sm:$0x6]
    %v1000 = vld [vmem:[%s216 + $0xc] sm:$0x6]
    %v1001 = vld [vmem:[%s216 + $0x18] sm:$0x6]
    %v1002 = vld [vmem:[%s216 + $0x1c] sm:$0x6]
    %v1003 = vld [vmem:[%s216 + $0x20] sm:$0x6]
    %v1004 = vld [vmem:[%s216 + $0x24] sm:$0x6]
    %v1014 = vunpack.c.l.s4 1983009808
    %v1015 = vunpack.c.0.s8 %v1014
    %v1016 = vlaneseq
    %v1017 = vshrl.u32 %v1016, 7
    %v1018 = vsub.s32 %v1015, %v1017
    %v1019 = vrot.slane %v997, %v1018
    %v1020 = vcombine.high %v1019, %v1019
    %v1022 = vunpack.c.l.s4 1983009808
    %v1023 = vunpack.c.0.s8 %v1022
    %v1024 = vlaneseq
    %v1025 = vshrl.u32 %v1024, 7
    %v1026 = vsub.s32 %v1023, %v1025
    %v1027 = vrot.slane %v998, %v1026
    %v1028 = vcombine.high %v1027, %v1027
    %v1030 = vunpack.c.l.s4 1983009808
    %v1031 = vunpack.c.0.s8 %v1030
    %v1032 = vlaneseq
    %v1033 = vshrl.u32 %v1032, 7
    %v1034 = vsub.s32 %v1031, %v1033
    %v1035 = vrot.slane %v999, %v1034
    %v1036 = vcombine.high %v1035, %v1035
    %v1038 = vunpack.c.l.s4 1983009808
    %v1039 = vunpack.c.0.s8 %v1038
    %v1040 = vlaneseq
    %v1041 = vshrl.u32 %v1040, 7
    %v1042 = vsub.s32 %v1039, %v1041
    %v1043 = vrot.slane %v1000, %v1042
    %v1044 = vcombine.high %v1043, %v1043
    %v1046 = vunpack.c.l.s4 1983009808
    %v1047 = vunpack.c.0.s8 %v1046
    %v1048 = vlaneseq
    %v1049 = vshrl.u32 %v1048, 7
    %v1050 = vsub.s32 %v1047, %v1049
    %v1051 = vrot.slane %v1001, %v1050
    %v1052 = vcombine.high %v1051, %v1051
    %v1054 = vunpack.c.l.s4 1983009808
    %v1055 = vunpack.c.0.s8 %v1054
    %v1056 = vlaneseq
    %v1057 = vshrl.u32 %v1056, 7
    %v1058 = vsub.s32 %v1055, %v1057
    %v1059 = vrot.slane %v1002, %v1058
    %v1060 = vcombine.high %v1059, %v1059
    %v1062 = vunpack.c.l.s4 1983009808
    %v1063 = vunpack.c.0.s8 %v1062
    %v1064 = vlaneseq
    %v1065 = vshrl.u32 %v1064, 7
    %v1066 = vsub.s32 %v1063, %v1065
    %v1067 = vrot.slane %v1003, %v1066
    %v1068 = vcombine.high %v1067, %v1067
    %v1070 = vunpack.c.l.s4 1983009808
    %v1071 = vunpack.c.0.s8 %v1070
    %v1072 = vlaneseq
    %v1073 = vshrl.u32 %v1072, 7
    %v1074 = vsub.s32 %v1071, %v1073
    %v1075 = vrot.slane %v1004, %v1074
    %v1076 = vcombine.high %v1075, %v1075
    %v1077 = vrot.slane %v1019, 7
    %v1078 = vrot.slane %v1077, 2
    %v1079 = vrot.slane %v1020, 7
    %v1080 = vsel %vm627, %v1078, %v1079
    %v1081 = vrot.slane %v1027, 7
    %v1082 = vrot.slane %v1081, 2
    %v1083 = vrot.slane %v1028, 7
    %v1084 = vsel %vm627, %v1082, %v1083
    %v1085 = vrot.slane %v1035, 7
    %v1086 = vrot.slane %v1085, 2
    %v1087 = vrot.slane %v1036, 7
    %v1088 = vsel %vm627, %v1086, %v1087
    %v1089 = vrot.slane %v1043, 7
    %v1090 = vrot.slane %v1089, 2
    %v1091 = vrot.slane %v1044, 7
    %v1092 = vsel %vm627, %v1090, %v1091
    %v1093 = vrot.slane %v1051, 7
    %v1094 = vrot.slane %v1093, 2
    %v1095 = vrot.slane %v1052, 7
    %v1096 = vsel %vm627, %v1094, %v1095
    %v1097 = vrot.slane %v1059, 7
    %v1098 = vrot.slane %v1097, 2
    %v1099 = vrot.slane %v1060, 7
    %v1100 = vsel %vm627, %v1098, %v1099
    %v1101 = vrot.slane %v1067, 7
    %v1102 = vrot.slane %v1101, 2
    %v1103 = vrot.slane %v1068, 7
    %v1104 = vsel %vm627, %v1102, %v1103
    %v1105 = vrot.slane %v1075, 7
    %v1106 = vrot.slane %v1105, 2
    %v1107 = vrot.slane %v1076, 7
    %v1108 = vsel %vm627, %v1106, %v1107
    %v1109 = vcombine.low %v1080, %v1084
    %v1110 = vcombine.low %v1088, %v1092
    %v1112 = vunpack.c.l.s4 1983009808
    %v1113 = vunpack.c.0.s8 %v1112
    %v1114 = vlaneseq
    %v1115 = vshrl.u32 %v1114, 7
    %v1116 = vsub.s32 %v1113, %v1115
    %v1117 = vrot.slane %v1109, %v1116
    %v1119 = vunpack.c.l.s4 1983009808
    %v1120 = vunpack.c.0.s8 %v1119
    %v1121 = vlaneseq
    %v1122 = vshrl.u32 %v1121, 7
    %v1123 = vsub.s32 %v1120, %v1122
    %v1124 = vrot.slane %v1110, %v1123
    %v1125 = vcombine.low %v1117, %v1124
    %v1126 = vcombine.low %v1096, %v1100
    %v1127 = vcombine.low %v1104, %v1108
    %v1129 = vunpack.c.l.s4 1983009808
    %v1130 = vunpack.c.0.s8 %v1129
    %v1131 = vlaneseq
    %v1132 = vshrl.u32 %v1131, 7
    %v1133 = vsub.s32 %v1130, %v1132
    %v1134 = vrot.slane %v1126, %v1133
    %v1136 = vunpack.c.l.s4 1983009808
    %v1137 = vunpack.c.0.s8 %v1136
    %v1138 = vlaneseq
    %v1139 = vshrl.u32 %v1138, 7
    %v1140 = vsub.s32 %v1137, %v1139
    %v1141 = vrot.slane %v1127, %v1140
    %v1142 = vcombine.low %v1134, %v1141
    %1143 = vrot.lane.b32.xlu0 %v1125, 40
    %v1144 = vpop.permute.xlu0 %1143
    %1145 = vrot.lane.b32.xlu0 %v1142, 40
    %v1146 = vpop.permute.xlu0 %1145
    %vm1149 = vcmask 392512
    %1150 = vst.msk [vmem:[#allocation4] sm:$0xff] %vm1149, %v1144
    %1151 = vst.msk [vmem:[#allocation4 + $0x8] sm:$0xff] %vm1149, %v1146
    %s1152 = scalar_lea.vmem [#allocation2], 8
    %v1153 = vld [vmem:[%s1152] sm:$0x3]
    %v1154 = vld [vmem:[%s1152 + $0x4] sm:$0x3]
    %v1155 = vld [vmem:[%s1152 + $0x8] sm:$0x3]
    %v1156 = vld [vmem:[%s1152 + $0xc] sm:$0x3]
    %v1157 = vld [vmem:[%s1152 + $0x18] sm:$0x3]
    %v1158 = vld [vmem:[%s1152 + $0x1c] sm:$0x3]
    %v1159 = vld [vmem:[%s1152 + $0x20] sm:$0x3]
    %v1160 = vld [vmem:[%s1152 + $0x24] sm:$0x3]
    %v1169 = vcombine.low %v1153, %v1154
    %v1170 = vcombine.low %v1155, %v1156
    %v1172 = vunpack.c.l.s4 1983009808
    %v1173 = vunpack.c.0.s8 %v1172
    %v1174 = vlaneseq
    %v1175 = vshrl.u32 %v1174, 7
    %v1176 = vsub.s32 %v1173, %v1175
    %v1177 = vrot.slane %v1169, %v1176
    %v1179 = vunpack.c.l.s4 1983009808
    %v1180 = vunpack.c.0.s8 %v1179
    %v1181 = vlaneseq
    %v1182 = vshrl.u32 %v1181, 7
    %v1183 = vsub.s32 %v1180, %v1182
    %v1184 = vrot.slane %v1170, %v1183
    %v1185 = vcombine.low %v1177, %v1184
    %v1186 = vcombine.low %v1157, %v1158
    %v1187 = vcombine.low %v1159, %v1160
    %v1189 = vunpack.c.l.s4 1983009808
    %v1190 = vunpack.c.0.s8 %v1189
    %v1191 = vlaneseq
    %v1192 = vshrl.u32 %v1191, 7
    %v1193 = vsub.s32 %v1190, %v1192
    %v1194 = vrot.slane %v1186, %v1193
    %v1196 = vunpack.c.l.s4 1983009808
    %v1197 = vunpack.c.0.s8 %v1196
    %v1198 = vlaneseq
    %v1199 = vshrl.u32 %v1198, 7
    %v1200 = vsub.s32 %v1197, %v1199
    %v1201 = vrot.slane %v1187, %v1200
    %v1202 = vcombine.low %v1194, %v1201
    %1203 = vrot.lane.b32.xlu0 %v1185, 48
    %v1204 = vpop.permute.xlu0 %1203
    %1205 = vrot.lane.b32.xlu0 %v1202, 48
    %v1206 = vpop.permute.xlu0 %1205
    %vm1209 = vcmask 458112
    %1210 = vst.msk [vmem:[#allocation4] sm:$0xff] %vm1209, %v1204
    %1211 = vst.msk [vmem:[#allocation4 + $0x8] sm:$0xff] %vm1209, %v1206
    %v1212 = vld [vmem:[%s1152] sm:$0x7]
    %v1213 = vld [vmem:[%s1152 + $0x4] sm:$0x7]
    %v1214 = vld [vmem:[%s1152 + $0x8] sm:$0x7]
    %v1215 = vld [vmem:[%s1152 + $0xc] sm:$0x7]
    %v1216 = vld [vmem:[%s1152 + $0x18] sm:$0x7]
    %v1217 = vld [vmem:[%s1152 + $0x1c] sm:$0x7]
    %v1218 = vld [vmem:[%s1152 + $0x20] sm:$0x7]
    %v1219 = vld [vmem:[%s1152 + $0x24] sm:$0x7]
    %v1229 = vunpack.c.l.s4 1983009808
    %v1230 = vunpack.c.0.s8 %v1229
    %v1231 = vlaneseq
    %v1232 = vshrl.u32 %v1231, 7
    %v1233 = vsub.s32 %v1230, %v1232
    %v1234 = vrot.slane %v1212, %v1233
    %v1235 = vcombine.high %v1234, %v1234
    %v1237 = vunpack.c.l.s4 1983009808
    %v1238 = vunpack.c.0.s8 %v1237
    %v1239 = vlaneseq
    %v1240 = vshrl.u32 %v1239, 7
    %v1241 = vsub.s32 %v1238, %v1240
    %v1242 = vrot.slane %v1213, %v1241
    %v1243 = vcombine.high %v1242, %v1242
    %v1245 = vunpack.c.l.s4 1983009808
    %v1246 = vunpack.c.0.s8 %v1245
    %v1247 = vlaneseq
    %v1248 = vshrl.u32 %v1247, 7
    %v1249 = vsub.s32 %v1246, %v1248
    %v1250 = vrot.slane %v1214, %v1249
    %v1251 = vcombine.high %v1250, %v1250
    %v1253 = vunpack.c.l.s4 1983009808
    %v1254 = vunpack.c.0.s8 %v1253
    %v1255 = vlaneseq
    %v1256 = vshrl.u32 %v1255, 7
    %v1257 = vsub.s32 %v1254, %v1256
    %v1258 = vrot.slane %v1215, %v1257
    %v1259 = vcombine.high %v1258, %v1258
    %v1261 = vunpack.c.l.s4 1983009808
    %v1262 = vunpack.c.0.s8 %v1261
    %v1263 = vlaneseq
    %v1264 = vshrl.u32 %v1263, 7
    %v1265 = vsub.s32 %v1262, %v1264
    %v1266 = vrot.slane %v1216, %v1265
    %v1267 = vcombine.high %v1266, %v1266
    %v1269 = vunpack.c.l.s4 1983009808
    %v1270 = vunpack.c.0.s8 %v1269
    %v1271 = vlaneseq
    %v1272 = vshrl.u32 %v1271, 7
    %v1273 = vsub.s32 %v1270, %v1272
    %v1274 = vrot.slane %v1217, %v1273
    %v1275 = vcombine.high %v1274, %v1274
    %v1277 = vunpack.c.l.s4 1983009808
    %v1278 = vunpack.c.0.s8 %v1277
    %v1279 = vlaneseq
    %v1280 = vshrl.u32 %v1279, 7
    %v1281 = vsub.s32 %v1278, %v1280
    %v1282 = vrot.slane %v1218, %v1281
    %v1283 = vcombine.high %v1282, %v1282
    %v1285 = vunpack.c.l.s4 1983009808
    %v1286 = vunpack.c.0.s8 %v1285
    %v1287 = vlaneseq
    %v1288 = vshrl.u32 %v1287, 7
    %v1289 = vsub.s32 %v1286, %v1288
    %v1290 = vrot.slane %v1219, %v1289
    %v1291 = vcombine.high %v1290, %v1290
    %v1293 = vshrl.u32 %v1234, 16
    %v1295 = vrot.slane %v1293, 6
    %v1296 = vshll.u32 %v1234, 16
    %v1298 = vrot.slane %v1296, 7
    %v1299 = vor.u32 %v1295, %v1298
    %v1300 = vrot.slane %v1299, 2
    %v1302 = vshll.u32 %v1235, 16
    %v1304 = vrot.slane %v1302, 7
    %v1305 = vsel %vm385, %v1300, %v1304
    %v1307 = vshrl.u32 %v1242, 16
    %v1309 = vrot.slane %v1307, 6
    %v1310 = vshll.u32 %v1242, 16
    %v1312 = vrot.slane %v1310, 7
    %v1313 = vor.u32 %v1309, %v1312
    %v1314 = vrot.slane %v1313, 2
    %v1316 = vshll.u32 %v1243, 16
    %v1318 = vrot.slane %v1316, 7
    %v1319 = vsel %vm385, %v1314, %v1318
    %v1321 = vshrl.u32 %v1250, 16
    %v1323 = vrot.slane %v1321, 6
    %v1324 = vshll.u32 %v1250, 16
    %v1326 = vrot.slane %v1324, 7
    %v1327 = vor.u32 %v1323, %v1326
    %v1328 = vrot.slane %v1327, 2
    %v1330 = vshll.u32 %v1251, 16
    %v1332 = vrot.slane %v1330, 7
    %v1333 = vsel %vm385, %v1328, %v1332
    %v1335 = vshrl.u32 %v1258, 16
    %v1337 = vrot.slane %v1335, 6
    %v1338 = vshll.u32 %v1258, 16
    %v1340 = vrot.slane %v1338, 7
    %v1341 = vor.u32 %v1337, %v1340
    %v1342 = vrot.slane %v1341, 2
    %v1344 = vshll.u32 %v1259, 16
    %v1346 = vrot.slane %v1344, 7
    %v1347 = vsel %vm385, %v1342, %v1346
    %v1349 = vshrl.u32 %v1266, 16
    %v1351 = vrot.slane %v1349, 6
    %v1352 = vshll.u32 %v1266, 16
    %v1354 = vrot.slane %v1352, 7
    %v1355 = vor.u32 %v1351, %v1354
    %v1356 = vrot.slane %v1355, 2
    %v1358 = vshll.u32 %v1267, 16
    %v1360 = vrot.slane %v1358, 7
    %v1361 = vsel %vm385, %v1356, %v1360
    %v1363 = vshrl.u32 %v1274, 16
    %v1365 = vrot.slane %v1363, 6
    %v1366 = vshll.u32 %v1274, 16
    %v1368 = vrot.slane %v1366, 7
    %v1369 = vor.u32 %v1365, %v1368
    %v1370 = vrot.slane %v1369, 2
    %v1372 = vshll.u32 %v1275, 16
    %v1374 = vrot.slane %v1372, 7
    %v1375 = vsel %vm385, %v1370, %v1374
    %v1377 = vshrl.u32 %v1282, 16
    %v1379 = vrot.slane %v1377, 6
    %v1380 = vshll.u32 %v1282, 16
    %v1382 = vrot.slane %v1380, 7
    %v1383 = vor.u32 %v1379, %v1382
    %v1384 = vrot.slane %v1383, 2
    %v1386 = vshll.u32 %v1283, 16
    %v1388 = vrot.slane %v1386, 7
    %v1389 = vsel %vm385, %v1384, %v1388
    %v1391 = vshrl.u32 %v1290, 16
    %v1393 = vrot.slane %v1391, 6
    %v1394 = vshll.u32 %v1290, 16
    %v1396 = vrot.slane %v1394, 7
    %v1397 = vor.u32 %v1393, %v1396
    %v1398 = vrot.slane %v1397, 2
    %v1400 = vshll.u32 %v1291, 16
    %v1402 = vrot.slane %v1400, 7
    %v1403 = vsel %vm385, %v1398, %v1402
    %v1404 = vcombine.low %v1305, %v1319
    %v1405 = vcombine.low %v1333, %v1347
    %v1407 = vunpack.c.l.s4 1983009808
    %v1408 = vunpack.c.0.s8 %v1407
    %v1409 = vlaneseq
    %v1410 = vshrl.u32 %v1409, 7
    %v1411 = vsub.s32 %v1408, %v1410
    %v1412 = vrot.slane %v1404, %v1411
    %v1414 = vunpack.c.l.s4 1983009808
    %v1415 = vunpack.c.0.s8 %v1414
    %v1416 = vlaneseq
    %v1417 = vshrl.u32 %v1416, 7
    %v1418 = vsub.s32 %v1415, %v1417
    %v1419 = vrot.slane %v1405, %v1418
    %v1420 = vcombine.low %v1412, %v1419
    %v1421 = vcombine.low %v1361, %v1375
    %v1422 = vcombine.low %v1389, %v1403
    %v1424 = vunpack.c.l.s4 1983009808
    %v1425 = vunpack.c.0.s8 %v1424
    %v1426 = vlaneseq
    %v1427 = vshrl.u32 %v1426, 7
    %v1428 = vsub.s32 %v1425, %v1427
    %v1429 = vrot.slane %v1421, %v1428
    %v1431 = vunpack.c.l.s4 1983009808
    %v1432 = vunpack.c.0.s8 %v1431
    %v1433 = vlaneseq
    %v1434 = vshrl.u32 %v1433, 7
    %v1435 = vsub.s32 %v1432, %v1434
    %v1436 = vrot.slane %v1422, %v1435
    %v1437 = vcombine.low %v1429, %v1436
    %1438 = vrot.lane.b32.xlu0 %v1420, 56
    %v1439 = vpop.permute.xlu0 %1438
    %1440 = vrot.lane.b32.xlu0 %v1437, 56
    %v1441 = vpop.permute.xlu0 %1440
    %vm1444 = vcmask 523712
    %1445 = vst.msk [vmem:[#allocation4] sm:$0xff] %vm1444, %v1439
    %1446 = vst.msk [vmem:[#allocation4 + $0x8] sm:$0xff] %vm1444, %v1441
    %v1447 = vld [vmem:[%s1152] sm:$0x6]
    %v1448 = vld [vmem:[%s1152 + $0x4] sm:$0x6]
    %v1449 = vld [vmem:[%s1152 + $0x8] sm:$0x6]
    %v1450 = vld [vmem:[%s1152 + $0xc] sm:$0x6]
    %v1451 = vld [vmem:[%s1152 + $0x18] sm:$0x6]
    %v1452 = vld [vmem:[%s1152 + $0x1c] sm:$0x6]
    %v1453 = vld [vmem:[%s1152 + $0x20] sm:$0x6]
    %v1454 = vld [vmem:[%s1152 + $0x24] sm:$0x6]
    %v1464 = vunpack.c.l.s4 1983009808
    %v1465 = vunpack.c.0.s8 %v1464
    %v1466 = vlaneseq
    %v1467 = vshrl.u32 %v1466, 7
    %v1468 = vsub.s32 %v1465, %v1467
    %v1469 = vrot.slane %v1447, %v1468
    %v1470 = vcombine.high %v1469, %v1469
    %v1472 = vunpack.c.l.s4 1983009808
    %v1473 = vunpack.c.0.s8 %v1472
    %v1474 = vlaneseq
    %v1475 = vshrl.u32 %v1474, 7
    %v1476 = vsub.s32 %v1473, %v1475
    %v1477 = vrot.slane %v1448, %v1476
    %v1478 = vcombine.high %v1477, %v1477
    %v1480 = vunpack.c.l.s4 1983009808
    %v1481 = vunpack.c.0.s8 %v1480
    %v1482 = vlaneseq
    %v1483 = vshrl.u32 %v1482, 7
    %v1484 = vsub.s32 %v1481, %v1483
    %v1485 = vrot.slane %v1449, %v1484
    %v1486 = vcombine.high %v1485, %v1485
    %v1488 = vunpack.c.l.s4 1983009808
    %v1489 = vunpack.c.0.s8 %v1488
    %v1490 = vlaneseq
    %v1491 = vshrl.u32 %v1490, 7
    %v1492 = vsub.s32 %v1489, %v1491
    %v1493 = vrot.slane %v1450, %v1492
    %v1494 = vcombine.high %v1493, %v1493
    %v1496 = vunpack.c.l.s4 1983009808
    %v1497 = vunpack.c.0.s8 %v1496
    %v1498 = vlaneseq
    %v1499 = vshrl.u32 %v1498, 7
    %v1500 = vsub.s32 %v1497, %v1499
    %v1501 = vrot.slane %v1451, %v1500
    %v1502 = vcombine.high %v1501, %v1501
    %v1504 = vunpack.c.l.s4 1983009808
    %v1505 = vunpack.c.0.s8 %v1504
    %v1506 = vlaneseq
    %v1507 = vshrl.u32 %v1506, 7
    %v1508 = vsub.s32 %v1505, %v1507
    %v1509 = vrot.slane %v1452, %v1508
    %v1510 = vcombine.high %v1509, %v1509
    %v1512 = vunpack.c.l.s4 1983009808
    %v1513 = vunpack.c.0.s8 %v1512
    %v1514 = vlaneseq
    %v1515 = vshrl.u32 %v1514, 7
    %v1516 = vsub.s32 %v1513, %v1515
    %v1517 = vrot.slane %v1453, %v1516
    %v1518 = vcombine.high %v1517, %v1517
    %v1520 = vunpack.c.l.s4 1983009808
    %v1521 = vunpack.c.0.s8 %v1520
    %v1522 = vlaneseq
    %v1523 = vshrl.u32 %v1522, 7
    %v1524 = vsub.s32 %v1521, %v1523
    %v1525 = vrot.slane %v1454, %v1524
    %v1526 = vcombine.high %v1525, %v1525
    %v1527 = vrot.slane %v1469, 7
    %v1528 = vrot.slane %v1527, 2
    %v1529 = vrot.slane %v1470, 7
    %v1530 = vsel %vm627, %v1528, %v1529
    %v1531 = vrot.slane %v1477, 7
    %v1532 = vrot.slane %v1531, 2
    %v1533 = vrot.slane %v1478, 7
    %v1534 = vsel %vm627, %v1532, %v1533
    %v1535 = vrot.slane %v1485, 7
    %v1536 = vrot.slane %v1535, 2
    %v1537 = vrot.slane %v1486, 7
    %v1538 = vsel %vm627, %v1536, %v1537
    %v1539 = vrot.slane %v1493, 7
    %v1540 = vrot.slane %v1539, 2
    %v1541 = vrot.slane %v1494, 7
    %v1542 = vsel %vm627, %v1540, %v1541
    %v1543 = vrot.slane %v1501, 7
    %v1544 = vrot.slane %v1543, 2
    %v1545 = vrot.slane %v1502, 7
    %v1546 = vsel %vm627, %v1544, %v1545
    %v1547 = vrot.slane %v1509, 7
    %v1548 = vrot.slane %v1547, 2
    %v1549 = vrot.slane %v1510, 7
    %v1550 = vsel %vm627, %v1548, %v1549
    %v1551 = vrot.slane %v1517, 7
    %v1552 = vrot.slane %v1551, 2
    %v1553 = vrot.slane %v1518, 7
    %v1554 = vsel %vm627, %v1552, %v1553
    %v1555 = vrot.slane %v1525, 7
    %v1556 = vrot.slane %v1555, 2
    %v1557 = vrot.slane %v1526, 7
    %v1558 = vsel %vm627, %v1556, %v1557
    %v1559 = vcombine.low %v1530, %v1534
    %v1560 = vcombine.low %v1538, %v1542
    %v1562 = vunpack.c.l.s4 1983009808
    %v1563 = vunpack.c.0.s8 %v1562
    %v1564 = vlaneseq
    %v1565 = vshrl.u32 %v1564, 7
    %v1566 = vsub.s32 %v1563, %v1565
    %v1567 = vrot.slane %v1559, %v1566
    %v1569 = vunpack.c.l.s4 1983009808
    %v1570 = vunpack.c.0.s8 %v1569
    %v1571 = vlaneseq
    %v1572 = vshrl.u32 %v1571, 7
    %v1573 = vsub.s32 %v1570, %v1572
    %v1574 = vrot.slane %v1560, %v1573
    %v1575 = vcombine.low %v1567, %v1574
    %v1576 = vcombine.low %v1546, %v1550
    %v1577 = vcombine.low %v1554, %v1558
    %v1579 = vunpack.c.l.s4 1983009808
    %v1580 = vunpack.c.0.s8 %v1579
    %v1581 = vlaneseq
    %v1582 = vshrl.u32 %v1581, 7
    %v1583 = vsub.s32 %v1580, %v1582
    %v1584 = vrot.slane %v1576, %v1583
    %v1586 = vunpack.c.l.s4 1983009808
    %v1587 = vunpack.c.0.s8 %v1586
    %v1588 = vlaneseq
    %v1589 = vshrl.u32 %v1588, 7
    %v1590 = vsub.s32 %v1587, %v1589
    %v1591 = vrot.slane %v1577, %v1590
    %v1592 = vcombine.low %v1584, %v1591
    %1593 = vrot.lane.b32.xlu0 %v1575, 64
    %v1594 = vpop.permute.xlu0 %1593
    %1595 = vrot.lane.b32.xlu0 %v1592, 64
    %v1596 = vpop.permute.xlu0 %1595
    %vm1599 = vcmask 589312
    %1600 = vst.msk [vmem:[#allocation4] sm:$0xff] %vm1599, %v1594
    %1601 = vst.msk [vmem:[#allocation4 + $0x8] sm:$0xff] %vm1599, %v1596
    %v1602 = vld [vmem:[#allocation4] sm:$0xff]
    %v1603 = vld [vmem:[#allocation4 + $0x8] sm:$0xff]
    %v1604 = vld [vmem:[%s1] sm:$0xf]
    %v1605 = vld [vmem:[%s1 + $0x4] sm:$0xf]
    %v1606 = vld [vmem:[%s1 + $0x8] sm:$0xf]
    %v1607 = vld [vmem:[%s1 + $0xc] sm:$0xf]
    %v1608 = vld [vmem:[%s1 + $0x10] sm:$0xf]
    %v1609 = vld [vmem:[%s1 + $0x14] sm:$0xf]
    %v1610 = vld [vmem:[%s1 + $0x18] sm:$0xf]
    %v1611 = vld [vmem:[%s1 + $0x1c] sm:$0xf]
    %v1612 = vld [vmem:[%s1 + $0x20] sm:$0xf]
    %v1613 = vld [vmem:[%s2] sm:$0x1]
    %v1615 = vlaneseq
    %v1616 = vshrl.u32 %v1615, 7
    %v1617 = vsub.s32 0, %v1616
    %v1618 = vrot.slane %v1613, %v1617
    %v1629 = vunpack.c.l.b16 %v1604
    %v1630 = vunpack.c.l.b16 %v1605
    %v1631 = vunpack.c.l.b16 %v1606
    %v1632 = vunpack.c.l.b16 %v1607
    %v1633 = vunpack.c.l.b16 %v1608
    %v1634 = vunpack.c.l.b16 %v1609
    %v1635 = vunpack.c.l.b16 %v1610
    %v1636 = vunpack.c.l.b16 %v1611
    %v1637 = vunpack.c.l.b16 %v1612
    %v1638 = vpack.c.b16 %v1630, %v1629
    %v1639 = vpack.c.b16 %v1632, %v1631
    %v1640 = vpack.c.b16 %v1634, %v1633
    %v1641 = vpack.c.b16 %v1636, %v1635
    %v1642 = vpack.c.b16 %v1637, %v1637
    %vm1647 = vcmask 588800
    %v1649 = vsel %vm1647, %v1602, 0
    %v1652 = vsel %vm1647, %v1603, 0
    %vm1654 = vcmask 1043456
    %v1656 = vsel %vm1654, %v1642, 0
    %1658 = vmatprep.subr.bf16.mxu0 0
    %1659 = vmatpush1.bf16.msra.mxu0 %v1638
    %1660 = vmatprep.subr.bf16.mxu0 0
    %1661 = vmatpush1.bf16.msra.mxu0 %v1639
    %1662 = vmatprep.subr.bf16.mxu0 0
    %1663 = vmatpush1.bf16.msra.mxu0 %v1640
    %1664 = vmatprep.subr.bf16.mxu0 0
    %1665 = vmatpush1.bf16.msra.mxu0 %v1641
    %1666 = vmatprep.subr.bf16.mxu0 0
    %1667 = vmatpush1.bf16.msra.mxu0 %v1656
    %1668 = vmatprep.subr.bf16.mxu0 0
    %1669 = vmatpush1.bf16.msra.mxu0 0
    %1670 = vmatprep.subr.bf16.mxu0 0
    %1671 = vmatpush1.bf16.msra.mxu0 0
    %1672 = vmatprep.subr.bf16.mxu0 0
    %1673 = vmatpush1.bf16.msra.mxu0 0
    %1674 = vmatprep.subr.bf16.mxu0 0
    %1675 = vmatpush1.bf16.msra.mxu0 0
    %1676 = vmatprep.subr.bf16.mxu0 0
    %1677 = vmatpush1.bf16.msra.mxu0 0
    %1678 = vmatprep.subr.bf16.mxu0 0
    %1679 = vmatpush1.bf16.msra.mxu0 0
    %1680 = vmatprep.subr.bf16.mxu0 0
    %1681 = vmatpush1.bf16.msra.mxu0 0
    %1682 = vmatprep.subr.bf16.mxu0 0
    %1683 = vmatpush1.bf16.msra.mxu0 0
    %1684 = vmatprep.subr.bf16.mxu0 0
    %1685 = vmatpush1.bf16.msra.mxu0 0
    %1686 = vmatprep.subr.bf16.mxu0 0
    %1687 = vmatpush1.bf16.msra.mxu0 0
    %1688 = vmatprep.subr.bf16.mxu0 0
    %1689 = vmatpush1.bf16.msra.mxu0 0
    %1690 = vmatprep.mubr.bf16.mxu0 0
    %1691 = vmatmul.mubr.bf16.gmra.mrb[0].mxu0 %v1649
    %v1692 = vpop.f32.mrb[0].mxu0
    %v1693 = vadd.f32 %v1618, %v1692
    %v1694 = vpop.f32.mrb[0].mxu0
    %v1695 = vpop.f32.mrb[0].mxu0
    %v1696 = vadd.f32 %v1618, %v1695
    %v1697 = vpop.f32.mrb[0].mxu0
    %1698 = vmatprep.mubr.bf16.mxu0 0
    %1699 = vmatmul.mubr.bf16.gmra.mrb[0].mxu0 %v1652
    %v1700 = vpop.f32.mrb[0].mxu0
    %v1701 = vadd.f32 %v1618, %v1700
    %v1702 = vpop.f32.mrb[0].mxu0
    %v1703 = vpop.f32.mrb[0].mxu0
    %v1704 = vadd.f32 %v1618, %v1703
    %v1705 = vpop.f32.mrb[0].mxu0
    %1706 = vdwg.mxu0
    %v1711 = vcombine.high %v1693, %v1693
    %v1712 = vcombine.high %v1696, %v1696
    %v1713 = vcombine.high %v1701, %v1701
    %v1714 = vcombine.high %v1704, %v1704
    %v1719 = vpack.c.bf16 %v1693, %v1693
    %v1720 = vpack.c.bf16 %v1711, %v1711
    %v1721 = vpack.c.bf16 %v1696, %v1696
    %v1722 = vpack.c.bf16 %v1712, %v1712
    %v1723 = vpack.c.bf16 %v1701, %v1701
    %v1724 = vpack.c.bf16 %v1713, %v1713
    %v1725 = vpack.c.bf16 %v1704, %v1704
    %v1726 = vpack.c.bf16 %v1714, %v1714
    %vm1727 = vcmask 24576
    %vm1728 = vmand %vm1727, %vm45
    %v1729 = vld [vmem:[#allocation3] sm:$0x1]
    %v1730 = vsel %vm1728, 0, %v1729
    %1731 = vst [vmem:[#allocation3] sm:$0x1] %v1730
    %v1732 = vld [vmem:[#allocation3 + $0x4] sm:$0x1]
    %v1733 = vsel %vm1728, 0, %v1732
    %1734 = vst [vmem:[#allocation3 + $0x4] sm:$0x1] %v1733
    %v1735 = vld [vmem:[#allocation3 + $0x8] sm:$0x1]
    %v1736 = vsel %vm1728, 0, %v1735
    %1737 = vst [vmem:[#allocation3 + $0x8] sm:$0x1] %v1736
    %v1738 = vld [vmem:[#allocation3 + $0xc] sm:$0x1]
    %v1739 = vsel %vm1728, 0, %v1738
    %1740 = vst [vmem:[#allocation3 + $0xc] sm:$0x1] %v1739
    %v1741 = vld [vmem:[#allocation3 + $0x10] sm:$0x1]
    %v1742 = vsel %vm1728, 0, %v1741
    %1743 = vst [vmem:[#allocation3 + $0x10] sm:$0x1] %v1742
    %v1744 = vld [vmem:[#allocation3 + $0x14] sm:$0x1]
    %v1745 = vsel %vm1728, 0, %v1744
    %1746 = vst [vmem:[#allocation3 + $0x14] sm:$0x1] %v1745
    %v1747 = vld [vmem:[#allocation3 + $0x18] sm:$0x1]
    %v1748 = vsel %vm1728, 0, %v1747
    %1749 = vst [vmem:[#allocation3 + $0x18] sm:$0x1] %v1748
    %v1750 = vld [vmem:[#allocation3 + $0x1c] sm:$0x1]
    %v1751 = vsel %vm1728, 0, %v1750
    %1752 = vst [vmem:[#allocation3 + $0x1c] sm:$0x1] %v1751
    %v1753 = vld [vmem:[#allocation3 + $0x20] sm:$0x1]
    %v1754 = vsel %vm1728, 0, %v1753
    %1755 = vst [vmem:[#allocation3 + $0x20] sm:$0x1] %v1754
    %v1756 = vld [vmem:[#allocation3 + $0x24] sm:$0x1]
    %v1757 = vsel %vm1728, 0, %v1756
    %1758 = vst [vmem:[#allocation3 + $0x24] sm:$0x1] %v1757
    %v1759 = vld [vmem:[#allocation3 + $0x28] sm:$0x1]
    %v1760 = vsel %vm1728, 0, %v1759
    %1761 = vst [vmem:[#allocation3 + $0x28] sm:$0x1] %v1760
    %v1762 = vld [vmem:[#allocation3 + $0x2c] sm:$0x1]
    %v1763 = vsel %vm1728, 0, %v1762
    %1764 = vst [vmem:[#allocation3 + $0x2c] sm:$0x1] %v1763
    %vm1765 = vcmask 26626
    %vm1766 = vmand %vm1765, %vm84
    %v1767 = vld [vmem:[#allocation3] sm:$0x4]
    %v1768 = vsel %vm1766, 0, %v1767
    %1769 = vst [vmem:[#allocation3] sm:$0x4] %v1768
    %v1770 = vld [vmem:[#allocation3 + $0x4] sm:$0x4]
    %v1771 = vsel %vm1766, 0, %v1770
    %1772 = vst [vmem:[#allocation3 + $0x4] sm:$0x4] %v1771
    %v1773 = vld [vmem:[#allocation3 + $0x8] sm:$0x4]
    %v1774 = vsel %vm1766, 0, %v1773
    %1775 = vst [vmem:[#allocation3 + $0x8] sm:$0x4] %v1774
    %v1776 = vld [vmem:[#allocation3 + $0xc] sm:$0x4]
    %v1777 = vsel %vm1766, 0, %v1776
    %1778 = vst [vmem:[#allocation3 + $0xc] sm:$0x4] %v1777
    %v1779 = vld [vmem:[#allocation3 + $0x10] sm:$0x4]
    %v1780 = vsel %vm1766, 0, %v1779
    %1781 = vst [vmem:[#allocation3 + $0x10] sm:$0x4] %v1780
    %v1782 = vld [vmem:[#allocation3 + $0x14] sm:$0x4]
    %v1783 = vsel %vm1766, 0, %v1782
    %1784 = vst [vmem:[#allocation3 + $0x14] sm:$0x4] %v1783
    %v1785 = vld [vmem:[#allocation3 + $0x18] sm:$0x4]
    %v1786 = vsel %vm1766, 0, %v1785
    %1787 = vst [vmem:[#allocation3 + $0x18] sm:$0x4] %v1786
    %v1788 = vld [vmem:[#allocation3 + $0x1c] sm:$0x4]
    %v1789 = vsel %vm1766, 0, %v1788
    %1790 = vst [vmem:[#allocation3 + $0x1c] sm:$0x4] %v1789
    %v1791 = vld [vmem:[#allocation3 + $0x20] sm:$0x4]
    %v1792 = vsel %vm1766, 0, %v1791
    %1793 = vst [vmem:[#allocation3 + $0x20] sm:$0x4] %v1792
    %v1794 = vld [vmem:[#allocation3 + $0x24] sm:$0x4]
    %v1795 = vsel %vm1766, 0, %v1794
    %1796 = vst [vmem:[#allocation3 + $0x24] sm:$0x4] %v1795
    %v1797 = vld [vmem:[#allocation3 + $0x28] sm:$0x4]
    %v1798 = vsel %vm1766, 0, %v1797
    %1799 = vst [vmem:[#allocation3 + $0x28] sm:$0x4] %v1798
    %v1800 = vld [vmem:[#allocation3 + $0x2c] sm:$0x4]
    %v1801 = vsel %vm1766, 0, %v1800
    %1802 = vst [vmem:[#allocation3 + $0x2c] sm:$0x4] %v1801
    %vm1803 = vcmask 26624
    %1804 = vst.msk [vmem:[#allocation3] sm:$0x7] %vm1803, 0
    %1805 = vst.msk [vmem:[#allocation3 + $0x18] sm:$0x7] %vm1803, 0
    %s1806 = scalar_lea.vmem [#allocation3], 20
    %1807 = vst.msk [vmem:[%s1806] sm:$0x7] %vm1803, 0
    %1808 = vst.msk [vmem:[%s1806 + $0x18] sm:$0x7] %vm1803, 0
    %v1817 = vunpack.c.l.b16 %v1719
    %v1818 = vunpack.c.l.b16 %v1720
    %v1819 = vunpack.c.l.b16 %v1721
    %v1820 = vunpack.c.l.b16 %v1722
    %v1821 = vunpack.c.l.b16 %v1723
    %v1822 = vunpack.c.l.b16 %v1724
    %v1823 = vunpack.c.l.b16 %v1725
    %v1824 = vunpack.c.l.b16 %v1726
    %v1825 = vpack.c.b16 %v1817, %v1817
    %v1826 = vpack.c.b16 %v1818, %v1818
    %v1827 = vpack.c.b16 %v1819, %v1819
    %v1828 = vpack.c.b16 %v1820, %v1820
    %v1829 = vpack.c.b16 %v1821, %v1821
    %v1830 = vpack.c.b16 %v1822, %v1822
    %v1831 = vpack.c.b16 %v1823, %v1823
    %v1832 = vpack.c.b16 %v1824, %v1824
    %v1834 = vshrl.u32 %v1825, 16
    %v1836 = vrot.slane %v1834, 7
    %v1837 = vshll.u32 %v1825, 16
    %v1839 = vor.u32 %v1836, %v1837
    %v1841 = vshrl.u32 %v1826, 16
    %v1843 = vrot.slane %v1841, 7
    %v1844 = vshll.u32 %v1826, 16
    %v1846 = vor.u32 %v1843, %v1844
    %v1848 = vshrl.u32 %v1827, 16
    %v1850 = vrot.slane %v1848, 7
    %v1851 = vshll.u32 %v1827, 16
    %v1853 = vor.u32 %v1850, %v1851
    %v1855 = vshrl.u32 %v1828, 16
    %v1857 = vrot.slane %v1855, 7
    %v1858 = vshll.u32 %v1828, 16
    %v1860 = vor.u32 %v1857, %v1858
    %v1862 = vshrl.u32 %v1829, 16
    %v1864 = vrot.slane %v1862, 7
    %v1865 = vshll.u32 %v1829, 16
    %v1867 = vor.u32 %v1864, %v1865
    %v1869 = vshrl.u32 %v1830, 16
    %v1871 = vrot.slane %v1869, 7
    %v1872 = vshll.u32 %v1830, 16
    %v1874 = vor.u32 %v1871, %v1872
    %v1876 = vshrl.u32 %v1831, 16
    %v1878 = vrot.slane %v1876, 7
    %v1879 = vshll.u32 %v1831, 16
    %v1881 = vor.u32 %v1878, %v1879
    %v1883 = vshrl.u32 %v1832, 16
    %v1885 = vrot.slane %v1883, 7
    %v1886 = vshll.u32 %v1832, 16
    %v1888 = vor.u32 %v1885, %v1886
    %s1897 = scalar_lea.vmem [#allocation3], 4
    %vm1898 = vcmask 26624
    %vm1899 = vmand %vm1898, %vm218
    %v1900 = vld [vmem:[%s1897] sm:$0x7]
    %v1901 = vsel %vm1899, %v1839, %v1900
    %1902 = vst [vmem:[%s1897] sm:$0x7] %v1901
    %v1903 = vld [vmem:[%s1897 + $0x4] sm:$0x7]
    %v1904 = vsel %vm1899, %v1846, %v1903
    %1905 = vst [vmem:[%s1897 + $0x4] sm:$0x7] %v1904
    %v1906 = vld [vmem:[%s1897 + $0x8] sm:$0x7]
    %v1907 = vsel %vm1899, %v1853, %v1906
    %1908 = vst [vmem:[%s1897 + $0x8] sm:$0x7] %v1907
    %v1909 = vld [vmem:[%s1897 + $0xc] sm:$0x7]
    %v1910 = vsel %vm1899, %v1860, %v1909
    %1911 = vst [vmem:[%s1897 + $0xc] sm:$0x7] %v1910
    %v1912 = vld [vmem:[%s1897 + $0x18] sm:$0x7]
    %v1913 = vsel %vm1899, %v1867, %v1912
    %1914 = vst [vmem:[%s1897 + $0x18] sm:$0x7] %v1913
    %v1915 = vld [vmem:[%s1897 + $0x1c] sm:$0x7]
    %v1916 = vsel %vm1899, %v1874, %v1915
    %1917 = vst [vmem:[%s1897 + $0x1c] sm:$0x7] %v1916
    %v1918 = vld [vmem:[%s1897 + $0x20] sm:$0x7]
    %v1919 = vsel %vm1899, %v1881, %v1918
    %1920 = vst [vmem:[%s1897 + $0x20] sm:$0x7] %v1919
    %v1921 = vld [vmem:[%s1897 + $0x24] sm:$0x7]
    %v1922 = vsel %vm1899, %v1888, %v1921
    %1923 = vst [vmem:[%s1897 + $0x24] sm:$0x7] %v1922
    %v1924 = vld [vmem:[#allocation3] sm:$0x3]
    %v1925 = vld [vmem:[#allocation3 + $0x4] sm:$0x3]
    %v1926 = vld [vmem:[#allocation3 + $0x8] sm:$0x3]
    %v1927 = vld [vmem:[#allocation3 + $0xc] sm:$0x3]
    %v1928 = vld [vmem:[#allocation3 + $0x18] sm:$0x3]
    %v1929 = vld [vmem:[#allocation3 + $0x1c] sm:$0x3]
    %v1930 = vld [vmem:[#allocation3 + $0x20] sm:$0x3]
    %v1931 = vld [vmem:[#allocation3 + $0x24] sm:$0x3]
    %v1940 = vcombine.low %v1924, %v1925
    %v1941 = vcombine.low %v1926, %v1927
    %v1943 = vunpack.c.l.s4 1983009808
    %v1944 = vunpack.c.0.s8 %v1943
    %v1945 = vlaneseq
    %v1946 = vshrl.u32 %v1945, 7
    %v1947 = vsub.s32 %v1944, %v1946
    %v1948 = vrot.slane %v1940, %v1947
    %v1950 = vunpack.c.l.s4 1983009808
    %v1951 = vunpack.c.0.s8 %v1950
    %v1952 = vlaneseq
    %v1953 = vshrl.u32 %v1952, 7
    %v1954 = vsub.s32 %v1951, %v1953
    %v1955 = vrot.slane %v1941, %v1954
    %v1956 = vcombine.low %v1948, %v1955
    %v1957 = vcombine.low %v1928, %v1929
    %v1958 = vcombine.low %v1930, %v1931
    %v1960 = vunpack.c.l.s4 1983009808
    %v1961 = vunpack.c.0.s8 %v1960
    %v1962 = vlaneseq
    %v1963 = vshrl.u32 %v1962, 7
    %v1964 = vsub.s32 %v1961, %v1963
    %v1965 = vrot.slane %v1957, %v1964
    %v1967 = vunpack.c.l.s4 1983009808
    %v1968 = vunpack.c.0.s8 %v1967
    %v1969 = vlaneseq
    %v1970 = vshrl.u32 %v1969, 7
    %v1971 = vsub.s32 %v1968, %v1970
    %v1972 = vrot.slane %v1958, %v1971
    %v1973 = vcombine.low %v1965, %v1972
    %vm1976 = vcmask 31744
    %1977 = vst.msk [vmem:[#allocation5] sm:$0xff] %vm1976, %v1956
    %1978 = vst.msk [vmem:[#allocation5 + $0x8] sm:$0xff] %vm1976, %v1973
    %v1979 = vld [vmem:[#allocation3] sm:$0x7]
    %v1980 = vld [vmem:[#allocation3 + $0x4] sm:$0x7]
    %v1981 = vld [vmem:[#allocation3 + $0x8] sm:$0x7]
    %v1982 = vld [vmem:[#allocation3 + $0xc] sm:$0x7]
    %v1983 = vld [vmem:[#allocation3 + $0x18] sm:$0x7]
    %v1984 = vld [vmem:[#allocation3 + $0x1c] sm:$0x7]
    %v1985 = vld [vmem:[#allocation3 + $0x20] sm:$0x7]
    %v1986 = vld [vmem:[#allocation3 + $0x24] sm:$0x7]
    %v1996 = vunpack.c.l.s4 1983009808
    %v1997 = vunpack.c.0.s8 %v1996
    %v1998 = vlaneseq
    %v1999 = vshrl.u32 %v1998, 7
    %v2000 = vsub.s32 %v1997, %v1999
    %v2001 = vrot.slane %v1979, %v2000
    %v2002 = vcombine.high %v2001, %v2001
    %v2004 = vunpack.c.l.s4 1983009808
    %v2005 = vunpack.c.0.s8 %v2004
    %v2006 = vlaneseq
    %v2007 = vshrl.u32 %v2006, 7
    %v2008 = vsub.s32 %v2005, %v2007
    %v2009 = vrot.slane %v1980, %v2008
    %v2010 = vcombine.high %v2009, %v2009
    %v2012 = vunpack.c.l.s4 1983009808
    %v2013 = vunpack.c.0.s8 %v2012
    %v2014 = vlaneseq
    %v2015 = vshrl.u32 %v2014, 7
    %v2016 = vsub.s32 %v2013, %v2015
    %v2017 = vrot.slane %v1981, %v2016
    %v2018 = vcombine.high %v2017, %v2017
    %v2020 = vunpack.c.l.s4 1983009808
    %v2021 = vunpack.c.0.s8 %v2020
    %v2022 = vlaneseq
    %v2023 = vshrl.u32 %v2022, 7
    %v2024 = vsub.s32 %v2021, %v2023
    %v2025 = vrot.slane %v1982, %v2024
    %v2026 = vcombine.high %v2025, %v2025
    %v2028 = vunpack.c.l.s4 1983009808
    %v2029 = vunpack.c.0.s8 %v2028
    %v2030 = vlaneseq
    %v2031 = vshrl.u32 %v2030, 7
    %v2032 = vsub.s32 %v2029, %v2031
    %v2033 = vrot.slane %v1983, %v2032
    %v2034 = vcombine.high %v2033, %v2033
    %v2036 = vunpack.c.l.s4 1983009808
    %v2037 = vunpack.c.0.s8 %v2036
    %v2038 = vlaneseq
    %v2039 = vshrl.u32 %v2038, 7
    %v2040 = vsub.s32 %v2037, %v2039
    %v2041 = vrot.slane %v1984, %v2040
    %v2042 = vcombine.high %v2041, %v2041
    %v2044 = vunpack.c.l.s4 1983009808
    %v2045 = vunpack.c.0.s8 %v2044
    %v2046 = vlaneseq
    %v2047 = vshrl.u32 %v2046, 7
    %v2048 = vsub.s32 %v2045, %v2047
    %v2049 = vrot.slane %v1985, %v2048
    %v2050 = vcombine.high %v2049, %v2049
    %v2052 = vunpack.c.l.s4 1983009808
    %v2053 = vunpack.c.0.s8 %v2052
    %v2054 = vlaneseq
    %v2055 = vshrl.u32 %v2054, 7
    %v2056 = vsub.s32 %v2053, %v2055
    %v2057 = vrot.slane %v1986, %v2056
    %v2058 = vcombine.high %v2057, %v2057
    %v2060 = vshrl.u32 %v2001, 16
    %v2062 = vrot.slane %v2060, 6
    %v2063 = vshll.u32 %v2001, 16
    %v2065 = vrot.slane %v2063, 7
    %v2066 = vor.u32 %v2062, %v2065
    %v2067 = vrot.slane %v2066, 2
    %v2069 = vshll.u32 %v2002, 16
    %v2071 = vrot.slane %v2069, 7
    %v2072 = vsel %vm385, %v2067, %v2071
    %v2074 = vshrl.u32 %v2009, 16
    %v2076 = vrot.slane %v2074, 6
    %v2077 = vshll.u32 %v2009, 16
    %v2079 = vrot.slane %v2077, 7
    %v2080 = vor.u32 %v2076, %v2079
    %v2081 = vrot.slane %v2080, 2
    %v2083 = vshll.u32 %v2010, 16
    %v2085 = vrot.slane %v2083, 7
    %v2086 = vsel %vm385, %v2081, %v2085
    %v2088 = vshrl.u32 %v2017, 16
    %v2090 = vrot.slane %v2088, 6
    %v2091 = vshll.u32 %v2017, 16
    %v2093 = vrot.slane %v2091, 7
    %v2094 = vor.u32 %v2090, %v2093
    %v2095 = vrot.slane %v2094, 2
    %v2097 = vshll.u32 %v2018, 16
    %v2099 = vrot.slane %v2097, 7
    %v2100 = vsel %vm385, %v2095, %v2099
    %v2102 = vshrl.u32 %v2025, 16
    %v2104 = vrot.slane %v2102, 6
    %v2105 = vshll.u32 %v2025, 16
    %v2107 = vrot.slane %v2105, 7
    %v2108 = vor.u32 %v2104, %v2107
    %v2109 = vrot.slane %v2108, 2
    %v2111 = vshll.u32 %v2026, 16
    %v2113 = vrot.slane %v2111, 7
    %v2114 = vsel %vm385, %v2109, %v2113
    %v2116 = vshrl.u32 %v2033, 16
    %v2118 = vrot.slane %v2116, 6
    %v2119 = vshll.u32 %v2033, 16
    %v2121 = vrot.slane %v2119, 7
    %v2122 = vor.u32 %v2118, %v2121
    %v2123 = vrot.slane %v2122, 2
    %v2125 = vshll.u32 %v2034, 16
    %v2127 = vrot.slane %v2125, 7
    %v2128 = vsel %vm385, %v2123, %v2127
    %v2130 = vshrl.u32 %v2041, 16
    %v2132 = vrot.slane %v2130, 6
    %v2133 = vshll.u32 %v2041, 16
    %v2135 = vrot.slane %v2133, 7
    %v2136 = vor.u32 %v2132, %v2135
    %v2137 = vrot.slane %v2136, 2
    %v2139 = vshll.u32 %v2042, 16
    %v2141 = vrot.slane %v2139, 7
    %v2142 = vsel %vm385, %v2137, %v2141
    %v2144 = vshrl.u32 %v2049, 16
    %v2146 = vrot.slane %v2144, 6
    %v2147 = vshll.u32 %v2049, 16
    %v2149 = vrot.slane %v2147, 7
    %v2150 = vor.u32 %v2146, %v2149
    %v2151 = vrot.slane %v2150, 2
    %v2153 = vshll.u32 %v2050, 16
    %v2155 = vrot.slane %v2153, 7
    %v2156 = vsel %vm385, %v2151, %v2155
    %v2158 = vshrl.u32 %v2057, 16
    %v2160 = vrot.slane %v2158, 6
    %v2161 = vshll.u32 %v2057, 16
    %v2163 = vrot.slane %v2161, 7
    %v2164 = vor.u32 %v2160, %v2163
    %v2165 = vrot.slane %v2164, 2
    %v2167 = vshll.u32 %v2058, 16
    %v2169 = vrot.slane %v2167, 7
    %v2170 = vsel %vm385, %v2165, %v2169
    %v2171 = vcombine.low %v2072, %v2086
    %v2172 = vcombine.low %v2100, %v2114
    %v2174 = vunpack.c.l.s4 1983009808
    %v2175 = vunpack.c.0.s8 %v2174
    %v2176 = vlaneseq
    %v2177 = vshrl.u32 %v2176, 7
    %v2178 = vsub.s32 %v2175, %v2177
    %v2179 = vrot.slane %v2171, %v2178
    %v2181 = vunpack.c.l.s4 1983009808
    %v2182 = vunpack.c.0.s8 %v2181
    %v2183 = vlaneseq
    %v2184 = vshrl.u32 %v2183, 7
    %v2185 = vsub.s32 %v2182, %v2184
    %v2186 = vrot.slane %v2172, %v2185
    %v2187 = vcombine.low %v2179, %v2186
    %v2188 = vcombine.low %v2128, %v2142
    %v2189 = vcombine.low %v2156, %v2170
    %v2191 = vunpack.c.l.s4 1983009808
    %v2192 = vunpack.c.0.s8 %v2191
    %v2193 = vlaneseq
    %v2194 = vshrl.u32 %v2193, 7
    %v2195 = vsub.s32 %v2192, %v2194
    %v2196 = vrot.slane %v2188, %v2195
    %v2198 = vunpack.c.l.s4 1983009808
    %v2199 = vunpack.c.0.s8 %v2198
    %v2200 = vlaneseq
    %v2201 = vshrl.u32 %v2200, 7
    %v2202 = vsub.s32 %v2199, %v2201
    %v2203 = vrot.slane %v2189, %v2202
    %v2204 = vcombine.low %v2196, %v2203
    %2205 = vrot.lane.b32.xlu0 %v2187, 4
    %v2206 = vpop.permute.xlu0 %2205
    %2207 = vrot.lane.b32.xlu0 %v2204, 4
    %v2208 = vpop.permute.xlu0 %2207
    %vm2211 = vcmask 64544
    %2212 = vst.msk [vmem:[#allocation5] sm:$0xff] %vm2211, %v2206
    %2213 = vst.msk [vmem:[#allocation5 + $0x8] sm:$0xff] %vm2211, %v2208
    %v2214 = vld [vmem:[#allocation3] sm:$0x6]
    %v2215 = vld [vmem:[#allocation3 + $0x4] sm:$0x6]
    %v2216 = vld [vmem:[#allocation3 + $0x8] sm:$0x6]
    %v2217 = vld [vmem:[#allocation3 + $0xc] sm:$0x6]
    %v2218 = vld [vmem:[#allocation3 + $0x18] sm:$0x6]
    %v2219 = vld [vmem:[#allocation3 + $0x1c] sm:$0x6]
    %v2220 = vld [vmem:[#allocation3 + $0x20] sm:$0x6]
    %v2221 = vld [vmem:[#allocation3 + $0x24] sm:$0x6]
    %v2231 = vunpack.c.l.s4 1983009808
    %v2232 = vunpack.c.0.s8 %v2231
    %v2233 = vlaneseq
    %v2234 = vshrl.u32 %v2233, 7
    %v2235 = vsub.s32 %v2232, %v2234
    %v2236 = vrot.slane %v2214, %v2235
    %v2237 = vcombine.high %v2236, %v2236
    %v2239 = vunpack.c.l.s4 1983009808
    %v2240 = vunpack.c.0.s8 %v2239
    %v2241 = vlaneseq
    %v2242 = vshrl.u32 %v2241, 7
    %v2243 = vsub.s32 %v2240, %v2242
    %v2244 = vrot.slane %v2215, %v2243
    %v2245 = vcombine.high %v2244, %v2244
    %v2247 = vunpack.c.l.s4 1983009808
    %v2248 = vunpack.c.0.s8 %v2247
    %v2249 = vlaneseq
    %v2250 = vshrl.u32 %v2249, 7
    %v2251 = vsub.s32 %v2248, %v2250
    %v2252 = vrot.slane %v2216, %v2251
    %v2253 = vcombine.high %v2252, %v2252
    %v2255 = vunpack.c.l.s4 1983009808
    %v2256 = vunpack.c.0.s8 %v2255
    %v2257 = vlaneseq
    %v2258 = vshrl.u32 %v2257, 7
    %v2259 = vsub.s32 %v2256, %v2258
    %v2260 = vrot.slane %v2217, %v2259
    %v2261 = vcombine.high %v2260, %v2260
    %v2263 = vunpack.c.l.s4 1983009808
    %v2264 = vunpack.c.0.s8 %v2263
    %v2265 = vlaneseq
    %v2266 = vshrl.u32 %v2265, 7
    %v2267 = vsub.s32 %v2264, %v2266
    %v2268 = vrot.slane %v2218, %v2267
    %v2269 = vcombine.high %v2268, %v2268
    %v2271 = vunpack.c.l.s4 1983009808
    %v2272 = vunpack.c.0.s8 %v2271
    %v2273 = vlaneseq
    %v2274 = vshrl.u32 %v2273, 7
    %v2275 = vsub.s32 %v2272, %v2274
    %v2276 = vrot.slane %v2219, %v2275
    %v2277 = vcombine.high %v2276, %v2276
    %v2279 = vunpack.c.l.s4 1983009808
    %v2280 = vunpack.c.0.s8 %v2279
    %v2281 = vlaneseq
    %v2282 = vshrl.u32 %v2281, 7
    %v2283 = vsub.s32 %v2280, %v2282
    %v2284 = vrot.slane %v2220, %v2283
    %v2285 = vcombine.high %v2284, %v2284
    %v2287 = vunpack.c.l.s4 1983009808
    %v2288 = vunpack.c.0.s8 %v2287
    %v2289 = vlaneseq
    %v2290 = vshrl.u32 %v2289, 7
    %v2291 = vsub.s32 %v2288, %v2290
    %v2292 = vrot.slane %v2221, %v2291
    %v2293 = vcombine.high %v2292, %v2292
    %v2294 = vrot.slane %v2236, 7
    %v2295 = vrot.slane %v2294, 2
    %v2296 = vrot.slane %v2237, 7
    %v2297 = vsel %vm627, %v2295, %v2296
    %v2298 = vrot.slane %v2244, 7
    %v2299 = vrot.slane %v2298, 2
    %v2300 = vrot.slane %v2245, 7
    %v2301 = vsel %vm627, %v2299, %v2300
    %v2302 = vrot.slane %v2252, 7
    %v2303 = vrot.slane %v2302, 2
    %v2304 = vrot.slane %v2253, 7
    %v2305 = vsel %vm627, %v2303, %v2304
    %v2306 = vrot.slane %v2260, 7
    %v2307 = vrot.slane %v2306, 2
    %v2308 = vrot.slane %v2261, 7
    %v2309 = vsel %vm627, %v2307, %v2308
    %v2310 = vrot.slane %v2268, 7
    %v2311 = vrot.slane %v2310, 2
    %v2312 = vrot.slane %v2269, 7
    %v2313 = vsel %vm627, %v2311, %v2312
    %v2314 = vrot.slane %v2276, 7
    %v2315 = vrot.slane %v2314, 2
    %v2316 = vrot.slane %v2277, 7
    %v2317 = vsel %vm627, %v2315, %v2316
    %v2318 = vrot.slane %v2284, 7
    %v2319 = vrot.slane %v2318, 2
    %v2320 = vrot.slane %v2285, 7
    %v2321 = vsel %vm627, %v2319, %v2320
    %v2322 = vrot.slane %v2292, 7
    %v2323 = vrot.slane %v2322, 2
    %v2324 = vrot.slane %v2293, 7
    %v2325 = vsel %vm627, %v2323, %v2324
    %v2326 = vcombine.low %v2297, %v2301
    %v2327 = vcombine.low %v2305, %v2309
    %v2329 = vunpack.c.l.s4 1983009808
    %v2330 = vunpack.c.0.s8 %v2329
    %v2331 = vlaneseq
    %v2332 = vshrl.u32 %v2331, 7
    %v2333 = vsub.s32 %v2330, %v2332
    %v2334 = vrot.slane %v2326, %v2333
    %v2336 = vunpack.c.l.s4 1983009808
    %v2337 = vunpack.c.0.s8 %v2336
    %v2338 = vlaneseq
    %v2339 = vshrl.u32 %v2338, 7
    %v2340 = vsub.s32 %v2337, %v2339
    %v2341 = vrot.slane %v2327, %v2340
    %v2342 = vcombine.low %v2334, %v2341
    %v2343 = vcombine.low %v2313, %v2317
    %v2344 = vcombine.low %v2321, %v2325
    %v2346 = vunpack.c.l.s4 1983009808
    %v2347 = vunpack.c.0.s8 %v2346
    %v2348 = vlaneseq
    %v2349 = vshrl.u32 %v2348, 7
    %v2350 = vsub.s32 %v2347, %v2349
    %v2351 = vrot.slane %v2343, %v2350
    %v2353 = vunpack.c.l.s4 1983009808
    %v2354 = vunpack.c.0.s8 %v2353
    %v2355 = vlaneseq
    %v2356 = vshrl.u32 %v2355, 7
    %v2357 = vsub.s32 %v2354, %v2356
    %v2358 = vrot.slane %v2344, %v2357
    %v2359 = vcombine.low %v2351, %v2358
    %2360 = vrot.lane.b32.xlu0 %v2342, 8
    %v2361 = vpop.permute.xlu0 %2360
    %2362 = vrot.lane.b32.xlu0 %v2359, 8
    %v2363 = vpop.permute.xlu0 %2362
    %vm2366 = vcmask 97344
    %2367 = vst.msk [vmem:[#allocation5] sm:$0xff] %vm2366, %v2361
    %2368 = vst.msk [vmem:[#allocation5 + $0x8] sm:$0xff] %vm2366, %v2363
    %v2369 = vld [vmem:[%s1897] sm:$0x3]
    %v2370 = vld [vmem:[%s1897 + $0x4] sm:$0x3]
    %v2371 = vld [vmem:[%s1897 + $0x8] sm:$0x3]
    %v2372 = vld [vmem:[%s1897 + $0xc] sm:$0x3]
    %v2373 = vld [vmem:[%s1897 + $0x18] sm:$0x3]
    %v2374 = vld [vmem:[%s1897 + $0x1c] sm:$0x3]
    %v2375 = vld [vmem:[%s1897 + $0x20] sm:$0x3]
    %v2376 = vld [vmem:[%s1897 + $0x24] sm:$0x3]
    %v2385 = vcombine.low %v2369, %v2370
    %v2386 = vcombine.low %v2371, %v2372
    %v2388 = vunpack.c.l.s4 1983009808
    %v2389 = vunpack.c.0.s8 %v2388
    %v2390 = vlaneseq
    %v2391 = vshrl.u32 %v2390, 7
    %v2392 = vsub.s32 %v2389, %v2391
    %v2393 = vrot.slane %v2385, %v2392
    %v2395 = vunpack.c.l.s4 1983009808
    %v2396 = vunpack.c.0.s8 %v2395
    %v2397 = vlaneseq
    %v2398 = vshrl.u32 %v2397, 7
    %v2399 = vsub.s32 %v2396, %v2398
    %v2400 = vrot.slane %v2386, %v2399
    %v2401 = vcombine.low %v2393, %v2400
    %v2402 = vcombine.low %v2373, %v2374
    %v2403 = vcombine.low %v2375, %v2376
    %v2405 = vunpack.c.l.s4 1983009808
    %v2406 = vunpack.c.0.s8 %v2405
    %v2407 = vlaneseq
    %v2408 = vshrl.u32 %v2407, 7
    %v2409 = vsub.s32 %v2406, %v2408
    %v2410 = vrot.slane %v2402, %v2409
    %v2412 = vunpack.c.l.s4 1983009808
    %v2413 = vunpack.c.0.s8 %v2412
    %v2414 = vlaneseq
    %v2415 = vshrl.u32 %v2414, 7
    %v2416 = vsub.s32 %v2413, %v2415
    %v2417 = vrot.slane %v2403, %v2416
    %v2418 = vcombine.low %v2410, %v2417
    %2419 = vrot.lane.b32.xlu0 %v2401, 12
    %v2420 = vpop.permute.xlu0 %2419
    %2421 = vrot.lane.b32.xlu0 %v2418, 12
    %v2422 = vpop.permute.xlu0 %2421
    %vm2425 = vcmask 130144
    %2426 = vst.msk [vmem:[#allocation5] sm:$0xff] %vm2425, %v2420
    %2427 = vst.msk [vmem:[#allocation5 + $0x8] sm:$0xff] %vm2425, %v2422
    %v2428 = vld [vmem:[%s1897] sm:$0x7]
    %v2429 = vld [vmem:[%s1897 + $0x4] sm:$0x7]
    %v2430 = vld [vmem:[%s1897 + $0x8] sm:$0x7]
    %v2431 = vld [vmem:[%s1897 + $0xc] sm:$0x7]
    %v2432 = vld [vmem:[%s1897 + $0x18] sm:$0x7]
    %v2433 = vld [vmem:[%s1897 + $0x1c] sm:$0x7]
    %v2434 = vld [vmem:[%s1897 + $0x20] sm:$0x7]
    %v2435 = vld [vmem:[%s1897 + $0x24] sm:$0x7]
    %v2445 = vunpack.c.l.s4 1983009808
    %v2446 = vunpack.c.0.s8 %v2445
    %v2447 = vlaneseq
    %v2448 = vshrl.u32 %v2447, 7
    %v2449 = vsub.s32 %v2446, %v2448
    %v2450 = vrot.slane %v2428, %v2449
    %v2451 = vcombine.high %v2450, %v2450
    %v2453 = vunpack.c.l.s4 1983009808
    %v2454 = vunpack.c.0.s8 %v2453
    %v2455 = vlaneseq
    %v2456 = vshrl.u32 %v2455, 7
    %v2457 = vsub.s32 %v2454, %v2456
    %v2458 = vrot.slane %v2429, %v2457
    %v2459 = vcombine.high %v2458, %v2458
    %v2461 = vunpack.c.l.s4 1983009808
    %v2462 = vunpack.c.0.s8 %v2461
    %v2463 = vlaneseq
    %v2464 = vshrl.u32 %v2463, 7
    %v2465 = vsub.s32 %v2462, %v2464
    %v2466 = vrot.slane %v2430, %v2465
    %v2467 = vcombine.high %v2466, %v2466
    %v2469 = vunpack.c.l.s4 1983009808
    %v2470 = vunpack.c.0.s8 %v2469
    %v2471 = vlaneseq
    %v2472 = vshrl.u32 %v2471, 7
    %v2473 = vsub.s32 %v2470, %v2472
    %v2474 = vrot.slane %v2431, %v2473
    %v2475 = vcombine.high %v2474, %v2474
    %v2477 = vunpack.c.l.s4 1983009808
    %v2478 = vunpack.c.0.s8 %v2477
    %v2479 = vlaneseq
    %v2480 = vshrl.u32 %v2479, 7
    %v2481 = vsub.s32 %v2478, %v2480
    %v2482 = vrot.slane %v2432, %v2481
    %v2483 = vcombine.high %v2482, %v2482
    %v2485 = vunpack.c.l.s4 1983009808
    %v2486 = vunpack.c.0.s8 %v2485
    %v2487 = vlaneseq
    %v2488 = vshrl.u32 %v2487, 7
    %v2489 = vsub.s32 %v2486, %v2488
    %v2490 = vrot.slane %v2433, %v2489
    %v2491 = vcombine.high %v2490, %v2490
    %v2493 = vunpack.c.l.s4 1983009808
    %v2494 = vunpack.c.0.s8 %v2493
    %v2495 = vlaneseq
    %v2496 = vshrl.u32 %v2495, 7
    %v2497 = vsub.s32 %v2494, %v2496
    %v2498 = vrot.slane %v2434, %v2497
    %v2499 = vcombine.high %v2498, %v2498
    %v2501 = vunpack.c.l.s4 1983009808
    %v2502 = vunpack.c.0.s8 %v2501
    %v2503 = vlaneseq
    %v2504 = vshrl.u32 %v2503, 7
    %v2505 = vsub.s32 %v2502, %v2504
    %v2506 = vrot.slane %v2435, %v2505
    %v2507 = vcombine.high %v2506, %v2506
    %v2509 = vshrl.u32 %v2450, 16
    %v2511 = vrot.slane %v2509, 6
    %v2512 = vshll.u32 %v2450, 16
    %v2514 = vrot.slane %v2512, 7
    %v2515 = vor.u32 %v2511, %v2514
    %v2516 = vrot.slane %v2515, 2
    %v2518 = vshll.u32 %v2451, 16
    %v2520 = vrot.slane %v2518, 7
    %v2521 = vsel %vm385, %v2516, %v2520
    %v2523 = vshrl.u32 %v2458, 16
    %v2525 = vrot.slane %v2523, 6
    %v2526 = vshll.u32 %v2458, 16
    %v2528 = vrot.slane %v2526, 7
    %v2529 = vor.u32 %v2525, %v2528
    %v2530 = vrot.slane %v2529, 2
    %v2532 = vshll.u32 %v2459, 16
    %v2534 = vrot.slane %v2532, 7
    %v2535 = vsel %vm385, %v2530, %v2534
    %v2537 = vshrl.u32 %v2466, 16
    %v2539 = vrot.slane %v2537, 6
    %v2540 = vshll.u32 %v2466, 16
    %v2542 = vrot.slane %v2540, 7
    %v2543 = vor.u32 %v2539, %v2542
    %v2544 = vrot.slane %v2543, 2
    %v2546 = vshll.u32 %v2467, 16
    %v2548 = vrot.slane %v2546, 7
    %v2549 = vsel %vm385, %v2544, %v2548
    %v2551 = vshrl.u32 %v2474, 16
    %v2553 = vrot.slane %v2551, 6
    %v2554 = vshll.u32 %v2474, 16
    %v2556 = vrot.slane %v2554, 7
    %v2557 = vor.u32 %v2553, %v2556
    %v2558 = vrot.slane %v2557, 2
    %v2560 = vshll.u32 %v2475, 16
    %v2562 = vrot.slane %v2560, 7
    %v2563 = vsel %vm385, %v2558, %v2562
    %v2565 = vshrl.u32 %v2482, 16
    %v2567 = vrot.slane %v2565, 6
    %v2568 = vshll.u32 %v2482, 16
    %v2570 = vrot.slane %v2568, 7
    %v2571 = vor.u32 %v2567, %v2570
    %v2572 = vrot.slane %v2571, 2
    %v2574 = vshll.u32 %v2483, 16
    %v2576 = vrot.slane %v2574, 7
    %v2577 = vsel %vm385, %v2572, %v2576
    %v2579 = vshrl.u32 %v2490, 16
    %v2581 = vrot.slane %v2579, 6
    %v2582 = vshll.u32 %v2490, 16
    %v2584 = vrot.slane %v2582, 7
    %v2585 = vor.u32 %v2581, %v2584
    %v2586 = vrot.slane %v2585, 2
    %v2588 = vshll.u32 %v2491, 16
    %v2590 = vrot.slane %v2588, 7
    %v2591 = vsel %vm385, %v2586, %v2590
    %v2593 = vshrl.u32 %v2498, 16
    %v2595 = vrot.slane %v2593, 6
    %v2596 = vshll.u32 %v2498, 16
    %v2598 = vrot.slane %v2596, 7
    %v2599 = vor.u32 %v2595, %v2598
    %v2600 = vrot.slane %v2599, 2
    %v2602 = vshll.u32 %v2499, 16
    %v2604 = vrot.slane %v2602, 7
    %v2605 = vsel %vm385, %v2600, %v2604
    %v2607 = vshrl.u32 %v2506, 16
    %v2609 = vrot.slane %v2607, 6
    %v2610 = vshll.u32 %v2506, 16
    %v2612 = vrot.slane %v2610, 7
    %v2613 = vor.u32 %v2609, %v2612
    %v2614 = vrot.slane %v2613, 2
    %v2616 = vshll.u32 %v2507, 16
    %v2618 = vrot.slane %v2616, 7
    %v2619 = vsel %vm385, %v2614, %v2618
    %v2620 = vcombine.low %v2521, %v2535
    %v2621 = vcombine.low %v2549, %v2563
    %v2623 = vunpack.c.l.s4 1983009808
    %v2624 = vunpack.c.0.s8 %v2623
    %v2625 = vlaneseq
    %v2626 = vshrl.u32 %v2625, 7
    %v2627 = vsub.s32 %v2624, %v2626
    %v2628 = vrot.slane %v2620, %v2627
    %v2630 = vunpack.c.l.s4 1983009808
    %v2631 = vunpack.c.0.s8 %v2630
    %v2632 = vlaneseq
    %v2633 = vshrl.u32 %v2632, 7
    %v2634 = vsub.s32 %v2631, %v2633
    %v2635 = vrot.slane %v2621, %v2634
    %v2636 = vcombine.low %v2628, %v2635
    %v2637 = vcombine.low %v2577, %v2591
    %v2638 = vcombine.low %v2605, %v2619
    %v2640 = vunpack.c.l.s4 1983009808
    %v2641 = vunpack.c.0.s8 %v2640
    %v2642 = vlaneseq
    %v2643 = vshrl.u32 %v2642, 7
    %v2644 = vsub.s32 %v2641, %v2643
    %v2645 = vrot.slane %v2637, %v2644
    %v2647 = vunpack.c.l.s4 1983009808
    %v2648 = vunpack.c.0.s8 %v2647
    %v2649 = vlaneseq
    %v2650 = vshrl.u32 %v2649, 7
    %v2651 = vsub.s32 %v2648, %v2650
    %v2652 = vrot.slane %v2638, %v2651
    %v2653 = vcombine.low %v2645, %v2652
    %2654 = vrot.lane.b32.xlu0 %v2636, 16
    %v2655 = vpop.permute.xlu0 %2654
    %2656 = vrot.lane.b32.xlu0 %v2653, 16
    %v2657 = vpop.permute.xlu0 %2656
    %vm2660 = vcmask 162944
    %2661 = vst.msk [vmem:[#allocation5] sm:$0xff] %vm2660, %v2655
    %2662 = vst.msk [vmem:[#allocation5 + $0x8] sm:$0xff] %vm2660, %v2657
    %v2663 = vld [vmem:[%s1897] sm:$0x6]
    %v2664 = vld [vmem:[%s1897 + $0x4] sm:$0x6]
    %v2665 = vld [vmem:[%s1897 + $0x8] sm:$0x6]
    %v2666 = vld [vmem:[%s1897 + $0xc] sm:$0x6]
    %v2667 = vld [vmem:[%s1897 + $0x18] sm:$0x6]
    %v2668 = vld [vmem:[%s1897 + $0x1c] sm:$0x6]
    %v2669 = vld [vmem:[%s1897 + $0x20] sm:$0x6]
    %v2670 = vld [vmem:[%s1897 + $0x24] sm:$0x6]
    %v2680 = vunpack.c.l.s4 1983009808
    %v2681 = vunpack.c.0.s8 %v2680
    %v2682 = vlaneseq
    %v2683 = vshrl.u32 %v2682, 7
    %v2684 = vsub.s32 %v2681, %v2683
    %v2685 = vrot.slane %v2663, %v2684
    %v2686 = vcombine.high %v2685, %v2685
    %v2688 = vunpack.c.l.s4 1983009808
    %v2689 = vunpack.c.0.s8 %v2688
    %v2690 = vlaneseq
    %v2691 = vshrl.u32 %v2690, 7
    %v2692 = vsub.s32 %v2689, %v2691
    %v2693 = vrot.slane %v2664, %v2692
    %v2694 = vcombine.high %v2693, %v2693
    %v2696 = vunpack.c.l.s4 1983009808
    %v2697 = vunpack.c.0.s8 %v2696
    %v2698 = vlaneseq
    %v2699 = vshrl.u32 %v2698, 7
    %v2700 = vsub.s32 %v2697, %v2699
    %v2701 = vrot.slane %v2665, %v2700
    %v2702 = vcombine.high %v2701, %v2701
    %v2704 = vunpack.c.l.s4 1983009808
    %v2705 = vunpack.c.0.s8 %v2704
    %v2706 = vlaneseq
    %v2707 = vshrl.u32 %v2706, 7
    %v2708 = vsub.s32 %v2705, %v2707
    %v2709 = vrot.slane %v2666, %v2708
    %v2710 = vcombine.high %v2709, %v2709
    %v2712 = vunpack.c.l.s4 1983009808
    %v2713 = vunpack.c.0.s8 %v2712
    %v2714 = vlaneseq
    %v2715 = vshrl.u32 %v2714, 7
    %v2716 = vsub.s32 %v2713, %v2715
    %v2717 = vrot.slane %v2667, %v2716
    %v2718 = vcombine.high %v2717, %v2717
    %v2720 = vunpack.c.l.s4 1983009808
    %v2721 = vunpack.c.0.s8 %v2720
    %v2722 = vlaneseq
    %v2723 = vshrl.u32 %v2722, 7
    %v2724 = vsub.s32 %v2721, %v2723
    %v2725 = vrot.slane %v2668, %v2724
    %v2726 = vcombine.high %v2725, %v2725
    %v2728 = vunpack.c.l.s4 1983009808
    %v2729 = vunpack.c.0.s8 %v2728
    %v2730 = vlaneseq
    %v2731 = vshrl.u32 %v2730, 7
    %v2732 = vsub.s32 %v2729, %v2731
    %v2733 = vrot.slane %v2669, %v2732
    %v2734 = vcombine.high %v2733, %v2733
    %v2736 = vunpack.c.l.s4 1983009808
    %v2737 = vunpack.c.0.s8 %v2736
    %v2738 = vlaneseq
    %v2739 = vshrl.u32 %v2738, 7
    %v2740 = vsub.s32 %v2737, %v2739
    %v2741 = vrot.slane %v2670, %v2740
    %v2742 = vcombine.high %v2741, %v2741
    %v2743 = vrot.slane %v2685, 7
    %v2744 = vrot.slane %v2743, 2
    %v2745 = vrot.slane %v2686, 7
    %v2746 = vsel %vm627, %v2744, %v2745
    %v2747 = vrot.slane %v2693, 7
    %v2748 = vrot.slane %v2747, 2
    %v2749 = vrot.slane %v2694, 7
    %v2750 = vsel %vm627, %v2748, %v2749
    %v2751 = vrot.slane %v2701, 7
    %v2752 = vrot.slane %v2751, 2
    %v2753 = vrot.slane %v2702, 7
    %v2754 = vsel %vm627, %v2752, %v2753
    %v2755 = vrot.slane %v2709, 7
    %v2756 = vrot.slane %v2755, 2
    %v2757 = vrot.slane %v2710, 7
    %v2758 = vsel %vm627, %v2756, %v2757
    %v2759 = vrot.slane %v2717, 7
    %v2760 = vrot.slane %v2759, 2
    %v2761 = vrot.slane %v2718, 7
    %v2762 = vsel %vm627, %v2760, %v2761
    %v2763 = vrot.slane %v2725, 7
    %v2764 = vrot.slane %v2763, 2
    %v2765 = vrot.slane %v2726, 7
    %v2766 = vsel %vm627, %v2764, %v2765
    %v2767 = vrot.slane %v2733, 7
    %v2768 = vrot.slane %v2767, 2
    %v2769 = vrot.slane %v2734, 7
    %v2770 = vsel %vm627, %v2768, %v2769
    %v2771 = vrot.slane %v2741, 7
    %v2772 = vrot.slane %v2771, 2
    %v2773 = vrot.slane %v2742, 7
    %v2774 = vsel %vm627, %v2772, %v2773
    %v2775 = vcombine.low %v2746, %v2750
    %v2776 = vcombine.low %v2754, %v2758
    %v2778 = vunpack.c.l.s4 1983009808
    %v2779 = vunpack.c.0.s8 %v2778
    %v2780 = vlaneseq
    %v2781 = vshrl.u32 %v2780, 7
    %v2782 = vsub.s32 %v2779, %v2781
    %v2783 = vrot.slane %v2775, %v2782
    %v2785 = vunpack.c.l.s4 1983009808
    %v2786 = vunpack.c.0.s8 %v2785
    %v2787 = vlaneseq
    %v2788 = vshrl.u32 %v2787, 7
    %v2789 = vsub.s32 %v2786, %v2788
    %v2790 = vrot.slane %v2776, %v2789
    %v2791 = vcombine.low %v2783, %v2790
    %v2792 = vcombine.low %v2762, %v2766
    %v2793 = vcombine.low %v2770, %v2774
    %v2795 = vunpack.c.l.s4 1983009808
    %v2796 = vunpack.c.0.s8 %v2795
    %v2797 = vlaneseq
    %v2798 = vshrl.u32 %v2797, 7
    %v2799 = vsub.s32 %v2796, %v2798
    %v2800 = vrot.slane %v2792, %v2799
    %v2802 = vunpack.c.l.s4 1983009808
    %v2803 = vunpack.c.0.s8 %v2802
    %v2804 = vlaneseq
    %v2805 = vshrl.u32 %v2804, 7
    %v2806 = vsub.s32 %v2803, %v2805
    %v2807 = vrot.slane %v2793, %v2806
    %v2808 = vcombine.low %v2800, %v2807
    %2809 = vrot.lane.b32.xlu0 %v2791, 20
    %v2810 = vpop.permute.xlu0 %2809
    %2811 = vrot.lane.b32.xlu0 %v2808, 20
    %v2812 = vpop.permute.xlu0 %2811
    %vm2815 = vcmask 195744
    %2816 = vst.msk [vmem:[#allocation5] sm:$0xff] %vm2815, %v2810
    %2817 = vst.msk [vmem:[#allocation5 + $0x8] sm:$0xff] %vm2815, %v2812
    %s2818 = scalar_lea.vmem [#allocation3], 8
    %v2819 = vld [vmem:[%s2818] sm:$0x3]
    %v2820 = vld [vmem:[%s2818 + $0x4] sm:$0x3]
    %v2821 = vld [vmem:[%s2818 + $0x8] sm:$0x3]
    %v2822 = vld [vmem:[%s2818 + $0xc] sm:$0x3]
    %v2823 = vld [vmem:[%s2818 + $0x18] sm:$0x3]
    %v2824 = vld [vmem:[%s2818 + $0x1c] sm:$0x3]
    %v2825 = vld [vmem:[%s2818 + $0x20] sm:$0x3]
    %v2826 = vld [vmem:[%s2818 + $0x24] sm:$0x3]
    %v2835 = vcombine.low %v2819, %v2820
    %v2836 = vcombine.low %v2821, %v2822
    %v2838 = vunpack.c.l.s4 1983009808
    %v2839 = vunpack.c.0.s8 %v2838
    %v2840 = vlaneseq
    %v2841 = vshrl.u32 %v2840, 7
    %v2842 = vsub.s32 %v2839, %v2841
    %v2843 = vrot.slane %v2835, %v2842
    %v2845 = vunpack.c.l.s4 1983009808
    %v2846 = vunpack.c.0.s8 %v2845
    %v2847 = vlaneseq
    %v2848 = vshrl.u32 %v2847, 7
    %v2849 = vsub.s32 %v2846, %v2848
    %v2850 = vrot.slane %v2836, %v2849
    %v2851 = vcombine.low %v2843, %v2850
    %v2852 = vcombine.low %v2823, %v2824
    %v2853 = vcombine.low %v2825, %v2826
    %v2855 = vunpack.c.l.s4 1983009808
    %v2856 = vunpack.c.0.s8 %v2855
    %v2857 = vlaneseq
    %v2858 = vshrl.u32 %v2857, 7
    %v2859 = vsub.s32 %v2856, %v2858
    %v2860 = vrot.slane %v2852, %v2859
    %v2862 = vunpack.c.l.s4 1983009808
    %v2863 = vunpack.c.0.s8 %v2862
    %v2864 = vlaneseq
    %v2865 = vshrl.u32 %v2864, 7
    %v2866 = vsub.s32 %v2863, %v2865
    %v2867 = vrot.slane %v2853, %v2866
    %v2868 = vcombine.low %v2860, %v2867
    %2869 = vrot.lane.b32.xlu0 %v2851, 24
    %v2870 = vpop.permute.xlu0 %2869
    %2871 = vrot.lane.b32.xlu0 %v2868, 24
    %v2872 = vpop.permute.xlu0 %2871
    %vm2875 = vcmask 228544
    %2876 = vst.msk [vmem:[#allocation5] sm:$0xff] %vm2875, %v2870
    %2877 = vst.msk [vmem:[#allocation5 + $0x8] sm:$0xff] %vm2875, %v2872
    %v2878 = vld [vmem:[%s2818] sm:$0x7]
    %v2879 = vld [vmem:[%s2818 + $0x4] sm:$0x7]
    %v2880 = vld [vmem:[%s2818 + $0x8] sm:$0x7]
    %v2881 = vld [vmem:[%s2818 + $0xc] sm:$0x7]
    %v2882 = vld [vmem:[%s2818 + $0x18] sm:$0x7]
    %v2883 = vld [vmem:[%s2818 + $0x1c] sm:$0x7]
    %v2884 = vld [vmem:[%s2818 + $0x20] sm:$0x7]
    %v2885 = vld [vmem:[%s2818 + $0x24] sm:$0x7]
    %v2895 = vunpack.c.l.s4 1983009808
    %v2896 = vunpack.c.0.s8 %v2895
    %v2897 = vlaneseq
    %v2898 = vshrl.u32 %v2897, 7
    %v2899 = vsub.s32 %v2896, %v2898
    %v2900 = vrot.slane %v2878, %v2899
    %v2901 = vcombine.high %v2900, %v2900
    %v2903 = vunpack.c.l.s4 1983009808
    %v2904 = vunpack.c.0.s8 %v2903
    %v2905 = vlaneseq
    %v2906 = vshrl.u32 %v2905, 7
    %v2907 = vsub.s32 %v2904, %v2906
    %v2908 = vrot.slane %v2879, %v2907
    %v2909 = vcombine.high %v2908, %v2908
    %v2911 = vunpack.c.l.s4 1983009808
    %v2912 = vunpack.c.0.s8 %v2911
    %v2913 = vlaneseq
    %v2914 = vshrl.u32 %v2913, 7
    %v2915 = vsub.s32 %v2912, %v2914
    %v2916 = vrot.slane %v2880, %v2915
    %v2917 = vcombine.high %v2916, %v2916
    %v2919 = vunpack.c.l.s4 1983009808
    %v2920 = vunpack.c.0.s8 %v2919
    %v2921 = vlaneseq
    %v2922 = vshrl.u32 %v2921, 7
    %v2923 = vsub.s32 %v2920, %v2922
    %v2924 = vrot.slane %v2881, %v2923
    %v2925 = vcombine.high %v2924, %v2924
    %v2927 = vunpack.c.l.s4 1983009808
    %v2928 = vunpack.c.0.s8 %v2927
    %v2929 = vlaneseq
    %v2930 = vshrl.u32 %v2929, 7
    %v2931 = vsub.s32 %v2928, %v2930
    %v2932 = vrot.slane %v2882, %v2931
    %v2933 = vcombine.high %v2932, %v2932
    %v2935 = vunpack.c.l.s4 1983009808
    %v2936 = vunpack.c.0.s8 %v2935
    %v2937 = vlaneseq
    %v2938 = vshrl.u32 %v2937, 7
    %v2939 = vsub.s32 %v2936, %v2938
    %v2940 = vrot.slane %v2883, %v2939
    %v2941 = vcombine.high %v2940, %v2940
    %v2943 = vunpack.c.l.s4 1983009808
    %v2944 = vunpack.c.0.s8 %v2943
    %v2945 = vlaneseq
    %v2946 = vshrl.u32 %v2945, 7
    %v2947 = vsub.s32 %v2944, %v2946
    %v2948 = vrot.slane %v2884, %v2947
    %v2949 = vcombine.high %v2948, %v2948
    %v2951 = vunpack.c.l.s4 1983009808
    %v2952 = vunpack.c.0.s8 %v2951
    %v2953 = vlaneseq
    %v2954 = vshrl.u32 %v2953, 7
    %v2955 = vsub.s32 %v2952, %v2954
    %v2956 = vrot.slane %v2885, %v2955
    %v2957 = vcombine.high %v2956, %v2956
    %v2959 = vshrl.u32 %v2900, 16
    %v2961 = vrot.slane %v2959, 6
    %v2962 = vshll.u32 %v2900, 16
    %v2964 = vrot.slane %v2962, 7
    %v2965 = vor.u32 %v2961, %v2964
    %v2966 = vrot.slane %v2965, 2
    %v2968 = vshll.u32 %v2901, 16
    %v2970 = vrot.slane %v2968, 7
    %v2971 = vsel %vm385, %v2966, %v2970
    %v2973 = vshrl.u32 %v2908, 16
    %v2975 = vrot.slane %v2973, 6
    %v2976 = vshll.u32 %v2908, 16
    %v2978 = vrot.slane %v2976, 7
    %v2979 = vor.u32 %v2975, %v2978
    %v2980 = vrot.slane %v2979, 2
    %v2982 = vshll.u32 %v2909, 16
    %v2984 = vrot.slane %v2982, 7
    %v2985 = vsel %vm385, %v2980, %v2984
    %v2987 = vshrl.u32 %v2916, 16
    %v2989 = vrot.slane %v2987, 6
    %v2990 = vshll.u32 %v2916, 16
    %v2992 = vrot.slane %v2990, 7
    %v2993 = vor.u32 %v2989, %v2992
    %v2994 = vrot.slane %v2993, 2
    %v2996 = vshll.u32 %v2917, 16
    %v2998 = vrot.slane %v2996, 7
    %v2999 = vsel %vm385, %v2994, %v2998
    %v3001 = vshrl.u32 %v2924, 16
    %v3003 = vrot.slane %v3001, 6
    %v3004 = vshll.u32 %v2924, 16
    %v3006 = vrot.slane %v3004, 7
    %v3007 = vor.u32 %v3003, %v3006
    %v3008 = vrot.slane %v3007, 2
    %v3010 = vshll.u32 %v2925, 16
    %v3012 = vrot.slane %v3010, 7
    %v3013 = vsel %vm385, %v3008, %v3012
    %v3015 = vshrl.u32 %v2932, 16
    %v3017 = vrot.slane %v3015, 6
    %v3018 = vshll.u32 %v2932, 16
    %v3020 = vrot.slane %v3018, 7
    %v3021 = vor.u32 %v3017, %v3020
    %v3022 = vrot.slane %v3021, 2
    %v3024 = vshll.u32 %v2933, 16
    %v3026 = vrot.slane %v3024, 7
    %v3027 = vsel %vm385, %v3022, %v3026
    %v3029 = vshrl.u32 %v2940, 16
    %v3031 = vrot.slane %v3029, 6
    %v3032 = vshll.u32 %v2940, 16
    %v3034 = vrot.slane %v3032, 7
    %v3035 = vor.u32 %v3031, %v3034
    %v3036 = vrot.slane %v3035, 2
    %v3038 = vshll.u32 %v2941, 16
    %v3040 = vrot.slane %v3038, 7
    %v3041 = vsel %vm385, %v3036, %v3040
    %v3043 = vshrl.u32 %v2948, 16
    %v3045 = vrot.slane %v3043, 6
    %v3046 = vshll.u32 %v2948, 16
    %v3048 = vrot.slane %v3046, 7
    %v3049 = vor.u32 %v3045, %v3048
    %v3050 = vrot.slane %v3049, 2
    %v3052 = vshll.u32 %v2949, 16
    %v3054 = vrot.slane %v3052, 7
    %v3055 = vsel %vm385, %v3050, %v3054
    %v3057 = vshrl.u32 %v2956, 16
    %v3059 = vrot.slane %v3057, 6
    %v3060 = vshll.u32 %v2956, 16
    %v3062 = vrot.slane %v3060, 7
    %v3063 = vor.u32 %v3059, %v3062
    %v3064 = vrot.slane %v3063, 2
    %v3066 = vshll.u32 %v2957, 16
    %v3068 = vrot.slane %v3066, 7
    %v3069 = vsel %vm385, %v3064, %v3068
    %v3070 = vcombine.low %v2971, %v2985
    %v3071 = vcombine.low %v2999, %v3013
    %v3073 = vunpack.c.l.s4 1983009808
    %v3074 = vunpack.c.0.s8 %v3073
    %v3075 = vlaneseq
    %v3076 = vshrl.u32 %v3075, 7
    %v3077 = vsub.s32 %v3074, %v3076
    %v3078 = vrot.slane %v3070, %v3077
    %v3080 = vunpack.c.l.s4 1983009808
    %v3081 = vunpack.c.0.s8 %v3080
    %v3082 = vlaneseq
    %v3083 = vshrl.u32 %v3082, 7
    %v3084 = vsub.s32 %v3081, %v3083
    %v3085 = vrot.slane %v3071, %v3084
    %v3086 = vcombine.low %v3078, %v3085
    %v3087 = vcombine.low %v3027, %v3041
    %v3088 = vcombine.low %v3055, %v3069
    %v3090 = vunpack.c.l.s4 1983009808
    %v3091 = vunpack.c.0.s8 %v3090
    %v3092 = vlaneseq
    %v3093 = vshrl.u32 %v3092, 7
    %v3094 = vsub.s32 %v3091, %v3093
    %v3095 = vrot.slane %v3087, %v3094
    %v3097 = vunpack.c.l.s4 1983009808
    %v3098 = vunpack.c.0.s8 %v3097
    %v3099 = vlaneseq
    %v3100 = vshrl.u32 %v3099, 7
    %v3101 = vsub.s32 %v3098, %v3100
    %v3102 = vrot.slane %v3088, %v3101
    %v3103 = vcombine.low %v3095, %v3102
    %3104 = vrot.lane.b32.xlu0 %v3086, 28
    %v3105 = vpop.permute.xlu0 %3104
    %3106 = vrot.lane.b32.xlu0 %v3103, 28
    %v3107 = vpop.permute.xlu0 %3106
    %vm3110 = vcmask 261344
    %3111 = vst.msk [vmem:[#allocation5] sm:$0xff] %vm3110, %v3105
    %3112 = vst.msk [vmem:[#allocation5 + $0x8] sm:$0xff] %vm3110, %v3107
    %v3113 = vld [vmem:[%s2818] sm:$0x6]
    %v3114 = vld [vmem:[%s2818 + $0x4] sm:$0x6]
    %v3115 = vld [vmem:[%s2818 + $0x8] sm:$0x6]
    %v3116 = vld [vmem:[%s2818 + $0xc] sm:$0x6]
    %v3117 = vld [vmem:[%s2818 + $0x18] sm:$0x6]
    %v3118 = vld [vmem:[%s2818 + $0x1c] sm:$0x6]
    %v3119 = vld [vmem:[%s2818 + $0x20] sm:$0x6]
    %v3120 = vld [vmem:[%s2818 + $0x24] sm:$0x6]
    %v3130 = vunpack.c.l.s4 1983009808
    %v3131 = vunpack.c.0.s8 %v3130
    %v3132 = vlaneseq
    %v3133 = vshrl.u32 %v3132, 7
    %v3134 = vsub.s32 %v3131, %v3133
    %v3135 = vrot.slane %v3113, %v3134
    %v3136 = vcombine.high %v3135, %v3135
    %v3138 = vunpack.c.l.s4 1983009808
    %v3139 = vunpack.c.0.s8 %v3138
    %v3140 = vlaneseq
    %v3141 = vshrl.u32 %v3140, 7
    %v3142 = vsub.s32 %v3139, %v3141
    %v3143 = vrot.slane %v3114, %v3142
    %v3144 = vcombine.high %v3143, %v3143
    %v3146 = vunpack.c.l.s4 1983009808
    %v3147 = vunpack.c.0.s8 %v3146
    %v3148 = vlaneseq
    %v3149 = vshrl.u32 %v3148, 7
    %v3150 = vsub.s32 %v3147, %v3149
    %v3151 = vrot.slane %v3115, %v3150
    %v3152 = vcombine.high %v3151, %v3151
    %v3154 = vunpack.c.l.s4 1983009808
    %v3155 = vunpack.c.0.s8 %v3154
    %v3156 = vlaneseq
    %v3157 = vshrl.u32 %v3156, 7
    %v3158 = vsub.s32 %v3155, %v3157
    %v3159 = vrot.slane %v3116, %v3158
    %v3160 = vcombine.high %v3159, %v3159
    %v3162 = vunpack.c.l.s4 1983009808
    %v3163 = vunpack.c.0.s8 %v3162
    %v3164 = vlaneseq
    %v3165 = vshrl.u32 %v3164, 7
    %v3166 = vsub.s32 %v3163, %v3165
    %v3167 = vrot.slane %v3117, %v3166
    %v3168 = vcombine.high %v3167, %v3167
    %v3170 = vunpack.c.l.s4 1983009808
    %v3171 = vunpack.c.0.s8 %v3170
    %v3172 = vlaneseq
    %v3173 = vshrl.u32 %v3172, 7
    %v3174 = vsub.s32 %v3171, %v3173
    %v3175 = vrot.slane %v3118, %v3174
    %v3176 = vcombine.high %v3175, %v3175
    %v3178 = vunpack.c.l.s4 1983009808
    %v3179 = vunpack.c.0.s8 %v3178
    %v3180 = vlaneseq
    %v3181 = vshrl.u32 %v3180, 7
    %v3182 = vsub.s32 %v3179, %v3181
    %v3183 = vrot.slane %v3119, %v3182
    %v3184 = vcombine.high %v3183, %v3183
    %v3186 = vunpack.c.l.s4 1983009808
    %v3187 = vunpack.c.0.s8 %v3186
    %v3188 = vlaneseq
    %v3189 = vshrl.u32 %v3188, 7
    %v3190 = vsub.s32 %v3187, %v3189
    %v3191 = vrot.slane %v3120, %v3190
    %v3192 = vcombine.high %v3191, %v3191
    %v3193 = vrot.slane %v3135, 7
    %v3194 = vrot.slane %v3193, 2
    %v3195 = vrot.slane %v3136, 7
    %v3196 = vsel %vm627, %v3194, %v3195
    %v3197 = vrot.slane %v3143, 7
    %v3198 = vrot.slane %v3197, 2
    %v3199 = vrot.slane %v3144, 7
    %v3200 = vsel %vm627, %v3198, %v3199
    %v3201 = vrot.slane %v3151, 7
    %v3202 = vrot.slane %v3201, 2
    %v3203 = vrot.slane %v3152, 7
    %v3204 = vsel %vm627, %v3202, %v3203
    %v3205 = vrot.slane %v3159, 7
    %v3206 = vrot.slane %v3205, 2
    %v3207 = vrot.slane %v3160, 7
    %v3208 = vsel %vm627, %v3206, %v3207
    %v3209 = vrot.slane %v3167, 7
    %v3210 = vrot.slane %v3209, 2
    %v3211 = vrot.slane %v3168, 7
    %v3212 = vsel %vm627, %v3210, %v3211
    %v3213 = vrot.slane %v3175, 7
    %v3214 = vrot.slane %v3213, 2
    %v3215 = vrot.slane %v3176, 7
    %v3216 = vsel %vm627, %v3214, %v3215
    %v3217 = vrot.slane %v3183, 7
    %v3218 = vrot.slane %v3217, 2
    %v3219 = vrot.slane %v3184, 7
    %v3220 = vsel %vm627, %v3218, %v3219
    %v3221 = vrot.slane %v3191, 7
    %v3222 = vrot.slane %v3221, 2
    %v3223 = vrot.slane %v3192, 7
    %v3224 = vsel %vm627, %v3222, %v3223
    %v3225 = vcombine.low %v3196, %v3200
    %v3226 = vcombine.low %v3204, %v3208
    %v3228 = vunpack.c.l.s4 1983009808
    %v3229 = vunpack.c.0.s8 %v3228
    %v3230 = vlaneseq
    %v3231 = vshrl.u32 %v3230, 7
    %v3232 = vsub.s32 %v3229, %v3231
    %v3233 = vrot.slane %v3225, %v3232
    %v3235 = vunpack.c.l.s4 1983009808
    %v3236 = vunpack.c.0.s8 %v3235
    %v3237 = vlaneseq
    %v3238 = vshrl.u32 %v3237, 7
    %v3239 = vsub.s32 %v3236, %v3238
    %v3240 = vrot.slane %v3226, %v3239
    %v3241 = vcombine.low %v3233, %v3240
    %v3242 = vcombine.low %v3212, %v3216
    %v3243 = vcombine.low %v3220, %v3224
    %v3245 = vunpack.c.l.s4 1983009808
    %v3246 = vunpack.c.0.s8 %v3245
    %v3247 = vlaneseq
    %v3248 = vshrl.u32 %v3247, 7
    %v3249 = vsub.s32 %v3246, %v3248
    %v3250 = vrot.slane %v3242, %v3249
    %v3252 = vunpack.c.l.s4 1983009808
    %v3253 = vunpack.c.0.s8 %v3252
    %v3254 = vlaneseq
    %v3255 = vshrl.u32 %v3254, 7
    %v3256 = vsub.s32 %v3253, %v3255
    %v3257 = vrot.slane %v3243, %v3256
    %v3258 = vcombine.low %v3250, %v3257
    %3259 = vrot.lane.b32.xlu0 %v3241, 32
    %v3260 = vpop.permute.xlu0 %3259
    %3261 = vrot.lane.b32.xlu0 %v3258, 32
    %v3262 = vpop.permute.xlu0 %3261
    %vm3265 = vcmask 294144
    %3266 = vst.msk [vmem:[#allocation5] sm:$0xff] %vm3265, %v3260
    %3267 = vst.msk [vmem:[#allocation5 + $0x8] sm:$0xff] %vm3265, %v3262
    %v3268 = vld [vmem:[#allocation5] sm:$0xff]
    %v3269 = vld [vmem:[#allocation5 + $0x8] sm:$0xff]
    %v3270 = vld [vmem:[%s3] sm:$0xf]
    %v3271 = vld [vmem:[%s3 + $0x4] sm:$0xf]
    %v3272 = vld [vmem:[%s3 + $0x8] sm:$0xf]
    %v3273 = vld [vmem:[%s3 + $0xc] sm:$0xf]
    %v3274 = vld [vmem:[%s3 + $0x10] sm:$0x3]
    %v3275 = vld [vmem:[%s4] sm:$0x1]
    %v3277 = vlaneseq
    %v3278 = vshrl.u32 %v3277, 7
    %v3279 = vsub.s32 0, %v3278
    %v3280 = vrot.slane %v3275, %v3279
    %v3287 = vunpack.c.l.b16 %v3270
    %v3288 = vunpack.c.l.b16 %v3271
    %v3289 = vunpack.c.l.b16 %v3272
    %v3290 = vunpack.c.l.b16 %v3273
    %v3291 = vunpack.c.l.b16 %v3274
    %v3292 = vpack.c.b16 %v3288, %v3287
    %v3293 = vpack.c.b16 %v3290, %v3289
    %v3294 = vpack.c.b16 %v3291, %v3291
    %vm3297 = vcmask 293888
    %v3299 = vsel %vm3297, %v3268, 0
    %v3302 = vsel %vm3297, %v3269, 0
    %vm3304 = vcmask 1041408
    %v3306 = vsel %vm3304, %v3294, 0
    %3308 = vmatprep.subr.bf16.mxu0 0
    %3309 = vmatpush1.bf16.msra.mxu0 %v3292
    %3310 = vmatprep.subr.bf16.mxu0 0
    %3311 = vmatpush1.bf16.msra.mxu0 %v3293
    %3312 = vmatprep.subr.bf16.mxu0 0
    %3313 = vmatpush1.bf16.msra.mxu0 %v3306
    %3314 = vmatprep.subr.bf16.mxu0 0
    %3315 = vmatpush1.bf16.msra.mxu0 0
    %3316 = vmatprep.subr.bf16.mxu0 0
    %3317 = vmatpush1.bf16.msra.mxu0 0
    %3318 = vmatprep.subr.bf16.mxu0 0
    %3319 = vmatpush1.bf16.msra.mxu0 0
    %3320 = vmatprep.subr.bf16.mxu0 0
    %3321 = vmatpush1.bf16.msra.mxu0 0
    %3322 = vmatprep.subr.bf16.mxu0 0
    %3323 = vmatpush1.bf16.msra.mxu0 0
    %3324 = vmatprep.subr.bf16.mxu0 0
    %3325 = vmatpush1.bf16.msra.mxu0 0
    %3326 = vmatprep.subr.bf16.mxu0 0
    %3327 = vmatpush1.bf16.msra.mxu0 0
    %3328 = vmatprep.subr.bf16.mxu0 0
    %3329 = vmatpush1.bf16.msra.mxu0 0
    %3330 = vmatprep.subr.bf16.mxu0 0
    %3331 = vmatpush1.bf16.msra.mxu0 0
    %3332 = vmatprep.subr.bf16.mxu0 0
    %3333 = vmatpush1.bf16.msra.mxu0 0
    %3334 = vmatprep.subr.bf16.mxu0 0
    %3335 = vmatpush1.bf16.msra.mxu0 0
    %3336 = vmatprep.subr.bf16.mxu0 0
    %3337 = vmatpush1.bf16.msra.mxu0 0
    %3338 = vmatprep.subr.bf16.mxu0 0
    %3339 = vmatpush1.bf16.msra.mxu0 0
    %3340 = vmatprep.mubr.bf16.mxu0 0
    %3341 = vmatmul.mubr.bf16.gmra.mrb[0].mxu0 %v3299
    %v3342 = vpop.f32.mrb[0].mxu0
    %v3343 = vadd.f32 %v3280, %v3342
    %v3344 = vpop.f32.mrb[0].mxu0
    %v3345 = vpop.f32.mrb[0].mxu0
    %v3346 = vadd.f32 %v3280, %v3345
    %v3347 = vpop.f32.mrb[0].mxu0
    %3348 = vmatprep.mubr.bf16.mxu0 0
    %3349 = vmatmul.mubr.bf16.gmra.mrb[0].mxu0 %v3302
    %v3350 = vpop.f32.mrb[0].mxu0
    %v3351 = vadd.f32 %v3280, %v3350
    %v3352 = vpop.f32.mrb[0].mxu0
    %v3353 = vpop.f32.mrb[0].mxu0
    %v3354 = vadd.f32 %v3280, %v3353
    %v3355 = vpop.f32.mrb[0].mxu0
    %3356 = vdwg.mxu0
    %v3357 = vld [vmem:[%s5] sm:$0x3]
    %v3358 = vld [vmem:[%s6] sm:$0x3]
    %3359 = vxpose.xlu0.b32.start [1/16] %v3343, 128
    %3360 = vxpose.xlu0.b32.cont [2/16] %v3346, 128
    %3361 = vxpose.xlu0.b32.cont [3/16] 0.0, 128
    %3362 = vxpose.xlu0.b32.cont [4/16] 0.0, 128
    %3363 = vxpose.xlu0.b32.cont [5/16] 0.0, 128
    %3364 = vxpose.xlu0.b32.cont [6/16] 0.0, 128
    %3365 = vxpose.xlu0.b32.cont [7/16] 0.0, 128
    %3366 = vxpose.xlu0.b32.cont [8/16] 0.0, 128
    %3367 = vxpose.xlu0.b32.cont [9/16] 0.0, 128
    %3368 = vxpose.xlu0.b32.cont [10/16] 0.0, 128
    %3369 = vxpose.xlu0.b32.cont [11/16] 0.0, 128
    %3370 = vxpose.xlu0.b32.cont [12/16] 0.0, 128
    %3371 = vxpose.xlu0.b32.cont [13/16] 0.0, 128
    %3372 = vxpose.xlu0.b32.cont [14/16] 0.0, 128
    %3373 = vxpose.xlu0.b32.cont [15/16] 0.0, 128
    %3374 = vxpose.xlu0.b32.end [16/16] 0.0, 128
    %v3375 = vpop.trf.xlu0
    %v3376 = vpop.trf.xlu0
    %v3377 = vpop.trf.xlu0
    %v3378 = vpop.trf.xlu0
    %v3379 = vpop.trf.xlu0
    %v3380 = vpop.trf.xlu0
    %v3381 = vpop.trf.xlu0
    %v3382 = vpop.trf.xlu0
    %v3383 = vpop.trf.xlu0
    %v3384 = vpop.trf.xlu0
    %v3385 = vpop.trf.xlu0
    %v3386 = vpop.trf.xlu0
    %v3387 = vpop.trf.xlu0
    %v3388 = vpop.trf.xlu0
    %v3389 = vpop.trf.xlu0
    %v3390 = vpop.trf.xlu0
    %3392 = vrot.lane.b32.xlu0 %v3375, 124
    %v3393 = vpop.permute.xlu0 %3392
    %3395 = vrot.lane.b32.xlu0 %v3375, 120
    %v3396 = vpop.permute.xlu0 %3395
    %3398 = vrot.lane.b32.xlu0 %v3375, 116
    %v3399 = vpop.permute.xlu0 %3398
    %v3401 = vcombine.low %v3375, %v3396
    %v3403 = vunpack.c.l.s4 1983009808
    %v3404 = vunpack.c.0.s8 %v3403
    %v3405 = vlaneseq
    %v3406 = vshrl.u32 %v3405, 7
    %v3407 = vsub.s32 %v3404, %v3406
    %v3408 = vrot.slane %v3401, %v3407
    %v3409 = vcombine.low %v3393, %v3399
    %v3411 = vunpack.c.l.s4 1983009808
    %v3412 = vunpack.c.0.s8 %v3411
    %v3413 = vlaneseq
    %v3414 = vshrl.u32 %v3413, 7
    %v3415 = vsub.s32 %v3412, %v3414
    %v3416 = vrot.slane %v3409, %v3415
    %v3417 = vcombine.low %v3408, %v3416
    %v3418 = vcombine.high %v3408, %v3416
    %v3420 = vunpack.c.l.s4 1934713408
    %v3421 = vunpack.c.0.s8 %v3420
    %v3422 = vlaneseq
    %v3423 = vshrl.u32 %v3422, 7
    %v3424 = vsub.s32 %v3421, %v3423
    %v3425 = vrot.slane %v3417, %v3424
    %v3427 = vunpack.c.l.s4 1934713408
    %v3428 = vunpack.c.0.s8 %v3427
    %v3429 = vlaneseq
    %v3430 = vshrl.u32 %v3429, 7
    %v3431 = vsub.s32 %v3428, %v3430
    %v3432 = vrot.slane %v3418, %v3431
    %v3433 = vcombine.high %v3425, 0.0
    %v3434 = vcombine.high %v3432, 0.0
    %3435 = vxpose.xlu0.b32.start [1/16] %v3425, 128
    %3436 = vxpose.xlu0.b32.cont [2/16] 0.0, 128
    %3437 = vxpose.xlu0.b32.cont [3/16] 0.0, 128
    %3438 = vxpose.xlu0.b32.cont [4/16] 0.0, 128
    %3439 = vxpose.xlu0.b32.cont [5/16] 0.0, 128
    %3440 = vxpose.xlu0.b32.cont [6/16] 0.0, 128
    %3441 = vxpose.xlu0.b32.cont [7/16] 0.0, 128
    %3442 = vxpose.xlu0.b32.cont [8/16] 0.0, 128
    %3443 = vxpose.xlu0.b32.cont [9/16] 0.0, 128
    %3444 = vxpose.xlu0.b32.cont [10/16] 0.0, 128
    %3445 = vxpose.xlu0.b32.cont [11/16] 0.0, 128
    %3446 = vxpose.xlu0.b32.cont [12/16] 0.0, 128
    %3447 = vxpose.xlu0.b32.cont [13/16] 0.0, 128
    %3448 = vxpose.xlu0.b32.cont [14/16] 0.0, 128
    %3449 = vxpose.xlu0.b32.cont [15/16] 0.0, 128
    %3450 = vxpose.xlu0.b32.end [16/16] 0.0, 128
    %v3451 = vpop.trf.xlu0
    %v3452 = vpop.trf.xlu0
    %v3453 = vpop.trf.xlu0
    %v3454 = vpop.trf.xlu0
    %v3455 = vpop.trf.xlu0
    %v3456 = vpop.trf.xlu0
    %v3457 = vpop.trf.xlu0
    %v3458 = vpop.trf.xlu0
    %v3459 = vpop.trf.xlu0
    %v3460 = vpop.trf.xlu0
    %v3461 = vpop.trf.xlu0
    %v3462 = vpop.trf.xlu0
    %v3463 = vpop.trf.xlu0
    %v3464 = vpop.trf.xlu0
    %v3465 = vpop.trf.xlu0
    %v3466 = vpop.trf.xlu0
    %3467 = vxpose.xlu0.b32.start [1/16] %v3433, 128
    %3468 = vxpose.xlu0.b32.cont [2/16] 0.0, 128
    %3469 = vxpose.xlu0.b32.cont [3/16] 0.0, 128
    %3470 = vxpose.xlu0.b32.cont [4/16] 0.0, 128
    %3471 = vxpose.xlu0.b32.cont [5/16] 0.0, 128
    %3472 = vxpose.xlu0.b32.cont [6/16] 0.0, 128
    %3473 = vxpose.xlu0.b32.cont [7/16] 0.0, 128
    %3474 = vxpose.xlu0.b32.cont [8/16] 0.0, 128
    %3475 = vxpose.xlu0.b32.cont [9/16] 0.0, 128
    %3476 = vxpose.xlu0.b32.cont [10/16] 0.0, 128
    %3477 = vxpose.xlu0.b32.cont [11/16] 0.0, 128
    %3478 = vxpose.xlu0.b32.cont [12/16] 0.0, 128
    %3479 = vxpose.xlu0.b32.cont [13/16] 0.0, 128
    %3480 = vxpose.xlu0.b32.cont [14/16] 0.0, 128
    %3481 = vxpose.xlu0.b32.cont [15/16] 0.0, 128
    %3482 = vxpose.xlu0.b32.end [16/16] 0.0, 128
    %v3483 = vpop.trf.xlu0
    %v3484 = vpop.trf.xlu0
    %v3485 = vpop.trf.xlu0
    %v3486 = vpop.trf.xlu0
    %v3487 = vpop.trf.xlu0
    %v3488 = vpop.trf.xlu0
    %v3489 = vpop.trf.xlu0
    %v3490 = vpop.trf.xlu0
    %v3491 = vpop.trf.xlu0
    %v3492 = vpop.trf.xlu0
    %v3493 = vpop.trf.xlu0
    %v3494 = vpop.trf.xlu0
    %v3495 = vpop.trf.xlu0
    %v3496 = vpop.trf.xlu0
    %v3497 = vpop.trf.xlu0
    %v3498 = vpop.trf.xlu0
    %3499 = vxpose.xlu0.b32.start [1/16] %v3432, 128
    %3500 = vxpose.xlu0.b32.cont [2/16] 0.0, 128
    %3501 = vxpose.xlu0.b32.cont [3/16] 0.0, 128
    %3502 = vxpose.xlu0.b32.cont [4/16] 0.0, 128
    %3503 = vxpose.xlu0.b32.cont [5/16] 0.0, 128
    %3504 = vxpose.xlu0.b32.cont [6/16] 0.0, 128
    %3505 = vxpose.xlu0.b32.cont [7/16] 0.0, 128
    %3506 = vxpose.xlu0.b32.cont [8/16] 0.0, 128
    %3507 = vxpose.xlu0.b32.cont [9/16] 0.0, 128
    %3508 = vxpose.xlu0.b32.cont [10/16] 0.0, 128
    %3509 = vxpose.xlu0.b32.cont [11/16] 0.0, 128
    %3510 = vxpose.xlu0.b32.cont [12/16] 0.0, 128
    %3511 = vxpose.xlu0.b32.cont [13/16] 0.0, 128
    %3512 = vxpose.xlu0.b32.cont [14/16] 0.0, 128
    %3513 = vxpose.xlu0.b32.cont [15/16] 0.0, 128
    %3514 = vxpose.xlu0.b32.end [16/16] 0.0, 128
    %v3515 = vpop.trf.xlu0
    %v3516 = vpop.trf.xlu0
    %v3517 = vpop.trf.xlu0
    %v3518 = vpop.trf.xlu0
    %v3519 = vpop.trf.xlu0
    %v3520 = vpop.trf.xlu0
    %v3521 = vpop.trf.xlu0
    %v3522 = vpop.trf.xlu0
    %v3523 = vpop.trf.xlu0
    %v3524 = vpop.trf.xlu0
    %v3525 = vpop.trf.xlu0
    %v3526 = vpop.trf.xlu0
    %v3527 = vpop.trf.xlu0
    %v3528 = vpop.trf.xlu0
    %v3529 = vpop.trf.xlu0
    %v3530 = vpop.trf.xlu0
    %3531 = vxpose.xlu0.b32.start [1/16] %v3434, 128
    %3532 = vxpose.xlu0.b32.cont [2/16] 0.0, 128
    %3533 = vxpose.xlu0.b32.cont [3/16] 0.0, 128
    %3534 = vxpose.xlu0.b32.cont [4/16] 0.0, 128
    %3535 = vxpose.xlu0.b32.cont [5/16] 0.0, 128
    %3536 = vxpose.xlu0.b32.cont [6/16] 0.0, 128
    %3537 = vxpose.xlu0.b32.cont [7/16] 0.0, 128
    %3538 = vxpose.xlu0.b32.cont [8/16] 0.0, 128
    %3539 = vxpose.xlu0.b32.cont [9/16] 0.0, 128
    %3540 = vxpose.xlu0.b32.cont [10/16] 0.0, 128
    %3541 = vxpose.xlu0.b32.cont [11/16] 0.0, 128
    %3542 = vxpose.xlu0.b32.cont [12/16] 0.0, 128
    %3543 = vxpose.xlu0.b32.cont [13/16] 0.0, 128
    %3544 = vxpose.xlu0.b32.cont [14/16] 0.0, 128
    %3545 = vxpose.xlu0.b32.cont [15/16] 0.0, 128
    %3546 = vxpose.xlu0.b32.end [16/16] 0.0, 128
    %v3547 = vpop.trf.xlu0
    %v3548 = vpop.trf.xlu0
    %v3549 = vpop.trf.xlu0
    %v3550 = vpop.trf.xlu0
    %v3551 = vpop.trf.xlu0
    %v3552 = vpop.trf.xlu0
    %v3553 = vpop.trf.xlu0
    %v3554 = vpop.trf.xlu0
    %v3555 = vpop.trf.xlu0
    %v3556 = vpop.trf.xlu0
    %v3557 = vpop.trf.xlu0
    %v3558 = vpop.trf.xlu0
    %v3559 = vpop.trf.xlu0
    %v3560 = vpop.trf.xlu0
    %v3561 = vpop.trf.xlu0
    %v3562 = vpop.trf.xlu0
    %v3567 = vcombine.low %v3451, %v3483
    %v3568 = vcombine.low %v3515, %v3547
    %v3571 = vpack.c.bf16 %v3568, %v3567
    %v3573 = vsel %vm1976, %v3571, 0
    %v3576 = vsel %vm3304, %v3357, 0
    %3578 = vmatprep.subr.bf16.mxu0 0
    %3579 = vmatpush1.bf16.msra.mxu0 %v3576
    %3580 = vmatprep.subr.bf16.mxu0 0
    %3581 = vmatpush1.bf16.msra.mxu0 0
    %3582 = vmatprep.subr.bf16.mxu0 0
    %3583 = vmatpush1.bf16.msra.mxu0 0
    %3584 = vmatprep.subr.bf16.mxu0 0
    %3585 = vmatpush1.bf16.msra.mxu0 0
    %3586 = vmatprep.subr.bf16.mxu0 0
    %3587 = vmatpush1.bf16.msra.mxu0 0
    %3588 = vmatprep.subr.bf16.mxu0 0
    %3589 = vmatpush1.bf16.msra.mxu0 0
    %3590 = vmatprep.subr.bf16.mxu0 0
    %3591 = vmatpush1.bf16.msra.mxu0 0
    %3592 = vmatprep.subr.bf16.mxu0 0
    %3593 = vmatpush1.bf16.msra.mxu0 0
    %3594 = vmatprep.subr.bf16.mxu0 0
    %3595 = vmatpush1.bf16.msra.mxu0 0
    %3596 = vmatprep.subr.bf16.mxu0 0
    %3597 = vmatpush1.bf16.msra.mxu0 0
    %3598 = vmatprep.subr.bf16.mxu0 0
    %3599 = vmatpush1.bf16.msra.mxu0 0
    %3600 = vmatprep.subr.bf16.mxu0 0
    %3601 = vmatpush1.bf16.msra.mxu0 0
    %3602 = vmatprep.subr.bf16.mxu0 0
    %3603 = vmatpush1.bf16.msra.mxu0 0
    %3604 = vmatprep.subr.bf16.mxu0 0
    %3605 = vmatpush1.bf16.msra.mxu0 0
    %3606 = vmatprep.subr.bf16.mxu0 0
    %3607 = vmatpush1.bf16.msra.mxu0 0
    %3608 = vmatprep.subr.bf16.mxu0 0
    %3609 = vmatpush1.bf16.msra.mxu0 0
    %3610 = vmatprep.mubr.bf16.mxu0 0
    %3611 = vmatmul.mubr.bf16.gmra.mrb[0].mxu0 %v3573
    %v3612 = vpop.f32.mrb[0].mxu0
    %v3613 = vadd.f32 0.0, %v3612
    %v3614 = vpop.f32.mrb[0].mxu0
    %v3615 = vpop.f32.mrb[0].mxu0
    %v3616 = vadd.f32 0.0, %v3615
    %v3617 = vpop.f32.mrb[0].mxu0
    %3618 = vdwg.mxu0
    %v3621 = vcombine.high %v3613, %v3613
    %v3622 = vcombine.high %v3616, %v3616
    %3625 = vxpose.xlu0.b32.start [1/16] %v3613, 128
    %3626 = vxpose.xlu0.b32.cont [2/16] 0.0, 128
    %3627 = vxpose.xlu0.b32.cont [3/16] 0.0, 128
    %3628 = vxpose.xlu0.b32.cont [4/16] 0.0, 128
    %3629 = vxpose.xlu0.b32.cont [5/16] 0.0, 128
    %3630 = vxpose.xlu0.b32.cont [6/16] 0.0, 128
    %3631 = vxpose.xlu0.b32.cont [7/16] 0.0, 128
    %3632 = vxpose.xlu0.b32.cont [8/16] 0.0, 128
    %3633 = vxpose.xlu0.b32.cont [9/16] 0.0, 128
    %3634 = vxpose.xlu0.b32.cont [10/16] 0.0, 128
    %3635 = vxpose.xlu0.b32.cont [11/16] 0.0, 128
    %3636 = vxpose.xlu0.b32.cont [12/16] 0.0, 128
    %3637 = vxpose.xlu0.b32.cont [13/16] 0.0, 128
    %3638 = vxpose.xlu0.b32.cont [14/16] 0.0, 128
    %3639 = vxpose.xlu0.b32.cont [15/16] 0.0, 128
    %3640 = vxpose.xlu0.b32.end [16/16] 0.0, 128
    %v3641 = vpop.trf.xlu0
    %v3642 = vpop.trf.xlu0
    %v3643 = vpop.trf.xlu0
    %v3644 = vpop.trf.xlu0
    %v3645 = vpop.trf.xlu0
    %v3646 = vpop.trf.xlu0
    %v3647 = vpop.trf.xlu0
    %v3648 = vpop.trf.xlu0
    %v3649 = vpop.trf.xlu0
    %v3650 = vpop.trf.xlu0
    %v3651 = vpop.trf.xlu0
    %v3652 = vpop.trf.xlu0
    %v3653 = vpop.trf.xlu0
    %v3654 = vpop.trf.xlu0
    %v3655 = vpop.trf.xlu0
    %v3656 = vpop.trf.xlu0
    %3657 = vxpose.xlu0.b32.start [1/16] %v3621, 128
    %3658 = vxpose.xlu0.b32.cont [2/16] 0.0, 128
    %3659 = vxpose.xlu0.b32.cont [3/16] 0.0, 128
    %3660 = vxpose.xlu0.b32.cont [4/16] 0.0, 128
    %3661 = vxpose.xlu0.b32.cont [5/16] 0.0, 128
    %3662 = vxpose.xlu0.b32.cont [6/16] 0.0, 128
    %3663 = vxpose.xlu0.b32.cont [7/16] 0.0, 128
    %3664 = vxpose.xlu0.b32.cont [8/16] 0.0, 128
    %3665 = vxpose.xlu0.b32.cont [9/16] 0.0, 128
    %3666 = vxpose.xlu0.b32.cont [10/16] 0.0, 128
    %3667 = vxpose.xlu0.b32.cont [11/16] 0.0, 128
    %3668 = vxpose.xlu0.b32.cont [12/16] 0.0, 128
    %3669 = vxpose.xlu0.b32.cont [13/16] 0.0, 128
    %3670 = vxpose.xlu0.b32.cont [14/16] 0.0, 128
    %3671 = vxpose.xlu0.b32.cont [15/16] 0.0, 128
    %3672 = vxpose.xlu0.b32.end [16/16] 0.0, 128
    %v3673 = vpop.trf.xlu0
    %v3674 = vpop.trf.xlu0
    %v3675 = vpop.trf.xlu0
    %v3676 = vpop.trf.xlu0
    %v3677 = vpop.trf.xlu0
    %v3678 = vpop.trf.xlu0
    %v3679 = vpop.trf.xlu0
    %v3680 = vpop.trf.xlu0
    %v3681 = vpop.trf.xlu0
    %v3682 = vpop.trf.xlu0
    %v3683 = vpop.trf.xlu0
    %v3684 = vpop.trf.xlu0
    %v3685 = vpop.trf.xlu0
    %v3686 = vpop.trf.xlu0
    %v3687 = vpop.trf.xlu0
    %v3688 = vpop.trf.xlu0
    %3689 = vxpose.xlu0.b32.start [1/16] %v3616, 128
    %3690 = vxpose.xlu0.b32.cont [2/16] 0.0, 128
    %3691 = vxpose.xlu0.b32.cont [3/16] 0.0, 128
    %3692 = vxpose.xlu0.b32.cont [4/16] 0.0, 128
    %3693 = vxpose.xlu0.b32.cont [5/16] 0.0, 128
    %3694 = vxpose.xlu0.b32.cont [6/16] 0.0, 128
    %3695 = vxpose.xlu0.b32.cont [7/16] 0.0, 128
    %3696 = vxpose.xlu0.b32.cont [8/16] 0.0, 128
    %3697 = vxpose.xlu0.b32.cont [9/16] 0.0, 128
    %3698 = vxpose.xlu0.b32.cont [10/16] 0.0, 128
    %3699 = vxpose.xlu0.b32.cont [11/16] 0.0, 128
    %3700 = vxpose.xlu0.b32.cont [12/16] 0.0, 128
    %3701 = vxpose.xlu0.b32.cont [13/16] 0.0, 128
    %3702 = vxpose.xlu0.b32.cont [14/16] 0.0, 128
    %3703 = vxpose.xlu0.b32.cont [15/16] 0.0, 128
    %3704 = vxpose.xlu0.b32.end [16/16] 0.0, 128
    %v3705 = vpop.trf.xlu0
    %v3706 = vpop.trf.xlu0
    %v3707 = vpop.trf.xlu0
    %v3708 = vpop.trf.xlu0
    %v3709 = vpop.trf.xlu0
    %v3710 = vpop.trf.xlu0
    %v3711 = vpop.trf.xlu0
    %v3712 = vpop.trf.xlu0
    %v3713 = vpop.trf.xlu0
    %v3714 = vpop.trf.xlu0
    %v3715 = vpop.trf.xlu0
    %v3716 = vpop.trf.xlu0
    %v3717 = vpop.trf.xlu0
    %v3718 = vpop.trf.xlu0
    %v3719 = vpop.trf.xlu0
    %v3720 = vpop.trf.xlu0
    %3721 = vxpose.xlu0.b32.start [1/16] %v3622, 128
    %3722 = vxpose.xlu0.b32.cont [2/16] 0.0, 128
    %3723 = vxpose.xlu0.b32.cont [3/16] 0.0, 128
    %3724 = vxpose.xlu0.b32.cont [4/16] 0.0, 128
    %3725 = vxpose.xlu0.b32.cont [5/16] 0.0, 128
    %3726 = vxpose.xlu0.b32.cont [6/16] 0.0, 128
    %3727 = vxpose.xlu0.b32.cont [7/16] 0.0, 128
    %3728 = vxpose.xlu0.b32.cont [8/16] 0.0, 128
    %3729 = vxpose.xlu0.b32.cont [9/16] 0.0, 128
    %3730 = vxpose.xlu0.b32.cont [10/16] 0.0, 128
    %3731 = vxpose.xlu0.b32.cont [11/16] 0.0, 128
    %3732 = vxpose.xlu0.b32.cont [12/16] 0.0, 128
    %3733 = vxpose.xlu0.b32.cont [13/16] 0.0, 128
    %3734 = vxpose.xlu0.b32.cont [14/16] 0.0, 128
    %3735 = vxpose.xlu0.b32.cont [15/16] 0.0, 128
    %3736 = vxpose.xlu0.b32.end [16/16] 0.0, 128
    %v3737 = vpop.trf.xlu0
    %v3738 = vpop.trf.xlu0
    %v3739 = vpop.trf.xlu0
    %v3740 = vpop.trf.xlu0
    %v3741 = vpop.trf.xlu0
    %v3742 = vpop.trf.xlu0
    %v3743 = vpop.trf.xlu0
    %v3744 = vpop.trf.xlu0
    %v3745 = vpop.trf.xlu0
    %v3746 = vpop.trf.xlu0
    %v3747 = vpop.trf.xlu0
    %v3748 = vpop.trf.xlu0
    %v3749 = vpop.trf.xlu0
    %v3750 = vpop.trf.xlu0
    %v3751 = vpop.trf.xlu0
    %v3752 = vpop.trf.xlu0
    %v3753 = vpack.c.bf16 %v3642, %v3641
    %v3754 = vpack.c.bf16 %v3674, %v3673
    %v3755 = vpack.c.bf16 %v3706, %v3705
    %v3756 = vpack.c.bf16 %v3738, %v3737
    %v3758 = vsel %vm1976, %v3753, 0
    %v3761 = vsel %vm1976, %v3754, 0
    %v3764 = vsel %vm1976, %v3755, 0
    %v3767 = vsel %vm1976, %v3756, 0
    %v3770 = vsel %vm3304, %v3358, 0
    %3772 = vmatprep.subr.bf16.mxu0 0
    %3773 = vmatpush1.bf16.msra.mxu0 %v3770
    %3774 = vmatprep.subr.bf16.mxu0 0
    %3775 = vmatpush1.bf16.msra.mxu0 0
    %3776 = vmatprep.subr.bf16.mxu0 0
    %3777 = vmatpush1.bf16.msra.mxu0 0
    %3778 = vmatprep.subr.bf16.mxu0 0
    %3779 = vmatpush1.bf16.msra.mxu0 0
    %3780 = vmatprep.subr.bf16.mxu0 0
    %3781 = vmatpush1.bf16.msra.mxu0 0
    %3782 = vmatprep.subr.bf16.mxu0 0
    %3783 = vmatpush1.bf16.msra.mxu0 0
    %3784 = vmatprep.subr.bf16.mxu0 0
    %3785 = vmatpush1.bf16.msra.mxu0 0
    %3786 = vmatprep.subr.bf16.mxu0 0
    %3787 = vmatpush1.bf16.msra.mxu0 0
    %3788 = vmatprep.subr.bf16.mxu0 0
    %3789 = vmatpush1.bf16.msra.mxu0 0
    %3790 = vmatprep.subr.bf16.mxu0 0
    %3791 = vmatpush1.bf16.msra.mxu0 0
    %3792 = vmatprep.subr.bf16.mxu0 0
    %3793 = vmatpush1.bf16.msra.mxu0 0
    %3794 = vmatprep.subr.bf16.mxu0 0
    %3795 = vmatpush1.bf16.msra.mxu0 0
    %3796 = vmatprep.subr.bf16.mxu0 0
    %3797 = vmatpush1.bf16.msra.mxu0 0
    %3798 = vmatprep.subr.bf16.mxu0 0
    %3799 = vmatpush1.bf16.msra.mxu0 0
    %3800 = vmatprep.subr.bf16.mxu0 0
    %3801 = vmatpush1.bf16.msra.mxu0 0
    %3802 = vmatprep.subr.bf16.mxu0 0
    %3803 = vmatpush1.bf16.msra.mxu0 0
    %3804 = vmatprep.mubr.bf16.mxu0 0
    %3805 = vmatmul.mubr.bf16.gmra.mrb[0].mxu0 %v3758
    %v3806 = vpop.f32.mrb[0].mxu0
    %v3807 = vadd.f32 0.0, %v3806
    %v3808 = vpop.f32.mrb[0].mxu0
    %v3809 = vpop.f32.mrb[0].mxu0
    %v3810 = vadd.f32 0.0, %v3809
    %v3811 = vpop.f32.mrb[0].mxu0
    %3812 = vmatprep.mubr.bf16.mxu0 0
    %3813 = vmatmul.mubr.bf16.gmra.mrb[0].mxu0 %v3761
    %v3814 = vpop.f32.mrb[0].mxu0
    %v3815 = vadd.f32 0.0, %v3814
    %v3816 = vpop.f32.mrb[0].mxu0
    %v3817 = vpop.f32.mrb[0].mxu0
    %v3818 = vadd.f32 0.0, %v3817
    %v3819 = vpop.f32.mrb[0].mxu0
    %3820 = vmatprep.mubr.bf16.mxu0 0
    %3821 = vmatmul.mubr.bf16.gmra.mrb[0].mxu0 %v3764
    %v3822 = vpop.f32.mrb[0].mxu0
    %v3823 = vadd.f32 0.0, %v3822
    %v3824 = vpop.f32.mrb[0].mxu0
    %v3825 = vpop.f32.mrb[0].mxu0
    %v3826 = vadd.f32 0.0, %v3825
    %v3827 = vpop.f32.mrb[0].mxu0
    %3828 = vmatprep.mubr.bf16.mxu0 0
    %3829 = vmatmul.mubr.bf16.gmra.mrb[0].mxu0 %v3767
    %v3830 = vpop.f32.mrb[0].mxu0
    %v3831 = vadd.f32 0.0, %v3830
    %v3832 = vpop.f32.mrb[0].mxu0
    %v3833 = vpop.f32.mrb[0].mxu0
    %v3834 = vadd.f32 0.0, %v3833
    %v3835 = vpop.f32.mrb[0].mxu0
    %3836 = vdwg.mxu0
    %vm3837 = vcmask 130048
    %3838 = vst.msk [vmem:[#allocation6] sm:$0xff] %vm3837, %v3807
    %3839 = vst.msk [vmem:[#allocation6 + $0x8] sm:$0xff] %vm3837, %v3810
    %3840 = vst.msk [vmem:[#allocation6 + $0x10] sm:$0xff] %vm3837, %v3815
    %3841 = vst.msk [vmem:[#allocation6 + $0x18] sm:$0xff] %vm3837, %v3818
    %3842 = vst.msk [vmem:[#allocation6 + $0x20] sm:$0xff] %vm3837, %v3823
    %3843 = vst.msk [vmem:[#allocation6 + $0x28] sm:$0xff] %vm3837, %v3826
    %3844 = vst.msk [vmem:[#allocation6 + $0x30] sm:$0xff] %vm3837, %v3831
    %3845 = vst.msk [vmem:[#allocation6 + $0x38] sm:$0xff] %vm3837, %v3834
    %3846 = vxpose.xlu0.b32.start [1/16] %v3351, 128
    %3847 = vxpose.xlu0.b32.cont [2/16] %v3354, 128
    %3848 = vxpose.xlu0.b32.cont [3/16] 0.0, 128
    %3849 = vxpose.xlu0.b32.cont [4/16] 0.0, 128
    %3850 = vxpose.xlu0.b32.cont [5/16] 0.0, 128
    %3851 = vxpose.xlu0.b32.cont [6/16] 0.0, 128
    %3852 = vxpose.xlu0.b32.cont [7/16] 0.0, 128
    %3853 = vxpose.xlu0.b32.cont [8/16] 0.0, 128
    %3854 = vxpose.xlu0.b32.cont [9/16] 0.0, 128
    %3855 = vxpose.xlu0.b32.cont [10/16] 0.0, 128
    %3856 = vxpose.xlu0.b32.cont [11/16] 0.0, 128
    %3857 = vxpose.xlu0.b32.cont [12/16] 0.0, 128
    %3858 = vxpose.xlu0.b32.cont [13/16] 0.0, 128
    %3859 = vxpose.xlu0.b32.cont [14/16] 0.0, 128
    %3860 = vxpose.xlu0.b32.cont [15/16] 0.0, 128
    %3861 = vxpose.xlu0.b32.end [16/16] 0.0, 128
    %v3862 = vpop.trf.xlu0
    %v3863 = vpop.trf.xlu0
    %v3864 = vpop.trf.xlu0
    %v3865 = vpop.trf.xlu0
    %v3866 = vpop.trf.xlu0
    %v3867 = vpop.trf.xlu0
    %v3868 = vpop.trf.xlu0
    %v3869 = vpop.trf.xlu0
    %v3870 = vpop.trf.xlu0
    %v3871 = vpop.trf.xlu0
    %v3872 = vpop.trf.xlu0
    %v3873 = vpop.trf.xlu0
    %v3874 = vpop.trf.xlu0
    %v3875 = vpop.trf.xlu0
    %v3876 = vpop.trf.xlu0
    %v3877 = vpop.trf.xlu0
    %3879 = vrot.lane.b32.xlu0 %v3862, 124
    %v3880 = vpop.permute.xlu0 %3879
    %3882 = vrot.lane.b32.xlu0 %v3862, 120
    %v3883 = vpop.permute.xlu0 %3882
    %3885 = vrot.lane.b32.xlu0 %v3862, 116
    %v3886 = vpop.permute.xlu0 %3885
    %v3888 = vcombine.low %v3862, %v3883
    %v3890 = vunpack.c.l.s4 1983009808
    %v3891 = vunpack.c.0.s8 %v3890
    %v3892 = vlaneseq
    %v3893 = vshrl.u32 %v3892, 7
    %v3894 = vsub.s32 %v3891, %v3893
    %v3895 = vrot.slane %v3888, %v3894
    %v3896 = vcombine.low %v3880, %v3886
    %v3898 = vunpack.c.l.s4 1983009808
    %v3899 = vunpack.c.0.s8 %v3898
    %v3900 = vlaneseq
    %v3901 = vshrl.u32 %v3900, 7
    %v3902 = vsub.s32 %v3899, %v3901
    %v3903 = vrot.slane %v3896, %v3902
    %v3904 = vcombine.low %v3895, %v3903
    %v3905 = vcombine.high %v3895, %v3903
    %v3907 = vunpack.c.l.s4 1934713408
    %v3908 = vunpack.c.0.s8 %v3907
    %v3909 = vlaneseq
    %v3910 = vshrl.u32 %v3909, 7
    %v3911 = vsub.s32 %v3908, %v3910
    %v3912 = vrot.slane %v3904, %v3911
    %v3914 = vunpack.c.l.s4 1934713408
    %v3915 = vunpack.c.0.s8 %v3914
    %v3916 = vlaneseq
    %v3917 = vshrl.u32 %v3916, 7
    %v3918 = vsub.s32 %v3915, %v3917
    %v3919 = vrot.slane %v3905, %v3918
    %v3920 = vcombine.high %v3912, 0.0
    %v3921 = vcombine.high %v3919, 0.0
    %3922 = vxpose.xlu0.b32.start [1/16] %v3912, 128
    %3923 = vxpose.xlu0.b32.cont [2/16] 0.0, 128
    %3924 = vxpose.xlu0.b32.cont [3/16] 0.0, 128
    %3925 = vxpose.xlu0.b32.cont [4/16] 0.0, 128
    %3926 = vxpose.xlu0.b32.cont [5/16] 0.0, 128
    %3927 = vxpose.xlu0.b32.cont [6/16] 0.0, 128
    %3928 = vxpose.xlu0.b32.cont [7/16] 0.0, 128
    %3929 = vxpose.xlu0.b32.cont [8/16] 0.0, 128
    %3930 = vxpose.xlu0.b32.cont [9/16] 0.0, 128
    %3931 = vxpose.xlu0.b32.cont [10/16] 0.0, 128
    %3932 = vxpose.xlu0.b32.cont [11/16] 0.0, 128
    %3933 = vxpose.xlu0.b32.cont [12/16] 0.0, 128
    %3934 = vxpose.xlu0.b32.cont [13/16] 0.0, 128
    %3935 = vxpose.xlu0.b32.cont [14/16] 0.0, 128
    %3936 = vxpose.xlu0.b32.cont [15/16] 0.0, 128
    %3937 = vxpose.xlu0.b32.end [16/16] 0.0, 128
    %v3938 = vpop.trf.xlu0
    %v3939 = vpop.trf.xlu0
    %v3940 = vpop.trf.xlu0
    %v3941 = vpop.trf.xlu0
    %v3942 = vpop.trf.xlu0
    %v3943 = vpop.trf.xlu0
    %v3944 = vpop.trf.xlu0
    %v3945 = vpop.trf.xlu0
    %v3946 = vpop.trf.xlu0
    %v3947 = vpop.trf.xlu0
    %v3948 = vpop.trf.xlu0
    %v3949 = vpop.trf.xlu0
    %v3950 = vpop.trf.xlu0
    %v3951 = vpop.trf.xlu0
    %v3952 = vpop.trf.xlu0
    %v3953 = vpop.trf.xlu0
    %3954 = vxpose.xlu0.b32.start [1/16] %v3920, 128
    %3955 = vxpose.xlu0.b32.cont [2/16] 0.0, 128
    %3956 = vxpose.xlu0.b32.cont [3/16] 0.0, 128
    %3957 = vxpose.xlu0.b32.cont [4/16] 0.0, 128
    %3958 = vxpose.xlu0.b32.cont [5/16] 0.0, 128
    %3959 = vxpose.xlu0.b32.cont [6/16] 0.0, 128
    %3960 = vxpose.xlu0.b32.cont [7/16] 0.0, 128
    %3961 = vxpose.xlu0.b32.cont [8/16] 0.0, 128
    %3962 = vxpose.xlu0.b32.cont [9/16] 0.0, 128
    %3963 = vxpose.xlu0.b32.cont [10/16] 0.0, 128
    %3964 = vxpose.xlu0.b32.cont [11/16] 0.0, 128
    %3965 = vxpose.xlu0.b32.cont [12/16] 0.0, 128
    %3966 = vxpose.xlu0.b32.cont [13/16] 0.0, 128
    %3967 = vxpose.xlu0.b32.cont [14/16] 0.0, 128
    %3968 = vxpose.xlu0.b32.cont [15/16] 0.0, 128
    %3969 = vxpose.xlu0.b32.end [16/16] 0.0, 128
    %v3970 = vpop.trf.xlu0
    %v3971 = vpop.trf.xlu0
    %v3972 = vpop.trf.xlu0
    %v3973 = vpop.trf.xlu0
    %v3974 = vpop.trf.xlu0
    %v3975 = vpop.trf.xlu0
    %v3976 = vpop.trf.xlu0
    %v3977 = vpop.trf.xlu0
    %v3978 = vpop.trf.xlu0
    %v3979 = vpop.trf.xlu0
    %v3980 = vpop.trf.xlu0
    %v3981 = vpop.trf.xlu0
    %v3982 = vpop.trf.xlu0
    %v3983 = vpop.trf.xlu0
    %v3984 = vpop.trf.xlu0
    %v3985 = vpop.trf.xlu0
    %3986 = vxpose.xlu0.b32.start [1/16] %v3919, 128
    %3987 = vxpose.xlu0.b32.cont [2/16] 0.0, 128
    %3988 = vxpose.xlu0.b32.cont [3/16] 0.0, 128
    %3989 = vxpose.xlu0.b32.cont [4/16] 0.0, 128
    %3990 = vxpose.xlu0.b32.cont [5/16] 0.0, 128
    %3991 = vxpose.xlu0.b32.cont [6/16] 0.0, 128
    %3992 = vxpose.xlu0.b32.cont [7/16] 0.0, 128
    %3993 = vxpose.xlu0.b32.cont [8/16] 0.0, 128
    %3994 = vxpose.xlu0.b32.cont [9/16] 0.0, 128
    %3995 = vxpose.xlu0.b32.cont [10/16] 0.0, 128
    %3996 = vxpose.xlu0.b32.cont [11/16] 0.0, 128
    %3997 = vxpose.xlu0.b32.cont [12/16] 0.0, 128
    %3998 = vxpose.xlu0.b32.cont [13/16] 0.0, 128
    %3999 = vxpose.xlu0.b32.cont [14/16] 0.0, 128
    %4000 = vxpose.xlu0.b32.cont [15/16] 0.0, 128
    %4001 = vxpose.xlu0.b32.end [16/16] 0.0, 128
    %v4002 = vpop.trf.xlu0
    %v4003 = vpop.trf.xlu0
    %v4004 = vpop.trf.xlu0
    %v4005 = vpop.trf.xlu0
    %v4006 = vpop.trf.xlu0
    %v4007 = vpop.trf.xlu0
    %v4008 = vpop.trf.xlu0
    %v4009 = vpop.trf.xlu0
    %v4010 = vpop.trf.xlu0
    %v4011 = vpop.trf.xlu0
    %v4012 = vpop.trf.xlu0
    %v4013 = vpop.trf.xlu0
    %v4014 = vpop.trf.xlu0
    %v4015 = vpop.trf.xlu0
    %v4016 = vpop.trf.xlu0
    %v4017 = vpop.trf.xlu0
    %4018 = vxpose.xlu0.b32.start [1/16] %v3921, 128
    %4019 = vxpose.xlu0.b32.cont [2/16] 0.0, 128
    %4020 = vxpose.xlu0.b32.cont [3/16] 0.0, 128
    %4021 = vxpose.xlu0.b32.cont [4/16] 0.0, 128
    %4022 = vxpose.xlu0.b32.cont [5/16] 0.0, 128
    %4023 = vxpose.xlu0.b32.cont [6/16] 0.0, 128
    %4024 = vxpose.xlu0.b32.cont [7/16] 0.0, 128
    %4025 = vxpose.xlu0.b32.cont [8/16] 0.0, 128
    %4026 = vxpose.xlu0.b32.cont [9/16] 0.0, 128
    %4027 = vxpose.xlu0.b32.cont [10/16] 0.0, 128
    %4028 = vxpose.xlu0.b32.cont [11/16] 0.0, 128
    %4029 = vxpose.xlu0.b32.cont [12/16] 0.0, 128
    %4030 = vxpose.xlu0.b32.cont [13/16] 0.0, 128
    %4031 = vxpose.xlu0.b32.cont [14/16] 0.0, 128
    %4032 = vxpose.xlu0.b32.cont [15/16] 0.0, 128
    %4033 = vxpose.xlu0.b32.end [16/16] 0.0, 128
    %v4034 = vpop.trf.xlu0
    %v4035 = vpop.trf.xlu0
    %v4036 = vpop.trf.xlu0
    %v4037 = vpop.trf.xlu0
    %v4038 = vpop.trf.xlu0
    %v4039 = vpop.trf.xlu0
    %v4040 = vpop.trf.xlu0
    %v4041 = vpop.trf.xlu0
    %v4042 = vpop.trf.xlu0
    %v4043 = vpop.trf.xlu0
    %v4044 = vpop.trf.xlu0
    %v4045 = vpop.trf.xlu0
    %v4046 = vpop.trf.xlu0
    %v4047 = vpop.trf.xlu0
    %v4048 = vpop.trf.xlu0
    %v4049 = vpop.trf.xlu0
    %v4054 = vcombine.low %v3938, %v3970
    %v4055 = vcombine.low %v4002, %v4034
    %v4058 = vpack.c.bf16 %v4055, %v4054
    %v4060 = vsel %vm1976, %v4058, 0
    %4062 = vmatprep.subr.bf16.mxu0 0
    %4063 = vmatpush1.bf16.msra.mxu0 %v3576
    %4064 = vmatprep.subr.bf16.mxu0 0
    %4065 = vmatpush1.bf16.msra.mxu0 0
    %4066 = vmatprep.subr.bf16.mxu0 0
    %4067 = vmatpush1.bf16.msra.mxu0 0
    %4068 = vmatprep.subr.bf16.mxu0 0
    %4069 = vmatpush1.bf16.msra.mxu0 0
    %4070 = vmatprep.subr.bf16.mxu0 0
    %4071 = vmatpush1.bf16.msra.mxu0 0
    %4072 = vmatprep.subr.bf16.mxu0 0
    %4073 = vmatpush1.bf16.msra.mxu0 0
    %4074 = vmatprep.subr.bf16.mxu0 0
    %4075 = vmatpush1.bf16.msra.mxu0 0
    %4076 = vmatprep.subr.bf16.mxu0 0
    %4077 = vmatpush1.bf16.msra.mxu0 0
    %4078 = vmatprep.subr.bf16.mxu0 0
    %4079 = vmatpush1.bf16.msra.mxu0 0
    %4080 = vmatprep.subr.bf16.mxu0 0
    %4081 = vmatpush1.bf16.msra.mxu0 0
    %4082 = vmatprep.subr.bf16.mxu0 0
    %4083 = vmatpush1.bf16.msra.mxu0 0
    %4084 = vmatprep.subr.bf16.mxu0 0
    %4085 = vmatpush1.bf16.msra.mxu0 0
    %4086 = vmatprep.subr.bf16.mxu0 0
    %4087 = vmatpush1.bf16.msra.mxu0 0
    %4088 = vmatprep.subr.bf16.mxu0 0
    %4089 = vmatpush1.bf16.msra.mxu0 0
    %4090 = vmatprep.subr.bf16.mxu0 0
    %4091 = vmatpush1.bf16.msra.mxu0 0
    %4092 = vmatprep.subr.bf16.mxu0 0
    %4093 = vmatpush1.bf16.msra.mxu0 0
    %4094 = vmatprep.mubr.bf16.mxu0 0
    %4095 = vmatmul.mubr.bf16.gmra.mrb[0].mxu0 %v4060
    %v4096 = vpop.f32.mrb[0].mxu0
    %v4097 = vadd.f32 0.0, %v4096
    %v4098 = vpop.f32.mrb[0].mxu0
    %v4099 = vpop.f32.mrb[0].mxu0
    %v4100 = vadd.f32 0.0, %v4099
    %v4101 = vpop.f32.mrb[0].mxu0
    %4102 = vdwg.mxu0
    %v4105 = vcombine.high %v4097, %v4097
    %v4106 = vcombine.high %v4100, %v4100
    %4109 = vxpose.xlu0.b32.start [1/16] %v4097, 128
    %4110 = vxpose.xlu0.b32.cont [2/16] 0.0, 128
    %4111 = vxpose.xlu0.b32.cont [3/16] 0.0, 128
    %4112 = vxpose.xlu0.b32.cont [4/16] 0.0, 128
    %4113 = vxpose.xlu0.b32.cont [5/16] 0.0, 128
    %4114 = vxpose.xlu0.b32.cont [6/16] 0.0, 128
    %4115 = vxpose.xlu0.b32.cont [7/16] 0.0, 128
    %4116 = vxpose.xlu0.b32.cont [8/16] 0.0, 128
    %4117 = vxpose.xlu0.b32.cont [9/16] 0.0, 128
    %4118 = vxpose.xlu0.b32.cont [10/16] 0.0, 128
    %4119 = vxpose.xlu0.b32.cont [11/16] 0.0, 128
    %4120 = vxpose.xlu0.b32.cont [12/16] 0.0, 128
    %4121 = vxpose.xlu0.b32.cont [13/16] 0.0, 128
    %4122 = vxpose.xlu0.b32.cont [14/16] 0.0, 128
    %4123 = vxpose.xlu0.b32.cont [15/16] 0.0, 128
    %4124 = vxpose.xlu0.b32.end [16/16] 0.0, 128
    %v4125 = vpop.trf.xlu0
    %v4126 = vpop.trf.xlu0
    %v4127 = vpop.trf.xlu0
    %v4128 = vpop.trf.xlu0
    %v4129 = vpop.trf.xlu0
    %v4130 = vpop.trf.xlu0
    %v4131 = vpop.trf.xlu0
    %v4132 = vpop.trf.xlu0
    %v4133 = vpop.trf.xlu0
    %v4134 = vpop.trf.xlu0
    %v4135 = vpop.trf.xlu0
    %v4136 = vpop.trf.xlu0
    %v4137 = vpop.trf.xlu0
    %v4138 = vpop.trf.xlu0
    %v4139 = vpop.trf.xlu0
    %v4140 = vpop.trf.xlu0
    %4141 = vxpose.xlu0.b32.start [1/16] %v4105, 128
    %4142 = vxpose.xlu0.b32.cont [2/16] 0.0, 128
    %4143 = vxpose.xlu0.b32.cont [3/16] 0.0, 128
    %4144 = vxpose.xlu0.b32.cont [4/16] 0.0, 128
    %4145 = vxpose.xlu0.b32.cont [5/16] 0.0, 128
    %4146 = vxpose.xlu0.b32.cont [6/16] 0.0, 128
    %4147 = vxpose.xlu0.b32.cont [7/16] 0.0, 128
    %4148 = vxpose.xlu0.b32.cont [8/16] 0.0, 128
    %4149 = vxpose.xlu0.b32.cont [9/16] 0.0, 128
    %4150 = vxpose.xlu0.b32.cont [10/16] 0.0, 128
    %4151 = vxpose.xlu0.b32.cont [11/16] 0.0, 128
    %4152 = vxpose.xlu0.b32.cont [12/16] 0.0, 128
    %4153 = vxpose.xlu0.b32.cont [13/16] 0.0, 128
    %4154 = vxpose.xlu0.b32.cont [14/16] 0.0, 128
    %4155 = vxpose.xlu0.b32.cont [15/16] 0.0, 128
    %4156 = vxpose.xlu0.b32.end [16/16] 0.0, 128
    %v4157 = vpop.trf.xlu0
    %v4158 = vpop.trf.xlu0
    %v4159 = vpop.trf.xlu0
    %v4160 = vpop.trf.xlu0
    %v4161 = vpop.trf.xlu0
    %v4162 = vpop.trf.xlu0
    %v4163 = vpop.trf.xlu0
    %v4164 = vpop.trf.xlu0
    %v4165 = vpop.trf.xlu0
    %v4166 = vpop.trf.xlu0
    %v4167 = vpop.trf.xlu0
    %v4168 = vpop.trf.xlu0
    %v4169 = vpop.trf.xlu0
    %v4170 = vpop.trf.xlu0
    %v4171 = vpop.trf.xlu0
    %v4172 = vpop.trf.xlu0
    %4173 = vxpose.xlu0.b32.start [1/16] %v4100, 128
    %4174 = vxpose.xlu0.b32.cont [2/16] 0.0, 128
    %4175 = vxpose.xlu0.b32.cont [3/16] 0.0, 128
    %4176 = vxpose.xlu0.b32.cont [4/16] 0.0, 128
    %4177 = vxpose.xlu0.b32.cont [5/16] 0.0, 128
    %4178 = vxpose.xlu0.b32.cont [6/16] 0.0, 128
    %4179 = vxpose.xlu0.b32.cont [7/16] 0.0, 128
    %4180 = vxpose.xlu0.b32.cont [8/16] 0.0, 128
    %4181 = vxpose.xlu0.b32.cont [9/16] 0.0, 128
    %4182 = vxpose.xlu0.b32.cont [10/16] 0.0, 128
    %4183 = vxpose.xlu0.b32.cont [11/16] 0.0, 128
    %4184 = vxpose.xlu0.b32.cont [12/16] 0.0, 128
    %4185 = vxpose.xlu0.b32.cont [13/16] 0.0, 128
    %4186 = vxpose.xlu0.b32.cont [14/16] 0.0, 128
    %4187 = vxpose.xlu0.b32.cont [15/16] 0.0, 128
    %4188 = vxpose.xlu0.b32.end [16/16] 0.0, 128
    %v4189 = vpop.trf.xlu0
    %v4190 = vpop.trf.xlu0
    %v4191 = vpop.trf.xlu0
    %v4192 = vpop.trf.xlu0
    %v4193 = vpop.trf.xlu0
    %v4194 = vpop.trf.xlu0
    %v4195 = vpop.trf.xlu0
    %v4196 = vpop.trf.xlu0
    %v4197 = vpop.trf.xlu0
    %v4198 = vpop.trf.xlu0
    %v4199 = vpop.trf.xlu0
    %v4200 = vpop.trf.xlu0
    %v4201 = vpop.trf.xlu0
    %v4202 = vpop.trf.xlu0
    %v4203 = vpop.trf.xlu0
    %v4204 = vpop.trf.xlu0
    %4205 = vxpose.xlu0.b32.start [1/16] %v4106, 128
    %4206 = vxpose.xlu0.b32.cont [2/16] 0.0, 128
    %4207 = vxpose.xlu0.b32.cont [3/16] 0.0, 128
    %4208 = vxpose.xlu0.b32.cont [4/16] 0.0, 128
    %4209 = vxpose.xlu0.b32.cont [5/16] 0.0, 128
    %4210 = vxpose.xlu0.b32.cont [6/16] 0.0, 128
    %4211 = vxpose.xlu0.b32.cont [7/16] 0.0, 128
    %4212 = vxpose.xlu0.b32.cont [8/16] 0.0, 128
    %4213 = vxpose.xlu0.b32.cont [9/16] 0.0, 128
    %4214 = vxpose.xlu0.b32.cont [10/16] 0.0, 128
    %4215 = vxpose.xlu0.b32.cont [11/16] 0.0, 128
    %4216 = vxpose.xlu0.b32.cont [12/16] 0.0, 128
    %4217 = vxpose.xlu0.b32.cont [13/16] 0.0, 128
    %4218 = vxpose.xlu0.b32.cont [14/16] 0.0, 128
    %4219 = vxpose.xlu0.b32.cont [15/16] 0.0, 128
    %4220 = vxpose.xlu0.b32.end [16/16] 0.0, 128
    %v4221 = vpop.trf.xlu0
    %v4222 = vpop.trf.xlu0
    %v4223 = vpop.trf.xlu0
    %v4224 = vpop.trf.xlu0
    %v4225 = vpop.trf.xlu0
    %v4226 = vpop.trf.xlu0
    %v4227 = vpop.trf.xlu0
    %v4228 = vpop.trf.xlu0
    %v4229 = vpop.trf.xlu0
    %v4230 = vpop.trf.xlu0
    %v4231 = vpop.trf.xlu0
    %v4232 = vpop.trf.xlu0
    %v4233 = vpop.trf.xlu0
    %v4234 = vpop.trf.xlu0
    %v4235 = vpop.trf.xlu0
    %v4236 = vpop.trf.xlu0
    %v4237 = vpack.c.bf16 %v4126, %v4125
    %v4238 = vpack.c.bf16 %v4158, %v4157
    %v4239 = vpack.c.bf16 %v4190, %v4189
    %v4240 = vpack.c.bf16 %v4222, %v4221
    %v4242 = vsel %vm1976, %v4237, 0
    %v4245 = vsel %vm1976, %v4238, 0
    %v4248 = vsel %vm1976, %v4239, 0
    %v4251 = vsel %vm1976, %v4240, 0
    %4253 = vmatprep.subr.bf16.mxu0 0
    %4254 = vmatpush1.bf16.msra.mxu0 %v3770
    %4255 = vmatprep.subr.bf16.mxu0 0
    %4256 = vmatpush1.bf16.msra.mxu0 0
    %4257 = vmatprep.subr.bf16.mxu0 0
    %4258 = vmatpush1.bf16.msra.mxu0 0
    %4259 = vmatprep.subr.bf16.mxu0 0
    %4260 = vmatpush1.bf16.msra.mxu0 0
    %4261 = vmatprep.subr.bf16.mxu0 0
    %4262 = vmatpush1.bf16.msra.mxu0 0
    %4263 = vmatprep.subr.bf16.mxu0 0
    %4264 = vmatpush1.bf16.msra.mxu0 0
    %4265 = vmatprep.subr.bf16.mxu0 0
    %4266 = vmatpush1.bf16.msra.mxu0 0
    %4267 = vmatprep.subr.bf16.mxu0 0
    %4268 = vmatpush1.bf16.msra.mxu0 0
    %4269 = vmatprep.subr.bf16.mxu0 0
    %4270 = vmatpush1.bf16.msra.mxu0 0
    %4271 = vmatprep.subr.bf16.mxu0 0
    %4272 = vmatpush1.bf16.msra.mxu0 0
    %4273 = vmatprep.subr.bf16.mxu0 0
    %4274 = vmatpush1.bf16.msra.mxu0 0
    %4275 = vmatprep.subr.bf16.mxu0 0
    %4276 = vmatpush1.bf16.msra.mxu0 0
    %4277 = vmatprep.subr.bf16.mxu0 0
    %4278 = vmatpush1.bf16.msra.mxu0 0
    %4279 = vmatprep.subr.bf16.mxu0 0
    %4280 = vmatpush1.bf16.msra.mxu0 0
    %4281 = vmatprep.subr.bf16.mxu0 0
    %4282 = vmatpush1.bf16.msra.mxu0 0
    %4283 = vmatprep.subr.bf16.mxu0 0
    %4284 = vmatpush1.bf16.msra.mxu0 0
    %4285 = vmatprep.mubr.bf16.mxu0 0
    %4286 = vmatmul.mubr.bf16.gmra.mrb[0].mxu0 %v4242
    %v4287 = vpop.f32.mrb[0].mxu0
    %v4288 = vadd.f32 0.0, %v4287
    %v4289 = vpop.f32.mrb[0].mxu0
    %v4290 = vpop.f32.mrb[0].mxu0
    %v4291 = vadd.f32 0.0, %v4290
    %v4292 = vpop.f32.mrb[0].mxu0
    %4293 = vmatprep.mubr.bf16.mxu0 0
    %4294 = vmatmul.mubr.bf16.gmra.mrb[0].mxu0 %v4245
    %v4295 = vpop.f32.mrb[0].mxu0
    %v4296 = vadd.f32 0.0, %v4295
    %v4297 = vpop.f32.mrb[0].mxu0
    %v4298 = vpop.f32.mrb[0].mxu0
    %v4299 = vadd.f32 0.0, %v4298
    %v4300 = vpop.f32.mrb[0].mxu0
    %4301 = vmatprep.mubr.bf16.mxu0 0
    %4302 = vmatmul.mubr.bf16.gmra.mrb[0].mxu0 %v4248
    %v4303 = vpop.f32.mrb[0].mxu0
    %v4304 = vadd.f32 0.0, %v4303
    %v4305 = vpop.f32.mrb[0].mxu0
    %v4306 = vpop.f32.mrb[0].mxu0
    %v4307 = vadd.f32 0.0, %v4306
    %v4308 = vpop.f32.mrb[0].mxu0
    %4309 = vmatprep.mubr.bf16.mxu0 0
    %4310 = vmatmul.mubr.bf16.gmra.mrb[0].mxu0 %v4251
    %v4311 = vpop.f32.mrb[0].mxu0
    %v4312 = vadd.f32 0.0, %v4311
    %v4313 = vpop.f32.mrb[0].mxu0
    %v4314 = vpop.f32.mrb[0].mxu0
    %v4315 = vadd.f32 0.0, %v4314
    %v4316 = vpop.f32.mrb[0].mxu0
    %4317 = vdwg.mxu0
    %s4318 = scalar_lea.vmem [#allocation6], 64
    %4319 = vst.msk [vmem:[%s4318] sm:$0xff] %vm3837, %v4288
    %4320 = vst.msk [vmem:[%s4318 + $0x8] sm:$0xff] %vm3837, %v4291
    %4321 = vst.msk [vmem:[%s4318 + $0x10] sm:$0xff] %vm3837, %v4296
    %4322 = vst.msk [vmem:[%s4318 + $0x18] sm:$0xff] %vm3837, %v4299
    %4323 = vst.msk [vmem:[%s4318 + $0x20] sm:$0xff] %vm3837, %v4304
    %4324 = vst.msk [vmem:[%s4318 + $0x28] sm:$0xff] %vm3837, %v4307
    %4325 = vst.msk [vmem:[%s4318 + $0x30] sm:$0xff] %vm3837, %v4312
    %4326 = vst.msk [vmem:[%s4318 + $0x38] sm:$0xff] %vm3837, %v4315
    // Predicated region
    $region30: #{a_call__.2} parent=1 // pred_check
      _
    $region31: #{a_call__.2} parent=1 // pred_check_branch
      %4328 = sbr.rel (0) target = $region33
    $region32: #{a_call__.2} parent=1 // pred_region
      // Predicated region
      $region34: #{a_call__.2} parent=32 // pred_check
        _
      $region35: #{a_call__.2} parent=32 // pred_check_branch
        %4330 = sbr.rel (0) target = $region37
      $region36: #{a_call__.2} parent=32 // pred_region
        // Predicated region
        $region38: #{a_call__.2} parent=36 // pred_check
          _
        $region39: #{a_call__.2} parent=36 // pred_check_branch
          %4332 = sbr.rel (0) target = $region41
        $region40: #{a_call__.2} parent=36 // pred_region
          // Predicated region
          $region53: #{a_call__.2} parent=40 // pred_check
            _
          $region54: #{a_call__.2} parent=40 // pred_check_branch
            %4377 = sbr.rel (0) target = $region56
          $region55: #{a_call__.2} parent=40 // pred_region
            loop: start=0, step=1, limit=1
            $region57: #{a_call__.2} parent=55 // loop_pre_header
              _
            $region58: #{a_call__.2} parent=55 // loop_header
              %s4379 = sphi 0, %s4383
              %p4380 = scmp.ge.s32.totalorder %s4379, 1
              %s4384 = sphi [#allocation6], [#allocation6]
              %s4385 = sphi %s8, %s8
            $region59: #{a_call__.2} parent=55 // loop_header_branch
              %4382 = sbr.rel (%p4380) target = $region63
            $region60: #{a_call__.2} parent=55 // loop_body
              %v4386 = vld [vmem:[%s4384] sm:$0xff]
              %4387 = vst [vmem:[%s4385] sm:$0xff] %v4386
              %v4388 = vld [vmem:[%s4384 + $0x8] sm:$0xff]
              %4389 = vst [vmem:[%s4385 + $0x8] sm:$0xff] %v4388
              %v4390 = vld [vmem:[%s4384 + $0x10] sm:$0xff]
              %4391 = vst [vmem:[%s4385 + $0x10] sm:$0xff] %v4390
              %v4392 = vld [vmem:[%s4384 + $0x18] sm:$0xff]
              %4393 = vst [vmem:[%s4385 + $0x18] sm:$0xff] %v4392
              %v4394 = vld [vmem:[%s4384 + $0x20] sm:$0xff]
              %4395 = vst [vmem:[%s4385 + $0x20] sm:$0xff] %v4394
              %v4396 = vld [vmem:[%s4384 + $0x28] sm:$0xff]
              %4397 = vst [vmem:[%s4385 + $0x28] sm:$0xff] %v4396
              %v4398 = vld [vmem:[%s4384 + $0x30] sm:$0xff]
              %4399 = vst [vmem:[%s4385 + $0x30] sm:$0xff] %v4398
              %v4400 = vld [vmem:[%s4384 + $0x38] sm:$0xff]
              %4401 = vst [vmem:[%s4385 + $0x38] sm:$0xff] %v4400
              %v4402 = vld [vmem:[%s4384 + $0x40] sm:$0xff]
              %4403 = vst [vmem:[%s4385 + $0xc0] sm:$0xff] %v4402
              %v4404 = vld [vmem:[%s4384 + $0x48] sm:$0xff]
              %4405 = vst [vmem:[%s4385 + $0xc8] sm:$0xff] %v4404
              %v4406 = vld [vmem:[%s4384 + $0x50] sm:$0xff]
              %4407 = vst [vmem:[%s4385 + $0xd0] sm:$0xff] %v4406
              %v4408 = vld [vmem:[%s4384 + $0x58] sm:$0xff]
              %4409 = vst [vmem:[%s4385 + $0xd8] sm:$0xff] %v4408
              %v4410 = vld [vmem:[%s4384 + $0x60] sm:$0xff]
              %4411 = vst [vmem:[%s4385 + $0xe0] sm:$0xff] %v4410
              %v4412 = vld [vmem:[%s4384 + $0x68] sm:$0xff]
              %4413 = vst [vmem:[%s4385 + $0xe8] sm:$0xff] %v4412
              %v4414 = vld [vmem:[%s4384 + $0x70] sm:$0xff]
              %4415 = vst [vmem:[%s4385 + $0xf0] sm:$0xff] %v4414
              %v4416 = vld [vmem:[%s4384 + $0x78] sm:$0xff]
              %4417 = vst [vmem:[%s4385 + $0xf8] sm:$0xff] %v4416
            $region61: #{a_call__.2} parent=55 // loop_footer
              %s4383 = sadd.s32 1, %s4379
            $region62: #{a_call__.2} parent=55 // loop_footer_branch
              %4378 = sbr.rel target = $region58
            $region63: #{a_call__.2} parent=55 // loop_exit
              _
          $region56: #{a_call__.2} parent=40 // pred_fallthru
            _
          // Predicated region
          $region64: #{a_call__.2} parent=40 // pred_check
            _
          $region65: #{a_call__.2} parent=40 // pred_check_branch
            %4419 = sbr.rel target = $region67
          $region66: #{a_call__.2} parent=40 // pred_region
            _
          $region67: #{a_call__.2} parent=40 // pred_fallthru
            _
        $region41: #{a_call__.2} parent=36 // pred_fallthru
          _
        // Predicated region
        $region42: #{a_call__.2} parent=36 // pred_check
          _
        $region43: #{a_call__.2} parent=36 // pred_check_branch
          %4334 = sbr.rel target = $region45
        $region44: #{a_call__.2} parent=36 // pred_region
          loop: start=0, step=1, limit=1
          $region46: #{a_call__.2} parent=44 // loop_pre_header
            _
          $region47: #{a_call__.2} parent=44 // loop_header
            %s4337 = sphi 0, %s4341
            %p4338 = scmp.ge.s32.totalorder %s4337, 1
            %s4342 = sphi [#allocation6], [#allocation6]
            %s4343 = sphi %s8, %s8
          $region48: #{a_call__.2} parent=44 // loop_header_branch
            %4340 = sbr.rel (%p4338) target = $region52
          $region49: #{a_call__.2} parent=44 // loop_body
            %v4344 = vld [vmem:[%s4342] sm:$0xff]
            %4345 = vst [vmem:[%s4343] sm:$0xff] %v4344
            %v4346 = vld [vmem:[%s4342 + $0x8] sm:$0xff]
            %4347 = vst [vmem:[%s4343 + $0x8] sm:$0xff] %v4346
            %v4348 = vld [vmem:[%s4342 + $0x10] sm:$0xff]
            %4349 = vst [vmem:[%s4343 + $0x10] sm:$0xff] %v4348
            %v4350 = vld [vmem:[%s4342 + $0x18] sm:$0xff]
            %4351 = vst [vmem:[%s4343 + $0x18] sm:$0xff] %v4350
            %v4352 = vld [vmem:[%s4342 + $0x20] sm:$0xff]
            %4353 = vst [vmem:[%s4343 + $0x20] sm:$0xff] %v4352
            %v4354 = vld [vmem:[%s4342 + $0x28] sm:$0xff]
            %4355 = vst [vmem:[%s4343 + $0x28] sm:$0xff] %v4354
            %v4356 = vld [vmem:[%s4342 + $0x30] sm:$0xff]
            %4357 = vst [vmem:[%s4343 + $0x30] sm:$0xff] %v4356
            %v4358 = vld [vmem:[%s4342 + $0x38] sm:$0xff]
            %4359 = vst [vmem:[%s4343 + $0x38] sm:$0xff] %v4358
            %v4360 = vld [vmem:[%s4342 + $0x40] sm:$0xff]
            %4361 = vst [vmem:[%s4343 + $0xc0] sm:$0xff] %v4360
            %v4362 = vld [vmem:[%s4342 + $0x48] sm:$0xff]
            %4363 = vst [vmem:[%s4343 + $0xc8] sm:$0xff] %v4362
            %v4364 = vld [vmem:[%s4342 + $0x50] sm:$0xff]
            %4365 = vst [vmem:[%s4343 + $0xd0] sm:$0xff] %v4364
            %v4366 = vld [vmem:[%s4342 + $0x58] sm:$0xff]
            %4367 = vst [vmem:[%s4343 + $0xd8] sm:$0xff] %v4366
            %v4368 = vld [vmem:[%s4342 + $0x60] sm:$0xff]
            %4369 = vst [vmem:[%s4343 + $0xe0] sm:$0xff] %v4368
            %v4370 = vld [vmem:[%s4342 + $0x68] sm:$0xff]
            %4371 = vst [vmem:[%s4343 + $0xe8] sm:$0xff] %v4370
            %v4372 = vld [vmem:[%s4342 + $0x70] sm:$0xff]
            %4373 = vst [vmem:[%s4343 + $0xf0] sm:$0xff] %v4372
            %v4374 = vld [vmem:[%s4342 + $0x78] sm:$0xff]
            %4375 = vst [vmem:[%s4343 + $0xf8] sm:$0xff] %v4374
          $region50: #{a_call__.2} parent=44 // loop_footer
            %s4341 = sadd.s32 1, %s4337
          $region51: #{a_call__.2} parent=44 // loop_footer_branch
            %4336 = sbr.rel target = $region47
          $region52: #{a_call__.2} parent=44 // loop_exit
            _
        $region45: #{a_call__.2} parent=36 // pred_fallthru
          _
      $region37: #{a_call__.2} parent=32 // pred_fallthru
        _
      %4420 = vnop
    $region33: #{a_call__.2} parent=1 // pred_fallthru
      _
    // Predicated region
    $region68: #{a_call__.2} parent=1 // pred_check
      _
    $region69: #{a_call__.2} parent=1 // pred_check_branch
      %4422 = sbr.rel (0) target = $region71
    $region70: #{a_call__.2} parent=1 // pred_region
      _
    $region71: #{a_call__.2} parent=1 // pred_fallthru
      _

// kernel: a_call__.3
$region0: #{a_call__.3}
  #allocation0 [shape = 'u32[]', space=smem, size = 0x4, offset = 0x4, fixed_abs, tag = 'smem constant byte address 0x4 - core index']
  #allocation1 [shape = 'u32[144,128]{1,0:T(1,128)}', space=vmem, size = 0x12000, scoped, tag = 'internal scratch']
  #allocation2 [shape = 'bf16[2,10,10,6]{3,2,1,0:T(8,128)(2,1)}', space=vmem, size = 0x14000, scoped, tag = 'scratch operand']
  #allocation3 [shape = 'bf16[2,10,10,4]{3,2,1,0:T(8,128)(2,1)}', space=vmem, size = 0x14000, scoped, tag = 'scratch operand']
  #allocation4 [shape = 'bf16[128,54]{1,0:T(16,128)(2,1)}', space=vmem, size = 0x8000, scoped, tag = 'scratch operand']
  #allocation5 [shape = 'bf16[128,36]{1,0:T(16,128)(2,1)}', space=vmem, size = 0x8000, scoped, tag = 'scratch operand']
  #allocation8 [shape = 's32[]', space=sflag, size = 0x4, offset = 0, fixed_abs, tag = 'sflag constant byte address 0x0 - dummy sync flag']
  %s0 = inlined_call_operand.vmem [shape: f32[2,8,8,6], index: 0, kind: input, shape index: {}]
  %s1 = inlined_call_operand.vmem [shape: bf16[54,4], index: 1, kind: input, shape index: {}]
  %s2 = inlined_call_operand.vmem [shape: f32[1,4], index: 2, kind: input, shape index: {}]
  %s3 = inlined_call_operand.vmem [shape: bf16[36,4], index: 3, kind: input, shape index: {}]
  %s4 = inlined_call_operand.vmem [shape: f32[1,4], index: 4, kind: input, shape index: {}]
  %s5 = inlined_call_operand.vmem [shape: bf16[8,16], index: 5, kind: input, shape index: {}, may-alias: {5,6}]
  %s6 = inlined_call_operand.vmem [shape: bf16[8,16], index: 6, kind: input, shape index: {}, may-alias: {5,6}]
  %s7 = inlined_call_operand.hbm [shape: f32[2,12,16,16], index: 7, kind: input, shape index: {}, may-alias: {7,8}]
  %s8 = inlined_call_operand.hbm [shape: f32[2,12,16,16], index: 8, kind: output, shape index: {}, may-alias: {7,8}]
  %s9 = sld [smem:[#allocation0]]
  $region38: #{a_call__.3} parent=0
    _
  %s11 = ssub.s32 1, %s9
  %s12 = scalar_select 0, %s11, %s9
  $region1: #{a_call__.3} parent=0
    #allocation6 [shape = 'u8[65536]{0}', space=vmem, size = 0x10000, scoped, tag = 'output window, operand 0, single buffered']
    #allocation7 [shape = 's32[1]{0}', space=sflag, size = 0x4, scoped, tag = 'scoped memory for a_call__.3']
    %13 = vsyncpa [#allocation7], 0
    // Predicated region
    $region2: #{a_call__.3} parent=1 // pred_check
      _
    $region3: #{a_call__.3} parent=1 // pred_check_branch
      %15 = sbr.rel (0) target = $region5
    $region4: #{a_call__.3} parent=1 // pred_region
      _
    $region5: #{a_call__.3} parent=1 // pred_fallthru
      _
    // Predicated region
    $region6: #{a_call__.3} parent=1 // pred_check
      _
    $region7: #{a_call__.3} parent=1 // pred_check_branch
      %17 = sbr.rel (0) target = $region9
    $region8: #{a_call__.3} parent=1 // pred_region
      _
    $region9: #{a_call__.3} parent=1 // pred_fallthru
      _
    // Predicated region
    $region10: #{a_call__.3} parent=1 // pred_check
      _
    $region11: #{a_call__.3} parent=1 // pred_check_branch
      %19 = sbr.rel (0) target = $region13
    $region12: #{a_call__.3} parent=1 // pred_region
      _
    $region13: #{a_call__.3} parent=1 // pred_fallthru
      _
    // Predicated region
    $region14: #{a_call__.3} parent=1 // pred_check
      _
    $region15: #{a_call__.3} parent=1 // pred_check_branch
      %21 = sbr.rel (0) target = $region17
    $region16: #{a_call__.3} parent=1 // pred_region
      _
    $region17: #{a_call__.3} parent=1 // pred_fallthru
      _
    // Predicated region
    $region18: #{a_call__.3} parent=1 // pred_check
      _
    $region19: #{a_call__.3} parent=1 // pred_check_branch
      %23 = sbr.rel (0) target = $region21
    $region20: #{a_call__.3} parent=1 // pred_region
      _
    $region21: #{a_call__.3} parent=1 // pred_fallthru
      _
    // Predicated region
    $region22: #{a_call__.3} parent=1 // pred_check
      _
    $region23: #{a_call__.3} parent=1 // pred_check_branch
      %25 = sbr.rel (0) target = $region25
    $region24: #{a_call__.3} parent=1 // pred_region
      _
    $region25: #{a_call__.3} parent=1 // pred_fallthru
      _
    // Predicated region
    $region26: #{a_call__.3} parent=1 // pred_check
      _
    $region27: #{a_call__.3} parent=1 // pred_check_branch
      %27 = sbr.rel (0) target = $region29
    $region28: #{a_call__.3} parent=1 // pred_region
      _
    $region29: #{a_call__.3} parent=1 // pred_fallthru
      _
    %v29 = vld [vmem:[%s0] sm:$0xff]
    %v30 = vld [vmem:[%s0 + $0x8] sm:$0xff]
    %v31 = vld [vmem:[%s0 + $0x10] sm:$0xff]
    %v32 = vld [vmem:[%s0 + $0x18] sm:$0xff]
    %v33 = vld [vmem:[%s0 + $0x20] sm:$0xff]
    %v34 = vld [vmem:[%s0 + $0x28] sm:$0xff]
    %v35 = vld [vmem:[%s0 + $0x30] sm:$0xff]
    %v36 = vld [vmem:[%s0 + $0x38] sm:$0xff]
    %v37 = vld [vmem:[%s0 + $0x40] sm:$0xff]
    %v38 = vld [vmem:[%s0 + $0x48] sm:$0xff]
    %v39 = vld [vmem:[%s0 + $0x50] sm:$0xff]
    %v40 = vld [vmem:[%s0 + $0x58] sm:$0xff]
    %v41 = vld [vmem:[%s0 + $0x60] sm:$0xff]
    %v42 = vld [vmem:[%s0 + $0x68] sm:$0xff]
    %v43 = vld [vmem:[%s0 + $0x70] sm:$0xff]
    %v44 = vld [vmem:[%s0 + $0x78] sm:$0xff]
    %v45 = vpack.c.bf16 %v29, %v29
    %v46 = vpack.c.bf16 %v30, %v30
    %v47 = vpack.c.bf16 %v31, %v31
    %v48 = vpack.c.bf16 %v32, %v32
    %v49 = vpack.c.bf16 %v33, %v33
    %v50 = vpack.c.bf16 %v34, %v34
    %v51 = vpack.c.bf16 %v35, %v35
    %v52 = vpack.c.bf16 %v36, %v36
    %v53 = vpack.c.bf16 %v37, %v37
    %v54 = vpack.c.bf16 %v38, %v38
    %v55 = vpack.c.bf16 %v39, %v39
    %v56 = vpack.c.bf16 %v40, %v40
    %v57 = vpack.c.bf16 %v41, %v41
    %v58 = vpack.c.bf16 %v42, %v42
    %v59 = vpack.c.bf16 %v43, %v43
    %v60 = vpack.c.bf16 %v44, %v44
    %vm61 = vcmask 40960
    %vm62 = vsmask.f32 256
    %vm63 = vmand %vm61, %vm62
    %v64 = vld [vmem:[#allocation2] sm:$0x1]
    %v65 = vsel %vm63, 0, %v64
    %66 = vst [vmem:[#allocation2] sm:$0x1] %v65
    %v67 = vld [vmem:[#allocation2 + $0x8] sm:$0x1]
    %v68 = vsel %vm63, 0, %v67
    %69 = vst [vmem:[#allocation2 + $0x8] sm:$0x1] %v68
    %v70 = vld [vmem:[#allocation2 + $0x10] sm:$0x1]
    %v71 = vsel %vm63, 0, %v70
    %72 = vst [vmem:[#allocation2 + $0x10] sm:$0x1] %v71
    %v73 = vld [vmem:[#allocation2 + $0x18] sm:$0x1]
    %v74 = vsel %vm63, 0, %v73
    %75 = vst [vmem:[#allocation2 + $0x18] sm:$0x1] %v74
    %v76 = vld [vmem:[#allocation2 + $0x20] sm:$0x1]
    %v77 = vsel %vm63, 0, %v76
    %78 = vst [vmem:[#allocation2 + $0x20] sm:$0x1] %v77
    %v79 = vld [vmem:[#allocation2 + $0x28] sm:$0x1]
    %v80 = vsel %vm63, 0, %v79
    %81 = vst [vmem:[#allocation2 + $0x28] sm:$0x1] %v80
    %v82 = vld [vmem:[#allocation2 + $0x30] sm:$0x1]
    %v83 = vsel %vm63, 0, %v82
    %84 = vst [vmem:[#allocation2 + $0x30] sm:$0x1] %v83
    %v85 = vld [vmem:[#allocation2 + $0x38] sm:$0x1]
    %v86 = vsel %vm63, 0, %v85
    %87 = vst [vmem:[#allocation2 + $0x38] sm:$0x1] %v86
    %v88 = vld [vmem:[#allocation2 + $0x40] sm:$0x1]
    %v89 = vsel %vm63, 0, %v88
    %90 = vst [vmem:[#allocation2 + $0x40] sm:$0x1] %v89
    %v91 = vld [vmem:[#allocation2 + $0x48] sm:$0x1]
    %v92 = vsel %vm63, 0, %v91
    %93 = vst [vmem:[#allocation2 + $0x48] sm:$0x1] %v92
    %v94 = vld [vmem:[#allocation2 + $0x50] sm:$0x1]
    %v95 = vsel %vm63, 0, %v94
    %96 = vst [vmem:[#allocation2 + $0x50] sm:$0x1] %v95
    %v97 = vld [vmem:[#allocation2 + $0x58] sm:$0x1]
    %v98 = vsel %vm63, 0, %v97
    %99 = vst [vmem:[#allocation2 + $0x58] sm:$0x1] %v98
    %v100 = vld [vmem:[#allocation2 + $0x60] sm:$0x1]
    %v101 = vsel %vm63, 0, %v100
    %102 = vst [vmem:[#allocation2 + $0x60] sm:$0x1] %v101
    %v103 = vld [vmem:[#allocation2 + $0x68] sm:$0x1]
    %v104 = vsel %vm63, 0, %v103
    %105 = vst [vmem:[#allocation2 + $0x68] sm:$0x1] %v104
    %v106 = vld [vmem:[#allocation2 + $0x70] sm:$0x1]
    %v107 = vsel %vm63, 0, %v106
    %108 = vst [vmem:[#allocation2 + $0x70] sm:$0x1] %v107
    %v109 = vld [vmem:[#allocation2 + $0x78] sm:$0x1]
    %v110 = vsel %vm63, 0, %v109
    %111 = vst [vmem:[#allocation2 + $0x78] sm:$0x1] %v110
    %v112 = vld [vmem:[#allocation2 + $0x80] sm:$0x1]
    %v113 = vsel %vm63, 0, %v112
    %114 = vst [vmem:[#allocation2 + $0x80] sm:$0x1] %v113
    %v115 = vld [vmem:[#allocation2 + $0x88] sm:$0x1]
    %v116 = vsel %vm63, 0, %v115
    %117 = vst [vmem:[#allocation2 + $0x88] sm:$0x1] %v116
    %v118 = vld [vmem:[#allocation2 + $0x90] sm:$0x1]
    %v119 = vsel %vm63, 0, %v118
    %120 = vst [vmem:[#allocation2 + $0x90] sm:$0x1] %v119
    %v121 = vld [vmem:[#allocation2 + $0x98] sm:$0x1]
    %v122 = vsel %vm63, 0, %v121
    %123 = vst [vmem:[#allocation2 + $0x98] sm:$0x1] %v122
    %vm124 = vsmask.f32 7938
    %vm125 = vmand %vm61, %vm124
    %v126 = vld [vmem:[#allocation2 + $0x4] sm:$0x1]
    %v127 = vsel %vm125, 0, %v126
    %128 = vst [vmem:[#allocation2 + $0x4] sm:$0x1] %v127
    %v129 = vld [vmem:[#allocation2 + $0xc] sm:$0x1]
    %v130 = vsel %vm125, 0, %v129
    %131 = vst [vmem:[#allocation2 + $0xc] sm:$0x1] %v130
    %v132 = vld [vmem:[#allocation2 + $0x14] sm:$0x1]
    %v133 = vsel %vm125, 0, %v132
    %134 = vst [vmem:[#allocation2 + $0x14] sm:$0x1] %v133
    %v135 = vld [vmem:[#allocation2 + $0x1c] sm:$0x1]
    %v136 = vsel %vm125, 0, %v135
    %137 = vst [vmem:[#allocation2 + $0x1c] sm:$0x1] %v136
    %v138 = vld [vmem:[#allocation2 + $0x24] sm:$0x1]
    %v139 = vsel %vm125, 0, %v138
    %140 = vst [vmem:[#allocation2 + $0x24] sm:$0x1] %v139
    %v141 = vld [vmem:[#allocation2 + $0x2c] sm:$0x1]
    %v142 = vsel %vm125, 0, %v141
    %143 = vst [vmem:[#allocation2 + $0x2c] sm:$0x1] %v142
    %v144 = vld [vmem:[#allocation2 + $0x34] sm:$0x1]
    %v145 = vsel %vm125, 0, %v144
    %146 = vst [vmem:[#allocation2 + $0x34] sm:$0x1] %v145
    %v147 = vld [vmem:[#allocation2 + $0x3c] sm:$0x1]
    %v148 = vsel %vm125, 0, %v147
    %149 = vst [vmem:[#allocation2 + $0x3c] sm:$0x1] %v148
    %v150 = vld [vmem:[#allocation2 + $0x44] sm:$0x1]
    %v151 = vsel %vm125, 0, %v150
    %152 = vst [vmem:[#allocation2 + $0x44] sm:$0x1] %v151
    %v153 = vld [vmem:[#allocation2 + $0x4c] sm:$0x1]
    %v154 = vsel %vm125, 0, %v153
    %155 = vst [vmem:[#allocation2 + $0x4c] sm:$0x1] %v154
    %v156 = vld [vmem:[#allocation2 + $0x54] sm:$0x1]
    %v157 = vsel %vm125, 0, %v156
    %158 = vst [vmem:[#allocation2 + $0x54] sm:$0x1] %v157
    %v159 = vld [vmem:[#allocation2 + $0x5c] sm:$0x1]
    %v160 = vsel %vm125, 0, %v159
    %161 = vst [vmem:[#allocation2 + $0x5c] sm:$0x1] %v160
    %v162 = vld [vmem:[#allocation2 + $0x64] sm:$0x1]
    %v163 = vsel %vm125, 0, %v162
    %164 = vst [vmem:[#allocation2 + $0x64] sm:$0x1] %v163
    %v165 = vld [vmem:[#allocation2 + $0x6c] sm:$0x1]
    %v166 = vsel %vm125, 0, %v165
    %167 = vst [vmem:[#allocation2 + $0x6c] sm:$0x1] %v166
    %v168 = vld [vmem:[#allocation2 + $0x74] sm:$0x1]
    %v169 = vsel %vm125, 0, %v168
    %170 = vst [vmem:[#allocation2 + $0x74] sm:$0x1] %v169
    %v171 = vld [vmem:[#allocation2 + $0x7c] sm:$0x1]
    %v172 = vsel %vm125, 0, %v171
    %173 = vst [vmem:[#allocation2 + $0x7c] sm:$0x1] %v172
    %v174 = vld [vmem:[#allocation2 + $0x84] sm:$0x1]
    %v175 = vsel %vm125, 0, %v174
    %176 = vst [vmem:[#allocation2 + $0x84] sm:$0x1] %v175
    %v177 = vld [vmem:[#allocation2 + $0x8c] sm:$0x1]
    %v178 = vsel %vm125, 0, %v177
    %179 = vst [vmem:[#allocation2 + $0x8c] sm:$0x1] %v178
    %v180 = vld [vmem:[#allocation2 + $0x94] sm:$0x1]
    %v181 = vsel %vm125, 0, %v180
    %182 = vst [vmem:[#allocation2 + $0x94] sm:$0x1] %v181
    %v183 = vld [vmem:[#allocation2 + $0x9c] sm:$0x1]
    %v184 = vsel %vm125, 0, %v183
    %185 = vst [vmem:[#allocation2 + $0x9c] sm:$0x1] %v184
    %vm186 = vcmask 44032
    %187 = vst.msk [vmem:[#allocation2] sm:$0xf] %vm186, 0
    %vm188 = vcmask 40960
    %189 = vst.msk [vmem:[#allocation2 + $0x4] sm:$0x1] %vm188, 0
    %190 = vst.msk [vmem:[#allocation2 + $0x50] sm:$0xf] %vm186, 0
    %191 = vst.msk [vmem:[#allocation2 + $0x54] sm:$0x1] %vm188, 0
    %s192 = scalar_lea.vmem [#allocation2], 72
    %193 = vst.msk [vmem:[%s192] sm:$0xf] %vm186, 0
    %194 = vst.msk [vmem:[%s192 + $0x4] sm:$0x1] %vm188, 0
    %195 = vst.msk [vmem:[%s192 + $0x50] sm:$0xf] %vm186, 0
    %196 = vst.msk [vmem:[%s192 + $0x54] sm:$0x1] %vm188, 0
    %v213 = vunpack.c.l.b16 %v45
    %v214 = vunpack.c.l.b16 %v46
    %v215 = vunpack.c.l.b16 %v47
    %v216 = vunpack.c.l.b16 %v48
    %v217 = vunpack.c.l.b16 %v49
    %v218 = vunpack.c.l.b16 %v50
    %v219 = vunpack.c.l.b16 %v51
    %v220 = vunpack.c.l.b16 %v52
    %v221 = vunpack.c.l.b16 %v53
    %v222 = vunpack.c.l.b16 %v54
    %v223 = vunpack.c.l.b16 %v55
    %v224 = vunpack.c.l.b16 %v56
    %v225 = vunpack.c.l.b16 %v57
    %v226 = vunpack.c.l.b16 %v58
    %v227 = vunpack.c.l.b16 %v59
    %v228 = vunpack.c.l.b16 %v60
    %v229 = vpack.c.b16 %v213, %v213
    %v230 = vpack.c.b16 %v214, %v214
    %v231 = vpack.c.b16 %v215, %v215
    %v232 = vpack.c.b16 %v216, %v216
    %v233 = vpack.c.b16 %v217, %v217
    %v234 = vpack.c.b16 %v218, %v218
    %v235 = vpack.c.b16 %v219, %v219
    %v236 = vpack.c.b16 %v220, %v220
    %v237 = vpack.c.b16 %v221, %v221
    %v238 = vpack.c.b16 %v222, %v222
    %v239 = vpack.c.b16 %v223, %v223
    %v240 = vpack.c.b16 %v224, %v224
    %v241 = vpack.c.b16 %v225, %v225
    %v242 = vpack.c.b16 %v226, %v226
    %v243 = vpack.c.b16 %v227, %v227
    %v244 = vpack.c.b16 %v228, %v228
    %v246 = vshrl.u32 %v229, 16
    %v248 = vrot.slane %v246, 7
    %v249 = vshll.u32 %v229, 16
    %v251 = vor.u32 %v248, %v249
    %v252 = vrot.slane %v248, 4
    %v254 = vshrl.u32 %v230, 16
    %v256 = vrot.slane %v254, 7
    %v257 = vshll.u32 %v230, 16
    %v259 = vor.u32 %v256, %v257
    %v260 = vrot.slane %v256, 4
    %v262 = vshrl.u32 %v231, 16
    %v264 = vrot.slane %v262, 7
    %v265 = vshll.u32 %v231, 16
    %v267 = vor.u32 %v264, %v265
    %v268 = vrot.slane %v264, 4
    %v270 = vshrl.u32 %v232, 16
    %v272 = vrot.slane %v270, 7
    %v273 = vshll.u32 %v232, 16
    %v275 = vor.u32 %v272, %v273
    %v276 = vrot.slane %v272, 4
    %v278 = vshrl.u32 %v233, 16
    %v280 = vrot.slane %v278, 7
    %v281 = vshll.u32 %v233, 16
    %v283 = vor.u32 %v280, %v281
    %v284 = vrot.slane %v280, 4
    %v286 = vshrl.u32 %v234, 16
    %v288 = vrot.slane %v286, 7
    %v289 = vshll.u32 %v234, 16
    %v291 = vor.u32 %v288, %v289
    %v292 = vrot.slane %v288, 4
    %v294 = vshrl.u32 %v235, 16
    %v296 = vrot.slane %v294, 7
    %v297 = vshll.u32 %v235, 16
    %v299 = vor.u32 %v296, %v297
    %v300 = vrot.slane %v296, 4
    %v302 = vshrl.u32 %v236, 16
    %v304 = vrot.slane %v302, 7
    %v305 = vshll.u32 %v236, 16
    %v307 = vor.u32 %v304, %v305
    %v308 = vrot.slane %v304, 4
    %v310 = vshrl.u32 %v237, 16
    %v312 = vrot.slane %v310, 7
    %v313 = vshll.u32 %v237, 16
    %v315 = vor.u32 %v312, %v313
    %v316 = vrot.slane %v312, 4
    %v318 = vshrl.u32 %v238, 16
    %v320 = vrot.slane %v318, 7
    %v321 = vshll.u32 %v238, 16
    %v323 = vor.u32 %v320, %v321
    %v324 = vrot.slane %v320, 4
    %v326 = vshrl.u32 %v239, 16
    %v328 = vrot.slane %v326, 7
    %v329 = vshll.u32 %v239, 16
    %v331 = vor.u32 %v328, %v329
    %v332 = vrot.slane %v328, 4
    %v334 = vshrl.u32 %v240, 16
    %v336 = vrot.slane %v334, 7
    %v337 = vshll.u32 %v240, 16
    %v339 = vor.u32 %v336, %v337
    %v340 = vrot.slane %v336, 4
    %v342 = vshrl.u32 %v241, 16
    %v344 = vrot.slane %v342, 7
    %v345 = vshll.u32 %v241, 16
    %v347 = vor.u32 %v344, %v345
    %v348 = vrot.slane %v344, 4
    %v350 = vshrl.u32 %v242, 16
    %v352 = vrot.slane %v350, 7
    %v353 = vshll.u32 %v242, 16
    %v355 = vor.u32 %v352, %v353
    %v356 = vrot.slane %v352, 4
    %v358 = vshrl.u32 %v243, 16
    %v360 = vrot.slane %v358, 7
    %v361 = vshll.u32 %v243, 16
    %v363 = vor.u32 %v360, %v361
    %v364 = vrot.slane %v360, 4
    %v366 = vshrl.u32 %v244, 16
    %v368 = vrot.slane %v366, 7
    %v369 = vshll.u32 %v244, 16
    %v371 = vor.u32 %v368, %v369
    %v372 = vrot.slane %v368, 4
    %s405 = scalar_lea.vmem [#allocation2], 8
    %vm406 = vcmask 44032
    %vm407 = vmand %vm406, %vm124
    %v408 = vld [vmem:[%s405] sm:$0xf]
    %v409 = vsel %vm407, %v251, %v408
    %410 = vst [vmem:[%s405] sm:$0xf] %v409
    %v411 = vld [vmem:[%s405 + $0x4] sm:$0x1]
    %v412 = vsel %vm63, %v252, %v411
    %413 = vst [vmem:[%s405 + $0x4] sm:$0x1] %v412
    %v414 = vld [vmem:[%s405 + $0x8] sm:$0xf]
    %v415 = vsel %vm407, %v259, %v414
    %416 = vst [vmem:[%s405 + $0x8] sm:$0xf] %v415
    %v417 = vld [vmem:[%s405 + $0xc] sm:$0x1]
    %v418 = vsel %vm63, %v260, %v417
    %419 = vst [vmem:[%s405 + $0xc] sm:$0x1] %v418
    %v420 = vld [vmem:[%s405 + $0x10] sm:$0xf]
    %v421 = vsel %vm407, %v267, %v420
    %422 = vst [vmem:[%s405 + $0x10] sm:$0xf] %v421
    %v423 = vld [vmem:[%s405 + $0x14] sm:$0x1]
    %v424 = vsel %vm63, %v268, %v423
    %425 = vst [vmem:[%s405 + $0x14] sm:$0x1] %v424
    %v426 = vld [vmem:[%s405 + $0x18] sm:$0xf]
    %v427 = vsel %vm407, %v275, %v426
    %428 = vst [vmem:[%s405 + $0x18] sm:$0xf] %v427
    %v429 = vld [vmem:[%s405 + $0x1c] sm:$0x1]
    %v430 = vsel %vm63, %v276, %v429
    %431 = vst [vmem:[%s405 + $0x1c] sm:$0x1] %v430
    %v432 = vld [vmem:[%s405 + $0x20] sm:$0xf]
    %v433 = vsel %vm407, %v283, %v432
    %434 = vst [vmem:[%s405 + $0x20] sm:$0xf] %v433
    %v435 = vld [vmem:[%s405 + $0x24] sm:$0x1]
    %v436 = vsel %vm63, %v284, %v435
    %437 = vst [vmem:[%s405 + $0x24] sm:$0x1] %v436
    %v438 = vld [vmem:[%s405 + $0x28] sm:$0xf]
    %v439 = vsel %vm407, %v291, %v438
    %440 = vst [vmem:[%s405 + $0x28] sm:$0xf] %v439
    %v441 = vld [vmem:[%s405 + $0x2c] sm:$0x1]
    %v442 = vsel %vm63, %v292, %v441
    %443 = vst [vmem:[%s405 + $0x2c] sm:$0x1] %v442
    %v444 = vld [vmem:[%s405 + $0x30] sm:$0xf]
    %v445 = vsel %vm407, %v299, %v444
    %446 = vst [vmem:[%s405 + $0x30] sm:$0xf] %v445
    %v447 = vld [vmem:[%s405 + $0x34] sm:$0x1]
    %v448 = vsel %vm63, %v300, %v447
    %449 = vst [vmem:[%s405 + $0x34] sm:$0x1] %v448
    %v450 = vld [vmem:[%s405 + $0x38] sm:$0xf]
    %v451 = vsel %vm407, %v307, %v450
    %452 = vst [vmem:[%s405 + $0x38] sm:$0xf] %v451
    %v453 = vld [vmem:[%s405 + $0x3c] sm:$0x1]
    %v454 = vsel %vm63, %v308, %v453
    %455 = vst [vmem:[%s405 + $0x3c] sm:$0x1] %v454
    %v456 = vld [vmem:[%s405 + $0x50] sm:$0xf]
    %v457 = vsel %vm407, %v315, %v456
    %458 = vst [vmem:[%s405 + $0x50] sm:$0xf] %v457
    %v459 = vld [vmem:[%s405 + $0x54] sm:$0x1]
    %v460 = vsel %vm63, %v316, %v459
    %461 = vst [vmem:[%s405 + $0x54] sm:$0x1] %v460
    %v462 = vld [vmem:[%s405 + $0x58] sm:$0xf]
    %v463 = vsel %vm407, %v323, %v462
    %464 = vst [vmem:[%s405 + $0x58] sm:$0xf] %v463
    %v465 = vld [vmem:[%s405 + $0x5c] sm:$0x1]
    %v466 = vsel %vm63, %v324, %v465
    %467 = vst [vmem:[%s405 + $0x5c] sm:$0x1] %v466
    %v468 = vld [vmem:[%s405 + $0x60] sm:$0xf]
    %v469 = vsel %vm407, %v331, %v468
    %470 = vst [vmem:[%s405 + $0x60] sm:$0xf] %v469
    %v471 = vld [vmem:[%s405 + $0x64] sm:$0x1]
    %v472 = vsel %vm63, %v332, %v471
    %473 = vst [vmem:[%s405 + $0x64] sm:$0x1] %v472
    %v474 = vld [vmem:[%s405 + $0x68] sm:$0xf]
    %v475 = vsel %vm407, %v339, %v474
    %476 = vst [vmem:[%s405 + $0x68] sm:$0xf] %v475
    %v477 = vld [vmem:[%s405 + $0x6c] sm:$0x1]
    %v478 = vsel %vm63, %v340, %v477
    %479 = vst [vmem:[%s405 + $0x6c] sm:$0x1] %v478
    %v480 = vld [vmem:[%s405 + $0x70] sm:$0xf]
    %v481 = vsel %vm407, %v347, %v480
    %482 = vst [vmem:[%s405 + $0x70] sm:$0xf] %v481
    %v483 = vld [vmem:[%s405 + $0x74] sm:$0x1]
    %v484 = vsel %vm63, %v348, %v483
    %485 = vst [vmem:[%s405 + $0x74] sm:$0x1] %v484
    %v486 = vld [vmem:[%s405 + $0x78] sm:$0xf]
    %v487 = vsel %vm407, %v355, %v486
    %488 = vst [vmem:[%s405 + $0x78] sm:$0xf] %v487
    %v489 = vld [vmem:[%s405 + $0x7c] sm:$0x1]
    %v490 = vsel %vm63, %v356, %v489
    %491 = vst [vmem:[%s405 + $0x7c] sm:$0x1] %v490
    %v492 = vld [vmem:[%s405 + $0x80] sm:$0xf]
    %v493 = vsel %vm407, %v363, %v492
    %494 = vst [vmem:[%s405 + $0x80] sm:$0xf] %v493
    %v495 = vld [vmem:[%s405 + $0x84] sm:$0x1]
    %v496 = vsel %vm63, %v364, %v495
    %497 = vst [vmem:[%s405 + $0x84] sm:$0x1] %v496
    %v498 = vld [vmem:[%s405 + $0x88] sm:$0xf]
    %v499 = vsel %vm407, %v371, %v498
    %500 = vst [vmem:[%s405 + $0x88] sm:$0xf] %v499
    %v501 = vld [vmem:[%s405 + $0x8c] sm:$0x1]
    %v502 = vsel %vm63, %v372, %v501
    %503 = vst [vmem:[%s405 + $0x8c] sm:$0x1] %v502
    %v504 = vld [vmem:[#allocation2] sm:$0xf]
    %v505 = vld [vmem:[#allocation2 + $0x8] sm:$0xf]
    %v506 = vld [vmem:[#allocation2 + $0x10] sm:$0xf]
    %v507 = vld [vmem:[#allocation2 + $0x18] sm:$0xf]
    %v508 = vld [vmem:[#allocation2 + $0x20] sm:$0xf]
    %v509 = vld [vmem:[#allocation2 + $0x28] sm:$0xf]
    %v510 = vld [vmem:[#allocation2 + $0x30] sm:$0xf]
    %v511 = vld [vmem:[#allocation2 + $0x38] sm:$0xf]
    %v512 = vld [vmem:[#allocation2 + $0x50] sm:$0xf]
    %v513 = vld [vmem:[#allocation2 + $0x58] sm:$0xf]
    %v514 = vld [vmem:[#allocation2 + $0x60] sm:$0xf]
    %v515 = vld [vmem:[#allocation2 + $0x68] sm:$0xf]
    %v516 = vld [vmem:[#allocation2 + $0x70] sm:$0xf]
    %v517 = vld [vmem:[#allocation2 + $0x78] sm:$0xf]
    %v518 = vld [vmem:[#allocation2 + $0x80] sm:$0xf]
    %v519 = vld [vmem:[#allocation2 + $0x88] sm:$0xf]
    %v536 = vunpack.c.l.b16 %v504
    %v537 = vunpack.c.l.b16 %v505
    %v538 = vunpack.c.l.b16 %v506
    %v539 = vunpack.c.l.b16 %v507
    %v540 = vunpack.c.l.b16 %v508
    %v541 = vunpack.c.l.b16 %v509
    %v542 = vunpack.c.l.b16 %v510
    %v543 = vunpack.c.l.b16 %v511
    %v544 = vunpack.c.l.b16 %v512
    %v545 = vunpack.c.l.b16 %v513
    %v546 = vunpack.c.l.b16 %v514
    %v547 = vunpack.c.l.b16 %v515
    %v548 = vunpack.c.l.b16 %v516
    %v549 = vunpack.c.l.b16 %v517
    %v550 = vunpack.c.l.b16 %v518
    %v551 = vunpack.c.l.b16 %v519
    %v552 = vpack.c.b16 %v537, %v536
    %v553 = vpack.c.b16 %v539, %v538
    %v554 = vpack.c.b16 %v541, %v540
    %v555 = vpack.c.b16 %v543, %v542
    %v556 = vpack.c.b16 %v545, %v544
    %v557 = vpack.c.b16 %v547, %v546
    %v558 = vpack.c.b16 %v549, %v548
    %v559 = vpack.c.b16 %v551, %v550
    %vm568 = vcmask 48128
    %569 = vst.msk [vmem:[#allocation4] sm:$0xff] %vm568, %v552
    %570 = vst.msk [vmem:[#allocation4 + $0x8] sm:$0xff] %vm568, %v553
    %571 = vst.msk [vmem:[#allocation4 + $0x10] sm:$0xff] %vm568, %v554
    %572 = vst.msk [vmem:[#allocation4 + $0x18] sm:$0xff] %vm568, %v555
    %573 = vst.msk [vmem:[#allocation4 + $0x20] sm:$0xff] %vm568, %v556
    %574 = vst.msk [vmem:[#allocation4 + $0x28] sm:$0xff] %vm568, %v557
    %575 = vst.msk [vmem:[#allocation4 + $0x30] sm:$0xff] %vm568, %v558
    %576 = vst.msk [vmem:[#allocation4 + $0x38] sm:$0xff] %vm568, %v559
    %v577 = vld [vmem:[#allocation2] sm:$0xf]
    %v578 = vld [vmem:[#allocation2 + $0x4] sm:$0x1]
    %v579 = vld [vmem:[#allocation2 + $0x8] sm:$0xf]
    %v580 = vld [vmem:[#allocation2 + $0xc] sm:$0x1]
    %v581 = vld [vmem:[#allocation2 + $0x10] sm:$0xf]
    %v582 = vld [vmem:[#allocation2 + $0x14] sm:$0x1]
    %v583 = vld [vmem:[#allocation2 + $0x18] sm:$0xf]
    %v584 = vld [vmem:[#allocation2 + $0x1c] sm:$0x1]
    %v585 = vld [vmem:[#allocation2 + $0x20] sm:$0xf]
    %v586 = vld [vmem:[#allocation2 + $0x24] sm:$0x1]
    %v587 = vld [vmem:[#allocation2 + $0x28] sm:$0xf]
    %v588 = vld [vmem:[#allocation2 + $0x2c] sm:$0x1]
    %v589 = vld [vmem:[#allocation2 + $0x30] sm:$0xf]
    %v590 = vld [vmem:[#allocation2 + $0x34] sm:$0x1]
    %v591 = vld [vmem:[#allocation2 + $0x38] sm:$0xf]
    %v592 = vld [vmem:[#allocation2 + $0x3c] sm:$0x1]
    %v593 = vld [vmem:[#allocation2 + $0x50] sm:$0xf]
    %v594 = vld [vmem:[#allocation2 + $0x54] sm:$0x1]
    %v595 = vld [vmem:[#allocation2 + $0x58] sm:$0xf]
    %v596 = vld [vmem:[#allocation2 + $0x5c] sm:$0x1]
    %v597 = vld [vmem:[#allocation2 + $0x60] sm:$0xf]
    %v598 = vld [vmem:[#allocation2 + $0x64] sm:$0x1]
    %v599 = vld [vmem:[#allocation2 + $0x68] sm:$0xf]
    %v600 = vld [vmem:[#allocation2 + $0x6c] sm:$0x1]
    %v601 = vld [vmem:[#allocation2 + $0x70] sm:$0xf]
    %v602 = vld [vmem:[#allocation2 + $0x74] sm:$0x1]
    %v603 = vld [vmem:[#allocation2 + $0x78] sm:$0xf]
    %v604 = vld [vmem:[#allocation2 + $0x7c] sm:$0x1]
    %v605 = vld [vmem:[#allocation2 + $0x80] sm:$0xf]
    %v606 = vld [vmem:[#allocation2 + $0x84] sm:$0x1]
    %v607 = vld [vmem:[#allocation2 + $0x88] sm:$0xf]
    %v608 = vld [vmem:[#allocation2 + $0x8c] sm:$0x1]
    %vm609 = vsmask.f32 3328
    %vm610 = vsmask.f32 7440
    %vm611 = vmor %vm609, %vm610
    %v613 = vshrl.u32 %v577, 16
    %v615 = vrot.slane %v613, 4
    %v616 = vshll.u32 %v577, 16
    %v618 = vrot.slane %v616, 5
    %v619 = vor.u32 %v615, %v618
    %v620 = vrot.slane %v619, 4
    %v622 = vshll.u32 %v578, 16
    %v624 = vrot.slane %v622, 5
    %v625 = vsel %vm611, %v620, %v624
    %v627 = vshrl.u32 %v579, 16
    %v629 = vrot.slane %v627, 4
    %v630 = vshll.u32 %v579, 16
    %v632 = vrot.slane %v630, 5
    %v633 = vor.u32 %v629, %v632
    %v634 = vrot.slane %v633, 4
    %v636 = vshll.u32 %v580, 16
    %v638 = vrot.slane %v636, 5
    %v639 = vsel %vm611, %v634, %v638
    %v641 = vshrl.u32 %v581, 16
    %v643 = vrot.slane %v641, 4
    %v644 = vshll.u32 %v581, 16
    %v646 = vrot.slane %v644, 5
    %v647 = vor.u32 %v643, %v646
    %v648 = vrot.slane %v647, 4
    %v650 = vshll.u32 %v582, 16
    %v652 = vrot.slane %v650, 5
    %v653 = vsel %vm611, %v648, %v652
    %v655 = vshrl.u32 %v583, 16
    %v657 = vrot.slane %v655, 4
    %v658 = vshll.u32 %v583, 16
    %v660 = vrot.slane %v658, 5
    %v661 = vor.u32 %v657, %v660
    %v662 = vrot.slane %v661, 4
    %v664 = vshll.u32 %v584, 16
    %v666 = vrot.slane %v664, 5
    %v667 = vsel %vm611, %v662, %v666
    %v669 = vshrl.u32 %v585, 16
    %v671 = vrot.slane %v669, 4
    %v672 = vshll.u32 %v585, 16
    %v674 = vrot.slane %v672, 5
    %v675 = vor.u32 %v671, %v674
    %v676 = vrot.slane %v675, 4
    %v678 = vshll.u32 %v586, 16
    %v680 = vrot.slane %v678, 5
    %v681 = vsel %vm611, %v676, %v680
    %v683 = vshrl.u32 %v587, 16
    %v685 = vrot.slane %v683, 4
    %v686 = vshll.u32 %v587, 16
    %v688 = vrot.slane %v686, 5
    %v689 = vor.u32 %v685, %v688
    %v690 = vrot.slane %v689, 4
    %v692 = vshll.u32 %v588, 16
    %v694 = vrot.slane %v692, 5
    %v695 = vsel %vm611, %v690, %v694
    %v697 = vshrl.u32 %v589, 16
    %v699 = vrot.slane %v697, 4
    %v700 = vshll.u32 %v589, 16
    %v702 = vrot.slane %v700, 5
    %v703 = vor.u32 %v699, %v702
    %v704 = vrot.slane %v703, 4
    %v706 = vshll.u32 %v590, 16
    %v708 = vrot.slane %v706, 5
    %v709 = vsel %vm611, %v704, %v708
    %v711 = vshrl.u32 %v591, 16
    %v713 = vrot.slane %v711, 4
    %v714 = vshll.u32 %v591, 16
    %v716 = vrot.slane %v714, 5
    %v717 = vor.u32 %v713, %v716
    %v718 = vrot.slane %v717, 4
    %v720 = vshll.u32 %v592, 16
    %v722 = vrot.slane %v720, 5
    %v723 = vsel %vm611, %v718, %v722
    %v725 = vshrl.u32 %v593, 16
    %v727 = vrot.slane %v725, 4
    %v728 = vshll.u32 %v593, 16
    %v730 = vrot.slane %v728, 5
    %v731 = vor.u32 %v727, %v730
    %v732 = vrot.slane %v731, 4
    %v734 = vshll.u32 %v594, 16
    %v736 = vrot.slane %v734, 5
    %v737 = vsel %vm611, %v732, %v736
    %v739 = vshrl.u32 %v595, 16
    %v741 = vrot.slane %v739, 4
    %v742 = vshll.u32 %v595, 16
    %v744 = vrot.slane %v742, 5
    %v745 = vor.u32 %v741, %v744
    %v746 = vrot.slane %v745, 4
    %v748 = vshll.u32 %v596, 16
    %v750 = vrot.slane %v748, 5
    %v751 = vsel %vm611, %v746, %v750
    %v753 = vshrl.u32 %v597, 16
    %v755 = vrot.slane %v753, 4
    %v756 = vshll.u32 %v597, 16
    %v758 = vrot.slane %v756, 5
    %v759 = vor.u32 %v755, %v758
    %v760 = vrot.slane %v759, 4
    %v762 = vshll.u32 %v598, 16
    %v764 = vrot.slane %v762, 5
    %v765 = vsel %vm611, %v760, %v764
    %v767 = vshrl.u32 %v599, 16
    %v769 = vrot.slane %v767, 4
    %v770 = vshll.u32 %v599, 16
    %v772 = vrot.slane %v770, 5
    %v773 = vor.u32 %v769, %v772
    %v774 = vrot.slane %v773, 4
    %v776 = vshll.u32 %v600, 16
    %v778 = vrot.slane %v776, 5
    %v779 = vsel %vm611, %v774, %v778
    %v781 = vshrl.u32 %v601, 16
    %v783 = vrot.slane %v781, 4
    %v784 = vshll.u32 %v601, 16
    %v786 = vrot.slane %v784, 5
    %v787 = vor.u32 %v783, %v786
    %v788 = vrot.slane %v787, 4
    %v790 = vshll.u32 %v602, 16
    %v792 = vrot.slane %v790, 5
    %v793 = vsel %vm611, %v788, %v792
    %v795 = vshrl.u32 %v603, 16
    %v797 = vrot.slane %v795, 4
    %v798 = vshll.u32 %v603, 16
    %v800 = vrot.slane %v798, 5
    %v801 = vor.u32 %v797, %v800
    %v802 = vrot.slane %v801, 4
    %v804 = vshll.u32 %v604, 16
    %v806 = vrot.slane %v804, 5
    %v807 = vsel %vm611, %v802, %v806
    %v809 = vshrl.u32 %v605, 16
    %v811 = vrot.slane %v809, 4
    %v812 = vshll.u32 %v605, 16
    %v814 = vrot.slane %v812, 5
    %v815 = vor.u32 %v811, %v814
    %v816 = vrot.slane %v815, 4
    %v818 = vshll.u32 %v606, 16
    %v820 = vrot.slane %v818, 5
    %v821 = vsel %vm611, %v816, %v820
    %v823 = vshrl.u32 %v607, 16
    %v825 = vrot.slane %v823, 4
    %v826 = vshll.u32 %v607, 16
    %v828 = vrot.slane %v826, 5
    %v829 = vor.u32 %v825, %v828
    %v830 = vrot.slane %v829, 4
    %v832 = vshll.u32 %v608, 16
    %v834 = vrot.slane %v832, 5
    %v835 = vsel %vm611, %v830, %v834
    %v836 = vunpack.c.l.b16 %v625
    %v837 = vunpack.c.l.b16 %v639
    %v838 = vunpack.c.l.b16 %v653
    %v839 = vunpack.c.l.b16 %v667
    %v840 = vunpack.c.l.b16 %v681
    %v841 = vunpack.c.l.b16 %v695
    %v842 = vunpack.c.l.b16 %v709
    %v843 = vunpack.c.l.b16 %v723
    %v844 = vunpack.c.l.b16 %v737
    %v845 = vunpack.c.l.b16 %v751
    %v846 = vunpack.c.l.b16 %v765
    %v847 = vunpack.c.l.b16 %v779
    %v848 = vunpack.c.l.b16 %v793
    %v849 = vunpack.c.l.b16 %v807
    %v850 = vunpack.c.l.b16 %v821
    %v851 = vunpack.c.l.b16 %v835
    %v852 = vpack.c.b16 %v837, %v836
    %v853 = vpack.c.b16 %v839, %v838
    %v854 = vpack.c.b16 %v841, %v840
    %v855 = vpack.c.b16 %v843, %v842
    %v856 = vpack.c.b16 %v845, %v844
    %v857 = vpack.c.b16 %v847, %v846
    %v858 = vpack.c.b16 %v849, %v848
    %v859 = vpack.c.b16 %v851, %v850
    %860 = vrot.lane.b32.xlu0 %v852, 6
    %v861 = vpop.permute.xlu0 %860
    %862 = vrot.lane.b32.xlu0 %v853, 6
    %v863 = vpop.permute.xlu0 %862
    %864 = vrot.lane.b32.xlu0 %v854, 6
    %v865 = vpop.permute.xlu0 %864
    %866 = vrot.lane.b32.xlu0 %v855, 6
    %v867 = vpop.permute.xlu0 %866
    %868 = vrot.lane.b32.xlu0 %v856, 6
    %v869 = vpop.permute.xlu0 %868
    %870 = vrot.lane.b32.xlu0 %v857, 6
    %v871 = vpop.permute.xlu0 %870
    %872 = vrot.lane.b32.xlu0 %v858, 6
    %v873 = vpop.permute.xlu0 %872
    %874 = vrot.lane.b32.xlu0 %v859, 6
    %v875 = vpop.permute.xlu0 %874
    %vm884 = vcmask 97328
    %885 = vst.msk [vmem:[#allocation4] sm:$0xff] %vm884, %v861
    %886 = vst.msk [vmem:[#allocation4 + $0x8] sm:$0xff] %vm884, %v863
    %887 = vst.msk [vmem:[#allocation4 + $0x10] sm:$0xff] %vm884, %v865
    %888 = vst.msk [vmem:[#allocation4 + $0x18] sm:$0xff] %vm884, %v867
    %889 = vst.msk [vmem:[#allocation4 + $0x20] sm:$0xff] %vm884, %v869
    %890 = vst.msk [vmem:[#allocation4 + $0x28] sm:$0xff] %vm884, %v871
    %891 = vst.msk [vmem:[#allocation4 + $0x30] sm:$0xff] %vm884, %v873
    %892 = vst.msk [vmem:[#allocation4 + $0x38] sm:$0xff] %vm884, %v875
    %v893 = vld [vmem:[#allocation2] sm:$0xe]
    %v894 = vld [vmem:[#allocation2 + $0x4] sm:$0x1]
    %v895 = vld [vmem:[#allocation2 + $0x8] sm:$0xe]
    %v896 = vld [vmem:[#allocation2 + $0xc] sm:$0x1]
    %v897 = vld [vmem:[#allocation2 + $0x10] sm:$0xe]
    %v898 = vld [vmem:[#allocation2 + $0x14] sm:$0x1]
    %v899 = vld [vmem:[#allocation2 + $0x18] sm:$0xe]
    %v900 = vld [vmem:[#allocation2 + $0x1c] sm:$0x1]
    %v901 = vld [vmem:[#allocation2 + $0x20] sm:$0xe]
    %v902 = vld [vmem:[#allocation2 + $0x24] sm:$0x1]
    %v903 = vld [vmem:[#allocation2 + $0x28] sm:$0xe]
    %v904 = vld [vmem:[#allocation2 + $0x2c] sm:$0x1]
    %v905 = vld [vmem:[#allocation2 + $0x30] sm:$0xe]
    %v906 = vld [vmem:[#allocation2 + $0x34] sm:$0x1]
    %v907 = vld [vmem:[#allocation2 + $0x38] sm:$0xe]
    %v908 = vld [vmem:[#allocation2 + $0x3c] sm:$0x1]
    %v909 = vld [vmem:[#allocation2 + $0x50] sm:$0xe]
    %v910 = vld [vmem:[#allocation2 + $0x54] sm:$0x1]
    %v911 = vld [vmem:[#allocation2 + $0x58] sm:$0xe]
    %v912 = vld [vmem:[#allocation2 + $0x5c] sm:$0x1]
    %v913 = vld [vmem:[#allocation2 + $0x60] sm:$0xe]
    %v914 = vld [vmem:[#allocation2 + $0x64] sm:$0x1]
    %v915 = vld [vmem:[#allocation2 + $0x68] sm:$0xe]
    %v916 = vld [vmem:[#allocation2 + $0x6c] sm:$0x1]
    %v917 = vld [vmem:[#allocation2 + $0x70] sm:$0xe]
    %v918 = vld [vmem:[#allocation2 + $0x74] sm:$0x1]
    %v919 = vld [vmem:[#allocation2 + $0x78] sm:$0xe]
    %v920 = vld [vmem:[#allocation2 + $0x7c] sm:$0x1]
    %v921 = vld [vmem:[#allocation2 + $0x80] sm:$0xe]
    %v922 = vld [vmem:[#allocation2 + $0x84] sm:$0x1]
    %v923 = vld [vmem:[#allocation2 + $0x88] sm:$0xe]
    %v924 = vld [vmem:[#allocation2 + $0x8c] sm:$0x1]
    %vm957 = vcmask 1042432
    %vm958 = vcmask 1046532
    %vm959 = vmor %vm957, %vm958
    %v960 = vrot.slane %v893, 5
    %v961 = vrot.slane %v960, 4
    %v962 = vrot.slane %v894, 5
    %v963 = vsel %vm959, %v961, %v962
    %v964 = vrot.slane %v895, 5
    %v965 = vrot.slane %v964, 4
    %v966 = vrot.slane %v896, 5
    %v967 = vsel %vm959, %v965, %v966
    %v968 = vrot.slane %v897, 5
    %v969 = vrot.slane %v968, 4
    %v970 = vrot.slane %v898, 5
    %v971 = vsel %vm959, %v969, %v970
    %v972 = vrot.slane %v899, 5
    %v973 = vrot.slane %v972, 4
    %v974 = vrot.slane %v900, 5
    %v975 = vsel %vm959, %v973, %v974
    %v976 = vrot.slane %v901, 5
    %v977 = vrot.slane %v976, 4
    %v978 = vrot.slane %v902, 5
    %v979 = vsel %vm959, %v977, %v978
    %v980 = vrot.slane %v903, 5
    %v981 = vrot.slane %v980, 4
    %v982 = vrot.slane %v904, 5
    %v983 = vsel %vm959, %v981, %v982
    %v984 = vrot.slane %v905, 5
    %v985 = vrot.slane %v984, 4
    %v986 = vrot.slane %v906, 5
    %v987 = vsel %vm959, %v985, %v986
    %v988 = vrot.slane %v907, 5
    %v989 = vrot.slane %v988, 4
    %v990 = vrot.slane %v908, 5
    %v991 = vsel %vm959, %v989, %v990
    %v992 = vrot.slane %v909, 5
    %v993 = vrot.slane %v992, 4
    %v994 = vrot.slane %v910, 5
    %v995 = vsel %vm959, %v993, %v994
    %v996 = vrot.slane %v911, 5
    %v997 = vrot.slane %v996, 4
    %v998 = vrot.slane %v912, 5
    %v999 = vsel %vm959, %v997, %v998
    %v1000 = vrot.slane %v913, 5
    %v1001 = vrot.slane %v1000, 4
    %v1002 = vrot.slane %v914, 5
    %v1003 = vsel %vm959, %v1001, %v1002
    %v1004 = vrot.slane %v915, 5
    %v1005 = vrot.slane %v1004, 4
    %v1006 = vrot.slane %v916, 5
    %v1007 = vsel %vm959, %v1005, %v1006
    %v1008 = vrot.slane %v917, 5
    %v1009 = vrot.slane %v1008, 4
    %v1010 = vrot.slane %v918, 5
    %v1011 = vsel %vm959, %v1009, %v1010
    %v1012 = vrot.slane %v919, 5
    %v1013 = vrot.slane %v1012, 4
    %v1014 = vrot.slane %v920, 5
    %v1015 = vsel %vm959, %v1013, %v1014
    %v1016 = vrot.slane %v921, 5
    %v1017 = vrot.slane %v1016, 4
    %v1018 = vrot.slane %v922, 5
    %v1019 = vsel %vm959, %v1017, %v1018
    %v1020 = vrot.slane %v923, 5
    %v1021 = vrot.slane %v1020, 4
    %v1022 = vrot.slane %v924, 5
    %v1023 = vsel %vm959, %v1021, %v1022
    %v1024 = vunpack.c.l.b16 %v963
    %v1025 = vunpack.c.l.b16 %v967
    %v1026 = vunpack.c.l.b16 %v971
    %v1027 = vunpack.c.l.b16 %v975
    %v1028 = vunpack.c.l.b16 %v979
    %v1029 = vunpack.c.l.b16 %v983
    %v1030 = vunpack.c.l.b16 %v987
    %v1031 = vunpack.c.l.b16 %v991
    %v1032 = vunpack.c.l.b16 %v995
    %v1033 = vunpack.c.l.b16 %v999
    %v1034 = vunpack.c.l.b16 %v1003
    %v1035 = vunpack.c.l.b16 %v1007
    %v1036 = vunpack.c.l.b16 %v1011
    %v1037 = vunpack.c.l.b16 %v1015
    %v1038 = vunpack.c.l.b16 %v1019
    %v1039 = vunpack.c.l.b16 %v1023
    %v1040 = vpack.c.b16 %v1025, %v1024
    %v1041 = vpack.c.b16 %v1027, %v1026
    %v1042 = vpack.c.b16 %v1029, %v1028
    %v1043 = vpack.c.b16 %v1031, %v1030
    %v1044 = vpack.c.b16 %v1033, %v1032
    %v1045 = vpack.c.b16 %v1035, %v1034
    %v1046 = vpack.c.b16 %v1037, %v1036
    %v1047 = vpack.c.b16 %v1039, %v1038
    %1048 = vrot.lane.b32.xlu0 %v1040, 12
    %v1049 = vpop.permute.xlu0 %1048
    %1050 = vrot.lane.b32.xlu0 %v1041, 12
    %v1051 = vpop.permute.xlu0 %1050
    %1052 = vrot.lane.b32.xlu0 %v1042, 12
    %v1053 = vpop.permute.xlu0 %1052
    %1054 = vrot.lane.b32.xlu0 %v1043, 12
    %v1055 = vpop.permute.xlu0 %1054
    %1056 = vrot.lane.b32.xlu0 %v1044, 12
    %v1057 = vpop.permute.xlu0 %1056
    %1058 = vrot.lane.b32.xlu0 %v1045, 12
    %v1059 = vpop.permute.xlu0 %1058
    %1060 = vrot.lane.b32.xlu0 %v1046, 12
    %v1061 = vpop.permute.xlu0 %1060
    %1062 = vrot.lane.b32.xlu0 %v1047, 12
    %v1063 = vpop.permute.xlu0 %1062
    %vm1072 = vcmask 146528
    %1073 = vst.msk [vmem:[#allocation4] sm:$0xff] %vm1072, %v1049
    %1074 = vst.msk [vmem:[#allocation4 + $0x8] sm:$0xff] %vm1072, %v1051
    %1075 = vst.msk [vmem:[#allocation4 + $0x10] sm:$0xff] %vm1072, %v1053
    %1076 = vst.msk [vmem:[#allocation4 + $0x18] sm:$0xff] %vm1072, %v1055
    %1077 = vst.msk [vmem:[#allocation4 + $0x20] sm:$0xff] %vm1072, %v1057
    %1078 = vst.msk [vmem:[#allocation4 + $0x28] sm:$0xff] %vm1072, %v1059
    %1079 = vst.msk [vmem:[#allocation4 + $0x30] sm:$0xff] %vm1072, %v1061
    %1080 = vst.msk [vmem:[#allocation4 + $0x38] sm:$0xff] %vm1072, %v1063
    %v1081 = vld [vmem:[%s405] sm:$0xf]
    %v1082 = vld [vmem:[%s405 + $0x8] sm:$0xf]
    %v1083 = vld [vmem:[%s405 + $0x10] sm:$0xf]
    %v1084 = vld [vmem:[%s405 + $0x18] sm:$0xf]
    %v1085 = vld [vmem:[%s405 + $0x20] sm:$0xf]
    %v1086 = vld [vmem:[%s405 + $0x28] sm:$0xf]
    %v1087 = vld [vmem:[%s405 + $0x30] sm:$0xf]
    %v1088 = vld [vmem:[%s405 + $0x38] sm:$0xf]
    %v1089 = vld [vmem:[%s405 + $0x50] sm:$0xf]
    %v1090 = vld [vmem:[%s405 + $0x58] sm:$0xf]
    %v1091 = vld [vmem:[%s405 + $0x60] sm:$0xf]
    %v1092 = vld [vmem:[%s405 + $0x68] sm:$0xf]
    %v1093 = vld [vmem:[%s405 + $0x70] sm:$0xf]
    %v1094 = vld [vmem:[%s405 + $0x78] sm:$0xf]
    %v1095 = vld [vmem:[%s405 + $0x80] sm:$0xf]
    %v1096 = vld [vmem:[%s405 + $0x88] sm:$0xf]
    %v1113 = vunpack.c.l.b16 %v1081
    %v1114 = vunpack.c.l.b16 %v1082
    %v1115 = vunpack.c.l.b16 %v1083
    %v1116 = vunpack.c.l.b16 %v1084
    %v1117 = vunpack.c.l.b16 %v1085
    %v1118 = vunpack.c.l.b16 %v1086
    %v1119 = vunpack.c.l.b16 %v1087
    %v1120 = vunpack.c.l.b16 %v1088
    %v1121 = vunpack.c.l.b16 %v1089
    %v1122 = vunpack.c.l.b16 %v1090
    %v1123 = vunpack.c.l.b16 %v1091
    %v1124 = vunpack.c.l.b16 %v1092
    %v1125 = vunpack.c.l.b16 %v1093
    %v1126 = vunpack.c.l.b16 %v1094
    %v1127 = vunpack.c.l.b16 %v1095
    %v1128 = vunpack.c.l.b16 %v1096
    %v1129 = vpack.c.b16 %v1114, %v1113
    %v1130 = vpack.c.b16 %v1116, %v1115
    %v1131 = vpack.c.b16 %v1118, %v1117
    %v1132 = vpack.c.b16 %v1120, %v1119
    %v1133 = vpack.c.b16 %v1122, %v1121
    %v1134 = vpack.c.b16 %v1124, %v1123
    %v1135 = vpack.c.b16 %v1126, %v1125
    %v1136 = vpack.c.b16 %v1128, %v1127
    %1137 = vrot.lane.b32.xlu0 %v1129, 18
    %v1138 = vpop.permute.xlu0 %1137
    %1139 = vrot.lane.b32.xlu0 %v1130, 18
    %v1140 = vpop.permute.xlu0 %1139
    %1141 = vrot.lane.b32.xlu0 %v1131, 18
    %v1142 = vpop.permute.xlu0 %1141
    %1143 = vrot.lane.b32.xlu0 %v1132, 18
    %v1144 = vpop.permute.xlu0 %1143
    %1145 = vrot.lane.b32.xlu0 %v1133, 18
    %v1146 = vpop.permute.xlu0 %1145
    %1147 = vrot.lane.b32.xlu0 %v1134, 18
    %v1148 = vpop.permute.xlu0 %1147
    %1149 = vrot.lane.b32.xlu0 %v1135, 18
    %v1150 = vpop.permute.xlu0 %1149
    %1151 = vrot.lane.b32.xlu0 %v1136, 18
    %v1152 = vpop.permute.xlu0 %1151
    %vm1161 = vcmask 195728
    %1162 = vst.msk [vmem:[#allocation4] sm:$0xff] %vm1161, %v1138
    %1163 = vst.msk [vmem:[#allocation4 + $0x8] sm:$0xff] %vm1161, %v1140
    %1164 = vst.msk [vmem:[#allocation4 + $0x10] sm:$0xff] %vm1161, %v1142
    %1165 = vst.msk [vmem:[#allocation4 + $0x18] sm:$0xff] %vm1161, %v1144
    %1166 = vst.msk [vmem:[#allocation4 + $0x20] sm:$0xff] %vm1161, %v1146
    %1167 = vst.msk [vmem:[#allocation4 + $0x28] sm:$0xff] %vm1161, %v1148
    %1168 = vst.msk [vmem:[#allocation4 + $0x30] sm:$0xff] %vm1161, %v1150
    %1169 = vst.msk [vmem:[#allocation4 + $0x38] sm:$0xff] %vm1161, %v1152
    %v1170 = vld [vmem:[%s405] sm:$0xf]
    %v1171 = vld [vmem:[%s405 + $0x4] sm:$0x1]
    %v1172 = vld [vmem:[%s405 + $0x8] sm:$0xf]
    %v1173 = vld [vmem:[%s405 + $0xc] sm:$0x1]
    %v1174 = vld [vmem:[%s405 + $0x10] sm:$0xf]
    %v1175 = vld [vmem:[%s405 + $0x14] sm:$0x1]
    %v1176 = vld [vmem:[%s405 + $0x18] sm:$0xf]
    %v1177 = vld [vmem:[%s405 + $0x1c] sm:$0x1]
    %v1178 = vld [vmem:[%s405 + $0x20] sm:$0xf]
    %v1179 = vld [vmem:[%s405 + $0x24] sm:$0x1]
    %v1180 = vld [vmem:[%s405 + $0x28] sm:$0xf]
    %v1181 = vld [vmem:[%s405 + $0x2c] sm:$0x1]
    %v1182 = vld [vmem:[%s405 + $0x30] sm:$0xf]
    %v1183 = vld [vmem:[%s405 + $0x34] sm:$0x1]
    %v1184 = vld [vmem:[%s405 + $0x38] sm:$0xf]
    %v1185 = vld [vmem:[%s405 + $0x3c] sm:$0x1]
    %v1186 = vld [vmem:[%s405 + $0x50] sm:$0xf]
    %v1187 = vld [vmem:[%s405 + $0x54] sm:$0x1]
    %v1188 = vld [vmem:[%s405 + $0x58] sm:$0xf]
    %v1189 = vld [vmem:[%s405 + $0x5c] sm:$0x1]
    %v1190 = vld [vmem:[%s405 + $0x60] sm:$0xf]
    %v1191 = vld [vmem:[%s405 + $0x64] sm:$0x1]
    %v1192 = vld [vmem:[%s405 + $0x68] sm:$0xf]
    %v1193 = vld [vmem:[%s405 + $0x6c] sm:$0x1]
    %v1194 = vld [vmem:[%s405 + $0x70] sm:$0xf]
    %v1195 = vld [vmem:[%s405 + $0x74] sm:$0x1]
    %v1196 = vld [vmem:[%s405 + $0x78] sm:$0xf]
    %v1197 = vld [vmem:[%s405 + $0x7c] sm:$0x1]
    %v1198 = vld [vmem:[%s405 + $0x80] sm:$0xf]
    %v1199 = vld [vmem:[%s405 + $0x84] sm:$0x1]
    %v1200 = vld [vmem:[%s405 + $0x88] sm:$0xf]
    %v1201 = vld [vmem:[%s405 + $0x8c] sm:$0x1]
    %v1203 = vshrl.u32 %v1170, 16
    %v1205 = vrot.slane %v1203, 4
    %v1206 = vshll.u32 %v1170, 16
    %v1208 = vrot.slane %v1206, 5
    %v1209 = vor.u32 %v1205, %v1208
    %v1210 = vrot.slane %v1209, 4
    %v1212 = vshll.u32 %v1171, 16
    %v1214 = vrot.slane %v1212, 5
    %v1215 = vsel %vm611, %v1210, %v1214
    %v1217 = vshrl.u32 %v1172, 16
    %v1219 = vrot.slane %v1217, 4
    %v1220 = vshll.u32 %v1172, 16
    %v1222 = vrot.slane %v1220, 5
    %v1223 = vor.u32 %v1219, %v1222
    %v1224 = vrot.slane %v1223, 4
    %v1226 = vshll.u32 %v1173, 16
    %v1228 = vrot.slane %v1226, 5
    %v1229 = vsel %vm611, %v1224, %v1228
    %v1231 = vshrl.u32 %v1174, 16
    %v1233 = vrot.slane %v1231, 4
    %v1234 = vshll.u32 %v1174, 16
    %v1236 = vrot.slane %v1234, 5
    %v1237 = vor.u32 %v1233, %v1236
    %v1238 = vrot.slane %v1237, 4
    %v1240 = vshll.u32 %v1175, 16
    %v1242 = vrot.slane %v1240, 5
    %v1243 = vsel %vm611, %v1238, %v1242
    %v1245 = vshrl.u32 %v1176, 16
    %v1247 = vrot.slane %v1245, 4
    %v1248 = vshll.u32 %v1176, 16
    %v1250 = vrot.slane %v1248, 5
    %v1251 = vor.u32 %v1247, %v1250
    %v1252 = vrot.slane %v1251, 4
    %v1254 = vshll.u32 %v1177, 16
    %v1256 = vrot.slane %v1254, 5
    %v1257 = vsel %vm611, %v1252, %v1256
    %v1259 = vshrl.u32 %v1178, 16
    %v1261 = vrot.slane %v1259, 4
    %v1262 = vshll.u32 %v1178, 16
    %v1264 = vrot.slane %v1262, 5
    %v1265 = vor.u32 %v1261, %v1264
    %v1266 = vrot.slane %v1265, 4
    %v1268 = vshll.u32 %v1179, 16
    %v1270 = vrot.slane %v1268, 5
    %v1271 = vsel %vm611, %v1266, %v1270
    %v1273 = vshrl.u32 %v1180, 16
    %v1275 = vrot.slane %v1273, 4
    %v1276 = vshll.u32 %v1180, 16
    %v1278 = vrot.slane %v1276, 5
    %v1279 = vor.u32 %v1275, %v1278
    %v1280 = vrot.slane %v1279, 4
    %v1282 = vshll.u32 %v1181, 16
    %v1284 = vrot.slane %v1282, 5
    %v1285 = vsel %vm611, %v1280, %v1284
    %v1287 = vshrl.u32 %v1182, 16
    %v1289 = vrot.slane %v1287, 4
    %v1290 = vshll.u32 %v1182, 16
    %v1292 = vrot.slane %v1290, 5
    %v1293 = vor.u32 %v1289, %v1292
    %v1294 = vrot.slane %v1293, 4
    %v1296 = vshll.u32 %v1183, 16
    %v1298 = vrot.slane %v1296, 5
    %v1299 = vsel %vm611, %v1294, %v1298
    %v1301 = vshrl.u32 %v1184, 16
    %v1303 = vrot.slane %v1301, 4
    %v1304 = vshll.u32 %v1184, 16
    %v1306 = vrot.slane %v1304, 5
    %v1307 = vor.u32 %v1303, %v1306
    %v1308 = vrot.slane %v1307, 4
    %v1310 = vshll.u32 %v1185, 16
    %v1312 = vrot.slane %v1310, 5
    %v1313 = vsel %vm611, %v1308, %v1312
    %v1315 = vshrl.u32 %v1186, 16
    %v1317 = vrot.slane %v1315, 4
    %v1318 = vshll.u32 %v1186, 16
    %v1320 = vrot.slane %v1318, 5
    %v1321 = vor.u32 %v1317, %v1320
    %v1322 = vrot.slane %v1321, 4
    %v1324 = vshll.u32 %v1187, 16
    %v1326 = vrot.slane %v1324, 5
    %v1327 = vsel %vm611, %v1322, %v1326
    %v1329 = vshrl.u32 %v1188, 16
    %v1331 = vrot.slane %v1329, 4
    %v1332 = vshll.u32 %v1188, 16
    %v1334 = vrot.slane %v1332, 5
    %v1335 = vor.u32 %v1331, %v1334
    %v1336 = vrot.slane %v1335, 4
    %v1338 = vshll.u32 %v1189, 16
    %v1340 = vrot.slane %v1338, 5
    %v1341 = vsel %vm611, %v1336, %v1340
    %v1343 = vshrl.u32 %v1190, 16
    %v1345 = vrot.slane %v1343, 4
    %v1346 = vshll.u32 %v1190, 16
    %v1348 = vrot.slane %v1346, 5
    %v1349 = vor.u32 %v1345, %v1348
    %v1350 = vrot.slane %v1349, 4
    %v1352 = vshll.u32 %v1191, 16
    %v1354 = vrot.slane %v1352, 5
    %v1355 = vsel %vm611, %v1350, %v1354
    %v1357 = vshrl.u32 %v1192, 16
    %v1359 = vrot.slane %v1357, 4
    %v1360 = vshll.u32 %v1192, 16
    %v1362 = vrot.slane %v1360, 5
    %v1363 = vor.u32 %v1359, %v1362
    %v1364 = vrot.slane %v1363, 4
    %v1366 = vshll.u32 %v1193, 16
    %v1368 = vrot.slane %v1366, 5
    %v1369 = vsel %vm611, %v1364, %v1368
    %v1371 = vshrl.u32 %v1194, 16
    %v1373 = vrot.slane %v1371, 4
    %v1374 = vshll.u32 %v1194, 16
    %v1376 = vrot.slane %v1374, 5
    %v1377 = vor.u32 %v1373, %v1376
    %v1378 = vrot.slane %v1377, 4
    %v1380 = vshll.u32 %v1195, 16
    %v1382 = vrot.slane %v1380, 5
    %v1383 = vsel %vm611, %v1378, %v1382
    %v1385 = vshrl.u32 %v1196, 16
    %v1387 = vrot.slane %v1385, 4
    %v1388 = vshll.u32 %v1196, 16
    %v1390 = vrot.slane %v1388, 5
    %v1391 = vor.u32 %v1387, %v1390
    %v1392 = vrot.slane %v1391, 4
    %v1394 = vshll.u32 %v1197, 16
    %v1396 = vrot.slane %v1394, 5
    %v1397 = vsel %vm611, %v1392, %v1396
    %v1399 = vshrl.u32 %v1198, 16
    %v1401 = vrot.slane %v1399, 4
    %v1402 = vshll.u32 %v1198, 16
    %v1404 = vrot.slane %v1402, 5
    %v1405 = vor.u32 %v1401, %v1404
    %v1406 = vrot.slane %v1405, 4
    %v1408 = vshll.u32 %v1199, 16
    %v1410 = vrot.slane %v1408, 5
    %v1411 = vsel %vm611, %v1406, %v1410
    %v1413 = vshrl.u32 %v1200, 16
    %v1415 = vrot.slane %v1413, 4
    %v1416 = vshll.u32 %v1200, 16
    %v1418 = vrot.slane %v1416, 5
    %v1419 = vor.u32 %v1415, %v1418
    %v1420 = vrot.slane %v1419, 4
    %v1422 = vshll.u32 %v1201, 16
    %v1424 = vrot.slane %v1422, 5
    %v1425 = vsel %vm611, %v1420, %v1424
    %v1426 = vunpack.c.l.b16 %v1215
    %v1427 = vunpack.c.l.b16 %v1229
    %v1428 = vunpack.c.l.b16 %v1243
    %v1429 = vunpack.c.l.b16 %v1257
    %v1430 = vunpack.c.l.b16 %v1271
    %v1431 = vunpack.c.l.b16 %v1285
    %v1432 = vunpack.c.l.b16 %v1299
    %v1433 = vunpack.c.l.b16 %v1313
    %v1434 = vunpack.c.l.b16 %v1327
    %v1435 = vunpack.c.l.b16 %v1341
    %v1436 = vunpack.c.l.b16 %v1355
    %v1437 = vunpack.c.l.b16 %v1369
    %v1438 = vunpack.c.l.b16 %v1383
    %v1439 = vunpack.c.l.b16 %v1397
    %v1440 = vunpack.c.l.b16 %v1411
    %v1441 = vunpack.c.l.b16 %v1425
    %v1442 = vpack.c.b16 %v1427, %v1426
    %v1443 = vpack.c.b16 %v1429, %v1428
    %v1444 = vpack.c.b16 %v1431, %v1430
    %v1445 = vpack.c.b16 %v1433, %v1432
    %v1446 = vpack.c.b16 %v1435, %v1434
    %v1447 = vpack.c.b16 %v1437, %v1436
    %v1448 = vpack.c.b16 %v1439, %v1438
    %v1449 = vpack.c.b16 %v1441, %v1440
    %1450 = vrot.lane.b32.xlu0 %v1442, 24
    %v1451 = vpop.permute.xlu0 %1450
    %1452 = vrot.lane.b32.xlu0 %v1443, 24
    %v1453 = vpop.permute.xlu0 %1452
    %1454 = vrot.lane.b32.xlu0 %v1444, 24
    %v1455 = vpop.permute.xlu0 %1454
    %1456 = vrot.lane.b32.xlu0 %v1445, 24
    %v1457 = vpop.permute.xlu0 %1456
    %1458 = vrot.lane.b32.xlu0 %v1446, 24
    %v1459 = vpop.permute.xlu0 %1458
    %1460 = vrot.lane.b32.xlu0 %v1447, 24
    %v1461 = vpop.permute.xlu0 %1460
    %1462 = vrot.lane.b32.xlu0 %v1448, 24
    %v1463 = vpop.permute.xlu0 %1462
    %1464 = vrot.lane.b32.xlu0 %v1449, 24
    %v1465 = vpop.permute.xlu0 %1464
    %vm1474 = vcmask 244928
    %1475 = vst.msk [vmem:[#allocation4] sm:$0xff] %vm1474, %v1451
    %1476 = vst.msk [vmem:[#allocation4 + $0x8] sm:$0xff] %vm1474, %v1453
    %1477 = vst.msk [vmem:[#allocation4 + $0x10] sm:$0xff] %vm1474, %v1455
    %1478 = vst.msk [vmem:[#allocation4 + $0x18] sm:$0xff] %vm1474, %v1457
    %1479 = vst.msk [vmem:[#allocation4 + $0x20] sm:$0xff] %vm1474, %v1459
    %1480 = vst.msk [vmem:[#allocation4 + $0x28] sm:$0xff] %vm1474, %v1461
    %1481 = vst.msk [vmem:[#allocation4 + $0x30] sm:$0xff] %vm1474, %v1463
    %1482 = vst.msk [vmem:[#allocation4 + $0x38] sm:$0xff] %vm1474, %v1465
    %v1483 = vld [vmem:[%s405] sm:$0xe]
    %v1484 = vld [vmem:[%s405 + $0x4] sm:$0x1]
    %v1485 = vld [vmem:[%s405 + $0x8] sm:$0xe]
    %v1486 = vld [vmem:[%s405 + $0xc] sm:$0x1]
    %v1487 = vld [vmem:[%s405 + $0x10] sm:$0xe]
    %v1488 = vld [vmem:[%s405 + $0x14] sm:$0x1]
    %v1489 = vld [vmem:[%s405 + $0x18] sm:$0xe]
    %v1490 = vld [vmem:[%s405 + $0x1c] sm:$0x1]
    %v1491 = vld [vmem:[%s405 + $0x20] sm:$0xe]
    %v1492 = vld [vmem:[%s405 + $0x24] sm:$0x1]
    %v1493 = vld [vmem:[%s405 + $0x28] sm:$0xe]
    %v1494 = vld [vmem:[%s405 + $0x2c] sm:$0x1]
    %v1495 = vld [vmem:[%s405 + $0x30] sm:$0xe]
    %v1496 = vld [vmem:[%s405 + $0x34] sm:$0x1]
    %v1497 = vld [vmem:[%s405 + $0x38] sm:$0xe]
    %v1498 = vld [vmem:[%s405 + $0x3c] sm:$0x1]
    %v1499 = vld [vmem:[%s405 + $0x50] sm:$0xe]
    %v1500 = vld [vmem:[%s405 + $0x54] sm:$0x1]
    %v1501 = vld [vmem:[%s405 + $0x58] sm:$0xe]
    %v1502 = vld [vmem:[%s405 + $0x5c] sm:$0x1]
    %v1503 = vld [vmem:[%s405 + $0x60] sm:$0xe]
    %v1504 = vld [vmem:[%s405 + $0x64] sm:$0x1]
    %v1505 = vld [vmem:[%s405 + $0x68] sm:$0xe]
    %v1506 = vld [vmem:[%s405 + $0x6c] sm:$0x1]
    %v1507 = vld [vmem:[%s405 + $0x70] sm:$0xe]
    %v1508 = vld [vmem:[%s405 + $0x74] sm:$0x1]
    %v1509 = vld [vmem:[%s405 + $0x78] sm:$0xe]
    %v1510 = vld [vmem:[%s405 + $0x7c] sm:$0x1]
    %v1511 = vld [vmem:[%s405 + $0x80] sm:$0xe]
    %v1512 = vld [vmem:[%s405 + $0x84] sm:$0x1]
    %v1513 = vld [vmem:[%s405 + $0x88] sm:$0xe]
    %v1514 = vld [vmem:[%s405 + $0x8c] sm:$0x1]
    %v1547 = vrot.slane %v1483, 5
    %v1548 = vrot.slane %v1547, 4
    %v1549 = vrot.slane %v1484, 5
    %v1550 = vsel %vm959, %v1548, %v1549
    %v1551 = vrot.slane %v1485, 5
    %v1552 = vrot.slane %v1551, 4
    %v1553 = vrot.slane %v1486, 5
    %v1554 = vsel %vm959, %v1552, %v1553
    %v1555 = vrot.slane %v1487, 5
    %v1556 = vrot.slane %v1555, 4
    %v1557 = vrot.slane %v1488, 5
    %v1558 = vsel %vm959, %v1556, %v1557
    %v1559 = vrot.slane %v1489, 5
    %v1560 = vrot.slane %v1559, 4
    %v1561 = vrot.slane %v1490, 5
    %v1562 = vsel %vm959, %v1560, %v1561
    %v1563 = vrot.slane %v1491, 5
    %v1564 = vrot.slane %v1563, 4
    %v1565 = vrot.slane %v1492, 5
    %v1566 = vsel %vm959, %v1564, %v1565
    %v1567 = vrot.slane %v1493, 5
    %v1568 = vrot.slane %v1567, 4
    %v1569 = vrot.slane %v1494, 5
    %v1570 = vsel %vm959, %v1568, %v1569
    %v1571 = vrot.slane %v1495, 5
    %v1572 = vrot.slane %v1571, 4
    %v1573 = vrot.slane %v1496, 5
    %v1574 = vsel %vm959, %v1572, %v1573
    %v1575 = vrot.slane %v1497, 5
    %v1576 = vrot.slane %v1575, 4
    %v1577 = vrot.slane %v1498, 5
    %v1578 = vsel %vm959, %v1576, %v1577
    %v1579 = vrot.slane %v1499, 5
    %v1580 = vrot.slane %v1579, 4
    %v1581 = vrot.slane %v1500, 5
    %v1582 = vsel %vm959, %v1580, %v1581
    %v1583 = vrot.slane %v1501, 5
    %v1584 = vrot.slane %v1583, 4
    %v1585 = vrot.slane %v1502, 5
    %v1586 = vsel %vm959, %v1584, %v1585
    %v1587 = vrot.slane %v1503, 5
    %v1588 = vrot.slane %v1587, 4
    %v1589 = vrot.slane %v1504, 5
    %v1590 = vsel %vm959, %v1588, %v1589
    %v1591 = vrot.slane %v1505, 5
    %v1592 = vrot.slane %v1591, 4
    %v1593 = vrot.slane %v1506, 5
    %v1594 = vsel %vm959, %v1592, %v1593
    %v1595 = vrot.slane %v1507, 5
    %v1596 = vrot.slane %v1595, 4
    %v1597 = vrot.slane %v1508, 5
    %v1598 = vsel %vm959, %v1596, %v1597
    %v1599 = vrot.slane %v1509, 5
    %v1600 = vrot.slane %v1599, 4
    %v1601 = vrot.slane %v1510, 5
    %v1602 = vsel %vm959, %v1600, %v1601
    %v1603 = vrot.slane %v1511, 5
    %v1604 = vrot.slane %v1603, 4
    %v1605 = vrot.slane %v1512, 5
    %v1606 = vsel %vm959, %v1604, %v1605
    %v1607 = vrot.slane %v1513, 5
    %v1608 = vrot.slane %v1607, 4
    %v1609 = vrot.slane %v1514, 5
    %v1610 = vsel %vm959, %v1608, %v1609
    %v1611 = vunpack.c.l.b16 %v1550
    %v1612 = vunpack.c.l.b16 %v1554
    %v1613 = vunpack.c.l.b16 %v1558
    %v1614 = vunpack.c.l.b16 %v1562
    %v1615 = vunpack.c.l.b16 %v1566
    %v1616 = vunpack.c.l.b16 %v1570
    %v1617 = vunpack.c.l.b16 %v1574
    %v1618 = vunpack.c.l.b16 %v1578
    %v1619 = vunpack.c.l.b16 %v1582
    %v1620 = vunpack.c.l.b16 %v1586
    %v1621 = vunpack.c.l.b16 %v1590
    %v1622 = vunpack.c.l.b16 %v1594
    %v1623 = vunpack.c.l.b16 %v1598
    %v1624 = vunpack.c.l.b16 %v1602
    %v1625 = vunpack.c.l.b16 %v1606
    %v1626 = vunpack.c.l.b16 %v1610
    %v1627 = vpack.c.b16 %v1612, %v1611
    %v1628 = vpack.c.b16 %v1614, %v1613
    %v1629 = vpack.c.b16 %v1616, %v1615
    %v1630 = vpack.c.b16 %v1618, %v1617
    %v1631 = vpack.c.b16 %v1620, %v1619
    %v1632 = vpack.c.b16 %v1622, %v1621
    %v1633 = vpack.c.b16 %v1624, %v1623
    %v1634 = vpack.c.b16 %v1626, %v1625
    %1635 = vrot.lane.b32.xlu0 %v1627, 30
    %v1636 = vpop.permute.xlu0 %1635
    %1637 = vrot.lane.b32.xlu0 %v1628, 30
    %v1638 = vpop.permute.xlu0 %1637
    %1639 = vrot.lane.b32.xlu0 %v1629, 30
    %v1640 = vpop.permute.xlu0 %1639
    %1641 = vrot.lane.b32.xlu0 %v1630, 30
    %v1642 = vpop.permute.xlu0 %1641
    %1643 = vrot.lane.b32.xlu0 %v1631, 30
    %v1644 = vpop.permute.xlu0 %1643
    %1645 = vrot.lane.b32.xlu0 %v1632, 30
    %v1646 = vpop.permute.xlu0 %1645
    %1647 = vrot.lane.b32.xlu0 %v1633, 30
    %v1648 = vpop.permute.xlu0 %1647
    %1649 = vrot.lane.b32.xlu0 %v1634, 30
    %v1650 = vpop.permute.xlu0 %1649
    %vm1659 = vcmask 294128
    %1660 = vst.msk [vmem:[#allocation4] sm:$0xff] %vm1659, %v1636
    %1661 = vst.msk [vmem:[#allocation4 + $0x8] sm:$0xff] %vm1659, %v1638
    %1662 = vst.msk [vmem:[#allocation4 + $0x10] sm:$0xff] %vm1659, %v1640
    %1663 = vst.msk [vmem:[#allocation4 + $0x18] sm:$0xff] %vm1659, %v1642
    %1664 = vst.msk [vmem:[#allocation4 + $0x20] sm:$0xff] %vm1659, %v1644
    %1665 = vst.msk [vmem:[#allocation4 + $0x28] sm:$0xff] %vm1659, %v1646
    %1666 = vst.msk [vmem:[#allocation4 + $0x30] sm:$0xff] %vm1659, %v1648
    %1667 = vst.msk [vmem:[#allocation4 + $0x38] sm:$0xff] %vm1659, %v1650
    %s1668 = scalar_lea.vmem [#allocation2], 16
    %v1669 = vld [vmem:[%s1668] sm:$0xf]
    %v1670 = vld [vmem:[%s1668 + $0x8] sm:$0xf]
    %v1671 = vld [vmem:[%s1668 + $0x10] sm:$0xf]
    %v1672 = vld [vmem:[%s1668 + $0x18] sm:$0xf]
    %v1673 = vld [vmem:[%s1668 + $0x20] sm:$0xf]
    %v1674 = vld [vmem:[%s1668 + $0x28] sm:$0xf]
    %v1675 = vld [vmem:[%s1668 + $0x30] sm:$0xf]
    %v1676 = vld [vmem:[%s1668 + $0x38] sm:$0xf]
    %v1677 = vld [vmem:[%s1668 + $0x50] sm:$0xf]
    %v1678 = vld [vmem:[%s1668 + $0x58] sm:$0xf]
    %v1679 = vld [vmem:[%s1668 + $0x60] sm:$0xf]
    %v1680 = vld [vmem:[%s1668 + $0x68] sm:$0xf]
    %v1681 = vld [vmem:[%s1668 + $0x70] sm:$0xf]
    %v1682 = vld [vmem:[%s1668 + $0x78] sm:$0xf]
    %v1683 = vld [vmem:[%s1668 + $0x80] sm:$0xf]
    %v1684 = vld [vmem:[%s1668 + $0x88] sm:$0xf]
    %v1701 = vunpack.c.l.b16 %v1669
    %v1702 = vunpack.c.l.b16 %v1670
    %v1703 = vunpack.c.l.b16 %v1671
    %v1704 = vunpack.c.l.b16 %v1672
    %v1705 = vunpack.c.l.b16 %v1673
    %v1706 = vunpack.c.l.b16 %v1674
    %v1707 = vunpack.c.l.b16 %v1675
    %v1708 = vunpack.c.l.b16 %v1676
    %v1709 = vunpack.c.l.b16 %v1677
    %v1710 = vunpack.c.l.b16 %v1678
    %v1711 = vunpack.c.l.b16 %v1679
    %v1712 = vunpack.c.l.b16 %v1680
    %v1713 = vunpack.c.l.b16 %v1681
    %v1714 = vunpack.c.l.b16 %v1682
    %v1715 = vunpack.c.l.b16 %v1683
    %v1716 = vunpack.c.l.b16 %v1684
    %v1717 = vpack.c.b16 %v1702, %v1701
    %v1718 = vpack.c.b16 %v1704, %v1703
    %v1719 = vpack.c.b16 %v1706, %v1705
    %v1720 = vpack.c.b16 %v1708, %v1707
    %v1721 = vpack.c.b16 %v1710, %v1709
    %v1722 = vpack.c.b16 %v1712, %v1711
    %v1723 = vpack.c.b16 %v1714, %v1713
    %v1724 = vpack.c.b16 %v1716, %v1715
    %1725 = vrot.lane.b32.xlu0 %v1717, 36
    %v1726 = vpop.permute.xlu0 %1725
    %1727 = vrot.lane.b32.xlu0 %v1718, 36
    %v1728 = vpop.permute.xlu0 %1727
    %1729 = vrot.lane.b32.xlu0 %v1719, 36
    %v1730 = vpop.permute.xlu0 %1729
    %1731 = vrot.lane.b32.xlu0 %v1720, 36
    %v1732 = vpop.permute.xlu0 %1731
    %1733 = vrot.lane.b32.xlu0 %v1721, 36
    %v1734 = vpop.permute.xlu0 %1733
    %1735 = vrot.lane.b32.xlu0 %v1722, 36
    %v1736 = vpop.permute.xlu0 %1735
    %1737 = vrot.lane.b32.xlu0 %v1723, 36
    %v1738 = vpop.permute.xlu0 %1737
    %1739 = vrot.lane.b32.xlu0 %v1724, 36
    %v1740 = vpop.permute.xlu0 %1739
    %vm1749 = vcmask 343328
    %1750 = vst.msk [vmem:[#allocation4] sm:$0xff] %vm1749, %v1726
    %1751 = vst.msk [vmem:[#allocation4 + $0x8] sm:$0xff] %vm1749, %v1728
    %1752 = vst.msk [vmem:[#allocation4 + $0x10] sm:$0xff] %vm1749, %v1730
    %1753 = vst.msk [vmem:[#allocation4 + $0x18] sm:$0xff] %vm1749, %v1732
    %1754 = vst.msk [vmem:[#allocation4 + $0x20] sm:$0xff] %vm1749, %v1734
    %1755 = vst.msk [vmem:[#allocation4 + $0x28] sm:$0xff] %vm1749, %v1736
    %1756 = vst.msk [vmem:[#allocation4 + $0x30] sm:$0xff] %vm1749, %v1738
    %1757 = vst.msk [vmem:[#allocation4 + $0x38] sm:$0xff] %vm1749, %v1740
    %v1758 = vld [vmem:[%s1668] sm:$0xf]
    %v1759 = vld [vmem:[%s1668 + $0x4] sm:$0x1]
    %v1760 = vld [vmem:[%s1668 + $0x8] sm:$0xf]
    %v1761 = vld [vmem:[%s1668 + $0xc] sm:$0x1]
    %v1762 = vld [vmem:[%s1668 + $0x10] sm:$0xf]
    %v1763 = vld [vmem:[%s1668 + $0x14] sm:$0x1]
    %v1764 = vld [vmem:[%s1668 + $0x18] sm:$0xf]
    %v1765 = vld [vmem:[%s1668 + $0x1c] sm:$0x1]
    %v1766 = vld [vmem:[%s1668 + $0x20] sm:$0xf]
    %v1767 = vld [vmem:[%s1668 + $0x24] sm:$0x1]
    %v1768 = vld [vmem:[%s1668 + $0x28] sm:$0xf]
    %v1769 = vld [vmem:[%s1668 + $0x2c] sm:$0x1]
    %v1770 = vld [vmem:[%s1668 + $0x30] sm:$0xf]
    %v1771 = vld [vmem:[%s1668 + $0x34] sm:$0x1]
    %v1772 = vld [vmem:[%s1668 + $0x38] sm:$0xf]
    %v1773 = vld [vmem:[%s1668 + $0x3c] sm:$0x1]
    %v1774 = vld [vmem:[%s1668 + $0x50] sm:$0xf]
    %v1775 = vld [vmem:[%s1668 + $0x54] sm:$0x1]
    %v1776 = vld [vmem:[%s1668 + $0x58] sm:$0xf]
    %v1777 = vld [vmem:[%s1668 + $0x5c] sm:$0x1]
    %v1778 = vld [vmem:[%s1668 + $0x60] sm:$0xf]
    %v1779 = vld [vmem:[%s1668 + $0x64] sm:$0x1]
    %v1780 = vld [vmem:[%s1668 + $0x68] sm:$0xf]
    %v1781 = vld [vmem:[%s1668 + $0x6c] sm:$0x1]
    %v1782 = vld [vmem:[%s1668 + $0x70] sm:$0xf]
    %v1783 = vld [vmem:[%s1668 + $0x74] sm:$0x1]
    %v1784 = vld [vmem:[%s1668 + $0x78] sm:$0xf]
    %v1785 = vld [vmem:[%s1668 + $0x7c] sm:$0x1]
    %v1786 = vld [vmem:[%s1668 + $0x80] sm:$0xf]
    %v1787 = vld [vmem:[%s1668 + $0x84] sm:$0x1]
    %v1788 = vld [vmem:[%s1668 + $0x88] sm:$0xf]
    %v1789 = vld [vmem:[%s1668 + $0x8c] sm:$0x1]
    %v1791 = vshrl.u32 %v1758, 16
    %v1793 = vrot.slane %v1791, 4
    %v1794 = vshll.u32 %v1758, 16
    %v1796 = vrot.slane %v1794, 5
    %v1797 = vor.u32 %v1793, %v1796
    %v1798 = vrot.slane %v1797, 4
    %v1800 = vshll.u32 %v1759, 16
    %v1802 = vrot.slane %v1800, 5
    %v1803 = vsel %vm611, %v1798, %v1802
    %v1805 = vshrl.u32 %v1760, 16
    %v1807 = vrot.slane %v1805, 4
    %v1808 = vshll.u32 %v1760, 16
    %v1810 = vrot.slane %v1808, 5
    %v1811 = vor.u32 %v1807, %v1810
    %v1812 = vrot.slane %v1811, 4
    %v1814 = vshll.u32 %v1761, 16
    %v1816 = vrot.slane %v1814, 5
    %v1817 = vsel %vm611, %v1812, %v1816
    %v1819 = vshrl.u32 %v1762, 16
    %v1821 = vrot.slane %v1819, 4
    %v1822 = vshll.u32 %v1762, 16
    %v1824 = vrot.slane %v1822, 5
    %v1825 = vor.u32 %v1821, %v1824
    %v1826 = vrot.slane %v1825, 4
    %v1828 = vshll.u32 %v1763, 16
    %v1830 = vrot.slane %v1828, 5
    %v1831 = vsel %vm611, %v1826, %v1830
    %v1833 = vshrl.u32 %v1764, 16
    %v1835 = vrot.slane %v1833, 4
    %v1836 = vshll.u32 %v1764, 16
    %v1838 = vrot.slane %v1836, 5
    %v1839 = vor.u32 %v1835, %v1838
    %v1840 = vrot.slane %v1839, 4
    %v1842 = vshll.u32 %v1765, 16
    %v1844 = vrot.slane %v1842, 5
    %v1845 = vsel %vm611, %v1840, %v1844
    %v1847 = vshrl.u32 %v1766, 16
    %v1849 = vrot.slane %v1847, 4
    %v1850 = vshll.u32 %v1766, 16
    %v1852 = vrot.slane %v1850, 5
    %v1853 = vor.u32 %v1849, %v1852
    %v1854 = vrot.slane %v1853, 4
    %v1856 = vshll.u32 %v1767, 16
    %v1858 = vrot.slane %v1856, 5
    %v1859 = vsel %vm611, %v1854, %v1858
    %v1861 = vshrl.u32 %v1768, 16
    %v1863 = vrot.slane %v1861, 4
    %v1864 = vshll.u32 %v1768, 16
    %v1866 = vrot.slane %v1864, 5
    %v1867 = vor.u32 %v1863, %v1866
    %v1868 = vrot.slane %v1867, 4
    %v1870 = vshll.u32 %v1769, 16
    %v1872 = vrot.slane %v1870, 5
    %v1873 = vsel %vm611, %v1868, %v1872
    %v1875 = vshrl.u32 %v1770, 16
    %v1877 = vrot.slane %v1875, 4
    %v1878 = vshll.u32 %v1770, 16
    %v1880 = vrot.slane %v1878, 5
    %v1881 = vor.u32 %v1877, %v1880
    %v1882 = vrot.slane %v1881, 4
    %v1884 = vshll.u32 %v1771, 16
    %v1886 = vrot.slane %v1884, 5
    %v1887 = vsel %vm611, %v1882, %v1886
    %v1889 = vshrl.u32 %v1772, 16
    %v1891 = vrot.slane %v1889, 4
    %v1892 = vshll.u32 %v1772, 16
    %v1894 = vrot.slane %v1892, 5
    %v1895 = vor.u32 %v1891, %v1894
    %v1896 = vrot.slane %v1895, 4
    %v1898 = vshll.u32 %v1773, 16
    %v1900 = vrot.slane %v1898, 5
    %v1901 = vsel %vm611, %v1896, %v1900
    %v1903 = vshrl.u32 %v1774, 16
    %v1905 = vrot.slane %v1903, 4
    %v1906 = vshll.u32 %v1774, 16
    %v1908 = vrot.slane %v1906, 5
    %v1909 = vor.u32 %v1905, %v1908
    %v1910 = vrot.slane %v1909, 4
    %v1912 = vshll.u32 %v1775, 16
    %v1914 = vrot.slane %v1912, 5
    %v1915 = vsel %vm611, %v1910, %v1914
    %v1917 = vshrl.u32 %v1776, 16
    %v1919 = vrot.slane %v1917, 4
    %v1920 = vshll.u32 %v1776, 16
    %v1922 = vrot.slane %v1920, 5
    %v1923 = vor.u32 %v1919, %v1922
    %v1924 = vrot.slane %v1923, 4
    %v1926 = vshll.u32 %v1777, 16
    %v1928 = vrot.slane %v1926, 5
    %v1929 = vsel %vm611, %v1924, %v1928
    %v1931 = vshrl.u32 %v1778, 16
    %v1933 = vrot.slane %v1931, 4
    %v1934 = vshll.u32 %v1778, 16
    %v1936 = vrot.slane %v1934, 5
    %v1937 = vor.u32 %v1933, %v1936
    %v1938 = vrot.slane %v1937, 4
    %v1940 = vshll.u32 %v1779, 16
    %v1942 = vrot.slane %v1940, 5
    %v1943 = vsel %vm611, %v1938, %v1942
    %v1945 = vshrl.u32 %v1780, 16
    %v1947 = vrot.slane %v1945, 4
    %v1948 = vshll.u32 %v1780, 16
    %v1950 = vrot.slane %v1948, 5
    %v1951 = vor.u32 %v1947, %v1950
    %v1952 = vrot.slane %v1951, 4
    %v1954 = vshll.u32 %v1781, 16
    %v1956 = vrot.slane %v1954, 5
    %v1957 = vsel %vm611, %v1952, %v1956
    %v1959 = vshrl.u32 %v1782, 16
    %v1961 = vrot.slane %v1959, 4
    %v1962 = vshll.u32 %v1782, 16
    %v1964 = vrot.slane %v1962, 5
    %v1965 = vor.u32 %v1961, %v1964
    %v1966 = vrot.slane %v1965, 4
    %v1968 = vshll.u32 %v1783, 16
    %v1970 = vrot.slane %v1968, 5
    %v1971 = vsel %vm611, %v1966, %v1970
    %v1973 = vshrl.u32 %v1784, 16
    %v1975 = vrot.slane %v1973, 4
    %v1976 = vshll.u32 %v1784, 16
    %v1978 = vrot.slane %v1976, 5
    %v1979 = vor.u32 %v1975, %v1978
    %v1980 = vrot.slane %v1979, 4
    %v1982 = vshll.u32 %v1785, 16
    %v1984 = vrot.slane %v1982, 5
    %v1985 = vsel %vm611, %v1980, %v1984
    %v1987 = vshrl.u32 %v1786, 16
    %v1989 = vrot.slane %v1987, 4
    %v1990 = vshll.u32 %v1786, 16
    %v1992 = vrot.slane %v1990, 5
    %v1993 = vor.u32 %v1989, %v1992
    %v1994 = vrot.slane %v1993, 4
    %v1996 = vshll.u32 %v1787, 16
    %v1998 = vrot.slane %v1996, 5
    %v1999 = vsel %vm611, %v1994, %v1998
    %v2001 = vshrl.u32 %v1788, 16
    %v2003 = vrot.slane %v2001, 4
    %v2004 = vshll.u32 %v1788, 16
    %v2006 = vrot.slane %v2004, 5
    %v2007 = vor.u32 %v2003, %v2006
    %v2008 = vrot.slane %v2007, 4
    %v2010 = vshll.u32 %v1789, 16
    %v2012 = vrot.slane %v2010, 5
    %v2013 = vsel %vm611, %v2008, %v2012
    %v2014 = vunpack.c.l.b16 %v1803
    %v2015 = vunpack.c.l.b16 %v1817
    %v2016 = vunpack.c.l.b16 %v1831
    %v2017 = vunpack.c.l.b16 %v1845
    %v2018 = vunpack.c.l.b16 %v1859
    %v2019 = vunpack.c.l.b16 %v1873
    %v2020 = vunpack.c.l.b16 %v1887
    %v2021 = vunpack.c.l.b16 %v1901
    %v2022 = vunpack.c.l.b16 %v1915
    %v2023 = vunpack.c.l.b16 %v1929
    %v2024 = vunpack.c.l.b16 %v1943
    %v2025 = vunpack.c.l.b16 %v1957
    %v2026 = vunpack.c.l.b16 %v1971
    %v2027 = vunpack.c.l.b16 %v1985
    %v2028 = vunpack.c.l.b16 %v1999
    %v2029 = vunpack.c.l.b16 %v2013
    %v2030 = vpack.c.b16 %v2015, %v2014
    %v2031 = vpack.c.b16 %v2017, %v2016
    %v2032 = vpack.c.b16 %v2019, %v2018
    %v2033 = vpack.c.b16 %v2021, %v2020
    %v2034 = vpack.c.b16 %v2023, %v2022
    %v2035 = vpack.c.b16 %v2025, %v2024
    %v2036 = vpack.c.b16 %v2027, %v2026
    %v2037 = vpack.c.b16 %v2029, %v2028
    %2038 = vrot.lane.b32.xlu0 %v2030, 42
    %v2039 = vpop.permute.xlu0 %2038
    %2040 = vrot.lane.b32.xlu0 %v2031, 42
    %v2041 = vpop.permute.xlu0 %2040
    %2042 = vrot.lane.b32.xlu0 %v2032, 42
    %v2043 = vpop.permute.xlu0 %2042
    %2044 = vrot.lane.b32.xlu0 %v2033, 42
    %v2045 = vpop.permute.xlu0 %2044
    %2046 = vrot.lane.b32.xlu0 %v2034, 42
    %v2047 = vpop.permute.xlu0 %2046
    %2048 = vrot.lane.b32.xlu0 %v2035, 42
    %v2049 = vpop.permute.xlu0 %2048
    %2050 = vrot.lane.b32.xlu0 %v2036, 42
    %v2051 = vpop.permute.xlu0 %2050
    %2052 = vrot.lane.b32.xlu0 %v2037, 42
    %v2053 = vpop.permute.xlu0 %2052
    %vm2062 = vcmask 392528
    %2063 = vst.msk [vmem:[#allocation4] sm:$0xff] %vm2062, %v2039
    %2064 = vst.msk [vmem:[#allocation4 + $0x8] sm:$0xff] %vm2062, %v2041
    %2065 = vst.msk [vmem:[#allocation4 + $0x10] sm:$0xff] %vm2062, %v2043
    %2066 = vst.msk [vmem:[#allocation4 + $0x18] sm:$0xff] %vm2062, %v2045
    %2067 = vst.msk [vmem:[#allocation4 + $0x20] sm:$0xff] %vm2062, %v2047
    %2068 = vst.msk [vmem:[#allocation4 + $0x28] sm:$0xff] %vm2062, %v2049
    %2069 = vst.msk [vmem:[#allocation4 + $0x30] sm:$0xff] %vm2062, %v2051
    %2070 = vst.msk [vmem:[#allocation4 + $0x38] sm:$0xff] %vm2062, %v2053
    %v2071 = vld [vmem:[%s1668] sm:$0xe]
    %v2072 = vld [vmem:[%s1668 + $0x4] sm:$0x1]
    %v2073 = vld [vmem:[%s1668 + $0x8] sm:$0xe]
    %v2074 = vld [vmem:[%s1668 + $0xc] sm:$0x1]
    %v2075 = vld [vmem:[%s1668 + $0x10] sm:$0xe]
    %v2076 = vld [vmem:[%s1668 + $0x14] sm:$0x1]
    %v2077 = vld [vmem:[%s1668 + $0x18] sm:$0xe]
    %v2078 = vld [vmem:[%s1668 + $0x1c] sm:$0x1]
    %v2079 = vld [vmem:[%s1668 + $0x20] sm:$0xe]
    %v2080 = vld [vmem:[%s1668 + $0x24] sm:$0x1]
    %v2081 = vld [vmem:[%s1668 + $0x28] sm:$0xe]
    %v2082 = vld [vmem:[%s1668 + $0x2c] sm:$0x1]
    %v2083 = vld [vmem:[%s1668 + $0x30] sm:$0xe]
    %v2084 = vld [vmem:[%s1668 + $0x34] sm:$0x1]
    %v2085 = vld [vmem:[%s1668 + $0x38] sm:$0xe]
    %v2086 = vld [vmem:[%s1668 + $0x3c] sm:$0x1]
    %v2087 = vld [vmem:[%s1668 + $0x50] sm:$0xe]
    %v2088 = vld [vmem:[%s1668 + $0x54] sm:$0x1]
    %v2089 = vld [vmem:[%s1668 + $0x58] sm:$0xe]
    %v2090 = vld [vmem:[%s1668 + $0x5c] sm:$0x1]
    %v2091 = vld [vmem:[%s1668 + $0x60] sm:$0xe]
    %v2092 = vld [vmem:[%s1668 + $0x64] sm:$0x1]
    %v2093 = vld [vmem:[%s1668 + $0x68] sm:$0xe]
    %v2094 = vld [vmem:[%s1668 + $0x6c] sm:$0x1]
    %v2095 = vld [vmem:[%s1668 + $0x70] sm:$0xe]
    %v2096 = vld [vmem:[%s1668 + $0x74] sm:$0x1]
    %v2097 = vld [vmem:[%s1668 + $0x78] sm:$0xe]
    %v2098 = vld [vmem:[%s1668 + $0x7c] sm:$0x1]
    %v2099 = vld [vmem:[%s1668 + $0x80] sm:$0xe]
    %v2100 = vld [vmem:[%s1668 + $0x84] sm:$0x1]
    %v2101 = vld [vmem:[%s1668 + $0x88] sm:$0xe]
    %v2102 = vld [vmem:[%s1668 + $0x8c] sm:$0x1]
    %v2135 = vrot.slane %v2071, 5
    %v2136 = vrot.slane %v2135, 4
    %v2137 = vrot.slane %v2072, 5
    %v2138 = vsel %vm959, %v2136, %v2137
    %v2139 = vrot.slane %v2073, 5
    %v2140 = vrot.slane %v2139, 4
    %v2141 = vrot.slane %v2074, 5
    %v2142 = vsel %vm959, %v2140, %v2141
    %v2143 = vrot.slane %v2075, 5
    %v2144 = vrot.slane %v2143, 4
    %v2145 = vrot.slane %v2076, 5
    %v2146 = vsel %vm959, %v2144, %v2145
    %v2147 = vrot.slane %v2077, 5
    %v2148 = vrot.slane %v2147, 4
    %v2149 = vrot.slane %v2078, 5
    %v2150 = vsel %vm959, %v2148, %v2149
    %v2151 = vrot.slane %v2079, 5
    %v2152 = vrot.slane %v2151, 4
    %v2153 = vrot.slane %v2080, 5
    %v2154 = vsel %vm959, %v2152, %v2153
    %v2155 = vrot.slane %v2081, 5
    %v2156 = vrot.slane %v2155, 4
    %v2157 = vrot.slane %v2082, 5
    %v2158 = vsel %vm959, %v2156, %v2157
    %v2159 = vrot.slane %v2083, 5
    %v2160 = vrot.slane %v2159, 4
    %v2161 = vrot.slane %v2084, 5
    %v2162 = vsel %vm959, %v2160, %v2161
    %v2163 = vrot.slane %v2085, 5
    %v2164 = vrot.slane %v2163, 4
    %v2165 = vrot.slane %v2086, 5
    %v2166 = vsel %vm959, %v2164, %v2165
    %v2167 = vrot.slane %v2087, 5
    %v2168 = vrot.slane %v2167, 4
    %v2169 = vrot.slane %v2088, 5
    %v2170 = vsel %vm959, %v2168, %v2169
    %v2171 = vrot.slane %v2089, 5
    %v2172 = vrot.slane %v2171, 4
    %v2173 = vrot.slane %v2090, 5
    %v2174 = vsel %vm959, %v2172, %v2173
    %v2175 = vrot.slane %v2091, 5
    %v2176 = vrot.slane %v2175, 4
    %v2177 = vrot.slane %v2092, 5
    %v2178 = vsel %vm959, %v2176, %v2177
    %v2179 = vrot.slane %v2093, 5
    %v2180 = vrot.slane %v2179, 4
    %v2181 = vrot.slane %v2094, 5
    %v2182 = vsel %vm959, %v2180, %v2181
    %v2183 = vrot.slane %v2095, 5
    %v2184 = vrot.slane %v2183, 4
    %v2185 = vrot.slane %v2096, 5
    %v2186 = vsel %vm959, %v2184, %v2185
    %v2187 = vrot.slane %v2097, 5
    %v2188 = vrot.slane %v2187, 4
    %v2189 = vrot.slane %v2098, 5
    %v2190 = vsel %vm959, %v2188, %v2189
    %v2191 = vrot.slane %v2099, 5
    %v2192 = vrot.slane %v2191, 4
    %v2193 = vrot.slane %v2100, 5
    %v2194 = vsel %vm959, %v2192, %v2193
    %v2195 = vrot.slane %v2101, 5
    %v2196 = vrot.slane %v2195, 4
    %v2197 = vrot.slane %v2102, 5
    %v2198 = vsel %vm959, %v2196, %v2197
    %v2199 = vunpack.c.l.b16 %v2138
    %v2200 = vunpack.c.l.b16 %v2142
    %v2201 = vunpack.c.l.b16 %v2146
    %v2202 = vunpack.c.l.b16 %v2150
    %v2203 = vunpack.c.l.b16 %v2154
    %v2204 = vunpack.c.l.b16 %v2158
    %v2205 = vunpack.c.l.b16 %v2162
    %v2206 = vunpack.c.l.b16 %v2166
    %v2207 = vunpack.c.l.b16 %v2170
    %v2208 = vunpack.c.l.b16 %v2174
    %v2209 = vunpack.c.l.b16 %v2178
    %v2210 = vunpack.c.l.b16 %v2182
    %v2211 = vunpack.c.l.b16 %v2186
    %v2212 = vunpack.c.l.b16 %v2190
    %v2213 = vunpack.c.l.b16 %v2194
    %v2214 = vunpack.c.l.b16 %v2198
    %v2215 = vpack.c.b16 %v2200, %v2199
    %v2216 = vpack.c.b16 %v2202, %v2201
    %v2217 = vpack.c.b16 %v2204, %v2203
    %v2218 = vpack.c.b16 %v2206, %v2205
    %v2219 = vpack.c.b16 %v2208, %v2207
    %v2220 = vpack.c.b16 %v2210, %v2209
    %v2221 = vpack.c.b16 %v2212, %v2211
    %v2222 = vpack.c.b16 %v2214, %v2213
    %2223 = vrot.lane.b32.xlu0 %v2215, 48
    %v2224 = vpop.permute.xlu0 %2223
    %2225 = vrot.lane.b32.xlu0 %v2216, 48
    %v2226 = vpop.permute.xlu0 %2225
    %2227 = vrot.lane.b32.xlu0 %v2217, 48
    %v2228 = vpop.permute.xlu0 %2227
    %2229 = vrot.lane.b32.xlu0 %v2218, 48
    %v2230 = vpop.permute.xlu0 %2229
    %2231 = vrot.lane.b32.xlu0 %v2219, 48
    %v2232 = vpop.permute.xlu0 %2231
    %2233 = vrot.lane.b32.xlu0 %v2220, 48
    %v2234 = vpop.permute.xlu0 %2233
    %2235 = vrot.lane.b32.xlu0 %v2221, 48
    %v2236 = vpop.permute.xlu0 %2235
    %2237 = vrot.lane.b32.xlu0 %v2222, 48
    %v2238 = vpop.permute.xlu0 %2237
    %vm2247 = vcmask 441728
    %2248 = vst.msk [vmem:[#allocation4] sm:$0xff] %vm2247, %v2224
    %2249 = vst.msk [vmem:[#allocation4 + $0x8] sm:$0xff] %vm2247, %v2226
    %2250 = vst.msk [vmem:[#allocation4 + $0x10] sm:$0xff] %vm2247, %v2228
    %2251 = vst.msk [vmem:[#allocation4 + $0x18] sm:$0xff] %vm2247, %v2230
    %2252 = vst.msk [vmem:[#allocation4 + $0x20] sm:$0xff] %vm2247, %v2232
    %2253 = vst.msk [vmem:[#allocation4 + $0x28] sm:$0xff] %vm2247, %v2234
    %2254 = vst.msk [vmem:[#allocation4 + $0x30] sm:$0xff] %vm2247, %v2236
    %2255 = vst.msk [vmem:[#allocation4 + $0x38] sm:$0xff] %vm2247, %v2238
    %v2256 = vld [vmem:[#allocation4] sm:$0xff]
    %v2257 = vld [vmem:[#allocation4 + $0x8] sm:$0xff]
    %v2258 = vld [vmem:[#allocation4 + $0x10] sm:$0xff]
    %v2259 = vld [vmem:[#allocation4 + $0x18] sm:$0xff]
    %v2260 = vld [vmem:[#allocation4 + $0x20] sm:$0xff]
    %v2261 = vld [vmem:[#allocation4 + $0x28] sm:$0xff]
    %v2262 = vld [vmem:[#allocation4 + $0x30] sm:$0xff]
    %v2263 = vld [vmem:[#allocation4 + $0x38] sm:$0xff]
    %v2264 = vld [vmem:[%s1] sm:$0xf]
    %v2265 = vld [vmem:[%s1 + $0x4] sm:$0xf]
    %v2266 = vld [vmem:[%s1 + $0x8] sm:$0xf]
    %v2267 = vld [vmem:[%s1 + $0xc] sm:$0xf]
    %v2268 = vld [vmem:[%s1 + $0x10] sm:$0xf]
    %v2269 = vld [vmem:[%s1 + $0x14] sm:$0xf]
    %v2270 = vld [vmem:[%s1 + $0x18] sm:$0x7]
    %v2271 = vld [vmem:[%s2] sm:$0x1]
    %v2273 = vlaneseq
    %v2274 = vshrl.u32 %v2273, 7
    %v2275 = vsub.s32 0, %v2274
    %v2276 = vrot.slane %v2271, %v2275
    %v2285 = vunpack.c.l.b16 %v2264
    %v2286 = vunpack.c.l.b16 %v2265
    %v2287 = vunpack.c.l.b16 %v2266
    %v2288 = vunpack.c.l.b16 %v2267
    %v2289 = vunpack.c.l.b16 %v2268
    %v2290 = vunpack.c.l.b16 %v2269
    %v2291 = vunpack.c.l.b16 %v2270
    %v2292 = vpack.c.b16 %v2286, %v2285
    %v2293 = vpack.c.b16 %v2288, %v2287
    %v2294 = vpack.c.b16 %v2290, %v2289
    %v2295 = vpack.c.b16 %v2291, %v2291
    %vm2299 = vcmask 441344
    %v2301 = vsel %vm2299, %v2256, 0
    %v2304 = vsel %vm2299, %v2257, 0
    %v2307 = vsel %vm2299, %v2258, 0
    %v2310 = vsel %vm2299, %v2259, 0
    %v2313 = vsel %vm2299, %v2260, 0
    %v2316 = vsel %vm2299, %v2261, 0
    %v2319 = vsel %vm2299, %v2262, 0
    %v2322 = vsel %vm2299, %v2263, 0
    %vm2324 = vcmask 1042432
    %v2326 = vsel %vm2324, %v2295, 0
    %2328 = vmatprep.subr.bf16.mxu0 0
    %2329 = vmatpush1.bf16.msra.mxu0 %v2292
    %2330 = vmatprep.subr.bf16.mxu0 0
    %2331 = vmatpush1.bf16.msra.mxu0 %v2293
    %2332 = vmatprep.subr.bf16.mxu0 0
    %2333 = vmatpush1.bf16.msra.mxu0 %v2294
    %2334 = vmatprep.subr.bf16.mxu0 0
    %2335 = vmatpush1.bf16.msra.mxu0 %v2326
    %2336 = vmatprep.subr.bf16.mxu0 0
    %2337 = vmatpush1.bf16.msra.mxu0 0
    %2338 = vmatprep.subr.bf16.mxu0 0
    %2339 = vmatpush1.bf16.msra.mxu0 0
    %2340 = vmatprep.subr.bf16.mxu0 0
    %2341 = vmatpush1.bf16.msra.mxu0 0
    %2342 = vmatprep.subr.bf16.mxu0 0
    %2343 = vmatpush1.bf16.msra.mxu0 0
    %2344 = vmatprep.subr.bf16.mxu0 0
    %2345 = vmatpush1.bf16.msra.mxu0 0
    %2346 = vmatprep.subr.bf16.mxu0 0
    %2347 = vmatpush1.bf16.msra.mxu0 0
    %2348 = vmatprep.subr.bf16.mxu0 0
    %2349 = vmatpush1.bf16.msra.mxu0 0
    %2350 = vmatprep.subr.bf16.mxu0 0
    %2351 = vmatpush1.bf16.msra.mxu0 0
    %2352 = vmatprep.subr.bf16.mxu0 0
    %2353 = vmatpush1.bf16.msra.mxu0 0
    %2354 = vmatprep.subr.bf16.mxu0 0
    %2355 = vmatpush1.bf16.msra.mxu0 0
    %2356 = vmatprep.subr.bf16.mxu0 0
    %2357 = vmatpush1.bf16.msra.mxu0 0
    %2358 = vmatprep.subr.bf16.mxu0 0
    %2359 = vmatpush1.bf16.msra.mxu0 0
    %2360 = vmatprep.mubr.bf16.mxu0 0
    %2361 = vmatmul.mubr.bf16.gmra.mrb[0].mxu0 %v2301
    %v2362 = vpop.f32.mrb[0].mxu0
    %v2363 = vadd.f32 %v2276, %v2362
    %v2364 = vpop.f32.mrb[0].mxu0
    %v2365 = vpop.f32.mrb[0].mxu0
    %v2366 = vadd.f32 %v2276, %v2365
    %v2367 = vpop.f32.mrb[0].mxu0
    %2368 = vmatprep.mubr.bf16.mxu0 0
    %2369 = vmatmul.mubr.bf16.gmra.mrb[0].mxu0 %v2304
    %v2370 = vpop.f32.mrb[0].mxu0
    %v2371 = vadd.f32 %v2276, %v2370
    %v2372 = vpop.f32.mrb[0].mxu0
    %v2373 = vpop.f32.mrb[0].mxu0
    %v2374 = vadd.f32 %v2276, %v2373
    %v2375 = vpop.f32.mrb[0].mxu0
    %2376 = vmatprep.mubr.bf16.mxu0 0
    %2377 = vmatmul.mubr.bf16.gmra.mrb[0].mxu0 %v2307
    %v2378 = vpop.f32.mrb[0].mxu0
    %v2379 = vadd.f32 %v2276, %v2378
    %v2380 = vpop.f32.mrb[0].mxu0
    %v2381 = vpop.f32.mrb[0].mxu0
    %v2382 = vadd.f32 %v2276, %v2381
    %v2383 = vpop.f32.mrb[0].mxu0
    %2384 = vmatprep.mubr.bf16.mxu0 0
    %2385 = vmatmul.mubr.bf16.gmra.mrb[0].mxu0 %v2310
    %v2386 = vpop.f32.mrb[0].mxu0
    %v2387 = vadd.f32 %v2276, %v2386
    %v2388 = vpop.f32.mrb[0].mxu0
    %v2389 = vpop.f32.mrb[0].mxu0
    %v2390 = vadd.f32 %v2276, %v2389
    %v2391 = vpop.f32.mrb[0].mxu0
    %2392 = vmatprep.mubr.bf16.mxu0 0
    %2393 = vmatmul.mubr.bf16.gmra.mrb[0].mxu0 %v2313
    %v2394 = vpop.f32.mrb[0].mxu0
    %v2395 = vadd.f32 %v2276, %v2394
    %v2396 = vpop.f32.mrb[0].mxu0
    %v2397 = vpop.f32.mrb[0].mxu0
    %v2398 = vadd.f32 %v2276, %v2397
    %v2399 = vpop.f32.mrb[0].mxu0
    %2400 = vmatprep.mubr.bf16.mxu0 0
    %2401 = vmatmul.mubr.bf16.gmra.mrb[0].mxu0 %v2316
    %v2402 = vpop.f32.mrb[0].mxu0
    %v2403 = vadd.f32 %v2276, %v2402
    %v2404 = vpop.f32.mrb[0].mxu0
    %v2405 = vpop.f32.mrb[0].mxu0
    %v2406 = vadd.f32 %v2276, %v2405
    %v2407 = vpop.f32.mrb[0].mxu0
    %2408 = vmatprep.mubr.bf16.mxu0 0
    %2409 = vmatmul.mubr.bf16.gmra.mrb[0].mxu0 %v2319
    %v2410 = vpop.f32.mrb[0].mxu0
    %v2411 = vadd.f32 %v2276, %v2410
    %v2412 = vpop.f32.mrb[0].mxu0
    %v2413 = vpop.f32.mrb[0].mxu0
    %v2414 = vadd.f32 %v2276, %v2413
    %v2415 = vpop.f32.mrb[0].mxu0
    %2416 = vmatprep.mubr.bf16.mxu0 0
    %2417 = vmatmul.mubr.bf16.gmra.mrb[0].mxu0 %v2322
    %v2418 = vpop.f32.mrb[0].mxu0
    %v2419 = vadd.f32 %v2276, %v2418
    %v2420 = vpop.f32.mrb[0].mxu0
    %v2421 = vpop.f32.mrb[0].mxu0
    %v2422 = vadd.f32 %v2276, %v2421
    %v2423 = vpop.f32.mrb[0].mxu0
    %2424 = vdwg.mxu0
    %v2425 = vpack.c.bf16 %v2363, %v2363
    %v2426 = vpack.c.bf16 %v2366, %v2366
    %v2427 = vpack.c.bf16 %v2371, %v2371
    %v2428 = vpack.c.bf16 %v2374, %v2374
    %v2429 = vpack.c.bf16 %v2379, %v2379
    %v2430 = vpack.c.bf16 %v2382, %v2382
    %v2431 = vpack.c.bf16 %v2387, %v2387
    %v2432 = vpack.c.bf16 %v2390, %v2390
    %v2433 = vpack.c.bf16 %v2395, %v2395
    %v2434 = vpack.c.bf16 %v2398, %v2398
    %v2435 = vpack.c.bf16 %v2403, %v2403
    %v2436 = vpack.c.bf16 %v2406, %v2406
    %v2437 = vpack.c.bf16 %v2411, %v2411
    %v2438 = vpack.c.bf16 %v2414, %v2414
    %v2439 = vpack.c.bf16 %v2419, %v2419
    %v2440 = vpack.c.bf16 %v2422, %v2422
    %vm2441 = vcmask 24576
    %vm2442 = vmand %vm2441, %vm62
    %v2443 = vld [vmem:[#allocation3] sm:$0x1]
    %v2444 = vsel %vm2442, 0, %v2443
    %2445 = vst [vmem:[#allocation3] sm:$0x1] %v2444
    %v2446 = vld [vmem:[#allocation3 + $0x8] sm:$0x1]
    %v2447 = vsel %vm2442, 0, %v2446
    %2448 = vst [vmem:[#allocation3 + $0x8] sm:$0x1] %v2447
    %v2449 = vld [vmem:[#allocation3 + $0x10] sm:$0x1]
    %v2450 = vsel %vm2442, 0, %v2449
    %2451 = vst [vmem:[#allocation3 + $0x10] sm:$0x1] %v2450
    %v2452 = vld [vmem:[#allocation3 + $0x18] sm:$0x1]
    %v2453 = vsel %vm2442, 0, %v2452
    %2454 = vst [vmem:[#allocation3 + $0x18] sm:$0x1] %v2453
    %v2455 = vld [vmem:[#allocation3 + $0x20] sm:$0x1]
    %v2456 = vsel %vm2442, 0, %v2455
    %2457 = vst [vmem:[#allocation3 + $0x20] sm:$0x1] %v2456
    %v2458 = vld [vmem:[#allocation3 + $0x28] sm:$0x1]
    %v2459 = vsel %vm2442, 0, %v2458
    %2460 = vst [vmem:[#allocation3 + $0x28] sm:$0x1] %v2459
    %v2461 = vld [vmem:[#allocation3 + $0x30] sm:$0x1]
    %v2462 = vsel %vm2442, 0, %v2461
    %2463 = vst [vmem:[#allocation3 + $0x30] sm:$0x1] %v2462
    %v2464 = vld [vmem:[#allocation3 + $0x38] sm:$0x1]
    %v2465 = vsel %vm2442, 0, %v2464
    %2466 = vst [vmem:[#allocation3 + $0x38] sm:$0x1] %v2465
    %v2467 = vld [vmem:[#allocation3 + $0x40] sm:$0x1]
    %v2468 = vsel %vm2442, 0, %v2467
    %2469 = vst [vmem:[#allocation3 + $0x40] sm:$0x1] %v2468
    %v2470 = vld [vmem:[#allocation3 + $0x48] sm:$0x1]
    %v2471 = vsel %vm2442, 0, %v2470
    %2472 = vst [vmem:[#allocation3 + $0x48] sm:$0x1] %v2471
    %v2473 = vld [vmem:[#allocation3 + $0x50] sm:$0x1]
    %v2474 = vsel %vm2442, 0, %v2473
    %2475 = vst [vmem:[#allocation3 + $0x50] sm:$0x1] %v2474
    %v2476 = vld [vmem:[#allocation3 + $0x58] sm:$0x1]
    %v2477 = vsel %vm2442, 0, %v2476
    %2478 = vst [vmem:[#allocation3 + $0x58] sm:$0x1] %v2477
    %v2479 = vld [vmem:[#allocation3 + $0x60] sm:$0x1]
    %v2480 = vsel %vm2442, 0, %v2479
    %2481 = vst [vmem:[#allocation3 + $0x60] sm:$0x1] %v2480
    %v2482 = vld [vmem:[#allocation3 + $0x68] sm:$0x1]
    %v2483 = vsel %vm2442, 0, %v2482
    %2484 = vst [vmem:[#allocation3 + $0x68] sm:$0x1] %v2483
    %v2485 = vld [vmem:[#allocation3 + $0x70] sm:$0x1]
    %v2486 = vsel %vm2442, 0, %v2485
    %2487 = vst [vmem:[#allocation3 + $0x70] sm:$0x1] %v2486
    %v2488 = vld [vmem:[#allocation3 + $0x78] sm:$0x1]
    %v2489 = vsel %vm2442, 0, %v2488
    %2490 = vst [vmem:[#allocation3 + $0x78] sm:$0x1] %v2489
    %v2491 = vld [vmem:[#allocation3 + $0x80] sm:$0x1]
    %v2492 = vsel %vm2442, 0, %v2491
    %2493 = vst [vmem:[#allocation3 + $0x80] sm:$0x1] %v2492
    %v2494 = vld [vmem:[#allocation3 + $0x88] sm:$0x1]
    %v2495 = vsel %vm2442, 0, %v2494
    %2496 = vst [vmem:[#allocation3 + $0x88] sm:$0x1] %v2495
    %v2497 = vld [vmem:[#allocation3 + $0x90] sm:$0x1]
    %v2498 = vsel %vm2442, 0, %v2497
    %2499 = vst [vmem:[#allocation3 + $0x90] sm:$0x1] %v2498
    %v2500 = vld [vmem:[#allocation3 + $0x98] sm:$0x1]
    %v2501 = vsel %vm2442, 0, %v2500
    %2502 = vst [vmem:[#allocation3 + $0x98] sm:$0x1] %v2501
    %vm2503 = vmand %vm2441, %vm124
    %v2504 = vld [vmem:[#allocation3 + $0x4] sm:$0x1]
    %v2505 = vsel %vm2503, 0, %v2504
    %2506 = vst [vmem:[#allocation3 + $0x4] sm:$0x1] %v2505
    %v2507 = vld [vmem:[#allocation3 + $0xc] sm:$0x1]
    %v2508 = vsel %vm2503, 0, %v2507
    %2509 = vst [vmem:[#allocation3 + $0xc] sm:$0x1] %v2508
    %v2510 = vld [vmem:[#allocation3 + $0x14] sm:$0x1]
    %v2511 = vsel %vm2503, 0, %v2510
    %2512 = vst [vmem:[#allocation3 + $0x14] sm:$0x1] %v2511
    %v2513 = vld [vmem:[#allocation3 + $0x1c] sm:$0x1]
    %v2514 = vsel %vm2503, 0, %v2513
    %2515 = vst [vmem:[#allocation3 + $0x1c] sm:$0x1] %v2514
    %v2516 = vld [vmem:[#allocation3 + $0x24] sm:$0x1]
    %v2517 = vsel %vm2503, 0, %v2516
    %2518 = vst [vmem:[#allocation3 + $0x24] sm:$0x1] %v2517
    %v2519 = vld [vmem:[#allocation3 + $0x2c] sm:$0x1]
    %v2520 = vsel %vm2503, 0, %v2519
    %2521 = vst [vmem:[#allocation3 + $0x2c] sm:$0x1] %v2520
    %v2522 = vld [vmem:[#allocation3 + $0x34] sm:$0x1]
    %v2523 = vsel %vm2503, 0, %v2522
    %2524 = vst [vmem:[#allocation3 + $0x34] sm:$0x1] %v2523
    %v2525 = vld [vmem:[#allocation3 + $0x3c] sm:$0x1]
    %v2526 = vsel %vm2503, 0, %v2525
    %2527 = vst [vmem:[#allocation3 + $0x3c] sm:$0x1] %v2526
    %v2528 = vld [vmem:[#allocation3 + $0x44] sm:$0x1]
    %v2529 = vsel %vm2503, 0, %v2528
    %2530 = vst [vmem:[#allocation3 + $0x44] sm:$0x1] %v2529
    %v2531 = vld [vmem:[#allocation3 + $0x4c] sm:$0x1]
    %v2532 = vsel %vm2503, 0, %v2531
    %2533 = vst [vmem:[#allocation3 + $0x4c] sm:$0x1] %v2532
    %v2534 = vld [vmem:[#allocation3 + $0x54] sm:$0x1]
    %v2535 = vsel %vm2503, 0, %v2534
    %2536 = vst [vmem:[#allocation3 + $0x54] sm:$0x1] %v2535
    %v2537 = vld [vmem:[#allocation3 + $0x5c] sm:$0x1]
    %v2538 = vsel %vm2503, 0, %v2537
    %2539 = vst [vmem:[#allocation3 + $0x5c] sm:$0x1] %v2538
    %v2540 = vld [vmem:[#allocation3 + $0x64] sm:$0x1]
    %v2541 = vsel %vm2503, 0, %v2540
    %2542 = vst [vmem:[#allocation3 + $0x64] sm:$0x1] %v2541
    %v2543 = vld [vmem:[#allocation3 + $0x6c] sm:$0x1]
    %v2544 = vsel %vm2503, 0, %v2543
    %2545 = vst [vmem:[#allocation3 + $0x6c] sm:$0x1] %v2544
    %v2546 = vld [vmem:[#allocation3 + $0x74] sm:$0x1]
    %v2547 = vsel %vm2503, 0, %v2546
    %2548 = vst [vmem:[#allocation3 + $0x74] sm:$0x1] %v2547
    %v2549 = vld [vmem:[#allocation3 + $0x7c] sm:$0x1]
    %v2550 = vsel %vm2503, 0, %v2549
    %2551 = vst [vmem:[#allocation3 + $0x7c] sm:$0x1] %v2550
    %v2552 = vld [vmem:[#allocation3 + $0x84] sm:$0x1]
    %v2553 = vsel %vm2503, 0, %v2552
    %2554 = vst [vmem:[#allocation3 + $0x84] sm:$0x1] %v2553
    %v2555 = vld [vmem:[#allocation3 + $0x8c] sm:$0x1]
    %v2556 = vsel %vm2503, 0, %v2555
    %2557 = vst [vmem:[#allocation3 + $0x8c] sm:$0x1] %v2556
    %v2558 = vld [vmem:[#allocation3 + $0x94] sm:$0x1]
    %v2559 = vsel %vm2503, 0, %v2558
    %2560 = vst [vmem:[#allocation3 + $0x94] sm:$0x1] %v2559
    %v2561 = vld [vmem:[#allocation3 + $0x9c] sm:$0x1]
    %v2562 = vsel %vm2503, 0, %v2561
    %2563 = vst [vmem:[#allocation3 + $0x9c] sm:$0x1] %v2562
    %vm2564 = vcmask 27648
    %2565 = vst.msk [vmem:[#allocation3] sm:$0xf] %vm2564, 0
    %vm2566 = vcmask 24576
    %2567 = vst.msk [vmem:[#allocation3 + $0x4] sm:$0x1] %vm2566, 0
    %2568 = vst.msk [vmem:[#allocation3 + $0x50] sm:$0xf] %vm2564, 0
    %2569 = vst.msk [vmem:[#allocation3 + $0x54] sm:$0x1] %vm2566, 0
    %s2570 = scalar_lea.vmem [#allocation3], 72
    %2571 = vst.msk [vmem:[%s2570] sm:$0xf] %vm2564, 0
    %2572 = vst.msk [vmem:[%s2570 + $0x4] sm:$0x1] %vm2566, 0
    %2573 = vst.msk [vmem:[%s2570 + $0x50] sm:$0xf] %vm2564, 0
    %2574 = vst.msk [vmem:[%s2570 + $0x54] sm:$0x1] %vm2566, 0
    %v2591 = vunpack.c.l.b16 %v2425
    %v2592 = vunpack.c.l.b16 %v2426
    %v2593 = vunpack.c.l.b16 %v2427
    %v2594 = vunpack.c.l.b16 %v2428
    %v2595 = vunpack.c.l.b16 %v2429
    %v2596 = vunpack.c.l.b16 %v2430
    %v2597 = vunpack.c.l.b16 %v2431
    %v2598 = vunpack.c.l.b16 %v2432
    %v2599 = vunpack.c.l.b16 %v2433
    %v2600 = vunpack.c.l.b16 %v2434
    %v2601 = vunpack.c.l.b16 %v2435
    %v2602 = vunpack.c.l.b16 %v2436
    %v2603 = vunpack.c.l.b16 %v2437
    %v2604 = vunpack.c.l.b16 %v2438
    %v2605 = vunpack.c.l.b16 %v2439
    %v2606 = vunpack.c.l.b16 %v2440
    %v2607 = vpack.c.b16 %v2591, %v2591
    %v2608 = vpack.c.b16 %v2592, %v2592
    %v2609 = vpack.c.b16 %v2593, %v2593
    %v2610 = vpack.c.b16 %v2594, %v2594
    %v2611 = vpack.c.b16 %v2595, %v2595
    %v2612 = vpack.c.b16 %v2596, %v2596
    %v2613 = vpack.c.b16 %v2597, %v2597
    %v2614 = vpack.c.b16 %v2598, %v2598
    %v2615 = vpack.c.b16 %v2599, %v2599
    %v2616 = vpack.c.b16 %v2600, %v2600
    %v2617 = vpack.c.b16 %v2601, %v2601
    %v2618 = vpack.c.b16 %v2602, %v2602
    %v2619 = vpack.c.b16 %v2603, %v2603
    %v2620 = vpack.c.b16 %v2604, %v2604
    %v2621 = vpack.c.b16 %v2605, %v2605
    %v2622 = vpack.c.b16 %v2606, %v2606
    %v2624 = vshrl.u32 %v2607, 16
    %v2626 = vrot.slane %v2624, 7
    %v2627 = vshll.u32 %v2607, 16
    %v2629 = vor.u32 %v2626, %v2627
    %v2630 = vrot.slane %v2626, 4
    %v2632 = vshrl.u32 %v2608, 16
    %v2634 = vrot.slane %v2632, 7
    %v2635 = vshll.u32 %v2608, 16
    %v2637 = vor.u32 %v2634, %v2635
    %v2638 = vrot.slane %v2634, 4
    %v2640 = vshrl.u32 %v2609, 16
    %v2642 = vrot.slane %v2640, 7
    %v2643 = vshll.u32 %v2609, 16
    %v2645 = vor.u32 %v2642, %v2643
    %v2646 = vrot.slane %v2642, 4
    %v2648 = vshrl.u32 %v2610, 16
    %v2650 = vrot.slane %v2648, 7
    %v2651 = vshll.u32 %v2610, 16
    %v2653 = vor.u32 %v2650, %v2651
    %v2654 = vrot.slane %v2650, 4
    %v2656 = vshrl.u32 %v2611, 16
    %v2658 = vrot.slane %v2656, 7
    %v2659 = vshll.u32 %v2611, 16
    %v2661 = vor.u32 %v2658, %v2659
    %v2662 = vrot.slane %v2658, 4
    %v2664 = vshrl.u32 %v2612, 16
    %v2666 = vrot.slane %v2664, 7
    %v2667 = vshll.u32 %v2612, 16
    %v2669 = vor.u32 %v2666, %v2667
    %v2670 = vrot.slane %v2666, 4
    %v2672 = vshrl.u32 %v2613, 16
    %v2674 = vrot.slane %v2672, 7
    %v2675 = vshll.u32 %v2613, 16
    %v2677 = vor.u32 %v2674, %v2675
    %v2678 = vrot.slane %v2674, 4
    %v2680 = vshrl.u32 %v2614, 16
    %v2682 = vrot.slane %v2680, 7
    %v2683 = vshll.u32 %v2614, 16
    %v2685 = vor.u32 %v2682, %v2683
    %v2686 = vrot.slane %v2682, 4
    %v2688 = vshrl.u32 %v2615, 16
    %v2690 = vrot.slane %v2688, 7
    %v2691 = vshll.u32 %v2615, 16
    %v2693 = vor.u32 %v2690, %v2691
    %v2694 = vrot.slane %v2690, 4
    %v2696 = vshrl.u32 %v2616, 16
    %v2698 = vrot.slane %v2696, 7
    %v2699 = vshll.u32 %v2616, 16
    %v2701 = vor.u32 %v2698, %v2699
    %v2702 = vrot.slane %v2698, 4
    %v2704 = vshrl.u32 %v2617, 16
    %v2706 = vrot.slane %v2704, 7
    %v2707 = vshll.u32 %v2617, 16
    %v2709 = vor.u32 %v2706, %v2707
    %v2710 = vrot.slane %v2706, 4
    %v2712 = vshrl.u32 %v2618, 16
    %v2714 = vrot.slane %v2712, 7
    %v2715 = vshll.u32 %v2618, 16
    %v2717 = vor.u32 %v2714, %v2715
    %v2718 = vrot.slane %v2714, 4
    %v2720 = vshrl.u32 %v2619, 16
    %v2722 = vrot.slane %v2720, 7
    %v2723 = vshll.u32 %v2619, 16
    %v2725 = vor.u32 %v2722, %v2723
    %v2726 = vrot.slane %v2722, 4
    %v2728 = vshrl.u32 %v2620, 16
    %v2730 = vrot.slane %v2728, 7
    %v2731 = vshll.u32 %v2620, 16
    %v2733 = vor.u32 %v2730, %v2731
    %v2734 = vrot.slane %v2730, 4
    %v2736 = vshrl.u32 %v2621, 16
    %v2738 = vrot.slane %v2736, 7
    %v2739 = vshll.u32 %v2621, 16
    %v2741 = vor.u32 %v2738, %v2739
    %v2742 = vrot.slane %v2738, 4
    %v2744 = vshrl.u32 %v2622, 16
    %v2746 = vrot.slane %v2744, 7
    %v2747 = vshll.u32 %v2622, 16
    %v2749 = vor.u32 %v2746, %v2747
    %v2750 = vrot.slane %v2746, 4
    %s2783 = scalar_lea.vmem [#allocation3], 8
    %vm2784 = vcmask 27648
    %vm2785 = vmand %vm2784, %vm124
    %v2786 = vld [vmem:[%s2783] sm:$0xf]
    %v2787 = vsel %vm2785, %v2629, %v2786
    %2788 = vst [vmem:[%s2783] sm:$0xf] %v2787
    %v2789 = vld [vmem:[%s2783 + $0x4] sm:$0x1]
    %v2790 = vsel %vm2442, %v2630, %v2789
    %2791 = vst [vmem:[%s2783 + $0x4] sm:$0x1] %v2790
    %v2792 = vld [vmem:[%s2783 + $0x8] sm:$0xf]
    %v2793 = vsel %vm2785, %v2637, %v2792
    %2794 = vst [vmem:[%s2783 + $0x8] sm:$0xf] %v2793
    %v2795 = vld [vmem:[%s2783 + $0xc] sm:$0x1]
    %v2796 = vsel %vm2442, %v2638, %v2795
    %2797 = vst [vmem:[%s2783 + $0xc] sm:$0x1] %v2796
    %v2798 = vld [vmem:[%s2783 + $0x10] sm:$0xf]
    %v2799 = vsel %vm2785, %v2645, %v2798
    %2800 = vst [vmem:[%s2783 + $0x10] sm:$0xf] %v2799
    %v2801 = vld [vmem:[%s2783 + $0x14] sm:$0x1]
    %v2802 = vsel %vm2442, %v2646, %v2801
    %2803 = vst [vmem:[%s2783 + $0x14] sm:$0x1] %v2802
    %v2804 = vld [vmem:[%s2783 + $0x18] sm:$0xf]
    %v2805 = vsel %vm2785, %v2653, %v2804
    %2806 = vst [vmem:[%s2783 + $0x18] sm:$0xf] %v2805
    %v2807 = vld [vmem:[%s2783 + $0x1c] sm:$0x1]
    %v2808 = vsel %vm2442, %v2654, %v2807
    %2809 = vst [vmem:[%s2783 + $0x1c] sm:$0x1] %v2808
    %v2810 = vld [vmem:[%s2783 + $0x20] sm:$0xf]
    %v2811 = vsel %vm2785, %v2661, %v2810
    %2812 = vst [vmem:[%s2783 + $0x20] sm:$0xf] %v2811
    %v2813 = vld [vmem:[%s2783 + $0x24] sm:$0x1]
    %v2814 = vsel %vm2442, %v2662, %v2813
    %2815 = vst [vmem:[%s2783 + $0x24] sm:$0x1] %v2814
    %v2816 = vld [vmem:[%s2783 + $0x28] sm:$0xf]
    %v2817 = vsel %vm2785, %v2669, %v2816
    %2818 = vst [vmem:[%s2783 + $0x28] sm:$0xf] %v2817
    %v2819 = vld [vmem:[%s2783 + $0x2c] sm:$0x1]
    %v2820 = vsel %vm2442, %v2670, %v2819
    %2821 = vst [vmem:[%s2783 + $0x2c] sm:$0x1] %v2820
    %v2822 = vld [vmem:[%s2783 + $0x30] sm:$0xf]
    %v2823 = vsel %vm2785, %v2677, %v2822
    %2824 = vst [vmem:[%s2783 + $0x30] sm:$0xf] %v2823
    %v2825 = vld [vmem:[%s2783 + $0x34] sm:$0x1]
    %v2826 = vsel %vm2442, %v2678, %v2825
    %2827 = vst [vmem:[%s2783 + $0x34] sm:$0x1] %v2826
    %v2828 = vld [vmem:[%s2783 + $0x38] sm:$0xf]
    %v2829 = vsel %vm2785, %v2685, %v2828
    %2830 = vst [vmem:[%s2783 + $0x38] sm:$0xf] %v2829
    %v2831 = vld [vmem:[%s2783 + $0x3c] sm:$0x1]
    %v2832 = vsel %vm2442, %v2686, %v2831
    %2833 = vst [vmem:[%s2783 + $0x3c] sm:$0x1] %v2832
    %v2834 = vld [vmem:[%s2783 + $0x50] sm:$0xf]
    %v2835 = vsel %vm2785, %v2693, %v2834
    %2836 = vst [vmem:[%s2783 + $0x50] sm:$0xf] %v2835
    %v2837 = vld [vmem:[%s2783 + $0x54] sm:$0x1]
    %v2838 = vsel %vm2442, %v2694, %v2837
    %2839 = vst [vmem:[%s2783 + $0x54] sm:$0x1] %v2838
    %v2840 = vld [vmem:[%s2783 + $0x58] sm:$0xf]
    %v2841 = vsel %vm2785, %v2701, %v2840
    %2842 = vst [vmem:[%s2783 + $0x58] sm:$0xf] %v2841
    %v2843 = vld [vmem:[%s2783 + $0x5c] sm:$0x1]
    %v2844 = vsel %vm2442, %v2702, %v2843
    %2845 = vst [vmem:[%s2783 + $0x5c] sm:$0x1] %v2844
    %v2846 = vld [vmem:[%s2783 + $0x60] sm:$0xf]
    %v2847 = vsel %vm2785, %v2709, %v2846
    %2848 = vst [vmem:[%s2783 + $0x60] sm:$0xf] %v2847
    %v2849 = vld [vmem:[%s2783 + $0x64] sm:$0x1]
    %v2850 = vsel %vm2442, %v2710, %v2849
    %2851 = vst [vmem:[%s2783 + $0x64] sm:$0x1] %v2850
    %v2852 = vld [vmem:[%s2783 + $0x68] sm:$0xf]
    %v2853 = vsel %vm2785, %v2717, %v2852
    %2854 = vst [vmem:[%s2783 + $0x68] sm:$0xf] %v2853
    %v2855 = vld [vmem:[%s2783 + $0x6c] sm:$0x1]
    %v2856 = vsel %vm2442, %v2718, %v2855
    %2857 = vst [vmem:[%s2783 + $0x6c] sm:$0x1] %v2856
    %v2858 = vld [vmem:[%s2783 + $0x70] sm:$0xf]
    %v2859 = vsel %vm2785, %v2725, %v2858
    %2860 = vst [vmem:[%s2783 + $0x70] sm:$0xf] %v2859
    %v2861 = vld [vmem:[%s2783 + $0x74] sm:$0x1]
    %v2862 = vsel %vm2442, %v2726, %v2861
    %2863 = vst [vmem:[%s2783 + $0x74] sm:$0x1] %v2862
    %v2864 = vld [vmem:[%s2783 + $0x78] sm:$0xf]
    %v2865 = vsel %vm2785, %v2733, %v2864
    %2866 = vst [vmem:[%s2783 + $0x78] sm:$0xf] %v2865
    %v2867 = vld [vmem:[%s2783 + $0x7c] sm:$0x1]
    %v2868 = vsel %vm2442, %v2734, %v2867
    %2869 = vst [vmem:[%s2783 + $0x7c] sm:$0x1] %v2868
    %v2870 = vld [vmem:[%s2783 + $0x80] sm:$0xf]
    %v2871 = vsel %vm2785, %v2741, %v2870
    %2872 = vst [vmem:[%s2783 + $0x80] sm:$0xf] %v2871
    %v2873 = vld [vmem:[%s2783 + $0x84] sm:$0x1]
    %v2874 = vsel %vm2442, %v2742, %v2873
    %2875 = vst [vmem:[%s2783 + $0x84] sm:$0x1] %v2874
    %v2876 = vld [vmem:[%s2783 + $0x88] sm:$0xf]
    %v2877 = vsel %vm2785, %v2749, %v2876
    %2878 = vst [vmem:[%s2783 + $0x88] sm:$0xf] %v2877
    %v2879 = vld [vmem:[%s2783 + $0x8c] sm:$0x1]
    %v2880 = vsel %vm2442, %v2750, %v2879
    %2881 = vst [vmem:[%s2783 + $0x8c] sm:$0x1] %v2880
    %v2882 = vld [vmem:[#allocation3] sm:$0xf]
    %v2883 = vld [vmem:[#allocation3 + $0x8] sm:$0xf]
    %v2884 = vld [vmem:[#allocation3 + $0x10] sm:$0xf]
    %v2885 = vld [vmem:[#allocation3 + $0x18] sm:$0xf]
    %v2886 = vld [vmem:[#allocation3 + $0x20] sm:$0xf]
    %v2887 = vld [vmem:[#allocation3 + $0x28] sm:$0xf]
    %v2888 = vld [vmem:[#allocation3 + $0x30] sm:$0xf]
    %v2889 = vld [vmem:[#allocation3 + $0x38] sm:$0xf]
    %v2890 = vld [vmem:[#allocation3 + $0x50] sm:$0xf]
    %v2891 = vld [vmem:[#allocation3 + $0x58] sm:$0xf]
    %v2892 = vld [vmem:[#allocation3 + $0x60] sm:$0xf]
    %v2893 = vld [vmem:[#allocation3 + $0x68] sm:$0xf]
    %v2894 = vld [vmem:[#allocation3 + $0x70] sm:$0xf]
    %v2895 = vld [vmem:[#allocation3 + $0x78] sm:$0xf]
    %v2896 = vld [vmem:[#allocation3 + $0x80] sm:$0xf]
    %v2897 = vld [vmem:[#allocation3 + $0x88] sm:$0xf]
    %v2914 = vunpack.c.l.b16 %v2882
    %v2915 = vunpack.c.l.b16 %v2883
    %v2916 = vunpack.c.l.b16 %v2884
    %v2917 = vunpack.c.l.b16 %v2885
    %v2918 = vunpack.c.l.b16 %v2886
    %v2919 = vunpack.c.l.b16 %v2887
    %v2920 = vunpack.c.l.b16 %v2888
    %v2921 = vunpack.c.l.b16 %v2889
    %v2922 = vunpack.c.l.b16 %v2890
    %v2923 = vunpack.c.l.b16 %v2891
    %v2924 = vunpack.c.l.b16 %v2892
    %v2925 = vunpack.c.l.b16 %v2893
    %v2926 = vunpack.c.l.b16 %v2894
    %v2927 = vunpack.c.l.b16 %v2895
    %v2928 = vunpack.c.l.b16 %v2896
    %v2929 = vunpack.c.l.b16 %v2897
    %v2930 = vpack.c.b16 %v2915, %v2914
    %v2931 = vpack.c.b16 %v2917, %v2916
    %v2932 = vpack.c.b16 %v2919, %v2918
    %v2933 = vpack.c.b16 %v2921, %v2920
    %v2934 = vpack.c.b16 %v2923, %v2922
    %v2935 = vpack.c.b16 %v2925, %v2924
    %v2936 = vpack.c.b16 %v2927, %v2926
    %v2937 = vpack.c.b16 %v2929, %v2928
    %vm2946 = vcmask 31744
    %2947 = vst.msk [vmem:[#allocation5] sm:$0xff] %vm2946, %v2930
    %2948 = vst.msk [vmem:[#allocation5 + $0x8] sm:$0xff] %vm2946, %v2931
    %2949 = vst.msk [vmem:[#allocation5 + $0x10] sm:$0xff] %vm2946, %v2932
    %2950 = vst.msk [vmem:[#allocation5 + $0x18] sm:$0xff] %vm2946, %v2933
    %2951 = vst.msk [vmem:[#allocation5 + $0x20] sm:$0xff] %vm2946, %v2934
    %2952 = vst.msk [vmem:[#allocation5 + $0x28] sm:$0xff] %vm2946, %v2935
    %2953 = vst.msk [vmem:[#allocation5 + $0x30] sm:$0xff] %vm2946, %v2936
    %2954 = vst.msk [vmem:[#allocation5 + $0x38] sm:$0xff] %vm2946, %v2937
    %v2955 = vld [vmem:[#allocation3] sm:$0xf]
    %v2956 = vld [vmem:[#allocation3 + $0x4] sm:$0x1]
    %v2957 = vld [vmem:[#allocation3 + $0x8] sm:$0xf]
    %v2958 = vld [vmem:[#allocation3 + $0xc] sm:$0x1]
    %v2959 = vld [vmem:[#allocation3 + $0x10] sm:$0xf]
    %v2960 = vld [vmem:[#allocation3 + $0x14] sm:$0x1]
    %v2961 = vld [vmem:[#allocation3 + $0x18] sm:$0xf]
    %v2962 = vld [vmem:[#allocation3 + $0x1c] sm:$0x1]
    %v2963 = vld [vmem:[#allocation3 + $0x20] sm:$0xf]
    %v2964 = vld [vmem:[#allocation3 + $0x24] sm:$0x1]
    %v2965 = vld [vmem:[#allocation3 + $0x28] sm:$0xf]
    %v2966 = vld [vmem:[#allocation3 + $0x2c] sm:$0x1]
    %v2967 = vld [vmem:[#allocation3 + $0x30] sm:$0xf]
    %v2968 = vld [vmem:[#allocation3 + $0x34] sm:$0x1]
    %v2969 = vld [vmem:[#allocation3 + $0x38] sm:$0xf]
    %v2970 = vld [vmem:[#allocation3 + $0x3c] sm:$0x1]
    %v2971 = vld [vmem:[#allocation3 + $0x50] sm:$0xf]
    %v2972 = vld [vmem:[#allocation3 + $0x54] sm:$0x1]
    %v2973 = vld [vmem:[#allocation3 + $0x58] sm:$0xf]
    %v2974 = vld [vmem:[#allocation3 + $0x5c] sm:$0x1]
    %v2975 = vld [vmem:[#allocation3 + $0x60] sm:$0xf]
    %v2976 = vld [vmem:[#allocation3 + $0x64] sm:$0x1]
    %v2977 = vld [vmem:[#allocation3 + $0x68] sm:$0xf]
    %v2978 = vld [vmem:[#allocation3 + $0x6c] sm:$0x1]
    %v2979 = vld [vmem:[#allocation3 + $0x70] sm:$0xf]
    %v2980 = vld [vmem:[#allocation3 + $0x74] sm:$0x1]
    %v2981 = vld [vmem:[#allocation3 + $0x78] sm:$0xf]
    %v2982 = vld [vmem:[#allocation3 + $0x7c] sm:$0x1]
    %v2983 = vld [vmem:[#allocation3 + $0x80] sm:$0xf]
    %v2984 = vld [vmem:[#allocation3 + $0x84] sm:$0x1]
    %v2985 = vld [vmem:[#allocation3 + $0x88] sm:$0xf]
    %v2986 = vld [vmem:[#allocation3 + $0x8c] sm:$0x1]
    %v2988 = vshrl.u32 %v2955, 16
    %v2990 = vrot.slane %v2988, 4
    %v2991 = vshll.u32 %v2955, 16
    %v2993 = vrot.slane %v2991, 5
    %v2994 = vor.u32 %v2990, %v2993
    %v2995 = vrot.slane %v2994, 4
    %v2997 = vshll.u32 %v2956, 16
    %v2999 = vrot.slane %v2997, 5
    %v3000 = vsel %vm611, %v2995, %v2999
    %v3002 = vshrl.u32 %v2957, 16
    %v3004 = vrot.slane %v3002, 4
    %v3005 = vshll.u32 %v2957, 16
    %v3007 = vrot.slane %v3005, 5
    %v3008 = vor.u32 %v3004, %v3007
    %v3009 = vrot.slane %v3008, 4
    %v3011 = vshll.u32 %v2958, 16
    %v3013 = vrot.slane %v3011, 5
    %v3014 = vsel %vm611, %v3009, %v3013
    %v3016 = vshrl.u32 %v2959, 16
    %v3018 = vrot.slane %v3016, 4
    %v3019 = vshll.u32 %v2959, 16
    %v3021 = vrot.slane %v3019, 5
    %v3022 = vor.u32 %v3018, %v3021
    %v3023 = vrot.slane %v3022, 4
    %v3025 = vshll.u32 %v2960, 16
    %v3027 = vrot.slane %v3025, 5
    %v3028 = vsel %vm611, %v3023, %v3027
    %v3030 = vshrl.u32 %v2961, 16
    %v3032 = vrot.slane %v3030, 4
    %v3033 = vshll.u32 %v2961, 16
    %v3035 = vrot.slane %v3033, 5
    %v3036 = vor.u32 %v3032, %v3035
    %v3037 = vrot.slane %v3036, 4
    %v3039 = vshll.u32 %v2962, 16
    %v3041 = vrot.slane %v3039, 5
    %v3042 = vsel %vm611, %v3037, %v3041
    %v3044 = vshrl.u32 %v2963, 16
    %v3046 = vrot.slane %v3044, 4
    %v3047 = vshll.u32 %v2963, 16
    %v3049 = vrot.slane %v3047, 5
    %v3050 = vor.u32 %v3046, %v3049
    %v3051 = vrot.slane %v3050, 4
    %v3053 = vshll.u32 %v2964, 16
    %v3055 = vrot.slane %v3053, 5
    %v3056 = vsel %vm611, %v3051, %v3055
    %v3058 = vshrl.u32 %v2965, 16
    %v3060 = vrot.slane %v3058, 4
    %v3061 = vshll.u32 %v2965, 16
    %v3063 = vrot.slane %v3061, 5
    %v3064 = vor.u32 %v3060, %v3063
    %v3065 = vrot.slane %v3064, 4
    %v3067 = vshll.u32 %v2966, 16
    %v3069 = vrot.slane %v3067, 5
    %v3070 = vsel %vm611, %v3065, %v3069
    %v3072 = vshrl.u32 %v2967, 16
    %v3074 = vrot.slane %v3072, 4
    %v3075 = vshll.u32 %v2967, 16
    %v3077 = vrot.slane %v3075, 5
    %v3078 = vor.u32 %v3074, %v3077
    %v3079 = vrot.slane %v3078, 4
    %v3081 = vshll.u32 %v2968, 16
    %v3083 = vrot.slane %v3081, 5
    %v3084 = vsel %vm611, %v3079, %v3083
    %v3086 = vshrl.u32 %v2969, 16
    %v3088 = vrot.slane %v3086, 4
    %v3089 = vshll.u32 %v2969, 16
    %v3091 = vrot.slane %v3089, 5
    %v3092 = vor.u32 %v3088, %v3091
    %v3093 = vrot.slane %v3092, 4
    %v3095 = vshll.u32 %v2970, 16
    %v3097 = vrot.slane %v3095, 5
    %v3098 = vsel %vm611, %v3093, %v3097
    %v3100 = vshrl.u32 %v2971, 16
    %v3102 = vrot.slane %v3100, 4
    %v3103 = vshll.u32 %v2971, 16
    %v3105 = vrot.slane %v3103, 5
    %v3106 = vor.u32 %v3102, %v3105
    %v3107 = vrot.slane %v3106, 4
    %v3109 = vshll.u32 %v2972, 16
    %v3111 = vrot.slane %v3109, 5
    %v3112 = vsel %vm611, %v3107, %v3111
    %v3114 = vshrl.u32 %v2973, 16
    %v3116 = vrot.slane %v3114, 4
    %v3117 = vshll.u32 %v2973, 16
    %v3119 = vrot.slane %v3117, 5
    %v3120 = vor.u32 %v3116, %v3119
    %v3121 = vrot.slane %v3120, 4
    %v3123 = vshll.u32 %v2974, 16
    %v3125 = vrot.slane %v3123, 5
    %v3126 = vsel %vm611, %v3121, %v3125
    %v3128 = vshrl.u32 %v2975, 16
    %v3130 = vrot.slane %v3128, 4
    %v3131 = vshll.u32 %v2975, 16
    %v3133 = vrot.slane %v3131, 5
    %v3134 = vor.u32 %v3130, %v3133
    %v3135 = vrot.slane %v3134, 4
    %v3137 = vshll.u32 %v2976, 16
    %v3139 = vrot.slane %v3137, 5
    %v3140 = vsel %vm611, %v3135, %v3139
    %v3142 = vshrl.u32 %v2977, 16
    %v3144 = vrot.slane %v3142, 4
    %v3145 = vshll.u32 %v2977, 16
    %v3147 = vrot.slane %v3145, 5
    %v3148 = vor.u32 %v3144, %v3147
    %v3149 = vrot.slane %v3148, 4
    %v3151 = vshll.u32 %v2978, 16
    %v3153 = vrot.slane %v3151, 5
    %v3154 = vsel %vm611, %v3149, %v3153
    %v3156 = vshrl.u32 %v2979, 16
    %v3158 = vrot.slane %v3156, 4
    %v3159 = vshll.u32 %v2979, 16
    %v3161 = vrot.slane %v3159, 5
    %v3162 = vor.u32 %v3158, %v3161
    %v3163 = vrot.slane %v3162, 4
    %v3165 = vshll.u32 %v2980, 16
    %v3167 = vrot.slane %v3165, 5
    %v3168 = vsel %vm611, %v3163, %v3167
    %v3170 = vshrl.u32 %v2981, 16
    %v3172 = vrot.slane %v3170, 4
    %v3173 = vshll.u32 %v2981, 16
    %v3175 = vrot.slane %v3173, 5
    %v3176 = vor.u32 %v3172, %v3175
    %v3177 = vrot.slane %v3176, 4
    %v3179 = vshll.u32 %v2982, 16
    %v3181 = vrot.slane %v3179, 5
    %v3182 = vsel %vm611, %v3177, %v3181
    %v3184 = vshrl.u32 %v2983, 16
    %v3186 = vrot.slane %v3184, 4
    %v3187 = vshll.u32 %v2983, 16
    %v3189 = vrot.slane %v3187, 5
    %v3190 = vor.u32 %v3186, %v3189
    %v3191 = vrot.slane %v3190, 4
    %v3193 = vshll.u32 %v2984, 16
    %v3195 = vrot.slane %v3193, 5
    %v3196 = vsel %vm611, %v3191, %v3195
    %v3198 = vshrl.u32 %v2985, 16
    %v3200 = vrot.slane %v3198, 4
    %v3201 = vshll.u32 %v2985, 16
    %v3203 = vrot.slane %v3201, 5
    %v3204 = vor.u32 %v3200, %v3203
    %v3205 = vrot.slane %v3204, 4
    %v3207 = vshll.u32 %v2986, 16
    %v3209 = vrot.slane %v3207, 5
    %v3210 = vsel %vm611, %v3205, %v3209
    %v3211 = vunpack.c.l.b16 %v3000
    %v3212 = vunpack.c.l.b16 %v3014
    %v3213 = vunpack.c.l.b16 %v3028
    %v3214 = vunpack.c.l.b16 %v3042
    %v3215 = vunpack.c.l.b16 %v3056
    %v3216 = vunpack.c.l.b16 %v3070
    %v3217 = vunpack.c.l.b16 %v3084
    %v3218 = vunpack.c.l.b16 %v3098
    %v3219 = vunpack.c.l.b16 %v3112
    %v3220 = vunpack.c.l.b16 %v3126
    %v3221 = vunpack.c.l.b16 %v3140
    %v3222 = vunpack.c.l.b16 %v3154
    %v3223 = vunpack.c.l.b16 %v3168
    %v3224 = vunpack.c.l.b16 %v3182
    %v3225 = vunpack.c.l.b16 %v3196
    %v3226 = vunpack.c.l.b16 %v3210
    %v3227 = vpack.c.b16 %v3212, %v3211
    %v3228 = vpack.c.b16 %v3214, %v3213
    %v3229 = vpack.c.b16 %v3216, %v3215
    %v3230 = vpack.c.b16 %v3218, %v3217
    %v3231 = vpack.c.b16 %v3220, %v3219
    %v3232 = vpack.c.b16 %v3222, %v3221
    %v3233 = vpack.c.b16 %v3224, %v3223
    %v3234 = vpack.c.b16 %v3226, %v3225
    %3235 = vrot.lane.b32.xlu0 %v3227, 4
    %v3236 = vpop.permute.xlu0 %3235
    %3237 = vrot.lane.b32.xlu0 %v3228, 4
    %v3238 = vpop.permute.xlu0 %3237
    %3239 = vrot.lane.b32.xlu0 %v3229, 4
    %v3240 = vpop.permute.xlu0 %3239
    %3241 = vrot.lane.b32.xlu0 %v3230, 4
    %v3242 = vpop.permute.xlu0 %3241
    %3243 = vrot.lane.b32.xlu0 %v3231, 4
    %v3244 = vpop.permute.xlu0 %3243
    %3245 = vrot.lane.b32.xlu0 %v3232, 4
    %v3246 = vpop.permute.xlu0 %3245
    %3247 = vrot.lane.b32.xlu0 %v3233, 4
    %v3248 = vpop.permute.xlu0 %3247
    %3249 = vrot.lane.b32.xlu0 %v3234, 4
    %v3250 = vpop.permute.xlu0 %3249
    %vm3259 = vcmask 64544
    %3260 = vst.msk [vmem:[#allocation5] sm:$0xff] %vm3259, %v3236
    %3261 = vst.msk [vmem:[#allocation5 + $0x8] sm:$0xff] %vm3259, %v3238
    %3262 = vst.msk [vmem:[#allocation5 + $0x10] sm:$0xff] %vm3259, %v3240
    %3263 = vst.msk [vmem:[#allocation5 + $0x18] sm:$0xff] %vm3259, %v3242
    %3264 = vst.msk [vmem:[#allocation5 + $0x20] sm:$0xff] %vm3259, %v3244
    %3265 = vst.msk [vmem:[#allocation5 + $0x28] sm:$0xff] %vm3259, %v3246
    %3266 = vst.msk [vmem:[#allocation5 + $0x30] sm:$0xff] %vm3259, %v3248
    %3267 = vst.msk [vmem:[#allocation5 + $0x38] sm:$0xff] %vm3259, %v3250
    %v3268 = vld [vmem:[#allocation3] sm:$0xe]
    %v3269 = vld [vmem:[#allocation3 + $0x4] sm:$0x1]
    %v3270 = vld [vmem:[#allocation3 + $0x8] sm:$0xe]
    %v3271 = vld [vmem:[#allocation3 + $0xc] sm:$0x1]
    %v3272 = vld [vmem:[#allocation3 + $0x10] sm:$0xe]
    %v3273 = vld [vmem:[#allocation3 + $0x14] sm:$0x1]
    %v3274 = vld [vmem:[#allocation3 + $0x18] sm:$0xe]
    %v3275 = vld [vmem:[#allocation3 + $0x1c] sm:$0x1]
    %v3276 = vld [vmem:[#allocation3 + $0x20] sm:$0xe]
    %v3277 = vld [vmem:[#allocation3 + $0x24] sm:$0x1]
    %v3278 = vld [vmem:[#allocation3 + $0x28] sm:$0xe]
    %v3279 = vld [vmem:[#allocation3 + $0x2c] sm:$0x1]
    %v3280 = vld [vmem:[#allocation3 + $0x30] sm:$0xe]
    %v3281 = vld [vmem:[#allocation3 + $0x34] sm:$0x1]
    %v3282 = vld [vmem:[#allocation3 + $0x38] sm:$0xe]
    %v3283 = vld [vmem:[#allocation3 + $0x3c] sm:$0x1]
    %v3284 = vld [vmem:[#allocation3 + $0x50] sm:$0xe]
    %v3285 = vld [vmem:[#allocation3 + $0x54] sm:$0x1]
    %v3286 = vld [vmem:[#allocation3 + $0x58] sm:$0xe]
    %v3287 = vld [vmem:[#allocation3 + $0x5c] sm:$0x1]
    %v3288 = vld [vmem:[#allocation3 + $0x60] sm:$0xe]
    %v3289 = vld [vmem:[#allocation3 + $0x64] sm:$0x1]
    %v3290 = vld [vmem:[#allocation3 + $0x68] sm:$0xe]
    %v3291 = vld [vmem:[#allocation3 + $0x6c] sm:$0x1]
    %v3292 = vld [vmem:[#allocation3 + $0x70] sm:$0xe]
    %v3293 = vld [vmem:[#allocation3 + $0x74] sm:$0x1]
    %v3294 = vld [vmem:[#allocation3 + $0x78] sm:$0xe]
    %v3295 = vld [vmem:[#allocation3 + $0x7c] sm:$0x1]
    %v3296 = vld [vmem:[#allocation3 + $0x80] sm:$0xe]
    %v3297 = vld [vmem:[#allocation3 + $0x84] sm:$0x1]
    %v3298 = vld [vmem:[#allocation3 + $0x88] sm:$0xe]
    %v3299 = vld [vmem:[#allocation3 + $0x8c] sm:$0x1]
    %v3332 = vrot.slane %v3268, 5
    %v3333 = vrot.slane %v3332, 4
    %v3334 = vrot.slane %v3269, 5
    %v3335 = vsel %vm959, %v3333, %v3334
    %v3336 = vrot.slane %v3270, 5
    %v3337 = vrot.slane %v3336, 4
    %v3338 = vrot.slane %v3271, 5
    %v3339 = vsel %vm959, %v3337, %v3338
    %v3340 = vrot.slane %v3272, 5
    %v3341 = vrot.slane %v3340, 4
    %v3342 = vrot.slane %v3273, 5
    %v3343 = vsel %vm959, %v3341, %v3342
    %v3344 = vrot.slane %v3274, 5
    %v3345 = vrot.slane %v3344, 4
    %v3346 = vrot.slane %v3275, 5
    %v3347 = vsel %vm959, %v3345, %v3346
    %v3348 = vrot.slane %v3276, 5
    %v3349 = vrot.slane %v3348, 4
    %v3350 = vrot.slane %v3277, 5
    %v3351 = vsel %vm959, %v3349, %v3350
    %v3352 = vrot.slane %v3278, 5
    %v3353 = vrot.slane %v3352, 4
    %v3354 = vrot.slane %v3279, 5
    %v3355 = vsel %vm959, %v3353, %v3354
    %v3356 = vrot.slane %v3280, 5
    %v3357 = vrot.slane %v3356, 4
    %v3358 = vrot.slane %v3281, 5
    %v3359 = vsel %vm959, %v3357, %v3358
    %v3360 = vrot.slane %v3282, 5
    %v3361 = vrot.slane %v3360, 4
    %v3362 = vrot.slane %v3283, 5
    %v3363 = vsel %vm959, %v3361, %v3362
    %v3364 = vrot.slane %v3284, 5
    %v3365 = vrot.slane %v3364, 4
    %v3366 = vrot.slane %v3285, 5
    %v3367 = vsel %vm959, %v3365, %v3366
    %v3368 = vrot.slane %v3286, 5
    %v3369 = vrot.slane %v3368, 4
    %v3370 = vrot.slane %v3287, 5
    %v3371 = vsel %vm959, %v3369, %v3370
    %v3372 = vrot.slane %v3288, 5
    %v3373 = vrot.slane %v3372, 4
    %v3374 = vrot.slane %v3289, 5
    %v3375 = vsel %vm959, %v3373, %v3374
    %v3376 = vrot.slane %v3290, 5
    %v3377 = vrot.slane %v3376, 4
    %v3378 = vrot.slane %v3291, 5
    %v3379 = vsel %vm959, %v3377, %v3378
    %v3380 = vrot.slane %v3292, 5
    %v3381 = vrot.slane %v3380, 4
    %v3382 = vrot.slane %v3293, 5
    %v3383 = vsel %vm959, %v3381, %v3382
    %v3384 = vrot.slane %v3294, 5
    %v3385 = vrot.slane %v3384, 4
    %v3386 = vrot.slane %v3295, 5
    %v3387 = vsel %vm959, %v3385, %v3386
    %v3388 = vrot.slane %v3296, 5
    %v3389 = vrot.slane %v3388, 4
    %v3390 = vrot.slane %v3297, 5
    %v3391 = vsel %vm959, %v3389, %v3390
    %v3392 = vrot.slane %v3298, 5
    %v3393 = vrot.slane %v3392, 4
    %v3394 = vrot.slane %v3299, 5
    %v3395 = vsel %vm959, %v3393, %v3394
    %v3396 = vunpack.c.l.b16 %v3335
    %v3397 = vunpack.c.l.b16 %v3339
    %v3398 = vunpack.c.l.b16 %v3343
    %v3399 = vunpack.c.l.b16 %v3347
    %v3400 = vunpack.c.l.b16 %v3351
    %v3401 = vunpack.c.l.b16 %v3355
    %v3402 = vunpack.c.l.b16 %v3359
    %v3403 = vunpack.c.l.b16 %v3363
    %v3404 = vunpack.c.l.b16 %v3367
    %v3405 = vunpack.c.l.b16 %v3371
    %v3406 = vunpack.c.l.b16 %v3375
    %v3407 = vunpack.c.l.b16 %v3379
    %v3408 = vunpack.c.l.b16 %v3383
    %v3409 = vunpack.c.l.b16 %v3387
    %v3410 = vunpack.c.l.b16 %v3391
    %v3411 = vunpack.c.l.b16 %v3395
    %v3412 = vpack.c.b16 %v3397, %v3396
    %v3413 = vpack.c.b16 %v3399, %v3398
    %v3414 = vpack.c.b16 %v3401, %v3400
    %v3415 = vpack.c.b16 %v3403, %v3402
    %v3416 = vpack.c.b16 %v3405, %v3404
    %v3417 = vpack.c.b16 %v3407, %v3406
    %v3418 = vpack.c.b16 %v3409, %v3408
    %v3419 = vpack.c.b16 %v3411, %v3410
    %3420 = vrot.lane.b32.xlu0 %v3412, 8
    %v3421 = vpop.permute.xlu0 %3420
    %3422 = vrot.lane.b32.xlu0 %v3413, 8
    %v3423 = vpop.permute.xlu0 %3422
    %3424 = vrot.lane.b32.xlu0 %v3414, 8
    %v3425 = vpop.permute.xlu0 %3424
    %3426 = vrot.lane.b32.xlu0 %v3415, 8
    %v3427 = vpop.permute.xlu0 %3426
    %3428 = vrot.lane.b32.xlu0 %v3416, 8
    %v3429 = vpop.permute.xlu0 %3428
    %3430 = vrot.lane.b32.xlu0 %v3417, 8
    %v3431 = vpop.permute.xlu0 %3430
    %3432 = vrot.lane.b32.xlu0 %v3418, 8
    %v3433 = vpop.permute.xlu0 %3432
    %3434 = vrot.lane.b32.xlu0 %v3419, 8
    %v3435 = vpop.permute.xlu0 %3434
    %vm3444 = vcmask 97344
    %3445 = vst.msk [vmem:[#allocation5] sm:$0xff] %vm3444, %v3421
    %3446 = vst.msk [vmem:[#allocation5 + $0x8] sm:$0xff] %vm3444, %v3423
    %3447 = vst.msk [vmem:[#allocation5 + $0x10] sm:$0xff] %vm3444, %v3425
    %3448 = vst.msk [vmem:[#allocation5 + $0x18] sm:$0xff] %vm3444, %v3427
    %3449 = vst.msk [vmem:[#allocation5 + $0x20] sm:$0xff] %vm3444, %v3429
    %3450 = vst.msk [vmem:[#allocation5 + $0x28] sm:$0xff] %vm3444, %v3431
    %3451 = vst.msk [vmem:[#allocation5 + $0x30] sm:$0xff] %vm3444, %v3433
    %3452 = vst.msk [vmem:[#allocation5 + $0x38] sm:$0xff] %vm3444, %v3435
    %v3453 = vld [vmem:[%s2783] sm:$0xf]
    %v3454 = vld [vmem:[%s2783 + $0x8] sm:$0xf]
    %v3455 = vld [vmem:[%s2783 + $0x10] sm:$0xf]
    %v3456 = vld [vmem:[%s2783 + $0x18] sm:$0xf]
    %v3457 = vld [vmem:[%s2783 + $0x20] sm:$0xf]
    %v3458 = vld [vmem:[%s2783 + $0x28] sm:$0xf]
    %v3459 = vld [vmem:[%s2783 + $0x30] sm:$0xf]
    %v3460 = vld [vmem:[%s2783 + $0x38] sm:$0xf]
    %v3461 = vld [vmem:[%s2783 + $0x50] sm:$0xf]
    %v3462 = vld [vmem:[%s2783 + $0x58] sm:$0xf]
    %v3463 = vld [vmem:[%s2783 + $0x60] sm:$0xf]
    %v3464 = vld [vmem:[%s2783 + $0x68] sm:$0xf]
    %v3465 = vld [vmem:[%s2783 + $0x70] sm:$0xf]
    %v3466 = vld [vmem:[%s2783 + $0x78] sm:$0xf]
    %v3467 = vld [vmem:[%s2783 + $0x80] sm:$0xf]
    %v3468 = vld [vmem:[%s2783 + $0x88] sm:$0xf]
    %v3485 = vunpack.c.l.b16 %v3453
    %v3486 = vunpack.c.l.b16 %v3454
    %v3487 = vunpack.c.l.b16 %v3455
    %v3488 = vunpack.c.l.b16 %v3456
    %v3489 = vunpack.c.l.b16 %v3457
    %v3490 = vunpack.c.l.b16 %v3458
    %v3491 = vunpack.c.l.b16 %v3459
    %v3492 = vunpack.c.l.b16 %v3460
    %v3493 = vunpack.c.l.b16 %v3461
    %v3494 = vunpack.c.l.b16 %v3462
    %v3495 = vunpack.c.l.b16 %v3463
    %v3496 = vunpack.c.l.b16 %v3464
    %v3497 = vunpack.c.l.b16 %v3465
    %v3498 = vunpack.c.l.b16 %v3466
    %v3499 = vunpack.c.l.b16 %v3467
    %v3500 = vunpack.c.l.b16 %v3468
    %v3501 = vpack.c.b16 %v3486, %v3485
    %v3502 = vpack.c.b16 %v3488, %v3487
    %v3503 = vpack.c.b16 %v3490, %v3489
    %v3504 = vpack.c.b16 %v3492, %v3491
    %v3505 = vpack.c.b16 %v3494, %v3493
    %v3506 = vpack.c.b16 %v3496, %v3495
    %v3507 = vpack.c.b16 %v3498, %v3497
    %v3508 = vpack.c.b16 %v3500, %v3499
    %3509 = vrot.lane.b32.xlu0 %v3501, 12
    %v3510 = vpop.permute.xlu0 %3509
    %3511 = vrot.lane.b32.xlu0 %v3502, 12
    %v3512 = vpop.permute.xlu0 %3511
    %3513 = vrot.lane.b32.xlu0 %v3503, 12
    %v3514 = vpop.permute.xlu0 %3513
    %3515 = vrot.lane.b32.xlu0 %v3504, 12
    %v3516 = vpop.permute.xlu0 %3515
    %3517 = vrot.lane.b32.xlu0 %v3505, 12
    %v3518 = vpop.permute.xlu0 %3517
    %3519 = vrot.lane.b32.xlu0 %v3506, 12
    %v3520 = vpop.permute.xlu0 %3519
    %3521 = vrot.lane.b32.xlu0 %v3507, 12
    %v3522 = vpop.permute.xlu0 %3521
    %3523 = vrot.lane.b32.xlu0 %v3508, 12
    %v3524 = vpop.permute.xlu0 %3523
    %vm3533 = vcmask 130144
    %3534 = vst.msk [vmem:[#allocation5] sm:$0xff] %vm3533, %v3510
    %3535 = vst.msk [vmem:[#allocation5 + $0x8] sm:$0xff] %vm3533, %v3512
    %3536 = vst.msk [vmem:[#allocation5 + $0x10] sm:$0xff] %vm3533, %v3514
    %3537 = vst.msk [vmem:[#allocation5 + $0x18] sm:$0xff] %vm3533, %v3516
    %3538 = vst.msk [vmem:[#allocation5 + $0x20] sm:$0xff] %vm3533, %v3518
    %3539 = vst.msk [vmem:[#allocation5 + $0x28] sm:$0xff] %vm3533, %v3520
    %3540 = vst.msk [vmem:[#allocation5 + $0x30] sm:$0xff] %vm3533, %v3522
    %3541 = vst.msk [vmem:[#allocation5 + $0x38] sm:$0xff] %vm3533, %v3524
    %v3542 = vld [vmem:[%s2783] sm:$0xf]
    %v3543 = vld [vmem:[%s2783 + $0x4] sm:$0x1]
    %v3544 = vld [vmem:[%s2783 + $0x8] sm:$0xf]
    %v3545 = vld [vmem:[%s2783 + $0xc] sm:$0x1]
    %v3546 = vld [vmem:[%s2783 + $0x10] sm:$0xf]
    %v3547 = vld [vmem:[%s2783 + $0x14] sm:$0x1]
    %v3548 = vld [vmem:[%s2783 + $0x18] sm:$0xf]
    %v3549 = vld [vmem:[%s2783 + $0x1c] sm:$0x1]
    %v3550 = vld [vmem:[%s2783 + $0x20] sm:$0xf]
    %v3551 = vld [vmem:[%s2783 + $0x24] sm:$0x1]
    %v3552 = vld [vmem:[%s2783 + $0x28] sm:$0xf]
    %v3553 = vld [vmem:[%s2783 + $0x2c] sm:$0x1]
    %v3554 = vld [vmem:[%s2783 + $0x30] sm:$0xf]
    %v3555 = vld [vmem:[%s2783 + $0x34] sm:$0x1]
    %v3556 = vld [vmem:[%s2783 + $0x38] sm:$0xf]
    %v3557 = vld [vmem:[%s2783 + $0x3c] sm:$0x1]
    %v3558 = vld [vmem:[%s2783 + $0x50] sm:$0xf]
    %v3559 = vld [vmem:[%s2783 + $0x54] sm:$0x1]
    %v3560 = vld [vmem:[%s2783 + $0x58] sm:$0xf]
    %v3561 = vld [vmem:[%s2783 + $0x5c] sm:$0x1]
    %v3562 = vld [vmem:[%s2783 + $0x60] sm:$0xf]
    %v3563 = vld [vmem:[%s2783 + $0x64] sm:$0x1]
    %v3564 = vld [vmem:[%s2783 + $0x68] sm:$0xf]
    %v3565 = vld [vmem:[%s2783 + $0x6c] sm:$0x1]
    %v3566 = vld [vmem:[%s2783 + $0x70] sm:$0xf]
    %v3567 = vld [vmem:[%s2783 + $0x74] sm:$0x1]
    %v3568 = vld [vmem:[%s2783 + $0x78] sm:$0xf]
    %v3569 = vld [vmem:[%s2783 + $0x7c] sm:$0x1]
    %v3570 = vld [vmem:[%s2783 + $0x80] sm:$0xf]
    %v3571 = vld [vmem:[%s2783 + $0x84] sm:$0x1]
    %v3572 = vld [vmem:[%s2783 + $0x88] sm:$0xf]
    %v3573 = vld [vmem:[%s2783 + $0x8c] sm:$0x1]
    %v3575 = vshrl.u32 %v3542, 16
    %v3577 = vrot.slane %v3575, 4
    %v3578 = vshll.u32 %v3542, 16
    %v3580 = vrot.slane %v3578, 5
    %v3581 = vor.u32 %v3577, %v3580
    %v3582 = vrot.slane %v3581, 4
    %v3584 = vshll.u32 %v3543, 16
    %v3586 = vrot.slane %v3584, 5
    %v3587 = vsel %vm611, %v3582, %v3586
    %v3589 = vshrl.u32 %v3544, 16
    %v3591 = vrot.slane %v3589, 4
    %v3592 = vshll.u32 %v3544, 16
    %v3594 = vrot.slane %v3592, 5
    %v3595 = vor.u32 %v3591, %v3594
    %v3596 = vrot.slane %v3595, 4
    %v3598 = vshll.u32 %v3545, 16
    %v3600 = vrot.slane %v3598, 5
    %v3601 = vsel %vm611, %v3596, %v3600
    %v3603 = vshrl.u32 %v3546, 16
    %v3605 = vrot.slane %v3603, 4
    %v3606 = vshll.u32 %v3546, 16
    %v3608 = vrot.slane %v3606, 5
    %v3609 = vor.u32 %v3605, %v3608
    %v3610 = vrot.slane %v3609, 4
    %v3612 = vshll.u32 %v3547, 16
    %v3614 = vrot.slane %v3612, 5
    %v3615 = vsel %vm611, %v3610, %v3614
    %v3617 = vshrl.u32 %v3548, 16
    %v3619 = vrot.slane %v3617, 4
    %v3620 = vshll.u32 %v3548, 16
    %v3622 = vrot.slane %v3620, 5
    %v3623 = vor.u32 %v3619, %v3622
    %v3624 = vrot.slane %v3623, 4
    %v3626 = vshll.u32 %v3549, 16
    %v3628 = vrot.slane %v3626, 5
    %v3629 = vsel %vm611, %v3624, %v3628
    %v3631 = vshrl.u32 %v3550, 16
    %v3633 = vrot.slane %v3631, 4
    %v3634 = vshll.u32 %v3550, 16
    %v3636 = vrot.slane %v3634, 5
    %v3637 = vor.u32 %v3633, %v3636
    %v3638 = vrot.slane %v3637, 4
    %v3640 = vshll.u32 %v3551, 16
    %v3642 = vrot.slane %v3640, 5
    %v3643 = vsel %vm611, %v3638, %v3642
    %v3645 = vshrl.u32 %v3552, 16
    %v3647 = vrot.slane %v3645, 4
    %v3648 = vshll.u32 %v3552, 16
    %v3650 = vrot.slane %v3648, 5
    %v3651 = vor.u32 %v3647, %v3650
    %v3652 = vrot.slane %v3651, 4
    %v3654 = vshll.u32 %v3553, 16
    %v3656 = vrot.slane %v3654, 5
    %v3657 = vsel %vm611, %v3652, %v3656
    %v3659 = vshrl.u32 %v3554, 16
    %v3661 = vrot.slane %v3659, 4
    %v3662 = vshll.u32 %v3554, 16
    %v3664 = vrot.slane %v3662, 5
    %v3665 = vor.u32 %v3661, %v3664
    %v3666 = vrot.slane %v3665, 4
    %v3668 = vshll.u32 %v3555, 16
    %v3670 = vrot.slane %v3668, 5
    %v3671 = vsel %vm611, %v3666, %v3670
    %v3673 = vshrl.u32 %v3556, 16
    %v3675 = vrot.slane %v3673, 4
    %v3676 = vshll.u32 %v3556, 16
    %v3678 = vrot.slane %v3676, 5
    %v3679 = vor.u32 %v3675, %v3678
    %v3680 = vrot.slane %v3679, 4
    %v3682 = vshll.u32 %v3557, 16
    %v3684 = vrot.slane %v3682, 5
    %v3685 = vsel %vm611, %v3680, %v3684
    %v3687 = vshrl.u32 %v3558, 16
    %v3689 = vrot.slane %v3687, 4
    %v3690 = vshll.u32 %v3558, 16
    %v3692 = vrot.slane %v3690, 5
    %v3693 = vor.u32 %v3689, %v3692
    %v3694 = vrot.slane %v3693, 4
    %v3696 = vshll.u32 %v3559, 16
    %v3698 = vrot.slane %v3696, 5
    %v3699 = vsel %vm611, %v3694, %v3698
    %v3701 = vshrl.u32 %v3560, 16
    %v3703 = vrot.slane %v3701, 4
    %v3704 = vshll.u32 %v3560, 16
    %v3706 = vrot.slane %v3704, 5
    %v3707 = vor.u32 %v3703, %v3706
    %v3708 = vrot.slane %v3707, 4
    %v3710 = vshll.u32 %v3561, 16
    %v3712 = vrot.slane %v3710, 5
    %v3713 = vsel %vm611, %v3708, %v3712
    %v3715 = vshrl.u32 %v3562, 16
    %v3717 = vrot.slane %v3715, 4
    %v3718 = vshll.u32 %v3562, 16
    %v3720 = vrot.slane %v3718, 5
    %v3721 = vor.u32 %v3717, %v3720
    %v3722 = vrot.slane %v3721, 4
    %v3724 = vshll.u32 %v3563, 16
    %v3726 = vrot.slane %v3724, 5
    %v3727 = vsel %vm611, %v3722, %v3726
    %v3729 = vshrl.u32 %v3564, 16
    %v3731 = vrot.slane %v3729, 4
    %v3732 = vshll.u32 %v3564, 16
    %v3734 = vrot.slane %v3732, 5
    %v3735 = vor.u32 %v3731, %v3734
    %v3736 = vrot.slane %v3735, 4
    %v3738 = vshll.u32 %v3565, 16
    %v3740 = vrot.slane %v3738, 5
    %v3741 = vsel %vm611, %v3736, %v3740
    %v3743 = vshrl.u32 %v3566, 16
    %v3745 = vrot.slane %v3743, 4
    %v3746 = vshll.u32 %v3566, 16
    %v3748 = vrot.slane %v3746, 5
    %v3749 = vor.u32 %v3745, %v3748
    %v3750 = vrot.slane %v3749, 4
    %v3752 = vshll.u32 %v3567, 16
    %v3754 = vrot.slane %v3752, 5
    %v3755 = vsel %vm611, %v3750, %v3754
    %v3757 = vshrl.u32 %v3568, 16
    %v3759 = vrot.slane %v3757, 4
    %v3760 = vshll.u32 %v3568, 16
    %v3762 = vrot.slane %v3760, 5
    %v3763 = vor.u32 %v3759, %v3762
    %v3764 = vrot.slane %v3763, 4
    %v3766 = vshll.u32 %v3569, 16
    %v3768 = vrot.slane %v3766, 5
    %v3769 = vsel %vm611, %v3764, %v3768
    %v3771 = vshrl.u32 %v3570, 16
    %v3773 = vrot.slane %v3771, 4
    %v3774 = vshll.u32 %v3570, 16
    %v3776 = vrot.slane %v3774, 5
    %v3777 = vor.u32 %v3773, %v3776
    %v3778 = vrot.slane %v3777, 4
    %v3780 = vshll.u32 %v3571, 16
    %v3782 = vrot.slane %v3780, 5
    %v3783 = vsel %vm611, %v3778, %v3782
    %v3785 = vshrl.u32 %v3572, 16
    %v3787 = vrot.slane %v3785, 4
    %v3788 = vshll.u32 %v3572, 16
    %v3790 = vrot.slane %v3788, 5
    %v3791 = vor.u32 %v3787, %v3790
    %v3792 = vrot.slane %v3791, 4
    %v3794 = vshll.u32 %v3573, 16
    %v3796 = vrot.slane %v3794, 5
    %v3797 = vsel %vm611, %v3792, %v3796
    %v3798 = vunpack.c.l.b16 %v3587
    %v3799 = vunpack.c.l.b16 %v3601
    %v3800 = vunpack.c.l.b16 %v3615
    %v3801 = vunpack.c.l.b16 %v3629
    %v3802 = vunpack.c.l.b16 %v3643
    %v3803 = vunpack.c.l.b16 %v3657
    %v3804 = vunpack.c.l.b16 %v3671
    %v3805 = vunpack.c.l.b16 %v3685
    %v3806 = vunpack.c.l.b16 %v3699
    %v3807 = vunpack.c.l.b16 %v3713
    %v3808 = vunpack.c.l.b16 %v3727
    %v3809 = vunpack.c.l.b16 %v3741
    %v3810 = vunpack.c.l.b16 %v3755
    %v3811 = vunpack.c.l.b16 %v3769
    %v3812 = vunpack.c.l.b16 %v3783
    %v3813 = vunpack.c.l.b16 %v3797
    %v3814 = vpack.c.b16 %v3799, %v3798
    %v3815 = vpack.c.b16 %v3801, %v3800
    %v3816 = vpack.c.b16 %v3803, %v3802
    %v3817 = vpack.c.b16 %v3805, %v3804
    %v3818 = vpack.c.b16 %v3807, %v3806
    %v3819 = vpack.c.b16 %v3809, %v3808
    %v3820 = vpack.c.b16 %v3811, %v3810
    %v3821 = vpack.c.b16 %v3813, %v3812
    %3822 = vrot.lane.b32.xlu0 %v3814, 16
    %v3823 = vpop.permute.xlu0 %3822
    %3824 = vrot.lane.b32.xlu0 %v3815, 16
    %v3825 = vpop.permute.xlu0 %3824
    %3826 = vrot.lane.b32.xlu0 %v3816, 16
    %v3827 = vpop.permute.xlu0 %3826
    %3828 = vrot.lane.b32.xlu0 %v3817, 16
    %v3829 = vpop.permute.xlu0 %3828
    %3830 = vrot.lane.b32.xlu0 %v3818, 16
    %v3831 = vpop.permute.xlu0 %3830
    %3832 = vrot.lane.b32.xlu0 %v3819, 16
    %v3833 = vpop.permute.xlu0 %3832
    %3834 = vrot.lane.b32.xlu0 %v3820, 16
    %v3835 = vpop.permute.xlu0 %3834
    %3836 = vrot.lane.b32.xlu0 %v3821, 16
    %v3837 = vpop.permute.xlu0 %3836
    %vm3846 = vcmask 162944
    %3847 = vst.msk [vmem:[#allocation5] sm:$0xff] %vm3846, %v3823
    %3848 = vst.msk [vmem:[#allocation5 + $0x8] sm:$0xff] %vm3846, %v3825
    %3849 = vst.msk [vmem:[#allocation5 + $0x10] sm:$0xff] %vm3846, %v3827
    %3850 = vst.msk [vmem:[#allocation5 + $0x18] sm:$0xff] %vm3846, %v3829
    %3851 = vst.msk [vmem:[#allocation5 + $0x20] sm:$0xff] %vm3846, %v3831
    %3852 = vst.msk [vmem:[#allocation5 + $0x28] sm:$0xff] %vm3846, %v3833
    %3853 = vst.msk [vmem:[#allocation5 + $0x30] sm:$0xff] %vm3846, %v3835
    %3854 = vst.msk [vmem:[#allocation5 + $0x38] sm:$0xff] %vm3846, %v3837
    %v3855 = vld [vmem:[%s2783] sm:$0xe]
    %v3856 = vld [vmem:[%s2783 + $0x4] sm:$0x1]
    %v3857 = vld [vmem:[%s2783 + $0x8] sm:$0xe]
    %v3858 = vld [vmem:[%s2783 + $0xc] sm:$0x1]
    %v3859 = vld [vmem:[%s2783 + $0x10] sm:$0xe]
    %v3860 = vld [vmem:[%s2783 + $0x14] sm:$0x1]
    %v3861 = vld [vmem:[%s2783 + $0x18] sm:$0xe]
    %v3862 = vld [vmem:[%s2783 + $0x1c] sm:$0x1]
    %v3863 = vld [vmem:[%s2783 + $0x20] sm:$0xe]
    %v3864 = vld [vmem:[%s2783 + $0x24] sm:$0x1]
    %v3865 = vld [vmem:[%s2783 + $0x28] sm:$0xe]
    %v3866 = vld [vmem:[%s2783 + $0x2c] sm:$0x1]
    %v3867 = vld [vmem:[%s2783 + $0x30] sm:$0xe]
    %v3868 = vld [vmem:[%s2783 + $0x34] sm:$0x1]
    %v3869 = vld [vmem:[%s2783 + $0x38] sm:$0xe]
    %v3870 = vld [vmem:[%s2783 + $0x3c] sm:$0x1]
    %v3871 = vld [vmem:[%s2783 + $0x50] sm:$0xe]
    %v3872 = vld [vmem:[%s2783 + $0x54] sm:$0x1]
    %v3873 = vld [vmem:[%s2783 + $0x58] sm:$0xe]
    %v3874 = vld [vmem:[%s2783 + $0x5c] sm:$0x1]
    %v3875 = vld [vmem:[%s2783 + $0x60] sm:$0xe]
    %v3876 = vld [vmem:[%s2783 + $0x64] sm:$0x1]
    %v3877 = vld [vmem:[%s2783 + $0x68] sm:$0xe]
    %v3878 = vld [vmem:[%s2783 + $0x6c] sm:$0x1]
    %v3879 = vld [vmem:[%s2783 + $0x70] sm:$0xe]
    %v3880 = vld [vmem:[%s2783 + $0x74] sm:$0x1]
    %v3881 = vld [vmem:[%s2783 + $0x78] sm:$0xe]
    %v3882 = vld [vmem:[%s2783 + $0x7c] sm:$0x1]
    %v3883 = vld [vmem:[%s2783 + $0x80] sm:$0xe]
    %v3884 = vld [vmem:[%s2783 + $0x84] sm:$0x1]
    %v3885 = vld [vmem:[%s2783 + $0x88] sm:$0xe]
    %v3886 = vld [vmem:[%s2783 + $0x8c] sm:$0x1]
    %v3919 = vrot.slane %v3855, 5
    %v3920 = vrot.slane %v3919, 4
    %v3921 = vrot.slane %v3856, 5
    %v3922 = vsel %vm959, %v3920, %v3921
    %v3923 = vrot.slane %v3857, 5
    %v3924 = vrot.slane %v3923, 4
    %v3925 = vrot.slane %v3858, 5
    %v3926 = vsel %vm959, %v3924, %v3925
    %v3927 = vrot.slane %v3859, 5
    %v3928 = vrot.slane %v3927, 4
    %v3929 = vrot.slane %v3860, 5
    %v3930 = vsel %vm959, %v3928, %v3929
    %v3931 = vrot.slane %v3861, 5
    %v3932 = vrot.slane %v3931, 4
    %v3933 = vrot.slane %v3862, 5
    %v3934 = vsel %vm959, %v3932, %v3933
    %v3935 = vrot.slane %v3863, 5
    %v3936 = vrot.slane %v3935, 4
    %v3937 = vrot.slane %v3864, 5
    %v3938 = vsel %vm959, %v3936, %v3937
    %v3939 = vrot.slane %v3865, 5
    %v3940 = vrot.slane %v3939, 4
    %v3941 = vrot.slane %v3866, 5
    %v3942 = vsel %vm959, %v3940, %v3941
    %v3943 = vrot.slane %v3867, 5
    %v3944 = vrot.slane %v3943, 4
    %v3945 = vrot.slane %v3868, 5
    %v3946 = vsel %vm959, %v3944, %v3945
    %v3947 = vrot.slane %v3869, 5
    %v3948 = vrot.slane %v3947, 4
    %v3949 = vrot.slane %v3870, 5
    %v3950 = vsel %vm959, %v3948, %v3949
    %v3951 = vrot.slane %v3871, 5
    %v3952 = vrot.slane %v3951, 4
    %v3953 = vrot.slane %v3872, 5
    %v3954 = vsel %vm959, %v3952, %v3953
    %v3955 = vrot.slane %v3873, 5
    %v3956 = vrot.slane %v3955, 4
    %v3957 = vrot.slane %v3874, 5
    %v3958 = vsel %vm959, %v3956, %v3957
    %v3959 = vrot.slane %v3875, 5
    %v3960 = vrot.slane %v3959, 4
    %v3961 = vrot.slane %v3876, 5
    %v3962 = vsel %vm959, %v3960, %v3961
    %v3963 = vrot.slane %v3877, 5
    %v3964 = vrot.slane %v3963, 4
    %v3965 = vrot.slane %v3878, 5
    %v3966 = vsel %vm959, %v3964, %v3965
    %v3967 = vrot.slane %v3879, 5
    %v3968 = vrot.slane %v3967, 4
    %v3969 = vrot.slane %v3880, 5
    %v3970 = vsel %vm959, %v3968, %v3969
    %v3971 = vrot.slane %v3881, 5
    %v3972 = vrot.slane %v3971, 4
    %v3973 = vrot.slane %v3882, 5
    %v3974 = vsel %vm959, %v3972, %v3973
    %v3975 = vrot.slane %v3883, 5
    %v3976 = vrot.slane %v3975, 4
    %v3977 = vrot.slane %v3884, 5
    %v3978 = vsel %vm959, %v3976, %v3977
    %v3979 = vrot.slane %v3885, 5
    %v3980 = vrot.slane %v3979, 4
    %v3981 = vrot.slane %v3886, 5
    %v3982 = vsel %vm959, %v3980, %v3981
    %v3983 = vunpack.c.l.b16 %v3922
    %v3984 = vunpack.c.l.b16 %v3926
    %v3985 = vunpack.c.l.b16 %v3930
    %v3986 = vunpack.c.l.b16 %v3934
    %v3987 = vunpack.c.l.b16 %v3938
    %v3988 = vunpack.c.l.b16 %v3942
    %v3989 = vunpack.c.l.b16 %v3946
    %v3990 = vunpack.c.l.b16 %v3950
    %v3991 = vunpack.c.l.b16 %v3954
    %v3992 = vunpack.c.l.b16 %v3958
    %v3993 = vunpack.c.l.b16 %v3962
    %v3994 = vunpack.c.l.b16 %v3966
    %v3995 = vunpack.c.l.b16 %v3970
    %v3996 = vunpack.c.l.b16 %v3974
    %v3997 = vunpack.c.l.b16 %v3978
    %v3998 = vunpack.c.l.b16 %v3982
    %v3999 = vpack.c.b16 %v3984, %v3983
    %v4000 = vpack.c.b16 %v3986, %v3985
    %v4001 = vpack.c.b16 %v3988, %v3987
    %v4002 = vpack.c.b16 %v3990, %v3989
    %v4003 = vpack.c.b16 %v3992, %v3991
    %v4004 = vpack.c.b16 %v3994, %v3993
    %v4005 = vpack.c.b16 %v3996, %v3995
    %v4006 = vpack.c.b16 %v3998, %v3997
    %4007 = vrot.lane.b32.xlu0 %v3999, 20
    %v4008 = vpop.permute.xlu0 %4007
    %4009 = vrot.lane.b32.xlu0 %v4000, 20
    %v4010 = vpop.permute.xlu0 %4009
    %4011 = vrot.lane.b32.xlu0 %v4001, 20
    %v4012 = vpop.permute.xlu0 %4011
    %4013 = vrot.lane.b32.xlu0 %v4002, 20
    %v4014 = vpop.permute.xlu0 %4013
    %4015 = vrot.lane.b32.xlu0 %v4003, 20
    %v4016 = vpop.permute.xlu0 %4015
    %4017 = vrot.lane.b32.xlu0 %v4004, 20
    %v4018 = vpop.permute.xlu0 %4017
    %4019 = vrot.lane.b32.xlu0 %v4005, 20
    %v4020 = vpop.permute.xlu0 %4019
    %4021 = vrot.lane.b32.xlu0 %v4006, 20
    %v4022 = vpop.permute.xlu0 %4021
    %vm4031 = vcmask 195744
    %4032 = vst.msk [vmem:[#allocation5] sm:$0xff] %vm4031, %v4008
    %4033 = vst.msk [vmem:[#allocation5 + $0x8] sm:$0xff] %vm4031, %v4010
    %4034 = vst.msk [vmem:[#allocation5 + $0x10] sm:$0xff] %vm4031, %v4012
    %4035 = vst.msk [vmem:[#allocation5 + $0x18] sm:$0xff] %vm4031, %v4014
    %4036 = vst.msk [vmem:[#allocation5 + $0x20] sm:$0xff] %vm4031, %v4016
    %4037 = vst.msk [vmem:[#allocation5 + $0x28] sm:$0xff] %vm4031, %v4018
    %4038 = vst.msk [vmem:[#allocation5 + $0x30] sm:$0xff] %vm4031, %v4020
    %4039 = vst.msk [vmem:[#allocation5 + $0x38] sm:$0xff] %vm4031, %v4022
    %s4040 = scalar_lea.vmem [#allocation3], 16
    %v4041 = vld [vmem:[%s4040] sm:$0xf]
    %v4042 = vld [vmem:[%s4040 + $0x8] sm:$0xf]
    %v4043 = vld [vmem:[%s4040 + $0x10] sm:$0xf]
    %v4044 = vld [vmem:[%s4040 + $0x18] sm:$0xf]
    %v4045 = vld [vmem:[%s4040 + $0x20] sm:$0xf]
    %v4046 = vld [vmem:[%s4040 + $0x28] sm:$0xf]
    %v4047 = vld [vmem:[%s4040 + $0x30] sm:$0xf]
    %v4048 = vld [vmem:[%s4040 + $0x38] sm:$0xf]
    %v4049 = vld [vmem:[%s4040 + $0x50] sm:$0xf]
    %v4050 = vld [vmem:[%s4040 + $0x58] sm:$0xf]
    %v4051 = vld [vmem:[%s4040 + $0x60] sm:$0xf]
    %v4052 = vld [vmem:[%s4040 + $0x68] sm:$0xf]
    %v4053 = vld [vmem:[%s4040 + $0x70] sm:$0xf]
    %v4054 = vld [vmem:[%s4040 + $0x78] sm:$0xf]
    %v4055 = vld [vmem:[%s4040 + $0x80] sm:$0xf]
    %v4056 = vld [vmem:[%s4040 + $0x88] sm:$0xf]
    %v4073 = vunpack.c.l.b16 %v4041
    %v4074 = vunpack.c.l.b16 %v4042
    %v4075 = vunpack.c.l.b16 %v4043
    %v4076 = vunpack.c.l.b16 %v4044
    %v4077 = vunpack.c.l.b16 %v4045
    %v4078 = vunpack.c.l.b16 %v4046
    %v4079 = vunpack.c.l.b16 %v4047
    %v4080 = vunpack.c.l.b16 %v4048
    %v4081 = vunpack.c.l.b16 %v4049
    %v4082 = vunpack.c.l.b16 %v4050
    %v4083 = vunpack.c.l.b16 %v4051
    %v4084 = vunpack.c.l.b16 %v4052
    %v4085 = vunpack.c.l.b16 %v4053
    %v4086 = vunpack.c.l.b16 %v4054
    %v4087 = vunpack.c.l.b16 %v4055
    %v4088 = vunpack.c.l.b16 %v4056
    %v4089 = vpack.c.b16 %v4074, %v4073
    %v4090 = vpack.c.b16 %v4076, %v4075
    %v4091 = vpack.c.b16 %v4078, %v4077
    %v4092 = vpack.c.b16 %v4080, %v4079
    %v4093 = vpack.c.b16 %v4082, %v4081
    %v4094 = vpack.c.b16 %v4084, %v4083
    %v4095 = vpack.c.b16 %v4086, %v4085
    %v4096 = vpack.c.b16 %v4088, %v4087
    %4097 = vrot.lane.b32.xlu0 %v4089, 24
    %v4098 = vpop.permute.xlu0 %4097
    %4099 = vrot.lane.b32.xlu0 %v4090, 24
    %v4100 = vpop.permute.xlu0 %4099
    %4101 = vrot.lane.b32.xlu0 %v4091, 24
    %v4102 = vpop.permute.xlu0 %4101
    %4103 = vrot.lane.b32.xlu0 %v4092, 24
    %v4104 = vpop.permute.xlu0 %4103
    %4105 = vrot.lane.b32.xlu0 %v4093, 24
    %v4106 = vpop.permute.xlu0 %4105
    %4107 = vrot.lane.b32.xlu0 %v4094, 24
    %v4108 = vpop.permute.xlu0 %4107
    %4109 = vrot.lane.b32.xlu0 %v4095, 24
    %v4110 = vpop.permute.xlu0 %4109
    %4111 = vrot.lane.b32.xlu0 %v4096, 24
    %v4112 = vpop.permute.xlu0 %4111
    %vm4121 = vcmask 228544
    %4122 = vst.msk [vmem:[#allocation5] sm:$0xff] %vm4121, %v4098
    %4123 = vst.msk [vmem:[#allocation5 + $0x8] sm:$0xff] %vm4121, %v4100
    %4124 = vst.msk [vmem:[#allocation5 + $0x10] sm:$0xff] %vm4121, %v4102
    %4125 = vst.msk [vmem:[#allocation5 + $0x18] sm:$0xff] %vm4121, %v4104
    %4126 = vst.msk [vmem:[#allocation5 + $0x20] sm:$0xff] %vm4121, %v4106
    %4127 = vst.msk [vmem:[#allocation5 + $0x28] sm:$0xff] %vm4121, %v4108
    %4128 = vst.msk [vmem:[#allocation5 + $0x30] sm:$0xff] %vm4121, %v4110
    %4129 = vst.msk [vmem:[#allocation5 + $0x38] sm:$0xff] %vm4121, %v4112
    %v4130 = vld [vmem:[%s4040] sm:$0xf]
    %v4131 = vld [vmem:[%s4040 + $0x4] sm:$0x1]
    %v4132 = vld [vmem:[%s4040 + $0x8] sm:$0xf]
    %v4133 = vld [vmem:[%s4040 + $0xc] sm:$0x1]
    %v4134 = vld [vmem:[%s4040 + $0x10] sm:$0xf]
    %v4135 = vld [vmem:[%s4040 + $0x14] sm:$0x1]
    %v4136 = vld [vmem:[%s4040 + $0x18] sm:$0xf]
    %v4137 = vld [vmem:[%s4040 + $0x1c] sm:$0x1]
    %v4138 = vld [vmem:[%s4040 + $0x20] sm:$0xf]
    %v4139 = vld [vmem:[%s4040 + $0x24] sm:$0x1]
    %v4140 = vld [vmem:[%s4040 + $0x28] sm:$0xf]
    %v4141 = vld [vmem:[%s4040 + $0x2c] sm:$0x1]
    %v4142 = vld [vmem:[%s4040 + $0x30] sm:$0xf]
    %v4143 = vld [vmem:[%s4040 + $0x34] sm:$0x1]
    %v4144 = vld [vmem:[%s4040 + $0x38] sm:$0xf]
    %v4145 = vld [vmem:[%s4040 + $0x3c] sm:$0x1]
    %v4146 = vld [vmem:[%s4040 + $0x50] sm:$0xf]
    %v4147 = vld [vmem:[%s4040 + $0x54] sm:$0x1]
    %v4148 = vld [vmem:[%s4040 + $0x58] sm:$0xf]
    %v4149 = vld [vmem:[%s4040 + $0x5c] sm:$0x1]
    %v4150 = vld [vmem:[%s4040 + $0x60] sm:$0xf]
    %v4151 = vld [vmem:[%s4040 + $0x64] sm:$0x1]
    %v4152 = vld [vmem:[%s4040 + $0x68] sm:$0xf]
    %v4153 = vld [vmem:[%s4040 + $0x6c] sm:$0x1]
    %v4154 = vld [vmem:[%s4040 + $0x70] sm:$0xf]
    %v4155 = vld [vmem:[%s4040 + $0x74] sm:$0x1]
    %v4156 = vld [vmem:[%s4040 + $0x78] sm:$0xf]
    %v4157 = vld [vmem:[%s4040 + $0x7c] sm:$0x1]
    %v4158 = vld [vmem:[%s4040 + $0x80] sm:$0xf]
    %v4159 = vld [vmem:[%s4040 + $0x84] sm:$0x1]
    %v4160 = vld [vmem:[%s4040 + $0x88] sm:$0xf]
    %v4161 = vld [vmem:[%s4040 + $0x8c] sm:$0x1]
    %v4163 = vshrl.u32 %v4130, 16
    %v4165 = vrot.slane %v4163, 4
    %v4166 = vshll.u32 %v4130, 16
    %v4168 = vrot.slane %v4166, 5
    %v4169 = vor.u32 %v4165, %v4168
    %v4170 = vrot.slane %v4169, 4
    %v4172 = vshll.u32 %v4131, 16
    %v4174 = vrot.slane %v4172, 5
    %v4175 = vsel %vm611, %v4170, %v4174
    %v4177 = vshrl.u32 %v4132, 16
    %v4179 = vrot.slane %v4177, 4
    %v4180 = vshll.u32 %v4132, 16
    %v4182 = vrot.slane %v4180, 5
    %v4183 = vor.u32 %v4179, %v4182
    %v4184 = vrot.slane %v4183, 4
    %v4186 = vshll.u32 %v4133, 16
    %v4188 = vrot.slane %v4186, 5
    %v4189 = vsel %vm611, %v4184, %v4188
    %v4191 = vshrl.u32 %v4134, 16
    %v4193 = vrot.slane %v4191, 4
    %v4194 = vshll.u32 %v4134, 16
    %v4196 = vrot.slane %v4194, 5
    %v4197 = vor.u32 %v4193, %v4196
    %v4198 = vrot.slane %v4197, 4
    %v4200 = vshll.u32 %v4135, 16
    %v4202 = vrot.slane %v4200, 5
    %v4203 = vsel %vm611, %v4198, %v4202
    %v4205 = vshrl.u32 %v4136, 16
    %v4207 = vrot.slane %v4205, 4
    %v4208 = vshll.u32 %v4136, 16
    %v4210 = vrot.slane %v4208, 5
    %v4211 = vor.u32 %v4207, %v4210
    %v4212 = vrot.slane %v4211, 4
    %v4214 = vshll.u32 %v4137, 16
    %v4216 = vrot.slane %v4214, 5
    %v4217 = vsel %vm611, %v4212, %v4216
    %v4219 = vshrl.u32 %v4138, 16
    %v4221 = vrot.slane %v4219, 4
    %v4222 = vshll.u32 %v4138, 16
    %v4224 = vrot.slane %v4222, 5
    %v4225 = vor.u32 %v4221, %v4224
    %v4226 = vrot.slane %v4225, 4
    %v4228 = vshll.u32 %v4139, 16
    %v4230 = vrot.slane %v4228, 5
    %v4231 = vsel %vm611, %v4226, %v4230
    %v4233 = vshrl.u32 %v4140, 16
    %v4235 = vrot.slane %v4233, 4
    %v4236 = vshll.u32 %v4140, 16
    %v4238 = vrot.slane %v4236, 5
    %v4239 = vor.u32 %v4235, %v4238
    %v4240 = vrot.slane %v4239, 4
    %v4242 = vshll.u32 %v4141, 16
    %v4244 = vrot.slane %v4242, 5
    %v4245 = vsel %vm611, %v4240, %v4244
    %v4247 = vshrl.u32 %v4142, 16
    %v4249 = vrot.slane %v4247, 4
    %v4250 = vshll.u32 %v4142, 16
    %v4252 = vrot.slane %v4250, 5
    %v4253 = vor.u32 %v4249, %v4252
    %v4254 = vrot.slane %v4253, 4
    %v4256 = vshll.u32 %v4143, 16
    %v4258 = vrot.slane %v4256, 5
    %v4259 = vsel %vm611, %v4254, %v4258
    %v4261 = vshrl.u32 %v4144, 16
    %v4263 = vrot.slane %v4261, 4
    %v4264 = vshll.u32 %v4144, 16
    %v4266 = vrot.slane %v4264, 5
    %v4267 = vor.u32 %v4263, %v4266
    %v4268 = vrot.slane %v4267, 4
    %v4270 = vshll.u32 %v4145, 16
    %v4272 = vrot.slane %v4270, 5
    %v4273 = vsel %vm611, %v4268, %v4272
    %v4275 = vshrl.u32 %v4146, 16
    %v4277 = vrot.slane %v4275, 4
    %v4278 = vshll.u32 %v4146, 16
    %v4280 = vrot.slane %v4278, 5
    %v4281 = vor.u32 %v4277, %v4280
    %v4282 = vrot.slane %v4281, 4
    %v4284 = vshll.u32 %v4147, 16
    %v4286 = vrot.slane %v4284, 5
    %v4287 = vsel %vm611, %v4282, %v4286
    %v4289 = vshrl.u32 %v4148, 16
    %v4291 = vrot.slane %v4289, 4
    %v4292 = vshll.u32 %v4148, 16
    %v4294 = vrot.slane %v4292, 5
    %v4295 = vor.u32 %v4291, %v4294
    %v4296 = vrot.slane %v4295, 4
    %v4298 = vshll.u32 %v4149, 16
    %v4300 = vrot.slane %v4298, 5
    %v4301 = vsel %vm611, %v4296, %v4300
    %v4303 = vshrl.u32 %v4150, 16
    %v4305 = vrot.slane %v4303, 4
    %v4306 = vshll.u32 %v4150, 16
    %v4308 = vrot.slane %v4306, 5
    %v4309 = vor.u32 %v4305, %v4308
    %v4310 = vrot.slane %v4309, 4
    %v4312 = vshll.u32 %v4151, 16
    %v4314 = vrot.slane %v4312, 5
    %v4315 = vsel %vm611, %v4310, %v4314
    %v4317 = vshrl.u32 %v4152, 16
    %v4319 = vrot.slane %v4317, 4
    %v4320 = vshll.u32 %v4152, 16
    %v4322 = vrot.slane %v4320, 5
    %v4323 = vor.u32 %v4319, %v4322
    %v4324 = vrot.slane %v4323, 4
    %v4326 = vshll.u32 %v4153, 16
    %v4328 = vrot.slane %v4326, 5
    %v4329 = vsel %vm611, %v4324, %v4328
    %v4331 = vshrl.u32 %v4154, 16
    %v4333 = vrot.slane %v4331, 4
    %v4334 = vshll.u32 %v4154, 16
    %v4336 = vrot.slane %v4334, 5
    %v4337 = vor.u32 %v4333, %v4336
    %v4338 = vrot.slane %v4337, 4
    %v4340 = vshll.u32 %v4155, 16
    %v4342 = vrot.slane %v4340, 5
    %v4343 = vsel %vm611, %v4338, %v4342
    %v4345 = vshrl.u32 %v4156, 16
    %v4347 = vrot.slane %v4345, 4
    %v4348 = vshll.u32 %v4156, 16
    %v4350 = vrot.slane %v4348, 5
    %v4351 = vor.u32 %v4347, %v4350
    %v4352 = vrot.slane %v4351, 4
    %v4354 = vshll.u32 %v4157, 16
    %v4356 = vrot.slane %v4354, 5
    %v4357 = vsel %vm611, %v4352, %v4356
    %v4359 = vshrl.u32 %v4158, 16
    %v4361 = vrot.slane %v4359, 4
    %v4362 = vshll.u32 %v4158, 16
    %v4364 = vrot.slane %v4362, 5
    %v4365 = vor.u32 %v4361, %v4364
    %v4366 = vrot.slane %v4365, 4
    %v4368 = vshll.u32 %v4159, 16
    %v4370 = vrot.slane %v4368, 5
    %v4371 = vsel %vm611, %v4366, %v4370
    %v4373 = vshrl.u32 %v4160, 16
    %v4375 = vrot.slane %v4373, 4
    %v4376 = vshll.u32 %v4160, 16
    %v4378 = vrot.slane %v4376, 5
    %v4379 = vor.u32 %v4375, %v4378
    %v4380 = vrot.slane %v4379, 4
    %v4382 = vshll.u32 %v4161, 16
    %v4384 = vrot.slane %v4382, 5
    %v4385 = vsel %vm611, %v4380, %v4384
    %v4386 = vunpack.c.l.b16 %v4175
    %v4387 = vunpack.c.l.b16 %v4189
    %v4388 = vunpack.c.l.b16 %v4203
    %v4389 = vunpack.c.l.b16 %v4217
    %v4390 = vunpack.c.l.b16 %v4231
    %v4391 = vunpack.c.l.b16 %v4245
    %v4392 = vunpack.c.l.b16 %v4259
    %v4393 = vunpack.c.l.b16 %v4273
    %v4394 = vunpack.c.l.b16 %v4287
    %v4395 = vunpack.c.l.b16 %v4301
    %v4396 = vunpack.c.l.b16 %v4315
    %v4397 = vunpack.c.l.b16 %v4329
    %v4398 = vunpack.c.l.b16 %v4343
    %v4399 = vunpack.c.l.b16 %v4357
    %v4400 = vunpack.c.l.b16 %v4371
    %v4401 = vunpack.c.l.b16 %v4385
    %v4402 = vpack.c.b16 %v4387, %v4386
    %v4403 = vpack.c.b16 %v4389, %v4388
    %v4404 = vpack.c.b16 %v4391, %v4390
    %v4405 = vpack.c.b16 %v4393, %v4392
    %v4406 = vpack.c.b16 %v4395, %v4394
    %v4407 = vpack.c.b16 %v4397, %v4396
    %v4408 = vpack.c.b16 %v4399, %v4398
    %v4409 = vpack.c.b16 %v4401, %v4400
    %4410 = vrot.lane.b32.xlu0 %v4402, 28
    %v4411 = vpop.permute.xlu0 %4410
    %4412 = vrot.lane.b32.xlu0 %v4403, 28
    %v4413 = vpop.permute.xlu0 %4412
    %4414 = vrot.lane.b32.xlu0 %v4404, 28
    %v4415 = vpop.permute.xlu0 %4414
    %4416 = vrot.lane.b32.xlu0 %v4405, 28
    %v4417 = vpop.permute.xlu0 %4416
    %4418 = vrot.lane.b32.xlu0 %v4406, 28
    %v4419 = vpop.permute.xlu0 %4418
    %4420 = vrot.lane.b32.xlu0 %v4407, 28
    %v4421 = vpop.permute.xlu0 %4420
    %4422 = vrot.lane.b32.xlu0 %v4408, 28
    %v4423 = vpop.permute.xlu0 %4422
    %4424 = vrot.lane.b32.xlu0 %v4409, 28
    %v4425 = vpop.permute.xlu0 %4424
    %vm4434 = vcmask 261344
    %4435 = vst.msk [vmem:[#allocation5] sm:$0xff] %vm4434, %v4411
    %4436 = vst.msk [vmem:[#allocation5 + $0x8] sm:$0xff] %vm4434, %v4413
    %4437 = vst.msk [vmem:[#allocation5 + $0x10] sm:$0xff] %vm4434, %v4415
    %4438 = vst.msk [vmem:[#allocation5 + $0x18] sm:$0xff] %vm4434, %v4417
    %4439 = vst.msk [vmem:[#allocation5 + $0x20] sm:$0xff] %vm4434, %v4419
    %4440 = vst.msk [vmem:[#allocation5 + $0x28] sm:$0xff] %vm4434, %v4421
    %4441 = vst.msk [vmem:[#allocation5 + $0x30] sm:$0xff] %vm4434, %v4423
    %4442 = vst.msk [vmem:[#allocation5 + $0x38] sm:$0xff] %vm4434, %v4425
    %v4443 = vld [vmem:[%s4040] sm:$0xe]
    %v4444 = vld [vmem:[%s4040 + $0x4] sm:$0x1]
    %v4445 = vld [vmem:[%s4040 + $0x8] sm:$0xe]
    %v4446 = vld [vmem:[%s4040 + $0xc] sm:$0x1]
    %v4447 = vld [vmem:[%s4040 + $0x10] sm:$0xe]
    %v4448 = vld [vmem:[%s4040 + $0x14] sm:$0x1]
    %v4449 = vld [vmem:[%s4040 + $0x18] sm:$0xe]
    %v4450 = vld [vmem:[%s4040 + $0x1c] sm:$0x1]
    %v4451 = vld [vmem:[%s4040 + $0x20] sm:$0xe]
    %v4452 = vld [vmem:[%s4040 + $0x24] sm:$0x1]
    %v4453 = vld [vmem:[%s4040 + $0x28] sm:$0xe]
    %v4454 = vld [vmem:[%s4040 + $0x2c] sm:$0x1]
    %v4455 = vld [vmem:[%s4040 + $0x30] sm:$0xe]
    %v4456 = vld [vmem:[%s4040 + $0x34] sm:$0x1]
    %v4457 = vld [vmem:[%s4040 + $0x38] sm:$0xe]
    %v4458 = vld [vmem:[%s4040 + $0x3c] sm:$0x1]
    %v4459 = vld [vmem:[%s4040 + $0x50] sm:$0xe]
    %v4460 = vld [vmem:[%s4040 + $0x54] sm:$0x1]
    %v4461 = vld [vmem:[%s4040 + $0x58] sm:$0xe]
    %v4462 = vld [vmem:[%s4040 + $0x5c] sm:$0x1]
    %v4463 = vld [vmem:[%s4040 + $0x60] sm:$0xe]
    %v4464 = vld [vmem:[%s4040 + $0x64] sm:$0x1]
    %v4465 = vld [vmem:[%s4040 + $0x68] sm:$0xe]
    %v4466 = vld [vmem:[%s4040 + $0x6c] sm:$0x1]
    %v4467 = vld [vmem:[%s4040 + $0x70] sm:$0xe]
    %v4468 = vld [vmem:[%s4040 + $0x74] sm:$0x1]
    %v4469 = vld [vmem:[%s4040 + $0x78] sm:$0xe]
    %v4470 = vld [vmem:[%s4040 + $0x7c] sm:$0x1]
    %v4471 = vld [vmem:[%s4040 + $0x80] sm:$0xe]
    %v4472 = vld [vmem:[%s4040 + $0x84] sm:$0x1]
    %v4473 = vld [vmem:[%s4040 + $0x88] sm:$0xe]
    %v4474 = vld [vmem:[%s4040 + $0x8c] sm:$0x1]
    %v4507 = vrot.slane %v4443, 5
    %v4508 = vrot.slane %v4507, 4
    %v4509 = vrot.slane %v4444, 5
    %v4510 = vsel %vm959, %v4508, %v4509
    %v4511 = vrot.slane %v4445, 5
    %v4512 = vrot.slane %v4511, 4
    %v4513 = vrot.slane %v4446, 5
    %v4514 = vsel %vm959, %v4512, %v4513
    %v4515 = vrot.slane %v4447, 5
    %v4516 = vrot.slane %v4515, 4
    %v4517 = vrot.slane %v4448, 5
    %v4518 = vsel %vm959, %v4516, %v4517
    %v4519 = vrot.slane %v4449, 5
    %v4520 = vrot.slane %v4519, 4
    %v4521 = vrot.slane %v4450, 5
    %v4522 = vsel %vm959, %v4520, %v4521
    %v4523 = vrot.slane %v4451, 5
    %v4524 = vrot.slane %v4523, 4
    %v4525 = vrot.slane %v4452, 5
    %v4526 = vsel %vm959, %v4524, %v4525
    %v4527 = vrot.slane %v4453, 5
    %v4528 = vrot.slane %v4527, 4
    %v4529 = vrot.slane %v4454, 5
    %v4530 = vsel %vm959, %v4528, %v4529
    %v4531 = vrot.slane %v4455, 5
    %v4532 = vrot.slane %v4531, 4
    %v4533 = vrot.slane %v4456, 5
    %v4534 = vsel %vm959, %v4532, %v4533
    %v4535 = vrot.slane %v4457, 5
    %v4536 = vrot.slane %v4535, 4
    %v4537 = vrot.slane %v4458, 5
    %v4538 = vsel %vm959, %v4536, %v4537
    %v4539 = vrot.slane %v4459, 5
    %v4540 = vrot.slane %v4539, 4
    %v4541 = vrot.slane %v4460, 5
    %v4542 = vsel %vm959, %v4540, %v4541
    %v4543 = vrot.slane %v4461, 5
    %v4544 = vrot.slane %v4543, 4
    %v4545 = vrot.slane %v4462, 5
    %v4546 = vsel %vm959, %v4544, %v4545
    %v4547 = vrot.slane %v4463, 5
    %v4548 = vrot.slane %v4547, 4
    %v4549 = vrot.slane %v4464, 5
    %v4550 = vsel %vm959, %v4548, %v4549
    %v4551 = vrot.slane %v4465, 5
    %v4552 = vrot.slane %v4551, 4
    %v4553 = vrot.slane %v4466, 5
    %v4554 = vsel %vm959, %v4552, %v4553
    %v4555 = vrot.slane %v4467, 5
    %v4556 = vrot.slane %v4555, 4
    %v4557 = vrot.slane %v4468, 5
    %v4558 = vsel %vm959, %v4556, %v4557
    %v4559 = vrot.slane %v4469, 5
    %v4560 = vrot.slane %v4559, 4
    %v4561 = vrot.slane %v4470, 5
    %v4562 = vsel %vm959, %v4560, %v4561
    %v4563 = vrot.slane %v4471, 5
    %v4564 = vrot.slane %v4563, 4
    %v4565 = vrot.slane %v4472, 5
    %v4566 = vsel %vm959, %v4564, %v4565
    %v4567 = vrot.slane %v4473, 5
    %v4568 = vrot.slane %v4567, 4
    %v4569 = vrot.slane %v4474, 5
    %v4570 = vsel %vm959, %v4568, %v4569
    %v4571 = vunpack.c.l.b16 %v4510
    %v4572 = vunpack.c.l.b16 %v4514
    %v4573 = vunpack.c.l.b16 %v4518
    %v4574 = vunpack.c.l.b16 %v4522
    %v4575 = vunpack.c.l.b16 %v4526
    %v4576 = vunpack.c.l.b16 %v4530
    %v4577 = vunpack.c.l.b16 %v4534
    %v4578 = vunpack.c.l.b16 %v4538
    %v4579 = vunpack.c.l.b16 %v4542
    %v4580 = vunpack.c.l.b16 %v4546
    %v4581 = vunpack.c.l.b16 %v4550
    %v4582 = vunpack.c.l.b16 %v4554
    %v4583 = vunpack.c.l.b16 %v4558
    %v4584 = vunpack.c.l.b16 %v4562
    %v4585 = vunpack.c.l.b16 %v4566
    %v4586 = vunpack.c.l.b16 %v4570
    %v4587 = vpack.c.b16 %v4572, %v4571
    %v4588 = vpack.c.b16 %v4574, %v4573
    %v4589 = vpack.c.b16 %v4576, %v4575
    %v4590 = vpack.c.b16 %v4578, %v4577
    %v4591 = vpack.c.b16 %v4580, %v4579
    %v4592 = vpack.c.b16 %v4582, %v4581
    %v4593 = vpack.c.b16 %v4584, %v4583
    %v4594 = vpack.c.b16 %v4586, %v4585
    %4595 = vrot.lane.b32.xlu0 %v4587, 32
    %v4596 = vpop.permute.xlu0 %4595
    %4597 = vrot.lane.b32.xlu0 %v4588, 32
    %v4598 = vpop.permute.xlu0 %4597
    %4599 = vrot.lane.b32.xlu0 %v4589, 32
    %v4600 = vpop.permute.xlu0 %4599
    %4601 = vrot.lane.b32.xlu0 %v4590, 32
    %v4602 = vpop.permute.xlu0 %4601
    %4603 = vrot.lane.b32.xlu0 %v4591, 32
    %v4604 = vpop.permute.xlu0 %4603
    %4605 = vrot.lane.b32.xlu0 %v4592, 32
    %v4606 = vpop.permute.xlu0 %4605
    %4607 = vrot.lane.b32.xlu0 %v4593, 32
    %v4608 = vpop.permute.xlu0 %4607
    %4609 = vrot.lane.b32.xlu0 %v4594, 32
    %v4610 = vpop.permute.xlu0 %4609
    %vm4619 = vcmask 294144
    %4620 = vst.msk [vmem:[#allocation5] sm:$0xff] %vm4619, %v4596
    %4621 = vst.msk [vmem:[#allocation5 + $0x8] sm:$0xff] %vm4619, %v4598
    %4622 = vst.msk [vmem:[#allocation5 + $0x10] sm:$0xff] %vm4619, %v4600
    %4623 = vst.msk [vmem:[#allocation5 + $0x18] sm:$0xff] %vm4619, %v4602
    %4624 = vst.msk [vmem:[#allocation5 + $0x20] sm:$0xff] %vm4619, %v4604
    %4625 = vst.msk [vmem:[#allocation5 + $0x28] sm:$0xff] %vm4619, %v4606
    %4626 = vst.msk [vmem:[#allocation5 + $0x30] sm:$0xff] %vm4619, %v4608
    %4627 = vst.msk [vmem:[#allocation5 + $0x38] sm:$0xff] %vm4619, %v4610
    %v4628 = vld [vmem:[#allocation5] sm:$0xff]
    %v4629 = vld [vmem:[#allocation5 + $0x8] sm:$0xff]
    %v4630 = vld [vmem:[#allocation5 + $0x10] sm:$0xff]
    %v4631 = vld [vmem:[#allocation5 + $0x18] sm:$0xff]
    %v4632 = vld [vmem:[#allocation5 + $0x20] sm:$0xff]
    %v4633 = vld [vmem:[#allocation5 + $0x28] sm:$0xff]
    %v4634 = vld [vmem:[#allocation5 + $0x30] sm:$0xff]
    %v4635 = vld [vmem:[#allocation5 + $0x38] sm:$0xff]
    %v4636 = vld [vmem:[%s3] sm:$0xf]
    %v4637 = vld [vmem:[%s3 + $0x4] sm:$0xf]
    %v4638 = vld [vmem:[%s3 + $0x8] sm:$0xf]
    %v4639 = vld [vmem:[%s3 + $0xc] sm:$0xf]
    %v4640 = vld [vmem:[%s3 + $0x10] sm:$0x3]
    %v4641 = vld [vmem:[%s4] sm:$0x1]
    %v4643 = vlaneseq
    %v4644 = vshrl.u32 %v4643, 7
    %v4645 = vsub.s32 0, %v4644
    %v4646 = vrot.slane %v4641, %v4645
    %v4653 = vunpack.c.l.b16 %v4636
    %v4654 = vunpack.c.l.b16 %v4637
    %v4655 = vunpack.c.l.b16 %v4638
    %v4656 = vunpack.c.l.b16 %v4639
    %v4657 = vunpack.c.l.b16 %v4640
    %v4658 = vpack.c.b16 %v4654, %v4653
    %v4659 = vpack.c.b16 %v4656, %v4655
    %v4660 = vpack.c.b16 %v4657, %v4657
    %vm4663 = vcmask 293888
    %v4665 = vsel %vm4663, %v4628, 0
    %v4668 = vsel %vm4663, %v4629, 0
    %v4671 = vsel %vm4663, %v4630, 0
    %v4674 = vsel %vm4663, %v4631, 0
    %v4677 = vsel %vm4663, %v4632, 0
    %v4680 = vsel %vm4663, %v4633, 0
    %v4683 = vsel %vm4663, %v4634, 0
    %v4686 = vsel %vm4663, %v4635, 0
    %vm4688 = vcmask 1041408
    %v4690 = vsel %vm4688, %v4660, 0
    %4692 = vmatprep.subr.bf16.mxu0 0
    %4693 = vmatpush1.bf16.msra.mxu0 %v4658
    %4694 = vmatprep.subr.bf16.mxu0 0
    %4695 = vmatpush1.bf16.msra.mxu0 %v4659
    %4696 = vmatprep.subr.bf16.mxu0 0
    %4697 = vmatpush1.bf16.msra.mxu0 %v4690
    %4698 = vmatprep.subr.bf16.mxu0 0
    %4699 = vmatpush1.bf16.msra.mxu0 0
    %4700 = vmatprep.subr.bf16.mxu0 0
    %4701 = vmatpush1.bf16.msra.mxu0 0
    %4702 = vmatprep.subr.bf16.mxu0 0
    %4703 = vmatpush1.bf16.msra.mxu0 0
    %4704 = vmatprep.subr.bf16.mxu0 0
    %4705 = vmatpush1.bf16.msra.mxu0 0
    %4706 = vmatprep.subr.bf16.mxu0 0
    %4707 = vmatpush1.bf16.msra.mxu0 0
    %4708 = vmatprep.subr.bf16.mxu0 0
    %4709 = vmatpush1.bf16.msra.mxu0 0
    %4710 = vmatprep.subr.bf16.mxu0 0
    %4711 = vmatpush1.bf16.msra.mxu0 0
    %4712 = vmatprep.subr.bf16.mxu0 0
    %4713 = vmatpush1.bf16.msra.mxu0 0
    %4714 = vmatprep.subr.bf16.mxu0 0
    %4715 = vmatpush1.bf16.msra.mxu0 0
    %4716 = vmatprep.subr.bf16.mxu0 0
    %4717 = vmatpush1.bf16.msra.mxu0 0
    %4718 = vmatprep.subr.bf16.mxu0 0
    %4719 = vmatpush1.bf16.msra.mxu0 0
    %4720 = vmatprep.subr.bf16.mxu0 0
    %4721 = vmatpush1.bf16.msra.mxu0 0
    %4722 = vmatprep.subr.bf16.mxu0 0
    %4723 = vmatpush1.bf16.msra.mxu0 0
    %4724 = vmatprep.mubr.bf16.mxu0 0
    %4725 = vmatmul.mubr.bf16.gmra.mrb[0].mxu0 %v4665
    %v4726 = vpop.f32.mrb[0].mxu0
    %v4727 = vadd.f32 %v4646, %v4726
    %v4728 = vpop.f32.mrb[0].mxu0
    %v4729 = vpop.f32.mrb[0].mxu0
    %v4730 = vadd.f32 %v4646, %v4729
    %v4731 = vpop.f32.mrb[0].mxu0
    %4732 = vmatprep.mubr.bf16.mxu0 0
    %4733 = vmatmul.mubr.bf16.gmra.mrb[0].mxu0 %v4668
    %v4734 = vpop.f32.mrb[0].mxu0
    %v4735 = vadd.f32 %v4646, %v4734
    %v4736 = vpop.f32.mrb[0].mxu0
    %v4737 = vpop.f32.mrb[0].mxu0
    %v4738 = vadd.f32 %v4646, %v4737
    %v4739 = vpop.f32.mrb[0].mxu0
    %4740 = vmatprep.mubr.bf16.mxu0 0
    %4741 = vmatmul.mubr.bf16.gmra.mrb[0].mxu0 %v4671
    %v4742 = vpop.f32.mrb[0].mxu0
    %v4743 = vadd.f32 %v4646, %v4742
    %v4744 = vpop.f32.mrb[0].mxu0
    %v4745 = vpop.f32.mrb[0].mxu0
    %v4746 = vadd.f32 %v4646, %v4745
    %v4747 = vpop.f32.mrb[0].mxu0
    %4748 = vmatprep.mubr.bf16.mxu0 0
    %4749 = vmatmul.mubr.bf16.gmra.mrb[0].mxu0 %v4674
    %v4750 = vpop.f32.mrb[0].mxu0
    %v4751 = vadd.f32 %v4646, %v4750
    %v4752 = vpop.f32.mrb[0].mxu0
    %v4753 = vpop.f32.mrb[0].mxu0
    %v4754 = vadd.f32 %v4646, %v4753
    %v4755 = vpop.f32.mrb[0].mxu0
    %4756 = vmatprep.mubr.bf16.mxu0 0
    %4757 = vmatmul.mubr.bf16.gmra.mrb[0].mxu0 %v4677
    %v4758 = vpop.f32.mrb[0].mxu0
    %v4759 = vadd.f32 %v4646, %v4758
    %v4760 = vpop.f32.mrb[0].mxu0
    %v4761 = vpop.f32.mrb[0].mxu0
    %v4762 = vadd.f32 %v4646, %v4761
    %v4763 = vpop.f32.mrb[0].mxu0
    %4764 = vmatprep.mubr.bf16.mxu0 0
    %4765 = vmatmul.mubr.bf16.gmra.mrb[0].mxu0 %v4680
    %v4766 = vpop.f32.mrb[0].mxu0
    %v4767 = vadd.f32 %v4646, %v4766
    %v4768 = vpop.f32.mrb[0].mxu0
    %v4769 = vpop.f32.mrb[0].mxu0
    %v4770 = vadd.f32 %v4646, %v4769
    %v4771 = vpop.f32.mrb[0].mxu0
    %4772 = vmatprep.mubr.bf16.mxu0 0
    %4773 = vmatmul.mubr.bf16.gmra.mrb[0].mxu0 %v4683
    %v4774 = vpop.f32.mrb[0].mxu0
    %v4775 = vadd.f32 %v4646, %v4774
    %v4776 = vpop.f32.mrb[0].mxu0
    %v4777 = vpop.f32.mrb[0].mxu0
    %v4778 = vadd.f32 %v4646, %v4777
    %v4779 = vpop.f32.mrb[0].mxu0
    %4780 = vmatprep.mubr.bf16.mxu0 0
    %4781 = vmatmul.mubr.bf16.gmra.mrb[0].mxu0 %v4686
    %v4782 = vpop.f32.mrb[0].mxu0
    %v4783 = vadd.f32 %v4646, %v4782
    %v4784 = vpop.f32.mrb[0].mxu0
    %v4785 = vpop.f32.mrb[0].mxu0
    %v4786 = vadd.f32 %v4646, %v4785
    %v4787 = vpop.f32.mrb[0].mxu0
    %4788 = vdwg.mxu0
    %v4789 = vld [vmem:[%s5] sm:$0xf]
    %v4790 = vld [vmem:[%s6] sm:$0xf]
    %4791 = vxpose.xlu0.b32.start [1/16] %v4727, 128
    %4792 = vxpose.xlu0.b32.cont [2/16] %v4730, 128
    %4793 = vxpose.xlu0.b32.cont [3/16] %v4735, 128
    %4794 = vxpose.xlu0.b32.cont [4/16] %v4738, 128
    %4795 = vxpose.xlu0.b32.cont [5/16] %v4743, 128
    %4796 = vxpose.xlu0.b32.cont [6/16] %v4746, 128
    %4797 = vxpose.xlu0.b32.cont [7/16] %v4751, 128
    %4798 = vxpose.xlu0.b32.cont [8/16] %v4754, 128
    %4799 = vxpose.xlu0.b32.cont [9/16] 0.0, 128
    %4800 = vxpose.xlu0.b32.cont [10/16] 0.0, 128
    %4801 = vxpose.xlu0.b32.cont [11/16] 0.0, 128
    %4802 = vxpose.xlu0.b32.cont [12/16] 0.0, 128
    %4803 = vxpose.xlu0.b32.cont [13/16] 0.0, 128
    %4804 = vxpose.xlu0.b32.cont [14/16] 0.0, 128
    %4805 = vxpose.xlu0.b32.cont [15/16] 0.0, 128
    %4806 = vxpose.xlu0.b32.end [16/16] 0.0, 128
    %v4807 = vpop.trf.xlu0
    %v4808 = vpop.trf.xlu0
    %v4809 = vpop.trf.xlu0
    %v4810 = vpop.trf.xlu0
    %v4811 = vpop.trf.xlu0
    %v4812 = vpop.trf.xlu0
    %v4813 = vpop.trf.xlu0
    %v4814 = vpop.trf.xlu0
    %v4815 = vpop.trf.xlu0
    %v4816 = vpop.trf.xlu0
    %v4817 = vpop.trf.xlu0
    %v4818 = vpop.trf.xlu0
    %v4819 = vpop.trf.xlu0
    %v4820 = vpop.trf.xlu0
    %v4821 = vpop.trf.xlu0
    %v4822 = vpop.trf.xlu0
    %4824 = vrot.lane.b32.xlu0 %v4807, 120
    %v4825 = vpop.permute.xlu0 %4824
    %4827 = vrot.lane.b32.xlu0 %v4807, 112
    %v4828 = vpop.permute.xlu0 %4827
    %4830 = vrot.lane.b32.xlu0 %v4807, 104
    %v4831 = vpop.permute.xlu0 %4830
    %4833 = vrot.lane.b32.xlu0 %v4807, 96
    %v4834 = vpop.permute.xlu0 %4833
    %4836 = vrot.lane.b32.xlu0 %v4807, 88
    %v4837 = vpop.permute.xlu0 %4836
    %4839 = vrot.lane.b32.xlu0 %v4807, 80
    %v4840 = vpop.permute.xlu0 %4839
    %4842 = vrot.lane.b32.xlu0 %v4807, 72
    %v4843 = vpop.permute.xlu0 %4842
    %v4845 = vcombine.low %v4807, %v4828
    %v4847 = vunpack.c.l.s4 1983009808
    %v4848 = vunpack.c.0.s8 %v4847
    %v4849 = vlaneseq
    %v4850 = vshrl.u32 %v4849, 7
    %v4851 = vsub.s32 %v4848, %v4850
    %v4852 = vrot.slane %v4845, %v4851
    %v4853 = vcombine.low %v4825, %v4831
    %v4855 = vunpack.c.l.s4 1983009808
    %v4856 = vunpack.c.0.s8 %v4855
    %v4857 = vlaneseq
    %v4858 = vshrl.u32 %v4857, 7
    %v4859 = vsub.s32 %v4856, %v4858
    %v4860 = vrot.slane %v4853, %v4859
    %v4861 = vcombine.low %v4834, %v4840
    %v4863 = vunpack.c.l.s4 1983009808
    %v4864 = vunpack.c.0.s8 %v4863
    %v4865 = vlaneseq
    %v4866 = vshrl.u32 %v4865, 7
    %v4867 = vsub.s32 %v4864, %v4866
    %v4868 = vrot.slane %v4861, %v4867
    %v4869 = vcombine.low %v4837, %v4843
    %v4871 = vunpack.c.l.s4 1983009808
    %v4872 = vunpack.c.0.s8 %v4871
    %v4873 = vlaneseq
    %v4874 = vshrl.u32 %v4873, 7
    %v4875 = vsub.s32 %v4872, %v4874
    %v4876 = vrot.slane %v4869, %v4875
    %v4877 = vcombine.low %v4852, %v4860
    %v4878 = vcombine.high %v4852, %v4860
    %v4880 = vunpack.c.l.s4 1934713408
    %v4881 = vunpack.c.0.s8 %v4880
    %v4882 = vlaneseq
    %v4883 = vshrl.u32 %v4882, 7
    %v4884 = vsub.s32 %v4881, %v4883
    %v4885 = vrot.slane %v4877, %v4884
    %v4887 = vunpack.c.l.s4 1934713408
    %v4888 = vunpack.c.0.s8 %v4887
    %v4889 = vlaneseq
    %v4890 = vshrl.u32 %v4889, 7
    %v4891 = vsub.s32 %v4888, %v4890
    %v4892 = vrot.slane %v4878, %v4891
    %v4893 = vcombine.low %v4868, %v4876
    %v4894 = vcombine.high %v4868, %v4876
    %v4896 = vunpack.c.l.s4 1934713408
    %v4897 = vunpack.c.0.s8 %v4896
    %v4898 = vlaneseq
    %v4899 = vshrl.u32 %v4898, 7
    %v4900 = vsub.s32 %v4897, %v4899
    %v4901 = vrot.slane %v4893, %v4900
    %v4903 = vunpack.c.l.s4 1934713408
    %v4904 = vunpack.c.0.s8 %v4903
    %v4905 = vlaneseq
    %v4906 = vshrl.u32 %v4905, 7
    %v4907 = vsub.s32 %v4904, %v4906
    %v4908 = vrot.slane %v4894, %v4907
    %v4909 = vcombine.low %v4885, %v4901
    %v4910 = vcombine.high %v4885, %v4901
    %v4911 = vcombine.low %v4892, %v4908
    %v4912 = vcombine.high %v4892, %v4908
    %4913 = vxpose.xlu0.b32.start [1/16] %v4909, 128
    %4914 = vxpose.xlu0.b32.cont [2/16] 0.0, 128
    %4915 = vxpose.xlu0.b32.cont [3/16] 0.0, 128
    %4916 = vxpose.xlu0.b32.cont [4/16] 0.0, 128
    %4917 = vxpose.xlu0.b32.cont [5/16] 0.0, 128
    %4918 = vxpose.xlu0.b32.cont [6/16] 0.0, 128
    %4919 = vxpose.xlu0.b32.cont [7/16] 0.0, 128
    %4920 = vxpose.xlu0.b32.cont [8/16] 0.0, 128
    %4921 = vxpose.xlu0.b32.cont [9/16] 0.0, 128
    %4922 = vxpose.xlu0.b32.cont [10/16] 0.0, 128
    %4923 = vxpose.xlu0.b32.cont [11/16] 0.0, 128
    %4924 = vxpose.xlu0.b32.cont [12/16] 0.0, 128
    %4925 = vxpose.xlu0.b32.cont [13/16] 0.0, 128
    %4926 = vxpose.xlu0.b32.cont [14/16] 0.0, 128
    %4927 = vxpose.xlu0.b32.cont [15/16] 0.0, 128
    %4928 = vxpose.xlu0.b32.end [16/16] 0.0, 128
    %v4929 = vpop.trf.xlu0
    %v4930 = vpop.trf.xlu0
    %v4931 = vpop.trf.xlu0
    %v4932 = vpop.trf.xlu0
    %v4933 = vpop.trf.xlu0
    %v4934 = vpop.trf.xlu0
    %v4935 = vpop.trf.xlu0
    %v4936 = vpop.trf.xlu0
    %v4937 = vpop.trf.xlu0
    %v4938 = vpop.trf.xlu0
    %v4939 = vpop.trf.xlu0
    %v4940 = vpop.trf.xlu0
    %v4941 = vpop.trf.xlu0
    %v4942 = vpop.trf.xlu0
    %v4943 = vpop.trf.xlu0
    %v4944 = vpop.trf.xlu0
    %4945 = vxpose.xlu0.b32.start [1/16] %v4910, 128
    %4946 = vxpose.xlu0.b32.cont [2/16] 0.0, 128
    %4947 = vxpose.xlu0.b32.cont [3/16] 0.0, 128
    %4948 = vxpose.xlu0.b32.cont [4/16] 0.0, 128
    %4949 = vxpose.xlu0.b32.cont [5/16] 0.0, 128
    %4950 = vxpose.xlu0.b32.cont [6/16] 0.0, 128
    %4951 = vxpose.xlu0.b32.cont [7/16] 0.0, 128
    %4952 = vxpose.xlu0.b32.cont [8/16] 0.0, 128
    %4953 = vxpose.xlu0.b32.cont [9/16] 0.0, 128
    %4954 = vxpose.xlu0.b32.cont [10/16] 0.0, 128
    %4955 = vxpose.xlu0.b32.cont [11/16] 0.0, 128
    %4956 = vxpose.xlu0.b32.cont [12/16] 0.0, 128
    %4957 = vxpose.xlu0.b32.cont [13/16] 0.0, 128
    %4958 = vxpose.xlu0.b32.cont [14/16] 0.0, 128
    %4959 = vxpose.xlu0.b32.cont [15/16] 0.0, 128
    %4960 = vxpose.xlu0.b32.end [16/16] 0.0, 128
    %v4961 = vpop.trf.xlu0
    %v4962 = vpop.trf.xlu0
    %v4963 = vpop.trf.xlu0
    %v4964 = vpop.trf.xlu0
    %v4965 = vpop.trf.xlu0
    %v4966 = vpop.trf.xlu0
    %v4967 = vpop.trf.xlu0
    %v4968 = vpop.trf.xlu0
    %v4969 = vpop.trf.xlu0
    %v4970 = vpop.trf.xlu0
    %v4971 = vpop.trf.xlu0
    %v4972 = vpop.trf.xlu0
    %v4973 = vpop.trf.xlu0
    %v4974 = vpop.trf.xlu0
    %v4975 = vpop.trf.xlu0
    %v4976 = vpop.trf.xlu0
    %4977 = vxpose.xlu0.b32.start [1/16] %v4911, 128
    %4978 = vxpose.xlu0.b32.cont [2/16] 0.0, 128
    %4979 = vxpose.xlu0.b32.cont [3/16] 0.0, 128
    %4980 = vxpose.xlu0.b32.cont [4/16] 0.0, 128
    %4981 = vxpose.xlu0.b32.cont [5/16] 0.0, 128
    %4982 = vxpose.xlu0.b32.cont [6/16] 0.0, 128
    %4983 = vxpose.xlu0.b32.cont [7/16] 0.0, 128
    %4984 = vxpose.xlu0.b32.cont [8/16] 0.0, 128
    %4985 = vxpose.xlu0.b32.cont [9/16] 0.0, 128
    %4986 = vxpose.xlu0.b32.cont [10/16] 0.0, 128
    %4987 = vxpose.xlu0.b32.cont [11/16] 0.0, 128
    %4988 = vxpose.xlu0.b32.cont [12/16] 0.0, 128
    %4989 = vxpose.xlu0.b32.cont [13/16] 0.0, 128
    %4990 = vxpose.xlu0.b32.cont [14/16] 0.0, 128
    %4991 = vxpose.xlu0.b32.cont [15/16] 0.0, 128
    %4992 = vxpose.xlu0.b32.end [16/16] 0.0, 128
    %v4993 = vpop.trf.xlu0
    %v4994 = vpop.trf.xlu0
    %v4995 = vpop.trf.xlu0
    %v4996 = vpop.trf.xlu0
    %v4997 = vpop.trf.xlu0
    %v4998 = vpop.trf.xlu0
    %v4999 = vpop.trf.xlu0
    %v5000 = vpop.trf.xlu0
    %v5001 = vpop.trf.xlu0
    %v5002 = vpop.trf.xlu0
    %v5003 = vpop.trf.xlu0
    %v5004 = vpop.trf.xlu0
    %v5005 = vpop.trf.xlu0
    %v5006 = vpop.trf.xlu0
    %v5007 = vpop.trf.xlu0
    %v5008 = vpop.trf.xlu0
    %5009 = vxpose.xlu0.b32.start [1/16] %v4912, 128
    %5010 = vxpose.xlu0.b32.cont [2/16] 0.0, 128
    %5011 = vxpose.xlu0.b32.cont [3/16] 0.0, 128
    %5012 = vxpose.xlu0.b32.cont [4/16] 0.0, 128
    %5013 = vxpose.xlu0.b32.cont [5/16] 0.0, 128
    %5014 = vxpose.xlu0.b32.cont [6/16] 0.0, 128
    %5015 = vxpose.xlu0.b32.cont [7/16] 0.0, 128
    %5016 = vxpose.xlu0.b32.cont [8/16] 0.0, 128
    %5017 = vxpose.xlu0.b32.cont [9/16] 0.0, 128
    %5018 = vxpose.xlu0.b32.cont [10/16] 0.0, 128
    %5019 = vxpose.xlu0.b32.cont [11/16] 0.0, 128
    %5020 = vxpose.xlu0.b32.cont [12/16] 0.0, 128
    %5021 = vxpose.xlu0.b32.cont [13/16] 0.0, 128
    %5022 = vxpose.xlu0.b32.cont [14/16] 0.0, 128
    %5023 = vxpose.xlu0.b32.cont [15/16] 0.0, 128
    %5024 = vxpose.xlu0.b32.end [16/16] 0.0, 128
    %v5025 = vpop.trf.xlu0
    %v5026 = vpop.trf.xlu0
    %v5027 = vpop.trf.xlu0
    %v5028 = vpop.trf.xlu0
    %v5029 = vpop.trf.xlu0
    %v5030 = vpop.trf.xlu0
    %v5031 = vpop.trf.xlu0
    %v5032 = vpop.trf.xlu0
    %v5033 = vpop.trf.xlu0
    %v5034 = vpop.trf.xlu0
    %v5035 = vpop.trf.xlu0
    %v5036 = vpop.trf.xlu0
    %v5037 = vpop.trf.xlu0
    %v5038 = vpop.trf.xlu0
    %v5039 = vpop.trf.xlu0
    %v5040 = vpop.trf.xlu0
    %v5041 = vpack.c.bf16 %v4961, %v4929
    %v5042 = vpack.c.bf16 %v5025, %v4993
    %vm5043 = vcmask 64512
    %v5045 = vsel %vm5043, %v5041, 0
    %v5048 = vsel %vm5043, %v5042, 0
    %vm5050 = vcmask 1043456
    %v5052 = vsel %vm5050, %v4789, 0
    %5054 = vmatprep.subr.bf16.mxu0 0
    %5055 = vmatpush1.bf16.msra.mxu0 %v5052
    %5056 = vmatprep.subr.bf16.mxu0 0
    %5057 = vmatpush1.bf16.msra.mxu0 0
    %5058 = vmatprep.subr.bf16.mxu0 0
    %5059 = vmatpush1.bf16.msra.mxu0 0
    %5060 = vmatprep.subr.bf16.mxu0 0
    %5061 = vmatpush1.bf16.msra.mxu0 0
    %5062 = vmatprep.subr.bf16.mxu0 0
    %5063 = vmatpush1.bf16.msra.mxu0 0
    %5064 = vmatprep.subr.bf16.mxu0 0
    %5065 = vmatpush1.bf16.msra.mxu0 0
    %5066 = vmatprep.subr.bf16.mxu0 0
    %5067 = vmatpush1.bf16.msra.mxu0 0
    %5068 = vmatprep.subr.bf16.mxu0 0
    %5069 = vmatpush1.bf16.msra.mxu0 0
    %5070 = vmatprep.subr.bf16.mxu0 0
    %5071 = vmatpush1.bf16.msra.mxu0 0
    %5072 = vmatprep.subr.bf16.mxu0 0
    %5073 = vmatpush1.bf16.msra.mxu0 0
    %5074 = vmatprep.subr.bf16.mxu0 0
    %5075 = vmatpush1.bf16.msra.mxu0 0
    %5076 = vmatprep.subr.bf16.mxu0 0
    %5077 = vmatpush1.bf16.msra.mxu0 0
    %5078 = vmatprep.subr.bf16.mxu0 0
    %5079 = vmatpush1.bf16.msra.mxu0 0
    %5080 = vmatprep.subr.bf16.mxu0 0
    %5081 = vmatpush1.bf16.msra.mxu0 0
    %5082 = vmatprep.subr.bf16.mxu0 0
    %5083 = vmatpush1.bf16.msra.mxu0 0
    %5084 = vmatprep.subr.bf16.mxu0 0
    %5085 = vmatpush1.bf16.msra.mxu0 0
    %5086 = vmatprep.mubr.bf16.mxu0 0
    %5087 = vmatmul.mubr.bf16.gmra.mrb[0].mxu0 %v5045
    %v5088 = vpop.f32.mrb[0].mxu0
    %v5089 = vadd.f32 0.0, %v5088
    %v5090 = vpop.f32.mrb[0].mxu0
    %v5091 = vpop.f32.mrb[0].mxu0
    %v5092 = vadd.f32 0.0, %v5091
    %v5093 = vpop.f32.mrb[0].mxu0
    %5094 = vmatprep.mubr.bf16.mxu0 0
    %5095 = vmatmul.mubr.bf16.gmra.mrb[0].mxu0 %v5048
    %v5096 = vpop.f32.mrb[0].mxu0
    %v5097 = vadd.f32 0.0, %v5096
    %v5098 = vpop.f32.mrb[0].mxu0
    %v5099 = vpop.f32.mrb[0].mxu0
    %v5100 = vadd.f32 0.0, %v5099
    %v5101 = vpop.f32.mrb[0].mxu0
    %5102 = vdwg.mxu0
    %5103 = vxpose.xlu0.b32.start [1/16] %v5089, 128
    %5104 = vxpose.xlu0.b32.cont [2/16] 0.0, 128
    %5105 = vxpose.xlu0.b32.cont [3/16] 0.0, 128
    %5106 = vxpose.xlu0.b32.cont [4/16] 0.0, 128
    %5107 = vxpose.xlu0.b32.cont [5/16] 0.0, 128
    %5108 = vxpose.xlu0.b32.cont [6/16] 0.0, 128
    %5109 = vxpose.xlu0.b32.cont [7/16] 0.0, 128
    %5110 = vxpose.xlu0.b32.cont [8/16] 0.0, 128
    %5111 = vxpose.xlu0.b32.cont [9/16] 0.0, 128
    %5112 = vxpose.xlu0.b32.cont [10/16] 0.0, 128
    %5113 = vxpose.xlu0.b32.cont [11/16] 0.0, 128
    %5114 = vxpose.xlu0.b32.cont [12/16] 0.0, 128
    %5115 = vxpose.xlu0.b32.cont [13/16] 0.0, 128
    %5116 = vxpose.xlu0.b32.cont [14/16] 0.0, 128
    %5117 = vxpose.xlu0.b32.cont [15/16] 0.0, 128
    %5118 = vxpose.xlu0.b32.end [16/16] 0.0, 128
    %v5119 = vpop.trf.xlu0
    %v5120 = vpop.trf.xlu0
    %v5121 = vpop.trf.xlu0
    %v5122 = vpop.trf.xlu0
    %v5123 = vpop.trf.xlu0
    %v5124 = vpop.trf.xlu0
    %v5125 = vpop.trf.xlu0
    %v5126 = vpop.trf.xlu0
    %v5127 = vpop.trf.xlu0
    %v5128 = vpop.trf.xlu0
    %v5129 = vpop.trf.xlu0
    %v5130 = vpop.trf.xlu0
    %v5131 = vpop.trf.xlu0
    %v5132 = vpop.trf.xlu0
    %v5133 = vpop.trf.xlu0
    %v5134 = vpop.trf.xlu0
    %5135 = vxpose.xlu0.b32.start [1/16] %v5092, 128
    %5136 = vxpose.xlu0.b32.cont [2/16] 0.0, 128
    %5137 = vxpose.xlu0.b32.cont [3/16] 0.0, 128
    %5138 = vxpose.xlu0.b32.cont [4/16] 0.0, 128
    %5139 = vxpose.xlu0.b32.cont [5/16] 0.0, 128
    %5140 = vxpose.xlu0.b32.cont [6/16] 0.0, 128
    %5141 = vxpose.xlu0.b32.cont [7/16] 0.0, 128
    %5142 = vxpose.xlu0.b32.cont [8/16] 0.0, 128
    %5143 = vxpose.xlu0.b32.cont [9/16] 0.0, 128
    %5144 = vxpose.xlu0.b32.cont [10/16] 0.0, 128
    %5145 = vxpose.xlu0.b32.cont [11/16] 0.0, 128
    %5146 = vxpose.xlu0.b32.cont [12/16] 0.0, 128
    %5147 = vxpose.xlu0.b32.cont [13/16] 0.0, 128
    %5148 = vxpose.xlu0.b32.cont [14/16] 0.0, 128
    %5149 = vxpose.xlu0.b32.cont [15/16] 0.0, 128
    %5150 = vxpose.xlu0.b32.end [16/16] 0.0, 128
    %v5151 = vpop.trf.xlu0
    %v5152 = vpop.trf.xlu0
    %v5153 = vpop.trf.xlu0
    %v5154 = vpop.trf.xlu0
    %v5155 = vpop.trf.xlu0
    %v5156 = vpop.trf.xlu0
    %v5157 = vpop.trf.xlu0
    %v5158 = vpop.trf.xlu0
    %v5159 = vpop.trf.xlu0
    %v5160 = vpop.trf.xlu0
    %v5161 = vpop.trf.xlu0
    %v5162 = vpop.trf.xlu0
    %v5163 = vpop.trf.xlu0
    %v5164 = vpop.trf.xlu0
    %v5165 = vpop.trf.xlu0
    %v5166 = vpop.trf.xlu0
    %5167 = vxpose.xlu0.b32.start [1/16] %v5097, 128
    %5168 = vxpose.xlu0.b32.cont [2/16] 0.0, 128
    %5169 = vxpose.xlu0.b32.cont [3/16] 0.0, 128
    %5170 = vxpose.xlu0.b32.cont [4/16] 0.0, 128
    %5171 = vxpose.xlu0.b32.cont [5/16] 0.0, 128
    %5172 = vxpose.xlu0.b32.cont [6/16] 0.0, 128
    %5173 = vxpose.xlu0.b32.cont [7/16] 0.0, 128
    %5174 = vxpose.xlu0.b32.cont [8/16] 0.0, 128
    %5175 = vxpose.xlu0.b32.cont [9/16] 0.0, 128
    %5176 = vxpose.xlu0.b32.cont [10/16] 0.0, 128
    %5177 = vxpose.xlu0.b32.cont [11/16] 0.0, 128
    %5178 = vxpose.xlu0.b32.cont [12/16] 0.0, 128
    %5179 = vxpose.xlu0.b32.cont [13/16] 0.0, 128
    %5180 = vxpose.xlu0.b32.cont [14/16] 0.0, 128
    %5181 = vxpose.xlu0.b32.cont [15/16] 0.0, 128
    %5182 = vxpose.xlu0.b32.end [16/16] 0.0, 128
    %v5183 = vpop.trf.xlu0
    %v5184 = vpop.trf.xlu0
    %v5185 = vpop.trf.xlu0
    %v5186 = vpop.trf.xlu0
    %v5187 = vpop.trf.xlu0
    %v5188 = vpop.trf.xlu0
    %v5189 = vpop.trf.xlu0
    %v5190 = vpop.trf.xlu0
    %v5191 = vpop.trf.xlu0
    %v5192 = vpop.trf.xlu0
    %v5193 = vpop.trf.xlu0
    %v5194 = vpop.trf.xlu0
    %v5195 = vpop.trf.xlu0
    %v5196 = vpop.trf.xlu0
    %v5197 = vpop.trf.xlu0
    %v5198 = vpop.trf.xlu0
    %5199 = vxpose.xlu0.b32.start [1/16] %v5100, 128
    %5200 = vxpose.xlu0.b32.cont [2/16] 0.0, 128
    %5201 = vxpose.xlu0.b32.cont [3/16] 0.0, 128
    %5202 = vxpose.xlu0.b32.cont [4/16] 0.0, 128
    %5203 = vxpose.xlu0.b32.cont [5/16] 0.0, 128
    %5204 = vxpose.xlu0.b32.cont [6/16] 0.0, 128
    %5205 = vxpose.xlu0.b32.cont [7/16] 0.0, 128
    %5206 = vxpose.xlu0.b32.cont [8/16] 0.0, 128
    %5207 = vxpose.xlu0.b32.cont [9/16] 0.0, 128
    %5208 = vxpose.xlu0.b32.cont [10/16] 0.0, 128
    %5209 = vxpose.xlu0.b32.cont [11/16] 0.0, 128
    %5210 = vxpose.xlu0.b32.cont [12/16] 0.0, 128
    %5211 = vxpose.xlu0.b32.cont [13/16] 0.0, 128
    %5212 = vxpose.xlu0.b32.cont [14/16] 0.0, 128
    %5213 = vxpose.xlu0.b32.cont [15/16] 0.0, 128
    %5214 = vxpose.xlu0.b32.end [16/16] 0.0, 128
    %v5215 = vpop.trf.xlu0
    %v5216 = vpop.trf.xlu0
    %v5217 = vpop.trf.xlu0
    %v5218 = vpop.trf.xlu0
    %v5219 = vpop.trf.xlu0
    %v5220 = vpop.trf.xlu0
    %v5221 = vpop.trf.xlu0
    %v5222 = vpop.trf.xlu0
    %v5223 = vpop.trf.xlu0
    %v5224 = vpop.trf.xlu0
    %v5225 = vpop.trf.xlu0
    %v5226 = vpop.trf.xlu0
    %v5227 = vpop.trf.xlu0
    %v5228 = vpop.trf.xlu0
    %v5229 = vpop.trf.xlu0
    %v5230 = vpop.trf.xlu0
    %v5231 = vpack.c.bf16 %v5120, %v5119
    %v5232 = vpack.c.bf16 %v5152, %v5151
    %v5233 = vpack.c.bf16 %v5184, %v5183
    %v5234 = vpack.c.bf16 %v5216, %v5215
    %v5236 = vsel %vm5043, %v5231, 0
    %v5239 = vsel %vm5043, %v5232, 0
    %v5242 = vsel %vm5043, %v5233, 0
    %v5245 = vsel %vm5043, %v5234, 0
    %v5248 = vsel %vm5050, %v4790, 0
    %5250 = vmatprep.subr.bf16.mxu0 0
    %5251 = vmatpush1.bf16.msra.mxu0 %v5248
    %5252 = vmatprep.subr.bf16.mxu0 0
    %5253 = vmatpush1.bf16.msra.mxu0 0
    %5254 = vmatprep.subr.bf16.mxu0 0
    %5255 = vmatpush1.bf16.msra.mxu0 0
    %5256 = vmatprep.subr.bf16.mxu0 0
    %5257 = vmatpush1.bf16.msra.mxu0 0
    %5258 = vmatprep.subr.bf16.mxu0 0
    %5259 = vmatpush1.bf16.msra.mxu0 0
    %5260 = vmatprep.subr.bf16.mxu0 0
    %5261 = vmatpush1.bf16.msra.mxu0 0
    %5262 = vmatprep.subr.bf16.mxu0 0
    %5263 = vmatpush1.bf16.msra.mxu0 0
    %5264 = vmatprep.subr.bf16.mxu0 0
    %5265 = vmatpush1.bf16.msra.mxu0 0
    %5266 = vmatprep.subr.bf16.mxu0 0
    %5267 = vmatpush1.bf16.msra.mxu0 0
    %5268 = vmatprep.subr.bf16.mxu0 0
    %5269 = vmatpush1.bf16.msra.mxu0 0
    %5270 = vmatprep.subr.bf16.mxu0 0
    %5271 = vmatpush1.bf16.msra.mxu0 0
    %5272 = vmatprep.subr.bf16.mxu0 0
    %5273 = vmatpush1.bf16.msra.mxu0 0
    %5274 = vmatprep.subr.bf16.mxu0 0
    %5275 = vmatpush1.bf16.msra.mxu0 0
    %5276 = vmatprep.subr.bf16.mxu0 0
    %5277 = vmatpush1.bf16.msra.mxu0 0
    %5278 = vmatprep.subr.bf16.mxu0 0
    %5279 = vmatpush1.bf16.msra.mxu0 0
    %5280 = vmatprep.subr.bf16.mxu0 0
    %5281 = vmatpush1.bf16.msra.mxu0 0
    %5282 = vmatprep.mubr.bf16.mxu0 0
    %5283 = vmatmul.mubr.bf16.gmra.mrb[0].mxu0 %v5236
    %v5284 = vpop.f32.mrb[0].mxu0
    %v5285 = vadd.f32 0.0, %v5284
    %v5286 = vpop.f32.mrb[0].mxu0
    %v5287 = vpop.f32.mrb[0].mxu0
    %v5288 = vadd.f32 0.0, %v5287
    %v5289 = vpop.f32.mrb[0].mxu0
    %5290 = vmatprep.mubr.bf16.mxu0 0
    %5291 = vmatmul.mubr.bf16.gmra.mrb[0].mxu0 %v5239
    %v5292 = vpop.f32.mrb[0].mxu0
    %v5293 = vadd.f32 0.0, %v5292
    %v5294 = vpop.f32.mrb[0].mxu0
    %v5295 = vpop.f32.mrb[0].mxu0
    %v5296 = vadd.f32 0.0, %v5295
    %v5297 = vpop.f32.mrb[0].mxu0
    %5298 = vmatprep.mubr.bf16.mxu0 0
    %5299 = vmatmul.mubr.bf16.gmra.mrb[0].mxu0 %v5242
    %v5300 = vpop.f32.mrb[0].mxu0
    %v5301 = vadd.f32 0.0, %v5300
    %v5302 = vpop.f32.mrb[0].mxu0
    %v5303 = vpop.f32.mrb[0].mxu0
    %v5304 = vadd.f32 0.0, %v5303
    %v5305 = vpop.f32.mrb[0].mxu0
    %5306 = vmatprep.mubr.bf16.mxu0 0
    %5307 = vmatmul.mubr.bf16.gmra.mrb[0].mxu0 %v5245
    %v5308 = vpop.f32.mrb[0].mxu0
    %v5309 = vadd.f32 0.0, %v5308
    %v5310 = vpop.f32.mrb[0].mxu0
    %v5311 = vpop.f32.mrb[0].mxu0
    %v5312 = vadd.f32 0.0, %v5311
    %v5313 = vpop.f32.mrb[0].mxu0
    %5314 = vdwg.mxu0
    %vm5315 = vcmask 130048
    %5316 = vst.msk [vmem:[#allocation6] sm:$0xff] %vm5315, %v5285
    %5317 = vst.msk [vmem:[#allocation6 + $0x8] sm:$0xff] %vm5315, %v5288
    %5318 = vst.msk [vmem:[#allocation6 + $0x10] sm:$0xff] %vm5315, %v5293
    %5319 = vst.msk [vmem:[#allocation6 + $0x18] sm:$0xff] %vm5315, %v5296
    %5320 = vst.msk [vmem:[#allocation6 + $0x20] sm:$0xff] %vm5315, %v5301
    %5321 = vst.msk [vmem:[#allocation6 + $0x28] sm:$0xff] %vm5315, %v5304
    %5322 = vst.msk [vmem:[#allocation6 + $0x30] sm:$0xff] %vm5315, %v5309
    %5323 = vst.msk [vmem:[#allocation6 + $0x38] sm:$0xff] %vm5315, %v5312
    %5324 = vxpose.xlu0.b32.start [1/16] %v4759, 128
    %5325 = vxpose.xlu0.b32.cont [2/16] %v4762, 128
    %5326 = vxpose.xlu0.b32.cont [3/16] %v4767, 128
    %5327 = vxpose.xlu0.b32.cont [4/16] %v4770, 128
    %5328 = vxpose.xlu0.b32.cont [5/16] %v4775, 128
    %5329 = vxpose.xlu0.b32.cont [6/16] %v4778, 128
    %5330 = vxpose.xlu0.b32.cont [7/16] %v4783, 128
    %5331 = vxpose.xlu0.b32.cont [8/16] %v4786, 128
    %5332 = vxpose.xlu0.b32.cont [9/16] 0.0, 128
    %5333 = vxpose.xlu0.b32.cont [10/16] 0.0, 128
    %5334 = vxpose.xlu0.b32.cont [11/16] 0.0, 128
    %5335 = vxpose.xlu0.b32.cont [12/16] 0.0, 128
    %5336 = vxpose.xlu0.b32.cont [13/16] 0.0, 128
    %5337 = vxpose.xlu0.b32.cont [14/16] 0.0, 128
    %5338 = vxpose.xlu0.b32.cont [15/16] 0.0, 128
    %5339 = vxpose.xlu0.b32.end [16/16] 0.0, 128
    %v5340 = vpop.trf.xlu0
    %v5341 = vpop.trf.xlu0
    %v5342 = vpop.trf.xlu0
    %v5343 = vpop.trf.xlu0
    %v5344 = vpop.trf.xlu0
    %v5345 = vpop.trf.xlu0
    %v5346 = vpop.trf.xlu0
    %v5347 = vpop.trf.xlu0
    %v5348 = vpop.trf.xlu0
    %v5349 = vpop.trf.xlu0
    %v5350 = vpop.trf.xlu0
    %v5351 = vpop.trf.xlu0
    %v5352 = vpop.trf.xlu0
    %v5353 = vpop.trf.xlu0
    %v5354 = vpop.trf.xlu0
    %v5355 = vpop.trf.xlu0
    %5357 = vrot.lane.b32.xlu0 %v5340, 120
    %v5358 = vpop.permute.xlu0 %5357
    %5360 = vrot.lane.b32.xlu0 %v5340, 112
    %v5361 = vpop.permute.xlu0 %5360
    %5363 = vrot.lane.b32.xlu0 %v5340, 104
    %v5364 = vpop.permute.xlu0 %5363
    %5366 = vrot.lane.b32.xlu0 %v5340, 96
    %v5367 = vpop.permute.xlu0 %5366
    %5369 = vrot.lane.b32.xlu0 %v5340, 88
    %v5370 = vpop.permute.xlu0 %5369
    %5372 = vrot.lane.b32.xlu0 %v5340, 80
    %v5373 = vpop.permute.xlu0 %5372
    %5375 = vrot.lane.b32.xlu0 %v5340, 72
    %v5376 = vpop.permute.xlu0 %5375
    %v5378 = vcombine.low %v5340, %v5361
    %v5380 = vunpack.c.l.s4 1983009808
    %v5381 = vunpack.c.0.s8 %v5380
    %v5382 = vlaneseq
    %v5383 = vshrl.u32 %v5382, 7
    %v5384 = vsub.s32 %v5381, %v5383
    %v5385 = vrot.slane %v5378, %v5384
    %v5386 = vcombine.low %v5358, %v5364
    %v5388 = vunpack.c.l.s4 1983009808
    %v5389 = vunpack.c.0.s8 %v5388
    %v5390 = vlaneseq
    %v5391 = vshrl.u32 %v5390, 7
    %v5392 = vsub.s32 %v5389, %v5391
    %v5393 = vrot.slane %v5386, %v5392
    %v5394 = vcombine.low %v5367, %v5373
    %v5396 = vunpack.c.l.s4 1983009808
    %v5397 = vunpack.c.0.s8 %v5396
    %v5398 = vlaneseq
    %v5399 = vshrl.u32 %v5398, 7
    %v5400 = vsub.s32 %v5397, %v5399
    %v5401 = vrot.slane %v5394, %v5400
    %v5402 = vcombine.low %v5370, %v5376
    %v5404 = vunpack.c.l.s4 1983009808
    %v5405 = vunpack.c.0.s8 %v5404
    %v5406 = vlaneseq
    %v5407 = vshrl.u32 %v5406, 7
    %v5408 = vsub.s32 %v5405, %v5407
    %v5409 = vrot.slane %v5402, %v5408
    %v5410 = vcombine.low %v5385, %v5393
    %v5411 = vcombine.high %v5385, %v5393
    %v5413 = vunpack.c.l.s4 1934713408
    %v5414 = vunpack.c.0.s8 %v5413
    %v5415 = vlaneseq
    %v5416 = vshrl.u32 %v5415, 7
    %v5417 = vsub.s32 %v5414, %v5416
    %v5418 = vrot.slane %v5410, %v5417
    %v5420 = vunpack.c.l.s4 1934713408
    %v5421 = vunpack.c.0.s8 %v5420
    %v5422 = vlaneseq
    %v5423 = vshrl.u32 %v5422, 7
    %v5424 = vsub.s32 %v5421, %v5423
    %v5425 = vrot.slane %v5411, %v5424
    %v5426 = vcombine.low %v5401, %v5409
    %v5427 = vcombine.high %v5401, %v5409
    %v5429 = vunpack.c.l.s4 1934713408
    %v5430 = vunpack.c.0.s8 %v5429
    %v5431 = vlaneseq
    %v5432 = vshrl.u32 %v5431, 7
    %v5433 = vsub.s32 %v5430, %v5432
    %v5434 = vrot.slane %v5426, %v5433
    %v5436 = vunpack.c.l.s4 1934713408
    %v5437 = vunpack.c.0.s8 %v5436
    %v5438 = vlaneseq
    %v5439 = vshrl.u32 %v5438, 7
    %v5440 = vsub.s32 %v5437, %v5439
    %v5441 = vrot.slane %v5427, %v5440
    %v5442 = vcombine.low %v5418, %v5434
    %v5443 = vcombine.high %v5418, %v5434
    %v5444 = vcombine.low %v5425, %v5441
    %v5445 = vcombine.high %v5425, %v5441
    %5446 = vxpose.xlu0.b32.start [1/16] %v5442, 128
    %5447 = vxpose.xlu0.b32.cont [2/16] 0.0, 128
    %5448 = vxpose.xlu0.b32.cont [3/16] 0.0, 128
    %5449 = vxpose.xlu0.b32.cont [4/16] 0.0, 128
    %5450 = vxpose.xlu0.b32.cont [5/16] 0.0, 128
    %5451 = vxpose.xlu0.b32.cont [6/16] 0.0, 128
    %5452 = vxpose.xlu0.b32.cont [7/16] 0.0, 128
    %5453 = vxpose.xlu0.b32.cont [8/16] 0.0, 128
    %5454 = vxpose.xlu0.b32.cont [9/16] 0.0, 128
    %5455 = vxpose.xlu0.b32.cont [10/16] 0.0, 128
    %5456 = vxpose.xlu0.b32.cont [11/16] 0.0, 128
    %5457 = vxpose.xlu0.b32.cont [12/16] 0.0, 128
    %5458 = vxpose.xlu0.b32.cont [13/16] 0.0, 128
    %5459 = vxpose.xlu0.b32.cont [14/16] 0.0, 128
    %5460 = vxpose.xlu0.b32.cont [15/16] 0.0, 128
    %5461 = vxpose.xlu0.b32.end [16/16] 0.0, 128
    %v5462 = vpop.trf.xlu0
    %v5463 = vpop.trf.xlu0
    %v5464 = vpop.trf.xlu0
    %v5465 = vpop.trf.xlu0
    %v5466 = vpop.trf.xlu0
    %v5467 = vpop.trf.xlu0
    %v5468 = vpop.trf.xlu0
    %v5469 = vpop.trf.xlu0
    %v5470 = vpop.trf.xlu0
    %v5471 = vpop.trf.xlu0
    %v5472 = vpop.trf.xlu0
    %v5473 = vpop.trf.xlu0
    %v5474 = vpop.trf.xlu0
    %v5475 = vpop.trf.xlu0
    %v5476 = vpop.trf.xlu0
    %v5477 = vpop.trf.xlu0
    %5478 = vxpose.xlu0.b32.start [1/16] %v5443, 128
    %5479 = vxpose.xlu0.b32.cont [2/16] 0.0, 128
    %5480 = vxpose.xlu0.b32.cont [3/16] 0.0, 128
    %5481 = vxpose.xlu0.b32.cont [4/16] 0.0, 128
    %5482 = vxpose.xlu0.b32.cont [5/16] 0.0, 128
    %5483 = vxpose.xlu0.b32.cont [6/16] 0.0, 128
    %5484 = vxpose.xlu0.b32.cont [7/16] 0.0, 128
    %5485 = vxpose.xlu0.b32.cont [8/16] 0.0, 128
    %5486 = vxpose.xlu0.b32.cont [9/16] 0.0, 128
    %5487 = vxpose.xlu0.b32.cont [10/16] 0.0, 128
    %5488 = vxpose.xlu0.b32.cont [11/16] 0.0, 128
    %5489 = vxpose.xlu0.b32.cont [12/16] 0.0, 128
    %5490 = vxpose.xlu0.b32.cont [13/16] 0.0, 128
    %5491 = vxpose.xlu0.b32.cont [14/16] 0.0, 128
    %5492 = vxpose.xlu0.b32.cont [15/16] 0.0, 128
    %5493 = vxpose.xlu0.b32.end [16/16] 0.0, 128
    %v5494 = vpop.trf.xlu0
    %v5495 = vpop.trf.xlu0
    %v5496 = vpop.trf.xlu0
    %v5497 = vpop.trf.xlu0
    %v5498 = vpop.trf.xlu0
    %v5499 = vpop.trf.xlu0
    %v5500 = vpop.trf.xlu0
    %v5501 = vpop.trf.xlu0
    %v5502 = vpop.trf.xlu0
    %v5503 = vpop.trf.xlu0
    %v5504 = vpop.trf.xlu0
    %v5505 = vpop.trf.xlu0
    %v5506 = vpop.trf.xlu0
    %v5507 = vpop.trf.xlu0
    %v5508 = vpop.trf.xlu0
    %v5509 = vpop.trf.xlu0
    %5510 = vxpose.xlu0.b32.start [1/16] %v5444, 128
    %5511 = vxpose.xlu0.b32.cont [2/16] 0.0, 128
    %5512 = vxpose.xlu0.b32.cont [3/16] 0.0, 128
    %5513 = vxpose.xlu0.b32.cont [4/16] 0.0, 128
    %5514 = vxpose.xlu0.b32.cont [5/16] 0.0, 128
    %5515 = vxpose.xlu0.b32.cont [6/16] 0.0, 128
    %5516 = vxpose.xlu0.b32.cont [7/16] 0.0, 128
    %5517 = vxpose.xlu0.b32.cont [8/16] 0.0, 128
    %5518 = vxpose.xlu0.b32.cont [9/16] 0.0, 128
    %5519 = vxpose.xlu0.b32.cont [10/16] 0.0, 128
    %5520 = vxpose.xlu0.b32.cont [11/16] 0.0, 128
    %5521 = vxpose.xlu0.b32.cont [12/16] 0.0, 128
    %5522 = vxpose.xlu0.b32.cont [13/16] 0.0, 128
    %5523 = vxpose.xlu0.b32.cont [14/16] 0.0, 128
    %5524 = vxpose.xlu0.b32.cont [15/16] 0.0, 128
    %5525 = vxpose.xlu0.b32.end [16/16] 0.0, 128
    %v5526 = vpop.trf.xlu0
    %v5527 = vpop.trf.xlu0
    %v5528 = vpop.trf.xlu0
    %v5529 = vpop.trf.xlu0
    %v5530 = vpop.trf.xlu0
    %v5531 = vpop.trf.xlu0
    %v5532 = vpop.trf.xlu0
    %v5533 = vpop.trf.xlu0
    %v5534 = vpop.trf.xlu0
    %v5535 = vpop.trf.xlu0
    %v5536 = vpop.trf.xlu0
    %v5537 = vpop.trf.xlu0
    %v5538 = vpop.trf.xlu0
    %v5539 = vpop.trf.xlu0
    %v5540 = vpop.trf.xlu0
    %v5541 = vpop.trf.xlu0
    %5542 = vxpose.xlu0.b32.start [1/16] %v5445, 128
    %5543 = vxpose.xlu0.b32.cont [2/16] 0.0, 128
    %5544 = vxpose.xlu0.b32.cont [3/16] 0.0, 128
    %5545 = vxpose.xlu0.b32.cont [4/16] 0.0, 128
    %5546 = vxpose.xlu0.b32.cont [5/16] 0.0, 128
    %5547 = vxpose.xlu0.b32.cont [6/16] 0.0, 128
    %5548 = vxpose.xlu0.b32.cont [7/16] 0.0, 128
    %5549 = vxpose.xlu0.b32.cont [8/16] 0.0, 128
    %5550 = vxpose.xlu0.b32.cont [9/16] 0.0, 128
    %5551 = vxpose.xlu0.b32.cont [10/16] 0.0, 128
    %5552 = vxpose.xlu0.b32.cont [11/16] 0.0, 128
    %5553 = vxpose.xlu0.b32.cont [12/16] 0.0, 128
    %5554 = vxpose.xlu0.b32.cont [13/16] 0.0, 128
    %5555 = vxpose.xlu0.b32.cont [14/16] 0.0, 128
    %5556 = vxpose.xlu0.b32.cont [15/16] 0.0, 128
    %5557 = vxpose.xlu0.b32.end [16/16] 0.0, 128
    %v5558 = vpop.trf.xlu0
    %v5559 = vpop.trf.xlu0
    %v5560 = vpop.trf.xlu0
    %v5561 = vpop.trf.xlu0
    %v5562 = vpop.trf.xlu0
    %v5563 = vpop.trf.xlu0
    %v5564 = vpop.trf.xlu0
    %v5565 = vpop.trf.xlu0
    %v5566 = vpop.trf.xlu0
    %v5567 = vpop.trf.xlu0
    %v5568 = vpop.trf.xlu0
    %v5569 = vpop.trf.xlu0
    %v5570 = vpop.trf.xlu0
    %v5571 = vpop.trf.xlu0
    %v5572 = vpop.trf.xlu0
    %v5573 = vpop.trf.xlu0
    %v5574 = vpack.c.bf16 %v5494, %v5462
    %v5575 = vpack.c.bf16 %v5558, %v5526
    %v5577 = vsel %vm5043, %v5574, 0
    %v5580 = vsel %vm5043, %v5575, 0
    %5582 = vmatprep.subr.bf16.mxu0 0
    %5583 = vmatpush1.bf16.msra.mxu0 %v5052
    %5584 = vmatprep.subr.bf16.mxu0 0
    %5585 = vmatpush1.bf16.msra.mxu0 0
    %5586 = vmatprep.subr.bf16.mxu0 0
    %5587 = vmatpush1.bf16.msra.mxu0 0
    %5588 = vmatprep.subr.bf16.mxu0 0
    %5589 = vmatpush1.bf16.msra.mxu0 0
    %5590 = vmatprep.subr.bf16.mxu0 0
    %5591 = vmatpush1.bf16.msra.mxu0 0
    %5592 = vmatprep.subr.bf16.mxu0 0
    %5593 = vmatpush1.bf16.msra.mxu0 0
    %5594 = vmatprep.subr.bf16.mxu0 0
    %5595 = vmatpush1.bf16.msra.mxu0 0
    %5596 = vmatprep.subr.bf16.mxu0 0
    %5597 = vmatpush1.bf16.msra.mxu0 0
    %5598 = vmatprep.subr.bf16.mxu0 0
    %5599 = vmatpush1.bf16.msra.mxu0 0
    %5600 = vmatprep.subr.bf16.mxu0 0
    %5601 = vmatpush1.bf16.msra.mxu0 0
    %5602 = vmatprep.subr.bf16.mxu0 0
    %5603 = vmatpush1.bf16.msra.mxu0 0
    %5604 = vmatprep.subr.bf16.mxu0 0
    %5605 = vmatpush1.bf16.msra.mxu0 0
    %5606 = vmatprep.subr.bf16.mxu0 0
    %5607 = vmatpush1.bf16.msra.mxu0 0
    %5608 = vmatprep.subr.bf16.mxu0 0
    %5609 = vmatpush1.bf16.msra.mxu0 0
    %5610 = vmatprep.subr.bf16.mxu0 0
    %5611 = vmatpush1.bf16.msra.mxu0 0
    %5612 = vmatprep.subr.bf16.mxu0 0
    %5613 = vmatpush1.bf16.msra.mxu0 0
    %5614 = vmatprep.mubr.bf16.mxu0 0
    %5615 = vmatmul.mubr.bf16.gmra.mrb[0].mxu0 %v5577
    %v5616 = vpop.f32.mrb[0].mxu0
    %v5617 = vadd.f32 0.0, %v5616
    %v5618 = vpop.f32.mrb[0].mxu0
    %v5619 = vpop.f32.mrb[0].mxu0
    %v5620 = vadd.f32 0.0, %v5619
    %v5621 = vpop.f32.mrb[0].mxu0
    %5622 = vmatprep.mubr.bf16.mxu0 0
    %5623 = vmatmul.mubr.bf16.gmra.mrb[0].mxu0 %v5580
    %v5624 = vpop.f32.mrb[0].mxu0
    %v5625 = vadd.f32 0.0, %v5624
    %v5626 = vpop.f32.mrb[0].mxu0
    %v5627 = vpop.f32.mrb[0].mxu0
    %v5628 = vadd.f32 0.0, %v5627
    %v5629 = vpop.f32.mrb[0].mxu0
    %5630 = vdwg.mxu0
    %5631 = vxpose.xlu0.b32.start [1/16] %v5617, 128
    %5632 = vxpose.xlu0.b32.cont [2/16] 0.0, 128
    %5633 = vxpose.xlu0.b32.cont [3/16] 0.0, 128
    %5634 = vxpose.xlu0.b32.cont [4/16] 0.0, 128
    %5635 = vxpose.xlu0.b32.cont [5/16] 0.0, 128
    %5636 = vxpose.xlu0.b32.cont [6/16] 0.0, 128
    %5637 = vxpose.xlu0.b32.cont [7/16] 0.0, 128
    %5638 = vxpose.xlu0.b32.cont [8/16] 0.0, 128
    %5639 = vxpose.xlu0.b32.cont [9/16] 0.0, 128
    %5640 = vxpose.xlu0.b32.cont [10/16] 0.0, 128
    %5641 = vxpose.xlu0.b32.cont [11/16] 0.0, 128
    %5642 = vxpose.xlu0.b32.cont [12/16] 0.0, 128
    %5643 = vxpose.xlu0.b32.cont [13/16] 0.0, 128
    %5644 = vxpose.xlu0.b32.cont [14/16] 0.0, 128
    %5645 = vxpose.xlu0.b32.cont [15/16] 0.0, 128
    %5646 = vxpose.xlu0.b32.end [16/16] 0.0, 128
    %v5647 = vpop.trf.xlu0
    %v5648 = vpop.trf.xlu0
    %v5649 = vpop.trf.xlu0
    %v5650 = vpop.trf.xlu0
    %v5651 = vpop.trf.xlu0
    %v5652 = vpop.trf.xlu0
    %v5653 = vpop.trf.xlu0
    %v5654 = vpop.trf.xlu0
    %v5655 = vpop.trf.xlu0
    %v5656 = vpop.trf.xlu0
    %v5657 = vpop.trf.xlu0
    %v5658 = vpop.trf.xlu0
    %v5659 = vpop.trf.xlu0
    %v5660 = vpop.trf.xlu0
    %v5661 = vpop.trf.xlu0
    %v5662 = vpop.trf.xlu0
    %5663 = vxpose.xlu0.b32.start [1/16] %v5620, 128
    %5664 = vxpose.xlu0.b32.cont [2/16] 0.0, 128
    %5665 = vxpose.xlu0.b32.cont [3/16] 0.0, 128
    %5666 = vxpose.xlu0.b32.cont [4/16] 0.0, 128
    %5667 = vxpose.xlu0.b32.cont [5/16] 0.0, 128
    %5668 = vxpose.xlu0.b32.cont [6/16] 0.0, 128
    %5669 = vxpose.xlu0.b32.cont [7/16] 0.0, 128
    %5670 = vxpose.xlu0.b32.cont [8/16] 0.0, 128
    %5671 = vxpose.xlu0.b32.cont [9/16] 0.0, 128
    %5672 = vxpose.xlu0.b32.cont [10/16] 0.0, 128
    %5673 = vxpose.xlu0.b32.cont [11/16] 0.0, 128
    %5674 = vxpose.xlu0.b32.cont [12/16] 0.0, 128
    %5675 = vxpose.xlu0.b32.cont [13/16] 0.0, 128
    %5676 = vxpose.xlu0.b32.cont [14/16] 0.0, 128
    %5677 = vxpose.xlu0.b32.cont [15/16] 0.0, 128
    %5678 = vxpose.xlu0.b32.end [16/16] 0.0, 128
    %v5679 = vpop.trf.xlu0
    %v5680 = vpop.trf.xlu0
    %v5681 = vpop.trf.xlu0
    %v5682 = vpop.trf.xlu0
    %v5683 = vpop.trf.xlu0
    %v5684 = vpop.trf.xlu0
    %v5685 = vpop.trf.xlu0
    %v5686 = vpop.trf.xlu0
    %v5687 = vpop.trf.xlu0
    %v5688 = vpop.trf.xlu0
    %v5689 = vpop.trf.xlu0
    %v5690 = vpop.trf.xlu0
    %v5691 = vpop.trf.xlu0
    %v5692 = vpop.trf.xlu0
    %v5693 = vpop.trf.xlu0
    %v5694 = vpop.trf.xlu0
    %5695 = vxpose.xlu0.b32.start [1/16] %v5625, 128
    %5696 = vxpose.xlu0.b32.cont [2/16] 0.0, 128
    %5697 = vxpose.xlu0.b32.cont [3/16] 0.0, 128
    %5698 = vxpose.xlu0.b32.cont [4/16] 0.0, 128
    %5699 = vxpose.xlu0.b32.cont [5/16] 0.0, 128
    %5700 = vxpose.xlu0.b32.cont [6/16] 0.0, 128
    %5701 = vxpose.xlu0.b32.cont [7/16] 0.0, 128
    %5702 = vxpose.xlu0.b32.cont [8/16] 0.0, 128
    %5703 = vxpose.xlu0.b32.cont [9/16] 0.0, 128
    %5704 = vxpose.xlu0.b32.cont [10/16] 0.0, 128
    %5705 = vxpose.xlu0.b32.cont [11/16] 0.0, 128
    %5706 = vxpose.xlu0.b32.cont [12/16] 0.0, 128
    %5707 = vxpose.xlu0.b32.cont [13/16] 0.0, 128
    %5708 = vxpose.xlu0.b32.cont [14/16] 0.0, 128
    %5709 = vxpose.xlu0.b32.cont [15/16] 0.0, 128
    %5710 = vxpose.xlu0.b32.end [16/16] 0.0, 128
    %v5711 = vpop.trf.xlu0
    %v5712 = vpop.trf.xlu0
    %v5713 = vpop.trf.xlu0
    %v5714 = vpop.trf.xlu0
    %v5715 = vpop.trf.xlu0
    %v5716 = vpop.trf.xlu0
    %v5717 = vpop.trf.xlu0
    %v5718 = vpop.trf.xlu0
    %v5719 = vpop.trf.xlu0
    %v5720 = vpop.trf.xlu0
    %v5721 = vpop.trf.xlu0
    %v5722 = vpop.trf.xlu0
    %v5723 = vpop.trf.xlu0
    %v5724 = vpop.trf.xlu0
    %v5725 = vpop.trf.xlu0
    %v5726 = vpop.trf.xlu0
    %5727 = vxpose.xlu0.b32.start [1/16] %v5628, 128
    %5728 = vxpose.xlu0.b32.cont [2/16] 0.0, 128
    %5729 = vxpose.xlu0.b32.cont [3/16] 0.0, 128
    %5730 = vxpose.xlu0.b32.cont [4/16] 0.0, 128
    %5731 = vxpose.xlu0.b32.cont [5/16] 0.0, 128
    %5732 = vxpose.xlu0.b32.cont [6/16] 0.0, 128
    %5733 = vxpose.xlu0.b32.cont [7/16] 0.0, 128
    %5734 = vxpose.xlu0.b32.cont [8/16] 0.0, 128
    %5735 = vxpose.xlu0.b32.cont [9/16] 0.0, 128
    %5736 = vxpose.xlu0.b32.cont [10/16] 0.0, 128
    %5737 = vxpose.xlu0.b32.cont [11/16] 0.0, 128
    %5738 = vxpose.xlu0.b32.cont [12/16] 0.0, 128
    %5739 = vxpose.xlu0.b32.cont [13/16] 0.0, 128
    %5740 = vxpose.xlu0.b32.cont [14/16] 0.0, 128
    %5741 = vxpose.xlu0.b32.cont [15/16] 0.0, 128
    %5742 = vxpose.xlu0.b32.end [16/16] 0.0, 128
    %v5743 = vpop.trf.xlu0
    %v5744 = vpop.trf.xlu0
    %v5745 = vpop.trf.xlu0
    %v5746 = vpop.trf.xlu0
    %v5747 = vpop.trf.xlu0
    %v5748 = vpop.trf.xlu0
    %v5749 = vpop.trf.xlu0
    %v5750 = vpop.trf.xlu0
    %v5751 = vpop.trf.xlu0
    %v5752 = vpop.trf.xlu0
    %v5753 = vpop.trf.xlu0
    %v5754 = vpop.trf.xlu0
    %v5755 = vpop.trf.xlu0
    %v5756 = vpop.trf.xlu0
    %v5757 = vpop.trf.xlu0
    %v5758 = vpop.trf.xlu0
    %v5759 = vpack.c.bf16 %v5648, %v5647
    %v5760 = vpack.c.bf16 %v5680, %v5679
    %v5761 = vpack.c.bf16 %v5712, %v5711
    %v5762 = vpack.c.bf16 %v5744, %v5743
    %v5764 = vsel %vm5043, %v5759, 0
    %v5767 = vsel %vm5043, %v5760, 0
    %v5770 = vsel %vm5043, %v5761, 0
    %v5773 = vsel %vm5043, %v5762, 0
    %5775 = vmatprep.subr.bf16.mxu0 0
    %5776 = vmatpush1.bf16.msra.mxu0 %v5248
    %5777 = vmatprep.subr.bf16.mxu0 0
    %5778 = vmatpush1.bf16.msra.mxu0 0
    %5779 = vmatprep.subr.bf16.mxu0 0
    %5780 = vmatpush1.bf16.msra.mxu0 0
    %5781 = vmatprep.subr.bf16.mxu0 0
    %5782 = vmatpush1.bf16.msra.mxu0 0
    %5783 = vmatprep.subr.bf16.mxu0 0
    %5784 = vmatpush1.bf16.msra.mxu0 0
    %5785 = vmatprep.subr.bf16.mxu0 0
    %5786 = vmatpush1.bf16.msra.mxu0 0
    %5787 = vmatprep.subr.bf16.mxu0 0
    %5788 = vmatpush1.bf16.msra.mxu0 0
    %5789 = vmatprep.subr.bf16.mxu0 0
    %5790 = vmatpush1.bf16.msra.mxu0 0
    %5791 = vmatprep.subr.bf16.mxu0 0
    %5792 = vmatpush1.bf16.msra.mxu0 0
    %5793 = vmatprep.subr.bf16.mxu0 0
    %5794 = vmatpush1.bf16.msra.mxu0 0
    %5795 = vmatprep.subr.bf16.mxu0 0
    %5796 = vmatpush1.bf16.msra.mxu0 0
    %5797 = vmatprep.subr.bf16.mxu0 0
    %5798 = vmatpush1.bf16.msra.mxu0 0
    %5799 = vmatprep.subr.bf16.mxu0 0
    %5800 = vmatpush1.bf16.msra.mxu0 0
    %5801 = vmatprep.subr.bf16.mxu0 0
    %5802 = vmatpush1.bf16.msra.mxu0 0
    %5803 = vmatprep.subr.bf16.mxu0 0
    %5804 = vmatpush1.bf16.msra.mxu0 0
    %5805 = vmatprep.subr.bf16.mxu0 0
    %5806 = vmatpush1.bf16.msra.mxu0 0
    %5807 = vmatprep.mubr.bf16.mxu0 0
    %5808 = vmatmul.mubr.bf16.gmra.mrb[0].mxu0 %v5764
    %v5809 = vpop.f32.mrb[0].mxu0
    %v5810 = vadd.f32 0.0, %v5809
    %v5811 = vpop.f32.mrb[0].mxu0
    %v5812 = vpop.f32.mrb[0].mxu0
    %v5813 = vadd.f32 0.0, %v5812
    %v5814 = vpop.f32.mrb[0].mxu0
    %5815 = vmatprep.mubr.bf16.mxu0 0
    %5816 = vmatmul.mubr.bf16.gmra.mrb[0].mxu0 %v5767
    %v5817 = vpop.f32.mrb[0].mxu0
    %v5818 = vadd.f32 0.0, %v5817
    %v5819 = vpop.f32.mrb[0].mxu0
    %v5820 = vpop.f32.mrb[0].mxu0
    %v5821 = vadd.f32 0.0, %v5820
    %v5822 = vpop.f32.mrb[0].mxu0
    %5823 = vmatprep.mubr.bf16.mxu0 0
    %5824 = vmatmul.mubr.bf16.gmra.mrb[0].mxu0 %v5770
    %v5825 = vpop.f32.mrb[0].mxu0
    %v5826 = vadd.f32 0.0, %v5825
    %v5827 = vpop.f32.mrb[0].mxu0
    %v5828 = vpop.f32.mrb[0].mxu0
    %v5829 = vadd.f32 0.0, %v5828
    %v5830 = vpop.f32.mrb[0].mxu0
    %5831 = vmatprep.mubr.bf16.mxu0 0
    %5832 = vmatmul.mubr.bf16.gmra.mrb[0].mxu0 %v5773
    %v5833 = vpop.f32.mrb[0].mxu0
    %v5834 = vadd.f32 0.0, %v5833
    %v5835 = vpop.f32.mrb[0].mxu0
    %v5836 = vpop.f32.mrb[0].mxu0
    %v5837 = vadd.f32 0.0, %v5836
    %v5838 = vpop.f32.mrb[0].mxu0
    %5839 = vdwg.mxu0
    %s5840 = scalar_lea.vmem [#allocation6], 64
    %5841 = vst.msk [vmem:[%s5840] sm:$0xff] %vm5315, %v5810
    %5842 = vst.msk [vmem:[%s5840 + $0x8] sm:$0xff] %vm5315, %v5813
    %5843 = vst.msk [vmem:[%s5840 + $0x10] sm:$0xff] %vm5315, %v5818
    %5844 = vst.msk [vmem:[%s5840 + $0x18] sm:$0xff] %vm5315, %v5821
    %5845 = vst.msk [vmem:[%s5840 + $0x20] sm:$0xff] %vm5315, %v5826
    %5846 = vst.msk [vmem:[%s5840 + $0x28] sm:$0xff] %vm5315, %v5829
    %5847 = vst.msk [vmem:[%s5840 + $0x30] sm:$0xff] %vm5315, %v5834
    %5848 = vst.msk [vmem:[%s5840 + $0x38] sm:$0xff] %vm5315, %v5837
    // Predicated region
    $region30: #{a_call__.3} parent=1 // pred_check
      _
    $region31: #{a_call__.3} parent=1 // pred_check_branch
      %5850 = sbr.rel (0) target = $region33
    $region32: #{a_call__.3} parent=1 // pred_region
      #allocation9 [shape = 'u32[6]{0}', space=smem, size = 0x18, scoped, tag = 'DMA stride descriptor']
      %s5852 = ssub.s32 2048, 2048
      %5853 = vsyncadd [#allocation7], %s5852
      %s5854 = scalar_lea.hbm %s8, 1024
      %s5856 = sshll.u32 1, 14
      %s5857 = sxor.u32 4294967295, %s5856
      %s5860 = sshll.u32 7, 18
      %s5861 = sxor.u32 4294967295, %s5860
      %s5862 = sand.u32 0, %s5861
      %s5864 = sor.u32 %s5862, 0
      %s5866 = sshll.u32 3, 24
      %s5867 = sxor.u32 4294967295, %s5866
      %s5868 = sand.u32 %s5864, %s5867
      %s5870 = sor.u32 %s5868, 0
      %s5871 = sshll.u32 [#allocation6], 4
      %s5872 = int_to_ptr.vmem [resolvable:$true] %s5871
      %5878 = sst [smem:[#allocation9]] 1024
      %s5879 = scalar_lea.smem [#allocation9], 1
      %5880 = sst [smem:[%s5879]] 3072
      %s5881 = scalar_lea.smem [#allocation9], 2
      %5882 = sst [smem:[%s5881]] 8
      %s5883 = scalar_lea.smem [#allocation9], 3
      %5884 = sst [smem:[%s5883]] 128
      %s5885 = scalar_lea.smem [#allocation9], 4
      %5886 = sst [smem:[%s5885]] 128
      %s5887 = scalar_lea.smem [#allocation9], 5
      %5888 = sst [smem:[%s5887]] 8
      %5890 = dma.general %s5872, 2048, %s5854, [#allocation7], [#allocation8], [#allocation9], %s5870, 0
    $region33: #{a_call__.3} parent=1 // pred_fallthru
      _
    // Predicated region
    $region34: #{a_call__.3} parent=1 // pred_check
      _
    $region35: #{a_call__.3} parent=1 // pred_check_branch
      %5892 = sbr.rel (0) target = $region37
    $region36: #{a_call__.3} parent=1 // pred_region
      %5893 = dma.done [#allocation7], 2048
    $region37: #{a_call__.3} parent=1 // pred_fallthru
      _
    %5894 = vsyncpa [#allocation7], 1

</llo_original>
